<compile_context>
chip_gen: v6e
topology: v6e:2x2x1
jax: 0.10.0
libtpu: 0.0.40
codegen_flags: <defaults>
</compile_context>

<pallas_src>
import functools

import jax
import jax.numpy as jnp
from jax.experimental import pallas as pl
from jax.experimental.pallas import tpu as pltpu

IMG_DEPTH = 3
NDF = 64
LRELU_SLOPE = 0.2
IN_EPS = 1e-5
VMEM_LIMIT = 32 * 1024 * 1024  # explicit scoped-VMEM budget (headroom on v7x)


def _leaky_relu(x):
    # max(x, 0.2*x) == LeakyReLU(0.2) and avoids a select mask.
    return jnp.maximum(x, LRELU_SLOPE * x)


# ---------------------------------------------------------------------------
# Pallas kernels
# ---------------------------------------------------------------------------
def _group_matmul(lhs_ref, w_ref, groups, m_rows):
    """Conv as k*s wide 2-D MXU matmuls, bf16 inputs, f32 accumulation.

    lhs_ref: (P, R, ndj*Cin) bf16 stride-phase variants of this sample
             (column shifts folded into the channel axis).
    w_ref  : (G, ndj*Cin, Cout) bf16 per-group weights, G = k*s.
    groups : static tuple of (phase_index, row_offset) per group.
    """
    cout = w_ref.shape[-1]
    acc = jnp.zeros((m_rows, cout), jnp.float32)
    for g, (vi, off) in enumerate(groups):
        lhs_g = lhs_ref[vi, pl.ds(off, m_rows), :]           # (m, ndj*cin) bf16
        acc = acc + jnp.dot(lhs_g, w_ref[g],
                            preferred_element_type=jnp.float32)
    return acc


def _conv_bias_lrelu_kernel(lhs_ref, w_ref, b_ref, o_ref, *, groups, m_rows):
    acc = _group_matmul(lhs_ref, w_ref, groups, m_rows) + b_ref[...]
    o_ref[...] = _leaky_relu(acc).astype(o_ref.dtype)


def _conv_inorm_lrelu_kernel(lhs_ref, w_ref, o_ref, *, groups, m_rows):
    # Grid step == one sample, so per-sample/per-channel InstanceNorm stats are
    # plain axis=0 reductions over this block (biased var, eps=1e-5, affine=F).
    acc = _group_matmul(lhs_ref, w_ref, groups, m_rows)
    mu = jnp.mean(acc, axis=0, keepdims=True)
    xc = acc - mu
    var = jnp.mean(xc * xc, axis=0, keepdims=True)
    y = xc * jax.lax.rsqrt(var + IN_EPS)
    o_ref[...] = _leaky_relu(y).astype(o_ref.dtype)


def _conv1_sigmoid_sum_kernel(lhs_ref, w_ref, b_ref, o_ref, *, groups, m_rows):
    # Cout == 1: keep it off the MXU (broadcast-mul + lane reduction), then
    # fused bias + sigmoid (EUP exp + approx reciprocal) + per-sample sum.
    col = jnp.zeros((m_rows, 1), jnp.float32)
    for g, (vi, off) in enumerate(groups):
        lhs_g = lhs_ref[vi, pl.ds(off, m_rows), :].astype(jnp.float32)
        col = col + jnp.sum(lhs_g * w_ref[g], axis=-1, keepdims=True)
    logits = col + b_ref[...]
    sig = pl.reciprocal(1.0 + jnp.exp(-logits), approx=True)
    o_ref[...] = jnp.sum(sig, axis=0, keepdims=True)         # (1, 1)


# ---------------------------------------------------------------------------
# Wrapper-side LHS / weight preparation (no kh*kw im2col blow-up)
# ---------------------------------------------------------------------------
def _conv_lhs(x_nhwc, k, s, p):
    """Build stride-phase variants with column shifts folded into channels.

    Returns (lhs, groups, (n, ho, wo)) where
      lhs    : (N, P, R, ndj*Cin), P = s*s, ndj = ceil(k/s), R = hv*wo
               (~ceil(k/s)x activation bytes total).
      groups : length k*s tuple of (phase_index, row_offset); group (i, b)
               reads the contiguous rows [off, off + ho*wo) of phase (i%s, b);
               its channel block dj equals x_pad[n, s*ho+i, s*wo+(b+s*dj), :].
    """
    n, h, w, c = x_nhwc.shape
    ho = (h + 2 * p - k) // s + 1
    wo = (w + 2 * p - k) // s + 1
    ndj = -(-k // s)                    # ceil(k / s) column shifts per phase
    hv = (k - 1) // s + ho              # phase rows needed per variant
    extra = s - 1                       # keeps slicing in-bounds for any (k,s)
    xp = jnp.pad(x_nhwc, ((0, 0), (p, p + extra), (p, p + extra), (0, 0)))

    variants = []
    for a in range(s):
        for b in range(s):
            ph = xp[:, a::s, b::s, :]                       # stride-phase plane
            planes = [ph[:, :hv, dj:dj + wo, :] for dj in range(ndj)]
            v = jnp.concatenate(planes, axis=-1)            # (n, hv, wo, ndj*c)
            variants.append(v.reshape(n, hv * wo, ndj * c))
    lhs = jnp.stack(variants, axis=1)                       # (N, P, R, ndj*C)

    groups = []
    for i in range(k):
        for b in range(s):
            groups.append(((i % s) * s + b, (i // s) * wo))
    return lhs, tuple(groups), (n, ho, wo)


def _group_weights(w_oihw, k, s):
    """(Cout, Cin, kh, kw) -> (k*s, ndj*Cin, Cout) matching _conv_lhs groups."""
    cout, cin = w_oihw.shape[0], w_oihw.shape[1]
    ndj = -(-k // s)
    gs = []
    for i in range(k):
        for b in range(s):
            blocks = []
            for dj in range(ndj):
                j = b + s * dj
                if j < k:
                    blocks.append(jnp.transpose(w_oihw[:, :, i, j], (1, 0)))
                else:                                       # padded (unused) tap
                    blocks.append(jnp.zeros((cin, cout), w_oihw.dtype))
            gs.append(jnp.concatenate(blocks, axis=0))      # (ndj*cin, cout)
    return jnp.stack(gs, axis=0)                            # (k*s, ndj*cin, cout)


# ---------------------------------------------------------------------------
# pallas_call wrappers per layer type
# ---------------------------------------------------------------------------
def _conv_layer(x_nhwc, w_oihw, k, s, p, mode, bias=None):
    lhs, groups, (n, ho, wo) = _conv_lhs(x_nhwc.astype(jnp.bfloat16), k, s, p)
    cout, cin = w_oihw.shape[0], w_oihw.shape[1]
    m = ho * wo
    p_cnt, r_rows, c_cols = lhs.shape[1], lhs.shape[2], lhs.shape[3]
    w_g = _group_weights(w_oihw, k, s).astype(jnp.bfloat16)
    g_cnt = w_g.shape[0]

    in_arrays = [lhs, w_g]
    in_specs = [
        pl.BlockSpec((None, p_cnt, r_rows, c_cols), lambda nn: (nn, 0, 0, 0)),
        pl.BlockSpec((g_cnt, c_cols, cout), lambda nn: (0, 0, 0)),
    ]
    if mode == "bias_lrelu":
        in_arrays.append(bias.reshape(1, cout).astype(jnp.float32))
        in_specs.append(pl.BlockSpec((1, cout), lambda nn: (0, 0)))
        kern = functools.partial(_conv_bias_lrelu_kernel,
                                 groups=groups, m_rows=m)
    else:  # "inorm_lrelu"
        kern = functools.partial(_conv_inorm_lrelu_kernel,
                                 groups=groups, m_rows=m)

    flops = 2 * n * m * (k * k * cin) * cout
    bytes_accessed = lhs.size * 2 + w_g.size * 2 + n * m * cout * 2
    out = pl.pallas_call(
        kern,
        out_shape=jax.ShapeDtypeStruct((n, m, cout), jnp.bfloat16),
        grid=(n,),
        in_specs=in_specs,
        out_specs=pl.BlockSpec((None, m, cout), lambda nn: (nn, 0, 0)),
        compiler_params=pltpu.CompilerParams(
            dimension_semantics=("parallel",),
            vmem_limit_bytes=VMEM_LIMIT),
        cost_estimate=pl.CostEstimate(
            flops=flops, transcendentals=0, bytes_accessed=bytes_accessed),
    )(*in_arrays)
    return out.reshape(n, ho, wo, cout)


def _final_conv_sigmoid_mean(x_nhwc, w_oihw, bias):
    k, s, p = 3, 1, 1
    lhs, groups, (n, ho, wo) = _conv_lhs(x_nhwc.astype(jnp.bfloat16), k, s, p)
    cin = w_oihw.shape[1]
    m = ho * wo
    p_cnt, r_rows, c_cols = lhs.shape[1], lhs.shape[2], lhs.shape[3]
    # (k*s, ndj*Cin, 1) -> (k*s, 1, ndj*Cin), keep f32 (VPU path, no MXU).
    w_g = jnp.transpose(_group_weights(w_oihw, k, s),
                        (0, 2, 1)).astype(jnp.float32)
    g_cnt = w_g.shape[0]
    b_arr = bias.reshape(1, 1).astype(jnp.float32)

    kern = functools.partial(_conv1_sigmoid_sum_kernel, groups=groups, m_rows=m)
    flops = 2 * n * m * (k * k * cin)
    bytes_accessed = lhs.size * 2 + w_g.size * 4 + n * 4 + 4
    sums = pl.pallas_call(
        kern,
        out_shape=jax.ShapeDtypeStruct((n, 1, 1), jnp.float32),
        grid=(n,),
        in_specs=[
            pl.BlockSpec((None, p_cnt, r_rows, c_cols),
                         lambda nn: (nn, 0, 0, 0)),
            pl.BlockSpec((g_cnt, 1, c_cols), lambda nn: (0, 0, 0)),
            pl.BlockSpec((1, 1), lambda nn: (0, 0)),
        ],
        out_specs=pl.BlockSpec((None, 1, 1), lambda nn: (nn, 0, 0)),
        compiler_params=pltpu.CompilerParams(
            dimension_semantics=("parallel",),
            vmem_limit_bytes=VMEM_LIMIT),
        cost_estimate=pl.CostEstimate(
            flops=flops, transcendentals=n * m, bytes_accessed=bytes_accessed),
    )(lhs, w_g, b_arr)
    # Global mean over all N*Ho*Wo sigmoid outputs == torch.mean(...).view(1).
    return (jnp.sum(sums) / (n * m)).reshape(1).astype(jnp.float32)


# ---------------------------------------------------------------------------
# Parameters + full forward
# ---------------------------------------------------------------------------
def init_params(key):
    ks = jax.random.split(key, 7)

    def conv_w(k_, cout, cin, ksz):
        return jax.random.normal(k_, (cout, cin, ksz, ksz), jnp.float32) * 0.05

    return {
        "w1": conv_w(ks[0], NDF, IMG_DEPTH, 4),
        "b1": jax.random.normal(ks[1], (NDF,), jnp.float32) * 0.05,
        "w2": conv_w(ks[2], NDF * 2, NDF, 4),
        "w3": conv_w(ks[3], NDF * 4, NDF * 2, 4),
        "w4": conv_w(ks[4], NDF * 8, NDF * 4, 3),
        "w5": conv_w(ks[5], 1, NDF * 8, 3),
        "b5": jax.random.normal(ks[6], (1,), jnp.float32) * 0.05,
    }


def discriminator_forward(params, x_nchw):
    x = jnp.transpose(x_nchw, (0, 2, 3, 1))  # NCHW -> NHWC
    h = _conv_layer(x, params["w1"], 4, 2, 1, "bias_lrelu", bias=params["b1"])
    h = _conv_layer(h, params["w2"], 4, 2, 1, "inorm_lrelu")
    h = _conv_layer(h, params["w3"], 4, 2, 1, "inorm_lrelu")
    h = _conv_layer(h, params["w4"], 3, 1, 1, "inorm_lrelu")
    return _final_conv_sigmoid_mean(h, params["w5"], params["b5"])


if __name__ == "__main__":
    key = jax.random.PRNGKey(0)
    pkey, xkey = jax.random.split(key)
    params = init_params(pkey)
    x = jax.random.normal(xkey, (2, IMG_DEPTH, 16, 16), jnp.float32)

    fwd = jax.jit(discriminator_forward)
    y = fwd(params, x)
    jax.block_until_ready(y)
    assert y.shape == (1,), y.shape
    print("KERNEL_OK")
</pallas_src>

<mosaic_0001>
module attributes {stable_mosaic.version = 11 : i64} {
  func.func @_conv_bias_lrelu_kernel(%arg0: i32, %arg1: memref<1x4x72x6xbf16, #tpu.memory_space<vmem>>, %arg2: memref<8x6x64xbf16, #tpu.memory_space<vmem>>, %arg3: memref<1x64xf32, #tpu.memory_space<vmem>>, %arg4: memref<1x64x64xbf16, #tpu.memory_space<vmem>>) attributes {dimension_semantics = [#tpu.dimension_semantics<parallel>], iteration_bounds = array<i64: 2>, scalar_prefetch = 0 : i64, scratch_operands = 0 : i64, tpu.core_type = #tpu.core_type<tc>, window_params = [{transform_indices = @transform_0, window_bounds = array<i64: 1, 4, 72, 6>}, {pipeline_mode = #tpu.pipeline_mode<synchronous>, transform_indices = @transform_1, window_bounds = array<i64: 8, 6, 64>}, {pipeline_mode = #tpu.pipeline_mode<synchronous>, transform_indices = @transform_2, window_bounds = array<i64: 1, 64>}, {transform_indices = @transform_3, window_bounds = array<i64: 1, 64, 64>}]} {
    %cst = arith.constant 0.000000e+00 : f32
    %0 = vector.broadcast %cst : f32 to vector<64x64xf32>
    %c0 = arith.constant 0 : index
    %c0_0 = arith.constant 0 : index
    %c0_1 = arith.constant 0 : index
    %c0_2 = arith.constant 0 : index
    %1 = vector.load %arg1[%c0, %c0_0, %c0_1, %c0_2] : memref<1x4x72x6xbf16, #tpu.memory_space<vmem>>, vector<1x1x64x6xbf16>
    %2 = vector.shape_cast %1 : vector<1x1x64x6xbf16> to vector<64x6xbf16>
    %c0_3 = arith.constant 0 : index
    %c0_4 = arith.constant 0 : index
    %c0_5 = arith.constant 0 : index
    %3 = vector.load %arg2[%c0_3, %c0_4, %c0_5] : memref<8x6x64xbf16, #tpu.memory_space<vmem>>, vector<1x6x64xbf16>
    %4 = vector.shape_cast %3 : vector<1x6x64xbf16> to vector<6x64xbf16>
    %cst_6 = arith.constant dense<0.000000e+00> : vector<64x64xf32>
    %5 = tpu.matmul %2, %4, %cst_6 {dimension_numbers = #tpu.dot_dimension_numbers<[1], [0], [0], [1], [0, 0, 1, 1], [], []>} : vector<64x6xbf16>, vector<6x64xbf16>, vector<64x64xf32> -> vector<64x64xf32>
    %6 = arith.addf %0, %5 : vector<64x64xf32>
    %c0_7 = arith.constant 0 : index
    %c1 = arith.constant 1 : index
    %c0_8 = arith.constant 0 : index
    %c0_9 = arith.constant 0 : index
    %7 = vector.load %arg1[%c0_7, %c1, %c0_8, %c0_9] : memref<1x4x72x6xbf16, #tpu.memory_space<vmem>>, vector<1x1x64x6xbf16>
    %8 = vector.shape_cast %7 : vector<1x1x64x6xbf16> to vector<64x6xbf16>
    %c1_10 = arith.constant 1 : index
    %c0_11 = arith.constant 0 : index
    %c0_12 = arith.constant 0 : index
    %9 = vector.load %arg2[%c1_10, %c0_11, %c0_12] : memref<8x6x64xbf16, #tpu.memory_space<vmem>>, vector<1x6x64xbf16>
    %10 = vector.shape_cast %9 : vector<1x6x64xbf16> to vector<6x64xbf16>
    %cst_13 = arith.constant dense<0.000000e+00> : vector<64x64xf32>
    %11 = tpu.matmul %8, %10, %cst_13 {dimension_numbers = #tpu.dot_dimension_numbers<[1], [0], [0], [1], [0, 0, 1, 1], [], []>} : vector<64x6xbf16>, vector<6x64xbf16>, vector<64x64xf32> -> vector<64x64xf32>
    %12 = arith.addf %6, %11 : vector<64x64xf32>
    %c0_14 = arith.constant 0 : index
    %c2 = arith.constant 2 : index
    %c0_15 = arith.constant 0 : index
    %c0_16 = arith.constant 0 : index
    %13 = vector.load %arg1[%c0_14, %c2, %c0_15, %c0_16] : memref<1x4x72x6xbf16, #tpu.memory_space<vmem>>, vector<1x1x64x6xbf16>
    %14 = vector.shape_cast %13 : vector<1x1x64x6xbf16> to vector<64x6xbf16>
    %c2_17 = arith.constant 2 : index
    %c0_18 = arith.constant 0 : index
    %c0_19 = arith.constant 0 : index
    %15 = vector.load %arg2[%c2_17, %c0_18, %c0_19] : memref<8x6x64xbf16, #tpu.memory_space<vmem>>, vector<1x6x64xbf16>
    %16 = vector.shape_cast %15 : vector<1x6x64xbf16> to vector<6x64xbf16>
    %cst_20 = arith.constant dense<0.000000e+00> : vector<64x64xf32>
    %17 = tpu.matmul %14, %16, %cst_20 {dimension_numbers = #tpu.dot_dimension_numbers<[1], [0], [0], [1], [0, 0, 1, 1], [], []>} : vector<64x6xbf16>, vector<6x64xbf16>, vector<64x64xf32> -> vector<64x64xf32>
    %18 = arith.addf %12, %17 : vector<64x64xf32>
    %c0_21 = arith.constant 0 : index
    %c3 = arith.constant 3 : index
    %c0_22 = arith.constant 0 : index
    %c0_23 = arith.constant 0 : index
    %19 = vector.load %arg1[%c0_21, %c3, %c0_22, %c0_23] : memref<1x4x72x6xbf16, #tpu.memory_space<vmem>>, vector<1x1x64x6xbf16>
    %20 = vector.shape_cast %19 : vector<1x1x64x6xbf16> to vector<64x6xbf16>
    %c3_24 = arith.constant 3 : index
    %c0_25 = arith.constant 0 : index
    %c0_26 = arith.constant 0 : index
    %21 = vector.load %arg2[%c3_24, %c0_25, %c0_26] : memref<8x6x64xbf16, #tpu.memory_space<vmem>>, vector<1x6x64xbf16>
    %22 = vector.shape_cast %21 : vector<1x6x64xbf16> to vector<6x64xbf16>
    %cst_27 = arith.constant dense<0.000000e+00> : vector<64x64xf32>
    %23 = tpu.matmul %20, %22, %cst_27 {dimension_numbers = #tpu.dot_dimension_numbers<[1], [0], [0], [1], [0, 0, 1, 1], [], []>} : vector<64x6xbf16>, vector<6x64xbf16>, vector<64x64xf32> -> vector<64x64xf32>
    %24 = arith.addf %18, %23 : vector<64x64xf32>
    %c0_28 = arith.constant 0 : index
    %c0_29 = arith.constant 0 : index
    %c8 = arith.constant 8 : index
    %c0_30 = arith.constant 0 : index
    %25 = vector.load %arg1[%c0_28, %c0_29, %c8, %c0_30] : memref<1x4x72x6xbf16, #tpu.memory_space<vmem>>, vector<1x1x64x6xbf16>
    %26 = vector.shape_cast %25 : vector<1x1x64x6xbf16> to vector<64x6xbf16>
    %c4 = arith.constant 4 : index
    %c0_31 = arith.constant 0 : index
    %c0_32 = arith.constant 0 : index
    %27 = vector.load %arg2[%c4, %c0_31, %c0_32] : memref<8x6x64xbf16, #tpu.memory_space<vmem>>, vector<1x6x64xbf16>
    %28 = vector.shape_cast %27 : vector<1x6x64xbf16> to vector<6x64xbf16>
    %cst_33 = arith.constant dense<0.000000e+00> : vector<64x64xf32>
    %29 = tpu.matmul %26, %28, %cst_33 {dimension_numbers = #tpu.dot_dimension_numbers<[1], [0], [0], [1], [0, 0, 1, 1], [], []>} : vector<64x6xbf16>, vector<6x64xbf16>, vector<64x64xf32> -> vector<64x64xf32>
    %30 = arith.addf %24, %29 : vector<64x64xf32>
    %c0_34 = arith.constant 0 : index
    %c1_35 = arith.constant 1 : index
    %c8_36 = arith.constant 8 : index
    %c0_37 = arith.constant 0 : index
    %31 = vector.load %arg1[%c0_34, %c1_35, %c8_36, %c0_37] : memref<1x4x72x6xbf16, #tpu.memory_space<vmem>>, vector<1x1x64x6xbf16>
    %32 = vector.shape_cast %31 : vector<1x1x64x6xbf16> to vector<64x6xbf16>
    %c5 = arith.constant 5 : index
    %c0_38 = arith.constant 0 : index
    %c0_39 = arith.constant 0 : index
    %33 = vector.load %arg2[%c5, %c0_38, %c0_39] : memref<8x6x64xbf16, #tpu.memory_space<vmem>>, vector<1x6x64xbf16>
    %34 = vector.shape_cast %33 : vector<1x6x64xbf16> to vector<6x64xbf16>
    %cst_40 = arith.constant dense<0.000000e+00> : vector<64x64xf32>
    %35 = tpu.matmul %32, %34, %cst_40 {dimension_numbers = #tpu.dot_dimension_numbers<[1], [0], [0], [1], [0, 0, 1, 1], [], []>} : vector<64x6xbf16>, vector<6x64xbf16>, vector<64x64xf32> -> vector<64x64xf32>
    %36 = arith.addf %30, %35 : vector<64x64xf32>
    %c0_41 = arith.constant 0 : index
    %c2_42 = arith.constant 2 : index
    %c8_43 = arith.constant 8 : index
    %c0_44 = arith.constant 0 : index
    %37 = vector.load %arg1[%c0_41, %c2_42, %c8_43, %c0_44] : memref<1x4x72x6xbf16, #tpu.memory_space<vmem>>, vector<1x1x64x6xbf16>
    %38 = vector.shape_cast %37 : vector<1x1x64x6xbf16> to vector<64x6xbf16>
    %c6 = arith.constant 6 : index
    %c0_45 = arith.constant 0 : index
    %c0_46 = arith.constant 0 : index
    %39 = vector.load %arg2[%c6, %c0_45, %c0_46] : memref<8x6x64xbf16, #tpu.memory_space<vmem>>, vector<1x6x64xbf16>
    %40 = vector.shape_cast %39 : vector<1x6x64xbf16> to vector<6x64xbf16>
    %cst_47 = arith.constant dense<0.000000e+00> : vector<64x64xf32>
    %41 = tpu.matmul %38, %40, %cst_47 {dimension_numbers = #tpu.dot_dimension_numbers<[1], [0], [0], [1], [0, 0, 1, 1], [], []>} : vector<64x6xbf16>, vector<6x64xbf16>, vector<64x64xf32> -> vector<64x64xf32>
    %42 = arith.addf %36, %41 : vector<64x64xf32>
    %c0_48 = arith.constant 0 : index
    %c3_49 = arith.constant 3 : index
    %c8_50 = arith.constant 8 : index
    %c0_51 = arith.constant 0 : index
    %43 = vector.load %arg1[%c0_48, %c3_49, %c8_50, %c0_51] : memref<1x4x72x6xbf16, #tpu.memory_space<vmem>>, vector<1x1x64x6xbf16>
    %44 = vector.shape_cast %43 : vector<1x1x64x6xbf16> to vector<64x6xbf16>
    %c7 = arith.constant 7 : index
    %c0_52 = arith.constant 0 : index
    %c0_53 = arith.constant 0 : index
    %45 = vector.load %arg2[%c7, %c0_52, %c0_53] : memref<8x6x64xbf16, #tpu.memory_space<vmem>>, vector<1x6x64xbf16>
    %46 = vector.shape_cast %45 : vector<1x6x64xbf16> to vector<6x64xbf16>
    %cst_54 = arith.constant dense<0.000000e+00> : vector<64x64xf32>
    %47 = tpu.matmul %44, %46, %cst_54 {dimension_numbers = #tpu.dot_dimension_numbers<[1], [0], [0], [1], [0, 0, 1, 1], [], []>} : vector<64x6xbf16>, vector<6x64xbf16>, vector<64x64xf32> -> vector<64x64xf32>
    %48 = arith.addf %42, %47 : vector<64x64xf32>
    %c0_55 = arith.constant 0 : index
    %c0_56 = arith.constant 0 : index
    %49 = vector.load %arg3[%c0_55, %c0_56] : memref<1x64xf32, #tpu.memory_space<vmem>>, vector<1x64xf32>
    %50 = vector.broadcast %49 : vector<1x64xf32> to vector<64x64xf32>
    %51 = arith.addf %48, %50 : vector<64x64xf32>
    %cst_57 = arith.constant 2.000000e-01 : f32
    %52 = vector.broadcast %cst_57 : f32 to vector<64x64xf32>
    %53 = arith.mulf %52, %51 : vector<64x64xf32>
    %54 = arith.maximumf %51, %53 : vector<64x64xf32>
    %55 = arith.truncf %54 : vector<64x64xf32> to vector<64x64xbf16>
    %c0_58 = arith.constant 0 : index
    %c0_59 = arith.constant 0 : index
    %c0_60 = arith.constant 0 : index
    %56 = vector.load %arg4[%c0_58, %c0_59, %c0_60] : memref<1x64x64xbf16, #tpu.memory_space<vmem>>, vector<1x64x64xbf16>
    %57 = vector.shape_cast %56 : vector<1x64x64xbf16> to vector<64x64xbf16>
    %58 = vector.shape_cast %55 : vector<64x64xbf16> to vector<1x64x64xbf16>
    tpu.vector_store %arg4[%c0_58, %c0_59, %c0_60], %58 {strides = array<i32>} : memref<1x64x64xbf16, #tpu.memory_space<vmem>>, vector<1x64x64xbf16>,
    return
  }
  func.func @transform_0(%arg0: i32) -> (i32, i32, i32, i32) {
    %c0_i32 = arith.constant 0 : i32
    %c0_i32_0 = arith.constant 0 : i32
    %c0_i32_1 = arith.constant 0 : i32
    %c0_i32_2 = arith.constant 0 : i32
    return %arg0, %c0_i32, %c0_i32_0, %c0_i32_1 : i32, i32, i32, i32
  }
  func.func @transform_1(%arg0: i32) -> (i32, i32, i32) {
    %c0_i32 = arith.constant 0 : i32
    %c0_i32_0 = arith.constant 0 : i32
    %c0_i32_1 = arith.constant 0 : i32
    %c0_i32_2 = arith.constant 0 : i32
    return %c0_i32, %c0_i32_0, %c0_i32_1 : i32, i32, i32
  }
  func.func @transform_2(%arg0: i32) -> (i32, i32) {
    %c0_i32 = arith.constant 0 : i32
    %c0_i32_0 = arith.constant 0 : i32
    %c0_i32_1 = arith.constant 0 : i32
    return %c0_i32, %c0_i32_0 : i32, i32
  }
  func.func @transform_3(%arg0: i32) -> (i32, i32, i32) {
    %c0_i32 = arith.constant 0 : i32
    %c0_i32_0 = arith.constant 0 : i32
    %c0_i32_1 = arith.constant 0 : i32
    return %arg0, %c0_i32, %c0_i32_0 : i32, i32, i32
  }
}

module attributes {stable_mosaic.version = 11 : i64} {
  func.func @_conv_inorm_lrelu_kernel(%arg0: i32, %arg1: memref<1x4x20x128xbf16, #tpu.memory_space<vmem>>, %arg2: memref<8x128x128xbf16, #tpu.memory_space<vmem>>, %arg3: memref<1x16x128xbf16, #tpu.memory_space<vmem>>) attributes {dimension_semantics = [#tpu.dimension_semantics<parallel>], iteration_bounds = array<i64: 2>, scalar_prefetch = 0 : i64, scratch_operands = 0 : i64, tpu.core_type = #tpu.core_type<tc>, window_params = [{transform_indices = @transform_0, window_bounds = array<i64: 1, 4, 20, 128>}, {pipeline_mode = #tpu.pipeline_mode<synchronous>, transform_indices = @transform_1, window_bounds = array<i64: 8, 128, 128>}, {transform_indices = @transform_2, window_bounds = array<i64: 1, 16, 128>}]} {
    %cst = arith.constant 0.000000e+00 : f32
    %0 = vector.broadcast %cst : f32 to vector<16x128xf32>
    %c0 = arith.constant 0 : index
    %c0_0 = arith.constant 0 : index
    %c0_1 = arith.constant 0 : index
    %c0_2 = arith.constant 0 : index
    %1 = vector.load %arg1[%c0, %c0_0, %c0_1, %c0_2] : memref<1x4x20x128xbf16, #tpu.memory_space<vmem>>, vector<1x1x16x128xbf16>
    %2 = vector.shape_cast %1 : vector<1x1x16x128xbf16> to vector<16x128xbf16>
    %c0_3 = arith.constant 0 : index
    %c0_4 = arith.constant 0 : index
    %c0_5 = arith.constant 0 : index
    %3 = vector.load %arg2[%c0_3, %c0_4, %c0_5] : memref<8x128x128xbf16, #tpu.memory_space<vmem>>, vector<1x128x128xbf16>
    %4 = vector.shape_cast %3 : vector<1x128x128xbf16> to vector<128x128xbf16>
    %cst_6 = arith.constant dense<0.000000e+00> : vector<16x128xf32>
    %5 = tpu.matmul %2, %4, %cst_6 {dimension_numbers = #tpu.dot_dimension_numbers<[1], [0], [0], [1], [0, 0, 1, 1], [], []>} : vector<16x128xbf16>, vector<128x128xbf16>, vector<16x128xf32> -> vector<16x128xf32>
    %6 = arith.addf %0, %5 : vector<16x128xf32>
    %c0_7 = arith.constant 0 : index
    %c1 = arith.constant 1 : index
    %c0_8 = arith.constant 0 : index
    %c0_9 = arith.constant 0 : index
    %7 = vector.load %arg1[%c0_7, %c1, %c0_8, %c0_9] : memref<1x4x20x128xbf16, #tpu.memory_space<vmem>>, vector<1x1x16x128xbf16>
    %8 = vector.shape_cast %7 : vector<1x1x16x128xbf16> to vector<16x128xbf16>
    %c1_10 = arith.constant 1 : index
    %c0_11 = arith.constant 0 : index
    %c0_12 = arith.constant 0 : index
    %9 = vector.load %arg2[%c1_10, %c0_11, %c0_12] : memref<8x128x128xbf16, #tpu.memory_space<vmem>>, vector<1x128x128xbf16>
    %10 = vector.shape_cast %9 : vector<1x128x128xbf16> to vector<128x128xbf16>
    %cst_13 = arith.constant dense<0.000000e+00> : vector<16x128xf32>
    %11 = tpu.matmul %8, %10, %cst_13 {dimension_numbers = #tpu.dot_dimension_numbers<[1], [0], [0], [1], [0, 0, 1, 1], [], []>} : vector<16x128xbf16>, vector<128x128xbf16>, vector<16x128xf32> -> vector<16x128xf32>
    %12 = arith.addf %6, %11 : vector<16x128xf32>
    %c0_14 = arith.constant 0 : index
    %c2 = arith.constant 2 : index
    %c0_15 = arith.constant 0 : index
    %c0_16 = arith.constant 0 : index
    %13 = vector.load %arg1[%c0_14, %c2, %c0_15, %c0_16] : memref<1x4x20x128xbf16, #tpu.memory_space<vmem>>, vector<1x1x16x128xbf16>
    %14 = vector.shape_cast %13 : vector<1x1x16x128xbf16> to vector<16x128xbf16>
    %c2_17 = arith.constant 2 : index
    %c0_18 = arith.constant 0 : index
    %c0_19 = arith.constant 0 : index
    %15 = vector.load %arg2[%c2_17, %c0_18, %c0_19] : memref<8x128x128xbf16, #tpu.memory_space<vmem>>, vector<1x128x128xbf16>
    %16 = vector.shape_cast %15 : vector<1x128x128xbf16> to vector<128x128xbf16>
    %cst_20 = arith.constant dense<0.000000e+00> : vector<16x128xf32>
    %17 = tpu.matmul %14, %16, %cst_20 {dimension_numbers = #tpu.dot_dimension_numbers<[1], [0], [0], [1], [0, 0, 1, 1], [], []>} : vector<16x128xbf16>, vector<128x128xbf16>, vector<16x128xf32> -> vector<16x128xf32>
    %18 = arith.addf %12, %17 : vector<16x128xf32>
    %c0_21 = arith.constant 0 : index
    %c3 = arith.constant 3 : index
    %c0_22 = arith.constant 0 : index
    %c0_23 = arith.constant 0 : index
    %19 = vector.load %arg1[%c0_21, %c3, %c0_22, %c0_23] : memref<1x4x20x128xbf16, #tpu.memory_space<vmem>>, vector<1x1x16x128xbf16>
    %20 = vector.shape_cast %19 : vector<1x1x16x128xbf16> to vector<16x128xbf16>
    %c3_24 = arith.constant 3 : index
    %c0_25 = arith.constant 0 : index
    %c0_26 = arith.constant 0 : index
    %21 = vector.load %arg2[%c3_24, %c0_25, %c0_26] : memref<8x128x128xbf16, #tpu.memory_space<vmem>>, vector<1x128x128xbf16>
    %22 = vector.shape_cast %21 : vector<1x128x128xbf16> to vector<128x128xbf16>
    %cst_27 = arith.constant dense<0.000000e+00> : vector<16x128xf32>
    %23 = tpu.matmul %20, %22, %cst_27 {dimension_numbers = #tpu.dot_dimension_numbers<[1], [0], [0], [1], [0, 0, 1, 1], [], []>} : vector<16x128xbf16>, vector<128x128xbf16>, vector<16x128xf32> -> vector<16x128xf32>
    %24 = arith.addf %18, %23 : vector<16x128xf32>
    %c0_28 = arith.constant 0 : index
    %c0_29 = arith.constant 0 : index
    %c4 = arith.constant 4 : index
    %c0_30 = arith.constant 0 : index
    %25 = vector.load %arg1[%c0_28, %c0_29, %c4, %c0_30] : memref<1x4x20x128xbf16, #tpu.memory_space<vmem>>, vector<1x1x16x128xbf16>
    %26 = vector.shape_cast %25 : vector<1x1x16x128xbf16> to vector<16x128xbf16>
    %c4_31 = arith.constant 4 : index
    %c0_32 = arith.constant 0 : index
    %c0_33 = arith.constant 0 : index
    %27 = vector.load %arg2[%c4_31, %c0_32, %c0_33] : memref<8x128x128xbf16, #tpu.memory_space<vmem>>, vector<1x128x128xbf16>
    %28 = vector.shape_cast %27 : vector<1x128x128xbf16> to vector<128x128xbf16>
    %cst_34 = arith.constant dense<0.000000e+00> : vector<16x128xf32>
    %29 = tpu.matmul %26, %28, %cst_34 {dimension_numbers = #tpu.dot_dimension_numbers<[1], [0], [0], [1], [0, 0, 1, 1], [], []>} : vector<16x128xbf16>, vector<128x128xbf16>, vector<16x128xf32> -> vector<16x128xf32>
    %30 = arith.addf %24, %29 : vector<16x128xf32>
    %c0_35 = arith.constant 0 : index
    %c1_36 = arith.constant 1 : index
    %c4_37 = arith.constant 4 : index
    %c0_38 = arith.constant 0 : index
    %31 = vector.load %arg1[%c0_35, %c1_36, %c4_37, %c0_38] : memref<1x4x20x128xbf16, #tpu.memory_space<vmem>>, vector<1x1x16x128xbf16>
    %32 = vector.shape_cast %31 : vector<1x1x16x128xbf16> to vector<16x128xbf16>
    %c5 = arith.constant 5 : index
    %c0_39 = arith.constant 0 : index
    %c0_40 = arith.constant 0 : index
    %33 = vector.load %arg2[%c5, %c0_39, %c0_40] : memref<8x128x128xbf16, #tpu.memory_space<vmem>>, vector<1x128x128xbf16>
    %34 = vector.shape_cast %33 : vector<1x128x128xbf16> to vector<128x128xbf16>
    %cst_41 = arith.constant dense<0.000000e+00> : vector<16x128xf32>
    %35 = tpu.matmul %32, %34, %cst_41 {dimension_numbers = #tpu.dot_dimension_numbers<[1], [0], [0], [1], [0, 0, 1, 1], [], []>} : vector<16x128xbf16>, vector<128x128xbf16>, vector<16x128xf32> -> vector<16x128xf32>
    %36 = arith.addf %30, %35 : vector<16x128xf32>
    %c0_42 = arith.constant 0 : index
    %c2_43 = arith.constant 2 : index
    %c4_44 = arith.constant 4 : index
    %c0_45 = arith.constant 0 : index
    %37 = vector.load %arg1[%c0_42, %c2_43, %c4_44, %c0_45] : memref<1x4x20x128xbf16, #tpu.memory_space<vmem>>, vector<1x1x16x128xbf16>
    %38 = vector.shape_cast %37 : vector<1x1x16x128xbf16> to vector<16x128xbf16>
    %c6 = arith.constant 6 : index
    %c0_46 = arith.constant 0 : index
    %c0_47 = arith.constant 0 : index
    %39 = vector.load %arg2[%c6, %c0_46, %c0_47] : memref<8x128x128xbf16, #tpu.memory_space<vmem>>, vector<1x128x128xbf16>
    %40 = vector.shape_cast %39 : vector<1x128x128xbf16> to vector<128x128xbf16>
    %cst_48 = arith.constant dense<0.000000e+00> : vector<16x128xf32>
    %41 = tpu.matmul %38, %40, %cst_48 {dimension_numbers = #tpu.dot_dimension_numbers<[1], [0], [0], [1], [0, 0, 1, 1], [], []>} : vector<16x128xbf16>, vector<128x128xbf16>, vector<16x128xf32> -> vector<16x128xf32>
    %42 = arith.addf %36, %41 : vector<16x128xf32>
    %c0_49 = arith.constant 0 : index
    %c3_50 = arith.constant 3 : index
    %c4_51 = arith.constant 4 : index
    %c0_52 = arith.constant 0 : index
    %43 = vector.load %arg1[%c0_49, %c3_50, %c4_51, %c0_52] : memref<1x4x20x128xbf16, #tpu.memory_space<vmem>>, vector<1x1x16x128xbf16>
    %44 = vector.shape_cast %43 : vector<1x1x16x128xbf16> to vector<16x128xbf16>
    %c7 = arith.constant 7 : index
    %c0_53 = arith.constant 0 : index
    %c0_54 = arith.constant 0 : index
    %45 = vector.load %arg2[%c7, %c0_53, %c0_54] : memref<8x128x128xbf16, #tpu.memory_space<vmem>>, vector<1x128x128xbf16>
    %46 = vector.shape_cast %45 : vector<1x128x128xbf16> to vector<128x128xbf16>
    %cst_55 = arith.constant dense<0.000000e+00> : vector<16x128xf32>
    %47 = tpu.matmul %44, %46, %cst_55 {dimension_numbers = #tpu.dot_dimension_numbers<[1], [0], [0], [1], [0, 0, 1, 1], [], []>} : vector<16x128xbf16>, vector<128x128xbf16>, vector<16x128xf32> -> vector<16x128xf32>
    %48 = arith.addf %42, %47 : vector<16x128xf32>
    %cst_56 = arith.constant dense<0.000000e+00> : vector<128xf32>
    %49 = vector.multi_reduction <add>, %48, %cst_56 [0] : vector<16x128xf32> to vector<128xf32>
    %50 = vector.shape_cast %49 : vector<128xf32> to vector<1x128xf32>
    %cst_57 = arith.constant 1.600000e+01 : f32
    %51 = vector.broadcast %cst_57 : f32 to vector<1x128xf32>
    %52 = arith.divf %50, %51 : vector<1x128xf32>
    %53 = vector.broadcast %52 : vector<1x128xf32> to vector<16x128xf32>
    %54 = arith.subf %48, %53 : vector<16x128xf32>
    %55 = arith.mulf %54, %54 : vector<16x128xf32>
    %cst_58 = arith.constant dense<0.000000e+00> : vector<128xf32>
    %56 = vector.multi_reduction <add>, %55, %cst_58 [0] : vector<16x128xf32> to vector<128xf32>
    %57 = vector.shape_cast %56 : vector<128xf32> to vector<1x128xf32>
    %cst_59 = arith.constant 1.600000e+01 : f32
    %58 = vector.broadcast %cst_59 : f32 to vector<1x128xf32>
    %59 = arith.divf %57, %58 : vector<1x128xf32>
    %cst_60 = arith.constant 9.99999974E-6 : f32
    %60 = vector.broadcast %cst_60 : f32 to vector<1x128xf32>
    %61 = arith.addf %59, %60 : vector<1x128xf32>
    %62 = math.rsqrt %61 : vector<1x128xf32>
    %63 = vector.broadcast %62 : vector<1x128xf32> to vector<16x128xf32>
    %64 = arith.mulf %54, %63 : vector<16x128xf32>
    %cst_61 = arith.constant 2.000000e-01 : f32
    %65 = vector.broadcast %cst_61 : f32 to vector<16x128xf32>
    %66 = arith.mulf %65, %64 : vector<16x128xf32>
    %67 = arith.maximumf %64, %66 : vector<16x128xf32>
    %68 = arith.truncf %67 : vector<16x128xf32> to vector<16x128xbf16>
    %c0_62 = arith.constant 0 : index
    %c0_63 = arith.constant 0 : index
    %c0_64 = arith.constant 0 : index
    %69 = vector.load %arg3[%c0_62, %c0_63, %c0_64] : memref<1x16x128xbf16, #tpu.memory_space<vmem>>, vector<1x16x128xbf16>
    %70 = vector.shape_cast %69 : vector<1x16x128xbf16> to vector<16x128xbf16>
    %71 = vector.shape_cast %68 : vector<16x128xbf16> to vector<1x16x128xbf16>
    tpu.vector_store %arg3[%c0_62, %c0_63, %c0_64], %71 {strides = array<i32>} : memref<1x16x128xbf16, #tpu.memory_space<vmem>>, vector<1x16x128xbf16>,
    return
  }
  func.func @transform_0(%arg0: i32) -> (i32, i32, i32, i32) {
    %c0_i32 = arith.constant 0 : i32
    %c0_i32_0 = arith.constant 0 : i32
    %c0_i32_1 = arith.constant 0 : i32
    %c0_i32_2 = arith.constant 0 : i32
    return %arg0, %c0_i32, %c0_i32_0, %c0_i32_1 : i32, i32, i32, i32
  }
  func.func @transform_1(%arg0: i32) -> (i32, i32, i32) {
    %c0_i32 = arith.constant 0 : i32
    %c0_i32_0 = arith.constant 0 : i32
    %c0_i32_1 = arith.constant 0 : i32
    %c0_i32_2 = arith.constant 0 : i32
    return %c0_i32, %c0_i32_0, %c0_i32_1 : i32, i32, i32
  }
  func.func @transform_2(%arg0: i32) -> (i32, i32, i32) {
    %c0_i32 = arith.constant 0 : i32
    %c0_i32_0 = arith.constant 0 : i32
    %c0_i32_1 = arith.constant 0 : i32
    return %arg0, %c0_i32, %c0_i32_0 : i32, i32, i32
  }
}

module attributes {stable_mosaic.version = 11 : i64} {
  func.func @_conv_inorm_lrelu_kernel(%arg0: i32, %arg1: memref<1x4x6x256xbf16, #tpu.memory_space<vmem>>, %arg2: memref<8x256x256xbf16, #tpu.memory_space<vmem>>, %arg3: memref<1x4x256xbf16, #tpu.memory_space<vmem>>) attributes {dimension_semantics = [#tpu.dimension_semantics<parallel>], iteration_bounds = array<i64: 2>, scalar_prefetch = 0 : i64, scratch_operands = 0 : i64, tpu.core_type = #tpu.core_type<tc>, window_params = [{transform_indices = @transform_0, window_bounds = array<i64: 1, 4, 6, 256>}, {pipeline_mode = #tpu.pipeline_mode<synchronous>, transform_indices = @transform_1, window_bounds = array<i64: 8, 256, 256>}, {transform_indices = @transform_2, window_bounds = array<i64: 1, 4, 256>}]} {
    %cst = arith.constant 0.000000e+00 : f32
    %0 = vector.broadcast %cst : f32 to vector<4x256xf32>
    %c0 = arith.constant 0 : index
    %c0_0 = arith.constant 0 : index
    %c0_1 = arith.constant 0 : index
    %c0_2 = arith.constant 0 : index
    %1 = vector.load %arg1[%c0, %c0_0, %c0_1, %c0_2] : memref<1x4x6x256xbf16, #tpu.memory_space<vmem>>, vector<1x1x4x256xbf16>
    %2 = vector.shape_cast %1 : vector<1x1x4x256xbf16> to vector<4x256xbf16>
    %c0_3 = arith.constant 0 : index
    %c0_4 = arith.constant 0 : index
    %c0_5 = arith.constant 0 : index
    %3 = vector.load %arg2[%c0_3, %c0_4, %c0_5] : memref<8x256x256xbf16, #tpu.memory_space<vmem>>, vector<1x256x256xbf16>
    %4 = vector.shape_cast %3 : vector<1x256x256xbf16> to vector<256x256xbf16>
    %cst_6 = arith.constant dense<0.000000e+00> : vector<4x256xf32>
    %5 = tpu.matmul %2, %4, %cst_6 {dimension_numbers = #tpu.dot_dimension_numbers<[1], [0], [0], [1], [0, 0, 1, 1], [], []>} : vector<4x256xbf16>, vector<256x256xbf16>, vector<4x256xf32> -> vector<4x256xf32>
    %6 = arith.addf %0, %5 : vector<4x256xf32>
    %c0_7 = arith.constant 0 : index
    %c1 = arith.constant 1 : index
    %c0_8 = arith.constant 0 : index
    %c0_9 = arith.constant 0 : index
    %7 = vector.load %arg1[%c0_7, %c1, %c0_8, %c0_9] : memref<1x4x6x256xbf16, #tpu.memory_space<vmem>>, vector<1x1x4x256xbf16>
    %8 = vector.shape_cast %7 : vector<1x1x4x256xbf16> to vector<4x256xbf16>
    %c1_10 = arith.constant 1 : index
    %c0_11 = arith.constant 0 : index
    %c0_12 = arith.constant 0 : index
    %9 = vector.load %arg2[%c1_10, %c0_11, %c0_12] : memref<8x256x256xbf16, #tpu.memory_space<vmem>>, vector<1x256x256xbf16>
    %10 = vector.shape_cast %9 : vector<1x256x256xbf16> to vector<256x256xbf16>
    %cst_13 = arith.constant dense<0.000000e+00> : vector<4x256xf32>
    %11 = tpu.matmul %8, %10, %cst_13 {dimension_numbers = #tpu.dot_dimension_numbers<[1], [0], [0], [1], [0, 0, 1, 1], [], []>} : vector<4x256xbf16>, vector<256x256xbf16>, vector<4x256xf32> -> vector<4x256xf32>
    %12 = arith.addf %6, %11 : vector<4x256xf32>
    %c0_14 = arith.constant 0 : index
    %c2 = arith.constant 2 : index
    %c0_15 = arith.constant 0 : index
    %c0_16 = arith.constant 0 : index
    %13 = vector.load %arg1[%c0_14, %c2, %c0_15, %c0_16] : memref<1x4x6x256xbf16, #tpu.memory_space<vmem>>, vector<1x1x4x256xbf16>
    %14 = vector.shape_cast %13 : vector<1x1x4x256xbf16> to vector<4x256xbf16>
    %c2_17 = arith.constant 2 : index
    %c0_18 = arith.constant 0 : index
    %c0_19 = arith.constant 0 : index
    %15 = vector.load %arg2[%c2_17, %c0_18, %c0_19] : memref<8x256x256xbf16, #tpu.memory_space<vmem>>, vector<1x256x256xbf16>
    %16 = vector.shape_cast %15 : vector<1x256x256xbf16> to vector<256x256xbf16>
    %cst_20 = arith.constant dense<0.000000e+00> : vector<4x256xf32>
    %17 = tpu.matmul %14, %16, %cst_20 {dimension_numbers = #tpu.dot_dimension_numbers<[1], [0], [0], [1], [0, 0, 1, 1], [], []>} : vector<4x256xbf16>, vector<256x256xbf16>, vector<4x256xf32> -> vector<4x256xf32>
    %18 = arith.addf %12, %17 : vector<4x256xf32>
    %c0_21 = arith.constant 0 : index
    %c3 = arith.constant 3 : index
    %c0_22 = arith.constant 0 : index
    %c0_23 = arith.constant 0 : index
    %19 = vector.load %arg1[%c0_21, %c3, %c0_22, %c0_23] : memref<1x4x6x256xbf16, #tpu.memory_space<vmem>>, vector<1x1x4x256xbf16>
    %20 = vector.shape_cast %19 : vector<1x1x4x256xbf16> to vector<4x256xbf16>
    %c3_24 = arith.constant 3 : index
    %c0_25 = arith.constant 0 : index
    %c0_26 = arith.constant 0 : index
    %21 = vector.load %arg2[%c3_24, %c0_25, %c0_26] : memref<8x256x256xbf16, #tpu.memory_space<vmem>>, vector<1x256x256xbf16>
    %22 = vector.shape_cast %21 : vector<1x256x256xbf16> to vector<256x256xbf16>
    %cst_27 = arith.constant dense<0.000000e+00> : vector<4x256xf32>
    %23 = tpu.matmul %20, %22, %cst_27 {dimension_numbers = #tpu.dot_dimension_numbers<[1], [0], [0], [1], [0, 0, 1, 1], [], []>} : vector<4x256xbf16>, vector<256x256xbf16>, vector<4x256xf32> -> vector<4x256xf32>
    %24 = arith.addf %18, %23 : vector<4x256xf32>
    %c0_28 = arith.constant 0 : index
    %c0_29 = arith.constant 0 : index
    %c2_30 = arith.constant 2 : index
    %c0_31 = arith.constant 0 : index
    %25 = vector.load %arg1[%c0_28, %c0_29, %c2_30, %c0_31] : memref<1x4x6x256xbf16, #tpu.memory_space<vmem>>, vector<1x1x4x256xbf16>
    %26 = vector.shape_cast %25 : vector<1x1x4x256xbf16> to vector<4x256xbf16>
    %c4 = arith.constant 4 : index
    %c0_32 = arith.constant 0 : index
    %c0_33 = arith.constant 0 : index
    %27 = vector.load %arg2[%c4, %c0_32, %c0_33] : memref<8x256x256xbf16, #tpu.memory_space<vmem>>, vector<1x256x256xbf16>
    %28 = vector.shape_cast %27 : vector<1x256x256xbf16> to vector<256x256xbf16>
    %cst_34 = arith.constant dense<0.000000e+00> : vector<4x256xf32>
    %29 = tpu.matmul %26, %28, %cst_34 {dimension_numbers = #tpu.dot_dimension_numbers<[1], [0], [0], [1], [0, 0, 1, 1], [], []>} : vector<4x256xbf16>, vector<256x256xbf16>, vector<4x256xf32> -> vector<4x256xf32>
    %30 = arith.addf %24, %29 : vector<4x256xf32>
    %c0_35 = arith.constant 0 : index
    %c1_36 = arith.constant 1 : index
    %c2_37 = arith.constant 2 : index
    %c0_38 = arith.constant 0 : index
    %31 = vector.load %arg1[%c0_35, %c1_36, %c2_37, %c0_38] : memref<1x4x6x256xbf16, #tpu.memory_space<vmem>>, vector<1x1x4x256xbf16>
    %32 = vector.shape_cast %31 : vector<1x1x4x256xbf16> to vector<4x256xbf16>
    %c5 = arith.constant 5 : index
    %c0_39 = arith.constant 0 : index
    %c0_40 = arith.constant 0 : index
    %33 = vector.load %arg2[%c5, %c0_39, %c0_40] : memref<8x256x256xbf16, #tpu.memory_space<vmem>>, vector<1x256x256xbf16>
    %34 = vector.shape_cast %33 : vector<1x256x256xbf16> to vector<256x256xbf16>
    %cst_41 = arith.constant dense<0.000000e+00> : vector<4x256xf32>
    %35 = tpu.matmul %32, %34, %cst_41 {dimension_numbers = #tpu.dot_dimension_numbers<[1], [0], [0], [1], [0, 0, 1, 1], [], []>} : vector<4x256xbf16>, vector<256x256xbf16>, vector<4x256xf32> -> vector<4x256xf32>
    %36 = arith.addf %30, %35 : vector<4x256xf32>
    %c0_42 = arith.constant 0 : index
    %c2_43 = arith.constant 2 : index
    %c2_44 = arith.constant 2 : index
    %c0_45 = arith.constant 0 : index
    %37 = vector.load %arg1[%c0_42, %c2_43, %c2_44, %c0_45] : memref<1x4x6x256xbf16, #tpu.memory_space<vmem>>, vector<1x1x4x256xbf16>
    %38 = vector.shape_cast %37 : vector<1x1x4x256xbf16> to vector<4x256xbf16>
    %c6 = arith.constant 6 : index
    %c0_46 = arith.constant 0 : index
    %c0_47 = arith.constant 0 : index
    %39 = vector.load %arg2[%c6, %c0_46, %c0_47] : memref<8x256x256xbf16, #tpu.memory_space<vmem>>, vector<1x256x256xbf16>
    %40 = vector.shape_cast %39 : vector<1x256x256xbf16> to vector<256x256xbf16>
    %cst_48 = arith.constant dense<0.000000e+00> : vector<4x256xf32>
    %41 = tpu.matmul %38, %40, %cst_48 {dimension_numbers = #tpu.dot_dimension_numbers<[1], [0], [0], [1], [0, 0, 1, 1], [], []>} : vector<4x256xbf16>, vector<256x256xbf16>, vector<4x256xf32> -> vector<4x256xf32>
    %42 = arith.addf %36, %41 : vector<4x256xf32>
    %c0_49 = arith.constant 0 : index
    %c3_50 = arith.constant 3 : index
    %c2_51 = arith.constant 2 : index
    %c0_52 = arith.constant 0 : index
    %43 = vector.load %arg1[%c0_49, %c3_50, %c2_51, %c0_52] : memref<1x4x6x256xbf16, #tpu.memory_space<vmem>>, vector<1x1x4x256xbf16>
    %44 = vector.shape_cast %43 : vector<1x1x4x256xbf16> to vector<4x256xbf16>
    %c7 = arith.constant 7 : index
    %c0_53 = arith.constant 0 : index
    %c0_54 = arith.constant 0 : index
    %45 = vector.load %arg2[%c7, %c0_53, %c0_54] : memref<8x256x256xbf16, #tpu.memory_space<vmem>>, vector<1x256x256xbf16>
    %46 = vector.shape_cast %45 : vector<1x256x256xbf16> to vector<256x256xbf16>
    %cst_55 = arith.constant dense<0.000000e+00> : vector<4x256xf32>
    %47 = tpu.matmul %44, %46, %cst_55 {dimension_numbers = #tpu.dot_dimension_numbers<[1], [0], [0], [1], [0, 0, 1, 1], [], []>} : vector<4x256xbf16>, vector<256x256xbf16>, vector<4x256xf32> -> vector<4x256xf32>
    %48 = arith.addf %42, %47 : vector<4x256xf32>
    %cst_56 = arith.constant dense<0.000000e+00> : vector<256xf32>
    %49 = vector.multi_reduction <add>, %48, %cst_56 [0] : vector<4x256xf32> to vector<256xf32>
    %50 = vector.shape_cast %49 : vector<256xf32> to vector<1x256xf32>
    %cst_57 = arith.constant 4.000000e+00 : f32
    %51 = vector.broadcast %cst_57 : f32 to vector<1x256xf32>
    %52 = arith.divf %50, %51 : vector<1x256xf32>
    %53 = vector.broadcast %52 : vector<1x256xf32> to vector<4x256xf32>
    %54 = arith.subf %48, %53 : vector<4x256xf32>
    %55 = arith.mulf %54, %54 : vector<4x256xf32>
    %cst_58 = arith.constant dense<0.000000e+00> : vector<256xf32>
    %56 = vector.multi_reduction <add>, %55, %cst_58 [0] : vector<4x256xf32> to vector<256xf32>
    %57 = vector.shape_cast %56 : vector<256xf32> to vector<1x256xf32>
    %cst_59 = arith.constant 4.000000e+00 : f32
    %58 = vector.broadcast %cst_59 : f32 to vector<1x256xf32>
    %59 = arith.divf %57, %58 : vector<1x256xf32>
    %cst_60 = arith.constant 9.99999974E-6 : f32
    %60 = vector.broadcast %cst_60 : f32 to vector<1x256xf32>
    %61 = arith.addf %59, %60 : vector<1x256xf32>
    %62 = math.rsqrt %61 : vector<1x256xf32>
    %63 = vector.broadcast %62 : vector<1x256xf32> to vector<4x256xf32>
    %64 = arith.mulf %54, %63 : vector<4x256xf32>
    %cst_61 = arith.constant 2.000000e-01 : f32
    %65 = vector.broadcast %cst_61 : f32 to vector<4x256xf32>
    %66 = arith.mulf %65, %64 : vector<4x256xf32>
    %67 = arith.maximumf %64, %66 : vector<4x256xf32>
    %68 = arith.truncf %67 : vector<4x256xf32> to vector<4x256xbf16>
    %c0_62 = arith.constant 0 : index
    %c0_63 = arith.constant 0 : index
    %c0_64 = arith.constant 0 : index
    %69 = vector.load %arg3[%c0_62, %c0_63, %c0_64] : memref<1x4x256xbf16, #tpu.memory_space<vmem>>, vector<1x4x256xbf16>
    %70 = vector.shape_cast %69 : vector<1x4x256xbf16> to vector<4x256xbf16>
    %71 = vector.shape_cast %68 : vector<4x256xbf16> to vector<1x4x256xbf16>
    tpu.vector_store %arg3[%c0_62, %c0_63, %c0_64], %71 {strides = array<i32>} : memref<1x4x256xbf16, #tpu.memory_space<vmem>>, vector<1x4x256xbf16>,
    return
  }
  func.func @transform_0(%arg0: i32) -> (i32, i32, i32, i32) {
    %c0_i32 = arith.constant 0 : i32
    %c0_i32_0 = arith.constant 0 : i32
    %c0_i32_1 = arith.constant 0 : i32
    %c0_i32_2 = arith.constant 0 : i32
    return %arg0, %c0_i32, %c0_i32_0, %c0_i32_1 : i32, i32, i32, i32
  }
  func.func @transform_1(%arg0: i32) -> (i32, i32, i32) {
    %c0_i32 = arith.constant 0 : i32
    %c0_i32_0 = arith.constant 0 : i32
    %c0_i32_1 = arith.constant 0 : i32
    %c0_i32_2 = arith.constant 0 : i32
    return %c0_i32, %c0_i32_0, %c0_i32_1 : i32, i32, i32
  }
  func.func @transform_2(%arg0: i32) -> (i32, i32, i32) {
    %c0_i32 = arith.constant 0 : i32
    %c0_i32_0 = arith.constant 0 : i32
    %c0_i32_1 = arith.constant 0 : i32
    return %arg0, %c0_i32, %c0_i32_0 : i32, i32, i32
  }
}

module attributes {stable_mosaic.version = 11 : i64} {
  func.func @_conv_inorm_lrelu_kernel(%arg0: i32, %arg1: memref<1x1x8x768xbf16, #tpu.memory_space<vmem>>, %arg2: memref<3x768x512xbf16, #tpu.memory_space<vmem>>, %arg3: memref<1x4x512xbf16, #tpu.memory_space<vmem>>) attributes {dimension_semantics = [#tpu.dimension_semantics<parallel>], iteration_bounds = array<i64: 2>, scalar_prefetch = 0 : i64, scratch_operands = 0 : i64, tpu.core_type = #tpu.core_type<tc>, window_params = [{transform_indices = @transform_0, window_bounds = array<i64: 1, 1, 8, 768>}, {pipeline_mode = #tpu.pipeline_mode<synchronous>, transform_indices = @transform_1, window_bounds = array<i64: 3, 768, 512>}, {transform_indices = @transform_2, window_bounds = array<i64: 1, 4, 512>}]} {
    %cst = arith.constant 0.000000e+00 : f32
    %0 = vector.broadcast %cst : f32 to vector<4x512xf32>
    %c0 = arith.constant 0 : index
    %c0_0 = arith.constant 0 : index
    %c0_1 = arith.constant 0 : index
    %c0_2 = arith.constant 0 : index
    %1 = vector.load %arg1[%c0, %c0_0, %c0_1, %c0_2] : memref<1x1x8x768xbf16, #tpu.memory_space<vmem>>, vector<1x1x4x768xbf16>
    %2 = vector.shape_cast %1 : vector<1x1x4x768xbf16> to vector<4x768xbf16>
    %c0_3 = arith.constant 0 : index
    %c0_4 = arith.constant 0 : index
    %c0_5 = arith.constant 0 : index
    %3 = vector.load %arg2[%c0_3, %c0_4, %c0_5] : memref<3x768x512xbf16, #tpu.memory_space<vmem>>, vector<1x768x512xbf16>
    %4 = vector.shape_cast %3 : vector<1x768x512xbf16> to vector<768x512xbf16>
    %cst_6 = arith.constant dense<0.000000e+00> : vector<4x512xf32>
    %5 = tpu.matmul %2, %4, %cst_6 {dimension_numbers = #tpu.dot_dimension_numbers<[1], [0], [0], [1], [0, 0, 1, 1], [], []>} : vector<4x768xbf16>, vector<768x512xbf16>, vector<4x512xf32> -> vector<4x512xf32>
    %6 = arith.addf %0, %5 : vector<4x512xf32>
    %c0_7 = arith.constant 0 : index
    %c0_8 = arith.constant 0 : index
    %c2 = arith.constant 2 : index
    %c0_9 = arith.constant 0 : index
    %7 = vector.load %arg1[%c0_7, %c0_8, %c2, %c0_9] : memref<1x1x8x768xbf16, #tpu.memory_space<vmem>>, vector<1x1x4x768xbf16>
    %8 = vector.shape_cast %7 : vector<1x1x4x768xbf16> to vector<4x768xbf16>
    %c1 = arith.constant 1 : index
    %c0_10 = arith.constant 0 : index
    %c0_11 = arith.constant 0 : index
    %9 = vector.load %arg2[%c1, %c0_10, %c0_11] : memref<3x768x512xbf16, #tpu.memory_space<vmem>>, vector<1x768x512xbf16>
    %10 = vector.shape_cast %9 : vector<1x768x512xbf16> to vector<768x512xbf16>
    %cst_12 = arith.constant dense<0.000000e+00> : vector<4x512xf32>
    %11 = tpu.matmul %8, %10, %cst_12 {dimension_numbers = #tpu.dot_dimension_numbers<[1], [0], [0], [1], [0, 0, 1, 1], [], []>} : vector<4x768xbf16>, vector<768x512xbf16>, vector<4x512xf32> -> vector<4x512xf32>
    %12 = arith.addf %6, %11 : vector<4x512xf32>
    %c0_13 = arith.constant 0 : index
    %c0_14 = arith.constant 0 : index
    %c4 = arith.constant 4 : index
    %c0_15 = arith.constant 0 : index
    %13 = vector.load %arg1[%c0_13, %c0_14, %c4, %c0_15] : memref<1x1x8x768xbf16, #tpu.memory_space<vmem>>, vector<1x1x4x768xbf16>
    %14 = vector.shape_cast %13 : vector<1x1x4x768xbf16> to vector<4x768xbf16>
    %c2_16 = arith.constant 2 : index
    %c0_17 = arith.constant 0 : index
    %c0_18 = arith.constant 0 : index
    %15 = vector.load %arg2[%c2_16, %c0_17, %c0_18] : memref<3x768x512xbf16, #tpu.memory_space<vmem>>, vector<1x768x512xbf16>
    %16 = vector.shape_cast %15 : vector<1x768x512xbf16> to vector<768x512xbf16>
    %cst_19 = arith.constant dense<0.000000e+00> : vector<4x512xf32>
    %17 = tpu.matmul %14, %16, %cst_19 {dimension_numbers = #tpu.dot_dimension_numbers<[1], [0], [0], [1], [0, 0, 1, 1], [], []>} : vector<4x768xbf16>, vector<768x512xbf16>, vector<4x512xf32> -> vector<4x512xf32>
    %18 = arith.addf %12, %17 : vector<4x512xf32>
    %cst_20 = arith.constant dense<0.000000e+00> : vector<512xf32>
    %19 = vector.multi_reduction <add>, %18, %cst_20 [0] : vector<4x512xf32> to vector<512xf32>
    %20 = vector.shape_cast %19 : vector<512xf32> to vector<1x512xf32>
    %cst_21 = arith.constant 4.000000e+00 : f32
    %21 = vector.broadcast %cst_21 : f32 to vector<1x512xf32>
    %22 = arith.divf %20, %21 : vector<1x512xf32>
    %23 = vector.broadcast %22 : vector<1x512xf32> to vector<4x512xf32>
    %24 = arith.subf %18, %23 : vector<4x512xf32>
    %25 = arith.mulf %24, %24 : vector<4x512xf32>
    %cst_22 = arith.constant dense<0.000000e+00> : vector<512xf32>
    %26 = vector.multi_reduction <add>, %25, %cst_22 [0] : vector<4x512xf32> to vector<512xf32>
    %27 = vector.shape_cast %26 : vector<512xf32> to vector<1x512xf32>
    %cst_23 = arith.constant 4.000000e+00 : f32
    %28 = vector.broadcast %cst_23 : f32 to vector<1x512xf32>
    %29 = arith.divf %27, %28 : vector<1x512xf32>
    %cst_24 = arith.constant 9.99999974E-6 : f32
    %30 = vector.broadcast %cst_24 : f32 to vector<1x512xf32>
    %31 = arith.addf %29, %30 : vector<1x512xf32>
    %32 = math.rsqrt %31 : vector<1x512xf32>
    %33 = vector.broadcast %32 : vector<1x512xf32> to vector<4x512xf32>
    %34 = arith.mulf %24, %33 : vector<4x512xf32>
    %cst_25 = arith.constant 2.000000e-01 : f32
    %35 = vector.broadcast %cst_25 : f32 to vector<4x512xf32>
    %36 = arith.mulf %35, %34 : vector<4x512xf32>
    %37 = arith.maximumf %34, %36 : vector<4x512xf32>
    %38 = arith.truncf %37 : vector<4x512xf32> to vector<4x512xbf16>
    %c0_26 = arith.constant 0 : index
    %c0_27 = arith.constant 0 : index
    %c0_28 = arith.constant 0 : index
    %39 = vector.load %arg3[%c0_26, %c0_27, %c0_28] : memref<1x4x512xbf16, #tpu.memory_space<vmem>>, vector<1x4x512xbf16>
    %40 = vector.shape_cast %39 : vector<1x4x512xbf16> to vector<4x512xbf16>
    %41 = vector.shape_cast %38 : vector<4x512xbf16> to vector<1x4x512xbf16>
    tpu.vector_store %arg3[%c0_26, %c0_27, %c0_28], %41 {strides = array<i32>} : memref<1x4x512xbf16, #tpu.memory_space<vmem>>, vector<1x4x512xbf16>,
    return
  }
  func.func @transform_0(%arg0: i32) -> (i32, i32, i32, i32) {
    %c0_i32 = arith.constant 0 : i32
    %c0_i32_0 = arith.constant 0 : i32
    %c0_i32_1 = arith.constant 0 : i32
    %c0_i32_2 = arith.constant 0 : i32
    return %arg0, %c0_i32, %c0_i32_0, %c0_i32_1 : i32, i32, i32, i32
  }
  func.func @transform_1(%arg0: i32) -> (i32, i32, i32) {
    %c0_i32 = arith.constant 0 : i32
    %c0_i32_0 = arith.constant 0 : i32
    %c0_i32_1 = arith.constant 0 : i32
    %c0_i32_2 = arith.constant 0 : i32
    return %c0_i32, %c0_i32_0, %c0_i32_1 : i32, i32, i32
  }
  func.func @transform_2(%arg0: i32) -> (i32, i32, i32) {
    %c0_i32 = arith.constant 0 : i32
    %c0_i32_0 = arith.constant 0 : i32
    %c0_i32_1 = arith.constant 0 : i32
    return %arg0, %c0_i32, %c0_i32_0 : i32, i32, i32
  }
}

module attributes {stable_mosaic.version = 11 : i64} {
  func.func @_conv1_sigmoid_sum_kernel(%arg0: i32, %arg1: memref<1x1x8x1536xbf16, #tpu.memory_space<vmem>>, %arg2: memref<3x1x1536xf32, #tpu.memory_space<vmem>>, %arg3: memref<1x1xf32, #tpu.memory_space<vmem>>, %arg4: memref<1x1x1xf32, #tpu.memory_space<vmem>>) attributes {dimension_semantics = [#tpu.dimension_semantics<parallel>], iteration_bounds = array<i64: 2>, scalar_prefetch = 0 : i64, scratch_operands = 0 : i64, tpu.core_type = #tpu.core_type<tc>, window_params = [{transform_indices = @transform_0, window_bounds = array<i64: 1, 1, 8, 1536>}, {pipeline_mode = #tpu.pipeline_mode<synchronous>, transform_indices = @transform_1, window_bounds = array<i64: 3, 1, 1536>}, {pipeline_mode = #tpu.pipeline_mode<synchronous>, transform_indices = @transform_2, window_bounds = array<i64: 1, 1>}, {transform_indices = @transform_3, window_bounds = array<i64: 1, 1, 1>}]} {
    %cst = arith.constant 0.000000e+00 : f32
    %0 = vector.broadcast %cst : f32 to vector<4x1xf32>
    %c0 = arith.constant 0 : index
    %c0_0 = arith.constant 0 : index
    %c0_1 = arith.constant 0 : index
    %c0_2 = arith.constant 0 : index
    %1 = vector.load %arg1[%c0, %c0_0, %c0_1, %c0_2] : memref<1x1x8x1536xbf16, #tpu.memory_space<vmem>>, vector<1x1x4x1536xbf16>
    %2 = vector.shape_cast %1 : vector<1x1x4x1536xbf16> to vector<4x1536xbf16>
    %3 = arith.extf %2 : vector<4x1536xbf16> to vector<4x1536xf32>
    %c0_3 = arith.constant 0 : index
    %c0_4 = arith.constant 0 : index
    %c0_5 = arith.constant 0 : index
    %4 = vector.load %arg2[%c0_3, %c0_4, %c0_5] : memref<3x1x1536xf32, #tpu.memory_space<vmem>>, vector<1x1x1536xf32>
    %5 = vector.shape_cast %4 : vector<1x1x1536xf32> to vector<1x1536xf32>
    %6 = vector.broadcast %5 : vector<1x1536xf32> to vector<4x1536xf32>
    %7 = arith.mulf %3, %6 : vector<4x1536xf32>
    %cst_6 = arith.constant dense<0.000000e+00> : vector<4xf32>
    %8 = vector.multi_reduction <add>, %7, %cst_6 [1] : vector<4x1536xf32> to vector<4xf32>
    %9 = vector.shape_cast %8 : vector<4xf32> to vector<4x1xf32>
    %10 = arith.addf %0, %9 : vector<4x1xf32>
    %c0_7 = arith.constant 0 : index
    %c0_8 = arith.constant 0 : index
    %c2 = arith.constant 2 : index
    %c0_9 = arith.constant 0 : index
    %11 = vector.load %arg1[%c0_7, %c0_8, %c2, %c0_9] : memref<1x1x8x1536xbf16, #tpu.memory_space<vmem>>, vector<1x1x4x1536xbf16>
    %12 = vector.shape_cast %11 : vector<1x1x4x1536xbf16> to vector<4x1536xbf16>
    %13 = arith.extf %12 : vector<4x1536xbf16> to vector<4x1536xf32>
    %c1 = arith.constant 1 : index
    %c0_10 = arith.constant 0 : index
    %c0_11 = arith.constant 0 : index
    %14 = vector.load %arg2[%c1, %c0_10, %c0_11] : memref<3x1x1536xf32, #tpu.memory_space<vmem>>, vector<1x1x1536xf32>
    %15 = vector.shape_cast %14 : vector<1x1x1536xf32> to vector<1x1536xf32>
    %16 = vector.broadcast %15 : vector<1x1536xf32> to vector<4x1536xf32>
    %17 = arith.mulf %13, %16 : vector<4x1536xf32>
    %cst_12 = arith.constant dense<0.000000e+00> : vector<4xf32>
    %18 = vector.multi_reduction <add>, %17, %cst_12 [1] : vector<4x1536xf32> to vector<4xf32>
    %19 = vector.shape_cast %18 : vector<4xf32> to vector<4x1xf32>
    %20 = arith.addf %10, %19 : vector<4x1xf32>
    %c0_13 = arith.constant 0 : index
    %c0_14 = arith.constant 0 : index
    %c4 = arith.constant 4 : index
    %c0_15 = arith.constant 0 : index
    %21 = vector.load %arg1[%c0_13, %c0_14, %c4, %c0_15] : memref<1x1x8x1536xbf16, #tpu.memory_space<vmem>>, vector<1x1x4x1536xbf16>
    %22 = vector.shape_cast %21 : vector<1x1x4x1536xbf16> to vector<4x1536xbf16>
    %23 = arith.extf %22 : vector<4x1536xbf16> to vector<4x1536xf32>
    %c2_16 = arith.constant 2 : index
    %c0_17 = arith.constant 0 : index
    %c0_18 = arith.constant 0 : index
    %24 = vector.load %arg2[%c2_16, %c0_17, %c0_18] : memref<3x1x1536xf32, #tpu.memory_space<vmem>>, vector<1x1x1536xf32>
    %25 = vector.shape_cast %24 : vector<1x1x1536xf32> to vector<1x1536xf32>
    %26 = vector.broadcast %25 : vector<1x1536xf32> to vector<4x1536xf32>
    %27 = arith.mulf %23, %26 : vector<4x1536xf32>
    %cst_19 = arith.constant dense<0.000000e+00> : vector<4xf32>
    %28 = vector.multi_reduction <add>, %27, %cst_19 [1] : vector<4x1536xf32> to vector<4xf32>
    %29 = vector.shape_cast %28 : vector<4xf32> to vector<4x1xf32>
    %30 = arith.addf %20, %29 : vector<4x1xf32>
    %c0_20 = arith.constant 0 : index
    %c0_21 = arith.constant 0 : index
    %31 = vector.load %arg3[%c0_20, %c0_21] : memref<1x1xf32, #tpu.memory_space<vmem>>, vector<1x1xf32>
    %32 = vector.broadcast %31 : vector<1x1xf32> to vector<4x1xf32>
    %33 = arith.addf %30, %32 : vector<4x1xf32>
    %cst_22 = arith.constant 0.000000e+00 : f32
    %34 = vector.broadcast %cst_22 : f32 to vector<4x1xf32>
    %35 = arith.subf %34, %33 : vector<4x1xf32>
    %36 = math.exp %35 : vector<4x1xf32>
    %cst_23 = arith.constant 1.000000e+00 : f32
    %37 = vector.broadcast %cst_23 : f32 to vector<4x1xf32>
    %38 = arith.addf %37, %36 : vector<4x1xf32>
    %39 = tpu.reciprocal %38 {approx = true} : vector<4x1xf32> -> vector<4x1xf32>
    %cst_24 = arith.constant dense<0.000000e+00> : vector<1xf32>
    %40 = vector.multi_reduction <add>, %39, %cst_24 [0] : vector<4x1xf32> to vector<1xf32>
    %41 = vector.shape_cast %40 : vector<1xf32> to vector<1x1xf32>
    %c0_25 = arith.constant 0 : index
    %c0_26 = arith.constant 0 : index
    %c0_27 = arith.constant 0 : index
    %42 = vector.load %arg4[%c0_25, %c0_26, %c0_27] : memref<1x1x1xf32, #tpu.memory_space<vmem>>, vector<1x1x1xf32>
    %43 = vector.shape_cast %42 : vector<1x1x1xf32> to vector<1x1xf32>
    %44 = vector.shape_cast %41 : vector<1x1xf32> to vector<1x1x1xf32>
    tpu.vector_store %arg4[%c0_25, %c0_26, %c0_27], %44 {strides = array<i32>} : memref<1x1x1xf32, #tpu.memory_space<vmem>>, vector<1x1x1xf32>,
    return
  }
  func.func @transform_0(%arg0: i32) -> (i32, i32, i32, i32) {
    %c0_i32 = arith.constant 0 : i32
    %c0_i32_0 = arith.constant 0 : i32
    %c0_i32_1 = arith.constant 0 : i32
    %c0_i32_2 = arith.constant 0 : i32
    return %arg0, %c0_i32, %c0_i32_0, %c0_i32_1 : i32, i32, i32, i32
  }
  func.func @transform_1(%arg0: i32) -> (i32, i32, i32) {
    %c0_i32 = arith.constant 0 : i32
    %c0_i32_0 = arith.constant 0 : i32
    %c0_i32_1 = arith.constant 0 : i32
    %c0_i32_2 = arith.constant 0 : i32
    return %c0_i32, %c0_i32_0, %c0_i32_1 : i32, i32, i32
  }
  func.func @transform_2(%arg0: i32) -> (i32, i32) {
    %c0_i32 = arith.constant 0 : i32
    %c0_i32_0 = arith.constant 0 : i32
    %c0_i32_1 = arith.constant 0 : i32
    return %c0_i32, %c0_i32_0 : i32, i32
  }
  func.func @transform_3(%arg0: i32) -> (i32, i32, i32) {
    %c0_i32 = arith.constant 0 : i32
    %c0_i32_0 = arith.constant 0 : i32
    %c0_i32_1 = arith.constant 0 : i32
    return %arg0, %c0_i32, %c0_i32_0 : i32, i32, i32
  }
}

</mosaic_0001>

<llo_original>
// kernel: discriminator_forward.5
$region0: #{discriminator_forward.5}
  #allocation0 [shape = 'u32[]', space=smem, size = 0x4, offset = 0x4, fixed_abs, tag = 'smem constant byte address 0x4 - core index']
  #allocation1 [shape = 'u32[144,128]{1,0:T(1,128)}', space=vmem, size = 0x12000, scoped, tag = 'internal scratch']
  %s0 = inlined_call_operand.vmem [shape: bf16[2,4,72,6], index: 0, kind: input, shape index: {}]
  %s1 = inlined_call_operand.vmem [shape: bf16[8,6,64], index: 1, kind: input, shape index: {}]
  %s2 = inlined_call_operand.vmem [shape: f32[1,64], index: 2, kind: input, shape index: {}]
  %s3 = inlined_call_operand.vmem [shape: bf16[2,64,64], index: 3, kind: output, shape index: {}]
  %s4 = sld [smem:[#allocation0]]
  $region45: #{discriminator_forward.5} parent=0
    _
  %s6 = ssub.s32 1, %s4
  %s7 = scalar_select 0, %s6, %s4
  loop: start=0, step=1, limit=4
  $region2: #{discriminator_forward.5} parent=0 // loop_pre_header
    _
  $region3: #{discriminator_forward.5} parent=0 // loop_header
    %s9 = sphi 0, %s13
    %p10 = scmp.ge.s32.totalorder %s9, 4
    %s19 = sphi 0, %s21
    %s22 = sphi 0, %s19
    %s23 = sphi 0, %s22
    %s39 = sphi 0, %s23
    %s43 = sphi 0, %s43
    %s45 = sphi 0, %s43
    %s46 = sphi 0, %s45
    %s60 = sphi 0, %s46
    %s64 = sphi 0, %s64
    %s66 = sphi 0, %s64
    %s67 = sphi 0, %s66
    %s81 = sphi 0, %s67
    %s87 = sphi 0, %s89
    %s90 = sphi 0, %s87
    %s91 = sphi 0, %s90
    %s107 = sphi 0, %s91
  $region4: #{discriminator_forward.5} parent=0 // loop_header_branch
    %12 = sbr.rel (%p10) target = $region8
  $region5: #{discriminator_forward.5} parent=0 // loop_body
    %s14 = ssub.s32 %s9, 1
    %s15 = ssub.s32 %s9, 2
    %s16 = sadd.s32 %s9, 1
    %s17 = ssub.s32 %s9, %s16
    %p18 = scmp.eq.s32.totalorder %s17, 0
    %s20 = sadd.s32 %s19, 1
    %s21 = scalar_select %p18, %s19, %s20
    %p24 = pneg %p18
    %p25 = scmp.eq.s32.totalorder %s9, 1
    %p26 = por %p24, %p25
    %p27 = scmp.ne.s32.totalorder %s19, %s22
    %p28 = scmp.eq.s32.totalorder %s9, 0
    %p29 = por %p27, %p28
    %p30 = scmp.ne.s32.totalorder %s19, %s22
    %p31 = scmp.eq.s32.totalorder %s14, 1
    %p32 = por %p30, %p31
    %p33 = scmp.ne.s32.totalorder %s22, %s23
    %p34 = scmp.eq.s32.totalorder %s14, 0
    %p35 = por %p33, %p34
    %p36 = scmp.ne.s32.totalorder %s22, %s23
    %p37 = scmp.eq.s32.totalorder %s15, 1
    %p38 = por %p36, %p37
    %p40 = scmp.ne.s32.totalorder %s23, %s39
    %p41 = scmp.eq.s32.totalorder %s15, 0
    %p42 = por %p40, %p41
    %s44 = sadd.s32 %s43, 1
    %p47 = scmp.eq.s32.totalorder %s9, 1
    %p48 = scmp.ne.s32.totalorder %s43, %s45
    %p49 = scmp.eq.s32.totalorder %s9, 0
    %p50 = por %p48, %p49
    %p51 = scmp.ne.s32.totalorder %s43, %s45
    %p52 = scmp.eq.s32.totalorder %s14, 1
    %p53 = por %p51, %p52
    %p54 = scmp.ne.s32.totalorder %s45, %s46
    %p55 = scmp.eq.s32.totalorder %s14, 0
    %p56 = por %p54, %p55
    %p57 = scmp.ne.s32.totalorder %s45, %s46
    %p58 = scmp.eq.s32.totalorder %s15, 1
    %p59 = por %p57, %p58
    %p61 = scmp.ne.s32.totalorder %s46, %s60
    %p62 = scmp.eq.s32.totalorder %s15, 0
    %p63 = por %p61, %p62
    %s65 = sadd.s32 %s64, 1
    %p68 = scmp.eq.s32.totalorder %s9, 1
    %p69 = scmp.ne.s32.totalorder %s64, %s66
    %p70 = scmp.eq.s32.totalorder %s9, 0
    %p71 = por %p69, %p70
    %p72 = scmp.ne.s32.totalorder %s64, %s66
    %p73 = scmp.eq.s32.totalorder %s14, 1
    %p74 = por %p72, %p73
    %p75 = scmp.ne.s32.totalorder %s66, %s67
    %p76 = scmp.eq.s32.totalorder %s14, 0
    %p77 = por %p75, %p76
    %p78 = scmp.ne.s32.totalorder %s66, %s67
    %p79 = scmp.eq.s32.totalorder %s15, 1
    %p80 = por %p78, %p79
    %p82 = scmp.ne.s32.totalorder %s67, %s81
    %p83 = scmp.eq.s32.totalorder %s15, 0
    %p84 = por %p82, %p83
    %s85 = ssub.s32 %s9, %s16
    %p86 = scmp.eq.s32.totalorder %s85, 0
    %s88 = sadd.s32 %s87, 1
    %s89 = scalar_select %p86, %s87, %s88
    %p92 = pneg %p86
    %p93 = scmp.eq.s32.totalorder %s9, 1
    %p94 = por %p92, %p93
    %p95 = scmp.ne.s32.totalorder %s87, %s90
    %p96 = scmp.eq.s32.totalorder %s9, 0
    %p97 = por %p95, %p96
    %p98 = scmp.ne.s32.totalorder %s87, %s90
    %p99 = scmp.eq.s32.totalorder %s14, 1
    %p100 = por %p98, %p99
    %p101 = scmp.ne.s32.totalorder %s90, %s91
    %p102 = scmp.eq.s32.totalorder %s14, 0
    %p103 = por %p101, %p102
    %p104 = scmp.ne.s32.totalorder %s90, %s91
    %p105 = scmp.eq.s32.totalorder %s15, 1
    %p106 = por %p104, %p105
    %p108 = scmp.ne.s32.totalorder %s91, %s107
    %p109 = scmp.eq.s32.totalorder %s15, 0
    %p110 = por %p108, %p109
    %p111 = scmp.le.s32.totalorder 1, %s9
    %p112 = scmp.lt.s32.totalorder %s9, 3
    %p113 = pnand %p111, %p112
    %p114 = pneg %p113
    // Predicated region
    $region9: #{discriminator_forward.5} parent=5 // pred_check
      _
    $region10: #{discriminator_forward.5} parent=5 // pred_check_branch
      %116 = sbr.rel (%p113) target = $region12
    $region11: #{discriminator_forward.5} parent=5 // pred_region
      %s117 = ssub.s32 %s9, 1
      // Predicated region
      $region13: #{discriminator_forward.5} parent=11 // pred_check
        %p118 = pneg %p56
      $region14: #{discriminator_forward.5} parent=11 // pred_check_branch
        %120 = sbr.rel (%p118) target = $region16
      $region15: #{discriminator_forward.5} parent=11 // pred_region
        _
      $region16: #{discriminator_forward.5} parent=11 // pred_fallthru
        _
      // Predicated region
      $region17: #{discriminator_forward.5} parent=11 // pred_check
        %p121 = pneg %p77
      $region18: #{discriminator_forward.5} parent=11 // pred_check_branch
        %123 = sbr.rel (%p121) target = $region20
      $region19: #{discriminator_forward.5} parent=11 // pred_region
        _
      $region20: #{discriminator_forward.5} parent=11 // pred_fallthru
        _
    $region12: #{discriminator_forward.5} parent=5 // pred_fallthru
      _
    %p124 = scmp.lt.s32.totalorder %s9, 2
    // Predicated region
    $region21: #{discriminator_forward.5} parent=5 // pred_check
      %p125 = pneg %p124
    $region22: #{discriminator_forward.5} parent=5 // pred_check_branch
      %127 = sbr.rel (%p125) target = $region24
    $region23: #{discriminator_forward.5} parent=5 // pred_region
      // Predicated region
      $region25: #{discriminator_forward.5} parent=23 // pred_check
        %p128 = pneg %p29
      $region26: #{discriminator_forward.5} parent=23 // pred_check_branch
        %130 = sbr.rel (%p128) target = $region28
      $region27: #{discriminator_forward.5} parent=23 // pred_region
        %p131 = scmp.lt.s32.totalorder %s9, 1
        %s132 = scalar_select %p131, %s9, 1
        %s133 = smul.addr %s132, 36
        %s134 = smul.addr %s133, 4
        %s135 = scalar_lea.vmem %s0, %s134
      $region28: #{discriminator_forward.5} parent=23 // pred_fallthru
        _
    $region24: #{discriminator_forward.5} parent=5 // pred_fallthru
      _
    %p136 = scmp.le.s32.totalorder 1, %s9
    %p137 = scmp.lt.s32.totalorder %s9, 3
    %p138 = pnand %p136, %p137
    %p139 = pneg %p138
    // Predicated region
    $region29: #{discriminator_forward.5} parent=5 // pred_check
      _
    $region30: #{discriminator_forward.5} parent=5 // pred_check_branch
      %141 = sbr.rel (%p138) target = $region32
    $region31: #{discriminator_forward.5} parent=5 // pred_region
      %s142 = ssub.s32 %s9, 1
      %p143 = scmp.lt.s32.totalorder %s14, 1
      %s144 = scalar_select %p143, %s14, 1
      %s145 = smul.addr %s144, 36
      %s146 = smul.addr %s145, 4
      %s147 = scalar_lea.vmem %s0, %s146
      %p148 = pneg %p35
      %p149 = pneg %p32
      %p150 = pneg %p56
      %p151 = pneg %p53
      %p152 = pneg %p77
      %p153 = pneg %p74
      %p154 = pneg %p103
      %p155 = pneg %p100
      %p156 = scmp.lt.s32.totalorder %s14, 1
      %s157 = scalar_select %p156, %s14, 1
      %s158 = smul.addr %s157, 8
      %s159 = smul.addr %s158, 4
      %s160 = scalar_lea.vmem %s3, %s159
      %p161 = scmp.lt.s32.totalorder %s14, 1
      %s162 = scalar_select %p161, %s14, 1
      %s163 = smul.addr %s162, 36
      %s164 = smul.addr %s163, 4
      %s165 = scalar_lea.vmem %s0, %s164
      %p166 = scmp.lt.s32.totalorder %s14, 1
      %s167 = scalar_select %p166, %s14, 1
      %s168 = smul.addr %s167, 8
      %s169 = smul.addr %s168, 4
      %s170 = scalar_lea.vmem %s3, %s169
      %v172 = vld [vmem:[%s165] sm:$0xf]
      %v173 = vld [vmem:[%s165 + $0x4] sm:$0xf]
      %v174 = vld [vmem:[%s165 + $0x8] sm:$0xf]
      %v175 = vld [vmem:[%s165 + $0xc] sm:$0xf]
      %v176 = vld [vmem:[%s165 + $0x10] sm:$0xf]
      %v177 = vld [vmem:[%s165 + $0x14] sm:$0xf]
      %v178 = vld [vmem:[%s165 + $0x18] sm:$0xf]
      %v179 = vld [vmem:[%s165 + $0x1c] sm:$0xf]
      %v180 = vld [vmem:[%s1] sm:$0x7]
      %s181 = scalar_lea.vmem %s165, 36
      %v182 = vld [vmem:[%s181] sm:$0xf]
      %v183 = vld [vmem:[%s181 + $0x4] sm:$0xf]
      %v184 = vld [vmem:[%s181 + $0x8] sm:$0xf]
      %v185 = vld [vmem:[%s181 + $0xc] sm:$0xf]
      %v186 = vld [vmem:[%s181 + $0x10] sm:$0xf]
      %v187 = vld [vmem:[%s181 + $0x14] sm:$0xf]
      %v188 = vld [vmem:[%s181 + $0x18] sm:$0xf]
      %v189 = vld [vmem:[%s181 + $0x1c] sm:$0xf]
      %s190 = scalar_lea.vmem %s1, 4
      %v191 = vld [vmem:[%s190] sm:$0x7]
      %v200 = vunpack.c.l.b16 %v182
      %v201 = vunpack.c.l.b16 %v183
      %v202 = vunpack.c.l.b16 %v184
      %v203 = vunpack.c.l.b16 %v185
      %v204 = vunpack.c.l.b16 %v186
      %v205 = vunpack.c.l.b16 %v187
      %v206 = vunpack.c.l.b16 %v188
      %v207 = vunpack.c.l.b16 %v189
      %v208 = vpack.c.b16 %v201, %v200
      %v209 = vpack.c.b16 %v203, %v202
      %v210 = vpack.c.b16 %v205, %v204
      %v211 = vpack.c.b16 %v207, %v206
      %vm212 = vcmask 48128
      %v214 = vsel %vm212, %v208, 0
      %v217 = vsel %vm212, %v209, 0
      %v220 = vsel %vm212, %v210, 0
      %v223 = vsel %vm212, %v211, 0
      %vm225 = vcmask 1042432
      %v227 = vsel %vm225, %v191, 0
      %229 = vmatprep.subr.bf16.mxu0 0
      %230 = vmatpush1.bf16.msra.mxu0 0
      %231 = vmatprep.subr.bf16.mxu0 0
      %232 = vmatpush1.bf16.msra.mxu0 0
      %233 = vmatprep.subr.bf16.mxu0 0
      %234 = vmatpush1.bf16.msra.mxu0 0
      %235 = vmatprep.subr.bf16.mxu0 0
      %236 = vmatpush1.bf16.msra.mxu0 0
      %237 = vmatprep.subr.bf16.mxu0 0
      %238 = vmatpush1.bf16.msra.mxu0 0
      %239 = vmatprep.subr.bf16.mxu0 0
      %240 = vmatpush1.bf16.msra.mxu0 0
      %241 = vmatprep.subr.bf16.mxu0 0
      %242 = vmatpush1.bf16.msra.mxu0 0
      %243 = vmatprep.subr.bf16.mxu0 0
      %244 = vmatpush1.bf16.msra.mxu0 %v227
      %245 = vmatprep.subr.bf16.mxu0 0
      %246 = vmatpush2.bf16.msra.mxu0 0
      %247 = vmatprep.subr.bf16.mxu0 0
      %248 = vmatpush2.bf16.msra.mxu0 0
      %249 = vmatprep.subr.bf16.mxu0 0
      %250 = vmatpush2.bf16.msra.mxu0 0
      %251 = vmatprep.subr.bf16.mxu0 0
      %252 = vmatpush2.bf16.msra.mxu0 0
      %253 = vmatprep.subr.bf16.mxu0 0
      %254 = vmatpush2.bf16.msra.mxu0 0
      %255 = vmatprep.subr.bf16.mxu0 0
      %256 = vmatpush2.bf16.msra.mxu0 0
      %257 = vmatprep.subr.bf16.mxu0 0
      %258 = vmatpush2.bf16.msra.mxu0 0
      %259 = vmatprep.subr.bf16.mxu0 0
      %260 = vmatpush2.bf16.msra.mxu0 0
      %261 = vmatprep.mubr.bf16.mxu0 0
      %262 = vmatmul.mubr.bf16.gmra.mxu0 %v214
      %v263 = vpop.f32.mrf.mxu0
      %v264 = vadd.f32 0.0, %v263
      %v265 = vpop.f32.mrf.mxu0
      %v266 = vpop.f32.mrf.mxu0
      %v267 = vadd.f32 0.0, %v266
      %v268 = vpop.f32.mrf.mxu0
      %269 = vmatprep.mubr.bf16.mxu0 0
      %270 = vmatmul.mubr.bf16.gmra.mxu0 %v217
      %v271 = vpop.f32.mrf.mxu0
      %v272 = vadd.f32 0.0, %v271
      %v273 = vpop.f32.mrf.mxu0
      %v274 = vpop.f32.mrf.mxu0
      %v275 = vadd.f32 0.0, %v274
      %v276 = vpop.f32.mrf.mxu0
      %277 = vmatprep.mubr.bf16.mxu0 0
      %278 = vmatmul.mubr.bf16.gmra.mxu0 %v220
      %v279 = vpop.f32.mrf.mxu0
      %v280 = vadd.f32 0.0, %v279
      %v281 = vpop.f32.mrf.mxu0
      %v282 = vpop.f32.mrf.mxu0
      %v283 = vadd.f32 0.0, %v282
      %v284 = vpop.f32.mrf.mxu0
      %285 = vmatprep.mubr.bf16.mxu0 0
      %286 = vmatmul.mubr.bf16.gmra.mxu0 %v223
      %v287 = vpop.f32.mrf.mxu0
      %v288 = vadd.f32 0.0, %v287
      %v289 = vpop.f32.mrf.mxu0
      %v290 = vpop.f32.mrf.mxu0
      %v291 = vadd.f32 0.0, %v290
      %v292 = vpop.f32.mrf.mxu0
      %293 = vdwg.mxu0
      %v302 = vunpack.c.l.b16 %v172
      %v303 = vunpack.c.l.b16 %v173
      %v304 = vunpack.c.l.b16 %v174
      %v305 = vunpack.c.l.b16 %v175
      %v306 = vunpack.c.l.b16 %v176
      %v307 = vunpack.c.l.b16 %v177
      %v308 = vunpack.c.l.b16 %v178
      %v309 = vunpack.c.l.b16 %v179
      %v310 = vpack.c.b16 %v303, %v302
      %v311 = vpack.c.b16 %v305, %v304
      %v312 = vpack.c.b16 %v307, %v306
      %v313 = vpack.c.b16 %v309, %v308
      %v315 = vsel %vm212, %v310, 0
      %v318 = vsel %vm212, %v311, 0
      %v321 = vsel %vm212, %v312, 0
      %v324 = vsel %vm212, %v313, 0
      %v327 = vsel %vm225, %v180, 0
      %329 = vmatprep.subr.bf16.mxu0 0
      %330 = vmatpush1.bf16.msra.mxu0 0
      %331 = vmatprep.subr.bf16.mxu0 0
      %332 = vmatpush1.bf16.msra.mxu0 0
      %333 = vmatprep.subr.bf16.mxu0 0
      %334 = vmatpush1.bf16.msra.mxu0 0
      %335 = vmatprep.subr.bf16.mxu0 0
      %336 = vmatpush1.bf16.msra.mxu0 0
      %337 = vmatprep.subr.bf16.mxu0 0
      %338 = vmatpush1.bf16.msra.mxu0 0
      %339 = vmatprep.subr.bf16.mxu0 0
      %340 = vmatpush1.bf16.msra.mxu0 0
      %341 = vmatprep.subr.bf16.mxu0 0
      %342 = vmatpush1.bf16.msra.mxu0 0
      %343 = vmatprep.subr.bf16.mxu0 0
      %344 = vmatpush1.bf16.msra.mxu0 %v327
      %345 = vmatprep.subr.bf16.mxu0 0
      %346 = vmatpush2.bf16.msra.mxu0 0
      %347 = vmatprep.subr.bf16.mxu0 0
      %348 = vmatpush2.bf16.msra.mxu0 0
      %349 = vmatprep.subr.bf16.mxu0 0
      %350 = vmatpush2.bf16.msra.mxu0 0
      %351 = vmatprep.subr.bf16.mxu0 0
      %352 = vmatpush2.bf16.msra.mxu0 0
      %353 = vmatprep.subr.bf16.mxu0 0
      %354 = vmatpush2.bf16.msra.mxu0 0
      %355 = vmatprep.subr.bf16.mxu0 0
      %356 = vmatpush2.bf16.msra.mxu0 0
      %357 = vmatprep.subr.bf16.mxu0 0
      %358 = vmatpush2.bf16.msra.mxu0 0
      %359 = vmatprep.subr.bf16.mxu0 0
      %360 = vmatpush2.bf16.msra.mxu0 0
      %361 = vmatprep.mubr.bf16.mxu0 0
      %362 = vmatmul.mubr.bf16.gmra.mxu0 %v315
      %v363 = vpop.f32.mrf.mxu0
      %v364 = vadd.f32 %v264, %v363
      %v365 = vpop.f32.mrf.mxu0
      %v366 = vpop.f32.mrf.mxu0
      %v367 = vadd.f32 %v267, %v366
      %v368 = vpop.f32.mrf.mxu0
      %369 = vmatprep.mubr.bf16.mxu0 0
      %370 = vmatmul.mubr.bf16.gmra.mxu0 %v318
      %v371 = vpop.f32.mrf.mxu0
      %v372 = vadd.f32 %v272, %v371
      %v373 = vpop.f32.mrf.mxu0
      %v374 = vpop.f32.mrf.mxu0
      %v375 = vadd.f32 %v275, %v374
      %v376 = vpop.f32.mrf.mxu0
      %377 = vmatprep.mubr.bf16.mxu0 0
      %378 = vmatmul.mubr.bf16.gmra.mxu0 %v321
      %v379 = vpop.f32.mrf.mxu0
      %v380 = vadd.f32 %v280, %v379
      %v381 = vpop.f32.mrf.mxu0
      %v382 = vpop.f32.mrf.mxu0
      %v383 = vadd.f32 %v283, %v382
      %v384 = vpop.f32.mrf.mxu0
      %385 = vmatprep.mubr.bf16.mxu0 0
      %386 = vmatmul.mubr.bf16.gmra.mxu0 %v324
      %v387 = vpop.f32.mrf.mxu0
      %v388 = vadd.f32 %v288, %v387
      %v389 = vpop.f32.mrf.mxu0
      %v390 = vpop.f32.mrf.mxu0
      %v391 = vadd.f32 %v291, %v390
      %v392 = vpop.f32.mrf.mxu0
      %393 = vdwg.mxu0
      %s394 = scalar_lea.vmem %s165, 72
      %v395 = vld [vmem:[%s394] sm:$0xf]
      %v396 = vld [vmem:[%s394 + $0x4] sm:$0xf]
      %v397 = vld [vmem:[%s394 + $0x8] sm:$0xf]
      %v398 = vld [vmem:[%s394 + $0xc] sm:$0xf]
      %v399 = vld [vmem:[%s394 + $0x10] sm:$0xf]
      %v400 = vld [vmem:[%s394 + $0x14] sm:$0xf]
      %v401 = vld [vmem:[%s394 + $0x18] sm:$0xf]
      %v402 = vld [vmem:[%s394 + $0x1c] sm:$0xf]
      %s403 = scalar_lea.vmem %s1, 8
      %v404 = vld [vmem:[%s403] sm:$0x7]
      %v413 = vunpack.c.l.b16 %v395
      %v414 = vunpack.c.l.b16 %v396
      %v415 = vunpack.c.l.b16 %v397
      %v416 = vunpack.c.l.b16 %v398
      %v417 = vunpack.c.l.b16 %v399
      %v418 = vunpack.c.l.b16 %v400
      %v419 = vunpack.c.l.b16 %v401
      %v420 = vunpack.c.l.b16 %v402
      %v421 = vpack.c.b16 %v414, %v413
      %v422 = vpack.c.b16 %v416, %v415
      %v423 = vpack.c.b16 %v418, %v417
      %v424 = vpack.c.b16 %v420, %v419
      %v426 = vsel %vm212, %v421, 0
      %v429 = vsel %vm212, %v422, 0
      %v432 = vsel %vm212, %v423, 0
      %v435 = vsel %vm212, %v424, 0
      %v438 = vsel %vm225, %v404, 0
      %440 = vmatprep.subr.bf16.mxu0 0
      %441 = vmatpush1.bf16.msra.mxu0 0
      %442 = vmatprep.subr.bf16.mxu0 0
      %443 = vmatpush1.bf16.msra.mxu0 0
      %444 = vmatprep.subr.bf16.mxu0 0
      %445 = vmatpush1.bf16.msra.mxu0 0
      %446 = vmatprep.subr.bf16.mxu0 0
      %447 = vmatpush1.bf16.msra.mxu0 0
      %448 = vmatprep.subr.bf16.mxu0 0
      %449 = vmatpush1.bf16.msra.mxu0 0
      %450 = vmatprep.subr.bf16.mxu0 0
      %451 = vmatpush1.bf16.msra.mxu0 0
      %452 = vmatprep.subr.bf16.mxu0 0
      %453 = vmatpush1.bf16.msra.mxu0 0
      %454 = vmatprep.subr.bf16.mxu0 0
      %455 = vmatpush1.bf16.msra.mxu0 %v438
      %456 = vmatprep.subr.bf16.mxu0 0
      %457 = vmatpush2.bf16.msra.mxu0 0
      %458 = vmatprep.subr.bf16.mxu0 0
      %459 = vmatpush2.bf16.msra.mxu0 0
      %460 = vmatprep.subr.bf16.mxu0 0
      %461 = vmatpush2.bf16.msra.mxu0 0
      %462 = vmatprep.subr.bf16.mxu0 0
      %463 = vmatpush2.bf16.msra.mxu0 0
      %464 = vmatprep.subr.bf16.mxu0 0
      %465 = vmatpush2.bf16.msra.mxu0 0
      %466 = vmatprep.subr.bf16.mxu0 0
      %467 = vmatpush2.bf16.msra.mxu0 0
      %468 = vmatprep.subr.bf16.mxu0 0
      %469 = vmatpush2.bf16.msra.mxu0 0
      %470 = vmatprep.subr.bf16.mxu0 0
      %471 = vmatpush2.bf16.msra.mxu0 0
      %472 = vmatprep.mubr.bf16.mxu0 0
      %473 = vmatmul.mubr.bf16.gmra.mxu0 %v426
      %v474 = vpop.f32.mrf.mxu0
      %v475 = vadd.f32 0.0, %v474
      %v476 = vpop.f32.mrf.mxu0
      %v477 = vpop.f32.mrf.mxu0
      %v478 = vadd.f32 0.0, %v477
      %v479 = vpop.f32.mrf.mxu0
      %480 = vmatprep.mubr.bf16.mxu0 0
      %481 = vmatmul.mubr.bf16.gmra.mxu0 %v429
      %v482 = vpop.f32.mrf.mxu0
      %v483 = vadd.f32 0.0, %v482
      %v484 = vpop.f32.mrf.mxu0
      %v485 = vpop.f32.mrf.mxu0
      %v486 = vadd.f32 0.0, %v485
      %v487 = vpop.f32.mrf.mxu0
      %488 = vmatprep.mubr.bf16.mxu0 0
      %489 = vmatmul.mubr.bf16.gmra.mxu0 %v432
      %v490 = vpop.f32.mrf.mxu0
      %v491 = vadd.f32 0.0, %v490
      %v492 = vpop.f32.mrf.mxu0
      %v493 = vpop.f32.mrf.mxu0
      %v494 = vadd.f32 0.0, %v493
      %v495 = vpop.f32.mrf.mxu0
      %496 = vmatprep.mubr.bf16.mxu0 0
      %497 = vmatmul.mubr.bf16.gmra.mxu0 %v435
      %v498 = vpop.f32.mrf.mxu0
      %v499 = vadd.f32 0.0, %v498
      %v500 = vpop.f32.mrf.mxu0
      %v501 = vpop.f32.mrf.mxu0
      %v502 = vadd.f32 0.0, %v501
      %v503 = vpop.f32.mrf.mxu0
      %504 = vdwg.mxu0
      %v505 = vadd.f32 %v364, %v475
      %v506 = vadd.f32 %v367, %v478
      %v507 = vadd.f32 %v372, %v483
      %v508 = vadd.f32 %v375, %v486
      %v509 = vadd.f32 %v380, %v491
      %v510 = vadd.f32 %v383, %v494
      %v511 = vadd.f32 %v388, %v499
      %v512 = vadd.f32 %v391, %v502
      %s513 = scalar_lea.vmem %s165, 108
      %v514 = vld [vmem:[%s513] sm:$0xf]
      %v515 = vld [vmem:[%s513 + $0x4] sm:$0xf]
      %v516 = vld [vmem:[%s513 + $0x8] sm:$0xf]
      %v517 = vld [vmem:[%s513 + $0xc] sm:$0xf]
      %v518 = vld [vmem:[%s513 + $0x10] sm:$0xf]
      %v519 = vld [vmem:[%s513 + $0x14] sm:$0xf]
      %v520 = vld [vmem:[%s513 + $0x18] sm:$0xf]
      %v521 = vld [vmem:[%s513 + $0x1c] sm:$0xf]
      %s522 = scalar_lea.vmem %s1, 12
      %v523 = vld [vmem:[%s522] sm:$0x7]
      %v532 = vunpack.c.l.b16 %v514
      %v533 = vunpack.c.l.b16 %v515
      %v534 = vunpack.c.l.b16 %v516
      %v535 = vunpack.c.l.b16 %v517
      %v536 = vunpack.c.l.b16 %v518
      %v537 = vunpack.c.l.b16 %v519
      %v538 = vunpack.c.l.b16 %v520
      %v539 = vunpack.c.l.b16 %v521
      %v540 = vpack.c.b16 %v533, %v532
      %v541 = vpack.c.b16 %v535, %v534
      %v542 = vpack.c.b16 %v537, %v536
      %v543 = vpack.c.b16 %v539, %v538
      %v545 = vsel %vm212, %v540, 0
      %v548 = vsel %vm212, %v541, 0
      %v551 = vsel %vm212, %v542, 0
      %v554 = vsel %vm212, %v543, 0
      %v557 = vsel %vm225, %v523, 0
      %559 = vmatprep.subr.bf16.mxu0 0
      %560 = vmatpush1.bf16.msra.mxu0 0
      %561 = vmatprep.subr.bf16.mxu0 0
      %562 = vmatpush1.bf16.msra.mxu0 0
      %563 = vmatprep.subr.bf16.mxu0 0
      %564 = vmatpush1.bf16.msra.mxu0 0
      %565 = vmatprep.subr.bf16.mxu0 0
      %566 = vmatpush1.bf16.msra.mxu0 0
      %567 = vmatprep.subr.bf16.mxu0 0
      %568 = vmatpush1.bf16.msra.mxu0 0
      %569 = vmatprep.subr.bf16.mxu0 0
      %570 = vmatpush1.bf16.msra.mxu0 0
      %571 = vmatprep.subr.bf16.mxu0 0
      %572 = vmatpush1.bf16.msra.mxu0 0
      %573 = vmatprep.subr.bf16.mxu0 0
      %574 = vmatpush1.bf16.msra.mxu0 %v557
      %575 = vmatprep.subr.bf16.mxu0 0
      %576 = vmatpush2.bf16.msra.mxu0 0
      %577 = vmatprep.subr.bf16.mxu0 0
      %578 = vmatpush2.bf16.msra.mxu0 0
      %579 = vmatprep.subr.bf16.mxu0 0
      %580 = vmatpush2.bf16.msra.mxu0 0
      %581 = vmatprep.subr.bf16.mxu0 0
      %582 = vmatpush2.bf16.msra.mxu0 0
      %583 = vmatprep.subr.bf16.mxu0 0
      %584 = vmatpush2.bf16.msra.mxu0 0
      %585 = vmatprep.subr.bf16.mxu0 0
      %586 = vmatpush2.bf16.msra.mxu0 0
      %587 = vmatprep.subr.bf16.mxu0 0
      %588 = vmatpush2.bf16.msra.mxu0 0
      %589 = vmatprep.subr.bf16.mxu0 0
      %590 = vmatpush2.bf16.msra.mxu0 0
      %591 = vmatprep.mubr.bf16.mxu0 0
      %592 = vmatmul.mubr.bf16.gmra.mxu0 %v545
      %v593 = vpop.f32.mrf.mxu0
      %v594 = vadd.f32 0.0, %v593
      %v595 = vpop.f32.mrf.mxu0
      %v596 = vpop.f32.mrf.mxu0
      %v597 = vadd.f32 0.0, %v596
      %v598 = vpop.f32.mrf.mxu0
      %599 = vmatprep.mubr.bf16.mxu0 0
      %600 = vmatmul.mubr.bf16.gmra.mxu0 %v548
      %v601 = vpop.f32.mrf.mxu0
      %v602 = vadd.f32 0.0, %v601
      %v603 = vpop.f32.mrf.mxu0
      %v604 = vpop.f32.mrf.mxu0
      %v605 = vadd.f32 0.0, %v604
      %v606 = vpop.f32.mrf.mxu0
      %607 = vmatprep.mubr.bf16.mxu0 0
      %608 = vmatmul.mubr.bf16.gmra.mxu0 %v551
      %v609 = vpop.f32.mrf.mxu0
      %v610 = vadd.f32 0.0, %v609
      %v611 = vpop.f32.mrf.mxu0
      %v612 = vpop.f32.mrf.mxu0
      %v613 = vadd.f32 0.0, %v612
      %v614 = vpop.f32.mrf.mxu0
      %615 = vmatprep.mubr.bf16.mxu0 0
      %616 = vmatmul.mubr.bf16.gmra.mxu0 %v554
      %v617 = vpop.f32.mrf.mxu0
      %v618 = vadd.f32 0.0, %v617
      %v619 = vpop.f32.mrf.mxu0
      %v620 = vpop.f32.mrf.mxu0
      %v621 = vadd.f32 0.0, %v620
      %v622 = vpop.f32.mrf.mxu0
      %623 = vdwg.mxu0
      %v624 = vadd.f32 %v505, %v594
      %v625 = vadd.f32 %v506, %v597
      %v626 = vadd.f32 %v507, %v602
      %v627 = vadd.f32 %v508, %v605
      %v628 = vadd.f32 %v509, %v610
      %v629 = vadd.f32 %v510, %v613
      %v630 = vadd.f32 %v511, %v618
      %v631 = vadd.f32 %v512, %v621
      %v632 = vld [vmem:[%s165 + $0x4] sm:$0xf]
      %v633 = vld [vmem:[%s165 + $0x8] sm:$0xf]
      %v634 = vld [vmem:[%s165 + $0xc] sm:$0xf]
      %v635 = vld [vmem:[%s165 + $0x10] sm:$0xf]
      %v636 = vld [vmem:[%s165 + $0x14] sm:$0xf]
      %v637 = vld [vmem:[%s165 + $0x18] sm:$0xf]
      %v638 = vld [vmem:[%s165 + $0x1c] sm:$0xf]
      %v639 = vld [vmem:[%s165 + $0x20] sm:$0xf]
      %s640 = scalar_lea.vmem %s1, 16
      %v641 = vld [vmem:[%s640] sm:$0x7]
      %v650 = vunpack.c.l.b16 %v632
      %v651 = vunpack.c.l.b16 %v633
      %v652 = vunpack.c.l.b16 %v634
      %v653 = vunpack.c.l.b16 %v635
      %v654 = vunpack.c.l.b16 %v636
      %v655 = vunpack.c.l.b16 %v637
      %v656 = vunpack.c.l.b16 %v638
      %v657 = vunpack.c.l.b16 %v639
      %v658 = vpack.c.b16 %v651, %v650
      %v659 = vpack.c.b16 %v653, %v652
      %v660 = vpack.c.b16 %v655, %v654
      %v661 = vpack.c.b16 %v657, %v656
      %v663 = vsel %vm212, %v658, 0
      %v666 = vsel %vm212, %v659, 0
      %v669 = vsel %vm212, %v660, 0
      %v672 = vsel %vm212, %v661, 0
      %v675 = vsel %vm225, %v641, 0
      %677 = vmatprep.subr.bf16.mxu0 0
      %678 = vmatpush1.bf16.msra.mxu0 0
      %679 = vmatprep.subr.bf16.mxu0 0
      %680 = vmatpush1.bf16.msra.mxu0 0
      %681 = vmatprep.subr.bf16.mxu0 0
      %682 = vmatpush1.bf16.msra.mxu0 0
      %683 = vmatprep.subr.bf16.mxu0 0
      %684 = vmatpush1.bf16.msra.mxu0 0
      %685 = vmatprep.subr.bf16.mxu0 0
      %686 = vmatpush1.bf16.msra.mxu0 0
      %687 = vmatprep.subr.bf16.mxu0 0
      %688 = vmatpush1.bf16.msra.mxu0 0
      %689 = vmatprep.subr.bf16.mxu0 0
      %690 = vmatpush1.bf16.msra.mxu0 0
      %691 = vmatprep.subr.bf16.mxu0 0
      %692 = vmatpush1.bf16.msra.mxu0 %v675
      %693 = vmatprep.subr.bf16.mxu0 0
      %694 = vmatpush2.bf16.msra.mxu0 0
      %695 = vmatprep.subr.bf16.mxu0 0
      %696 = vmatpush2.bf16.msra.mxu0 0
      %697 = vmatprep.subr.bf16.mxu0 0
      %698 = vmatpush2.bf16.msra.mxu0 0
      %699 = vmatprep.subr.bf16.mxu0 0
      %700 = vmatpush2.bf16.msra.mxu0 0
      %701 = vmatprep.subr.bf16.mxu0 0
      %702 = vmatpush2.bf16.msra.mxu0 0
      %703 = vmatprep.subr.bf16.mxu0 0
      %704 = vmatpush2.bf16.msra.mxu0 0
      %705 = vmatprep.subr.bf16.mxu0 0
      %706 = vmatpush2.bf16.msra.mxu0 0
      %707 = vmatprep.subr.bf16.mxu0 0
      %708 = vmatpush2.bf16.msra.mxu0 0
      %709 = vmatprep.mubr.bf16.mxu0 0
      %710 = vmatmul.mubr.bf16.gmra.mxu0 %v663
      %v711 = vpop.f32.mrf.mxu0
      %v712 = vadd.f32 0.0, %v711
      %v713 = vpop.f32.mrf.mxu0
      %v714 = vpop.f32.mrf.mxu0
      %v715 = vadd.f32 0.0, %v714
      %v716 = vpop.f32.mrf.mxu0
      %717 = vmatprep.mubr.bf16.mxu0 0
      %718 = vmatmul.mubr.bf16.gmra.mxu0 %v666
      %v719 = vpop.f32.mrf.mxu0
      %v720 = vadd.f32 0.0, %v719
      %v721 = vpop.f32.mrf.mxu0
      %v722 = vpop.f32.mrf.mxu0
      %v723 = vadd.f32 0.0, %v722
      %v724 = vpop.f32.mrf.mxu0
      %725 = vmatprep.mubr.bf16.mxu0 0
      %726 = vmatmul.mubr.bf16.gmra.mxu0 %v669
      %v727 = vpop.f32.mrf.mxu0
      %v728 = vadd.f32 0.0, %v727
      %v729 = vpop.f32.mrf.mxu0
      %v730 = vpop.f32.mrf.mxu0
      %v731 = vadd.f32 0.0, %v730
      %v732 = vpop.f32.mrf.mxu0
      %733 = vmatprep.mubr.bf16.mxu0 0
      %734 = vmatmul.mubr.bf16.gmra.mxu0 %v672
      %v735 = vpop.f32.mrf.mxu0
      %v736 = vadd.f32 0.0, %v735
      %v737 = vpop.f32.mrf.mxu0
      %v738 = vpop.f32.mrf.mxu0
      %v739 = vadd.f32 0.0, %v738
      %v740 = vpop.f32.mrf.mxu0
      %741 = vdwg.mxu0
      %v742 = vadd.f32 %v624, %v712
      %v743 = vadd.f32 %v625, %v715
      %v744 = vadd.f32 %v626, %v720
      %v745 = vadd.f32 %v627, %v723
      %v746 = vadd.f32 %v628, %v728
      %v747 = vadd.f32 %v629, %v731
      %v748 = vadd.f32 %v630, %v736
      %v749 = vadd.f32 %v631, %v739
      %v750 = vld [vmem:[%s181 + $0x4] sm:$0xf]
      %v751 = vld [vmem:[%s181 + $0x8] sm:$0xf]
      %v752 = vld [vmem:[%s181 + $0xc] sm:$0xf]
      %v753 = vld [vmem:[%s181 + $0x10] sm:$0xf]
      %v754 = vld [vmem:[%s181 + $0x14] sm:$0xf]
      %v755 = vld [vmem:[%s181 + $0x18] sm:$0xf]
      %v756 = vld [vmem:[%s181 + $0x1c] sm:$0xf]
      %v757 = vld [vmem:[%s181 + $0x20] sm:$0xf]
      %s758 = scalar_lea.vmem %s1, 20
      %v759 = vld [vmem:[%s758] sm:$0x7]
      %v768 = vunpack.c.l.b16 %v750
      %v769 = vunpack.c.l.b16 %v751
      %v770 = vunpack.c.l.b16 %v752
      %v771 = vunpack.c.l.b16 %v753
      %v772 = vunpack.c.l.b16 %v754
      %v773 = vunpack.c.l.b16 %v755
      %v774 = vunpack.c.l.b16 %v756
      %v775 = vunpack.c.l.b16 %v757
      %v776 = vpack.c.b16 %v769, %v768
      %v777 = vpack.c.b16 %v771, %v770
      %v778 = vpack.c.b16 %v773, %v772
      %v779 = vpack.c.b16 %v775, %v774
      %v781 = vsel %vm212, %v776, 0
      %v784 = vsel %vm212, %v777, 0
      %v787 = vsel %vm212, %v778, 0
      %v790 = vsel %vm212, %v779, 0
      %v793 = vsel %vm225, %v759, 0
      %795 = vmatprep.subr.bf16.mxu0 0
      %796 = vmatpush1.bf16.msra.mxu0 0
      %797 = vmatprep.subr.bf16.mxu0 0
      %798 = vmatpush1.bf16.msra.mxu0 0
      %799 = vmatprep.subr.bf16.mxu0 0
      %800 = vmatpush1.bf16.msra.mxu0 0
      %801 = vmatprep.subr.bf16.mxu0 0
      %802 = vmatpush1.bf16.msra.mxu0 0
      %803 = vmatprep.subr.bf16.mxu0 0
      %804 = vmatpush1.bf16.msra.mxu0 0
      %805 = vmatprep.subr.bf16.mxu0 0
      %806 = vmatpush1.bf16.msra.mxu0 0
      %807 = vmatprep.subr.bf16.mxu0 0
      %808 = vmatpush1.bf16.msra.mxu0 0
      %809 = vmatprep.subr.bf16.mxu0 0
      %810 = vmatpush1.bf16.msra.mxu0 %v793
      %811 = vmatprep.subr.bf16.mxu0 0
      %812 = vmatpush2.bf16.msra.mxu0 0
      %813 = vmatprep.subr.bf16.mxu0 0
      %814 = vmatpush2.bf16.msra.mxu0 0
      %815 = vmatprep.subr.bf16.mxu0 0
      %816 = vmatpush2.bf16.msra.mxu0 0
      %817 = vmatprep.subr.bf16.mxu0 0
      %818 = vmatpush2.bf16.msra.mxu0 0
      %819 = vmatprep.subr.bf16.mxu0 0
      %820 = vmatpush2.bf16.msra.mxu0 0
      %821 = vmatprep.subr.bf16.mxu0 0
      %822 = vmatpush2.bf16.msra.mxu0 0
      %823 = vmatprep.subr.bf16.mxu0 0
      %824 = vmatpush2.bf16.msra.mxu0 0
      %825 = vmatprep.subr.bf16.mxu0 0
      %826 = vmatpush2.bf16.msra.mxu0 0
      %827 = vmatprep.mubr.bf16.mxu0 0
      %828 = vmatmul.mubr.bf16.gmra.mxu0 %v781
      %v829 = vpop.f32.mrf.mxu0
      %v830 = vadd.f32 0.0, %v829
      %v831 = vpop.f32.mrf.mxu0
      %v832 = vpop.f32.mrf.mxu0
      %v833 = vadd.f32 0.0, %v832
      %v834 = vpop.f32.mrf.mxu0
      %835 = vmatprep.mubr.bf16.mxu0 0
      %836 = vmatmul.mubr.bf16.gmra.mxu0 %v784
      %v837 = vpop.f32.mrf.mxu0
      %v838 = vadd.f32 0.0, %v837
      %v839 = vpop.f32.mrf.mxu0
      %v840 = vpop.f32.mrf.mxu0
      %v841 = vadd.f32 0.0, %v840
      %v842 = vpop.f32.mrf.mxu0
      %843 = vmatprep.mubr.bf16.mxu0 0
      %844 = vmatmul.mubr.bf16.gmra.mxu0 %v787
      %v845 = vpop.f32.mrf.mxu0
      %v846 = vadd.f32 0.0, %v845
      %v847 = vpop.f32.mrf.mxu0
      %v848 = vpop.f32.mrf.mxu0
      %v849 = vadd.f32 0.0, %v848
      %v850 = vpop.f32.mrf.mxu0
      %851 = vmatprep.mubr.bf16.mxu0 0
      %852 = vmatmul.mubr.bf16.gmra.mxu0 %v790
      %v853 = vpop.f32.mrf.mxu0
      %v854 = vadd.f32 0.0, %v853
      %v855 = vpop.f32.mrf.mxu0
      %v856 = vpop.f32.mrf.mxu0
      %v857 = vadd.f32 0.0, %v856
      %v858 = vpop.f32.mrf.mxu0
      %859 = vdwg.mxu0
      %v860 = vadd.f32 %v742, %v830
      %v861 = vadd.f32 %v743, %v833
      %v862 = vadd.f32 %v744, %v838
      %v863 = vadd.f32 %v745, %v841
      %v864 = vadd.f32 %v746, %v846
      %v865 = vadd.f32 %v747, %v849
      %v866 = vadd.f32 %v748, %v854
      %v867 = vadd.f32 %v749, %v857
      %v868 = vld [vmem:[%s394 + $0x4] sm:$0xf]
      %v869 = vld [vmem:[%s394 + $0x8] sm:$0xf]
      %v870 = vld [vmem:[%s394 + $0xc] sm:$0xf]
      %v871 = vld [vmem:[%s394 + $0x10] sm:$0xf]
      %v872 = vld [vmem:[%s394 + $0x14] sm:$0xf]
      %v873 = vld [vmem:[%s394 + $0x18] sm:$0xf]
      %v874 = vld [vmem:[%s394 + $0x1c] sm:$0xf]
      %v875 = vld [vmem:[%s394 + $0x20] sm:$0xf]
      %s876 = scalar_lea.vmem %s1, 24
      %v877 = vld [vmem:[%s876] sm:$0x7]
      %v886 = vunpack.c.l.b16 %v868
      %v887 = vunpack.c.l.b16 %v869
      %v888 = vunpack.c.l.b16 %v870
      %v889 = vunpack.c.l.b16 %v871
      %v890 = vunpack.c.l.b16 %v872
      %v891 = vunpack.c.l.b16 %v873
      %v892 = vunpack.c.l.b16 %v874
      %v893 = vunpack.c.l.b16 %v875
      %v894 = vpack.c.b16 %v887, %v886
      %v895 = vpack.c.b16 %v889, %v888
      %v896 = vpack.c.b16 %v891, %v890
      %v897 = vpack.c.b16 %v893, %v892
      %v899 = vsel %vm212, %v894, 0
      %v902 = vsel %vm212, %v895, 0
      %v905 = vsel %vm212, %v896, 0
      %v908 = vsel %vm212, %v897, 0
      %v911 = vsel %vm225, %v877, 0
      %913 = vmatprep.subr.bf16.mxu0 0
      %914 = vmatpush1.bf16.msra.mxu0 0
      %915 = vmatprep.subr.bf16.mxu0 0
      %916 = vmatpush1.bf16.msra.mxu0 0
      %917 = vmatprep.subr.bf16.mxu0 0
      %918 = vmatpush1.bf16.msra.mxu0 0
      %919 = vmatprep.subr.bf16.mxu0 0
      %920 = vmatpush1.bf16.msra.mxu0 0
      %921 = vmatprep.subr.bf16.mxu0 0
      %922 = vmatpush1.bf16.msra.mxu0 0
      %923 = vmatprep.subr.bf16.mxu0 0
      %924 = vmatpush1.bf16.msra.mxu0 0
      %925 = vmatprep.subr.bf16.mxu0 0
      %926 = vmatpush1.bf16.msra.mxu0 0
      %927 = vmatprep.subr.bf16.mxu0 0
      %928 = vmatpush1.bf16.msra.mxu0 %v911
      %929 = vmatprep.subr.bf16.mxu0 0
      %930 = vmatpush2.bf16.msra.mxu0 0
      %931 = vmatprep.subr.bf16.mxu0 0
      %932 = vmatpush2.bf16.msra.mxu0 0
      %933 = vmatprep.subr.bf16.mxu0 0
      %934 = vmatpush2.bf16.msra.mxu0 0
      %935 = vmatprep.subr.bf16.mxu0 0
      %936 = vmatpush2.bf16.msra.mxu0 0
      %937 = vmatprep.subr.bf16.mxu0 0
      %938 = vmatpush2.bf16.msra.mxu0 0
      %939 = vmatprep.subr.bf16.mxu0 0
      %940 = vmatpush2.bf16.msra.mxu0 0
      %941 = vmatprep.subr.bf16.mxu0 0
      %942 = vmatpush2.bf16.msra.mxu0 0
      %943 = vmatprep.subr.bf16.mxu0 0
      %944 = vmatpush2.bf16.msra.mxu0 0
      %945 = vmatprep.mubr.bf16.mxu0 0
      %946 = vmatmul.mubr.bf16.gmra.mxu0 %v899
      %v947 = vpop.f32.mrf.mxu0
      %v948 = vadd.f32 0.0, %v947
      %v949 = vpop.f32.mrf.mxu0
      %v950 = vpop.f32.mrf.mxu0
      %v951 = vadd.f32 0.0, %v950
      %v952 = vpop.f32.mrf.mxu0
      %953 = vmatprep.mubr.bf16.mxu0 0
      %954 = vmatmul.mubr.bf16.gmra.mxu0 %v902
      %v955 = vpop.f32.mrf.mxu0
      %v956 = vadd.f32 0.0, %v955
      %v957 = vpop.f32.mrf.mxu0
      %v958 = vpop.f32.mrf.mxu0
      %v959 = vadd.f32 0.0, %v958
      %v960 = vpop.f32.mrf.mxu0
      %961 = vmatprep.mubr.bf16.mxu0 0
      %962 = vmatmul.mubr.bf16.gmra.mxu0 %v905
      %v963 = vpop.f32.mrf.mxu0
      %v964 = vadd.f32 0.0, %v963
      %v965 = vpop.f32.mrf.mxu0
      %v966 = vpop.f32.mrf.mxu0
      %v967 = vadd.f32 0.0, %v966
      %v968 = vpop.f32.mrf.mxu0
      %969 = vmatprep.mubr.bf16.mxu0 0
      %970 = vmatmul.mubr.bf16.gmra.mxu0 %v908
      %v971 = vpop.f32.mrf.mxu0
      %v972 = vadd.f32 0.0, %v971
      %v973 = vpop.f32.mrf.mxu0
      %v974 = vpop.f32.mrf.mxu0
      %v975 = vadd.f32 0.0, %v974
      %v976 = vpop.f32.mrf.mxu0
      %977 = vdwg.mxu0
      %v978 = vadd.f32 %v860, %v948
      %v979 = vadd.f32 %v861, %v951
      %v980 = vadd.f32 %v862, %v956
      %v981 = vadd.f32 %v863, %v959
      %v982 = vadd.f32 %v864, %v964
      %v983 = vadd.f32 %v865, %v967
      %v984 = vadd.f32 %v866, %v972
      %v985 = vadd.f32 %v867, %v975
      %v986 = vld [vmem:[%s513 + $0x4] sm:$0xf]
      %v987 = vld [vmem:[%s513 + $0x8] sm:$0xf]
      %v988 = vld [vmem:[%s513 + $0xc] sm:$0xf]
      %v989 = vld [vmem:[%s513 + $0x10] sm:$0xf]
      %v990 = vld [vmem:[%s513 + $0x14] sm:$0xf]
      %v991 = vld [vmem:[%s513 + $0x18] sm:$0xf]
      %v992 = vld [vmem:[%s513 + $0x1c] sm:$0xf]
      %v993 = vld [vmem:[%s513 + $0x20] sm:$0xf]
      %s994 = scalar_lea.vmem %s1, 28
      %v995 = vld [vmem:[%s994] sm:$0x7]
      %v1004 = vunpack.c.l.b16 %v986
      %v1005 = vunpack.c.l.b16 %v987
      %v1006 = vunpack.c.l.b16 %v988
      %v1007 = vunpack.c.l.b16 %v989
      %v1008 = vunpack.c.l.b16 %v990
      %v1009 = vunpack.c.l.b16 %v991
      %v1010 = vunpack.c.l.b16 %v992
      %v1011 = vunpack.c.l.b16 %v993
      %v1012 = vpack.c.b16 %v1005, %v1004
      %v1013 = vpack.c.b16 %v1007, %v1006
      %v1014 = vpack.c.b16 %v1009, %v1008
      %v1015 = vpack.c.b16 %v1011, %v1010
      %v1017 = vsel %vm212, %v1012, 0
      %v1020 = vsel %vm212, %v1013, 0
      %v1023 = vsel %vm212, %v1014, 0
      %v1026 = vsel %vm212, %v1015, 0
      %v1029 = vsel %vm225, %v995, 0
      %1031 = vmatprep.subr.bf16.mxu0 0
      %1032 = vmatpush1.bf16.msra.mxu0 0
      %1033 = vmatprep.subr.bf16.mxu0 0
      %1034 = vmatpush1.bf16.msra.mxu0 0
      %1035 = vmatprep.subr.bf16.mxu0 0
      %1036 = vmatpush1.bf16.msra.mxu0 0
      %1037 = vmatprep.subr.bf16.mxu0 0
      %1038 = vmatpush1.bf16.msra.mxu0 0
      %1039 = vmatprep.subr.bf16.mxu0 0
      %1040 = vmatpush1.bf16.msra.mxu0 0
      %1041 = vmatprep.subr.bf16.mxu0 0
      %1042 = vmatpush1.bf16.msra.mxu0 0
      %1043 = vmatprep.subr.bf16.mxu0 0
      %1044 = vmatpush1.bf16.msra.mxu0 0
      %1045 = vmatprep.subr.bf16.mxu0 0
      %1046 = vmatpush1.bf16.msra.mxu0 %v1029
      %1047 = vmatprep.subr.bf16.mxu0 0
      %1048 = vmatpush2.bf16.msra.mxu0 0
      %1049 = vmatprep.subr.bf16.mxu0 0
      %1050 = vmatpush2.bf16.msra.mxu0 0
      %1051 = vmatprep.subr.bf16.mxu0 0
      %1052 = vmatpush2.bf16.msra.mxu0 0
      %1053 = vmatprep.subr.bf16.mxu0 0
      %1054 = vmatpush2.bf16.msra.mxu0 0
      %1055 = vmatprep.subr.bf16.mxu0 0
      %1056 = vmatpush2.bf16.msra.mxu0 0
      %1057 = vmatprep.subr.bf16.mxu0 0
      %1058 = vmatpush2.bf16.msra.mxu0 0
      %1059 = vmatprep.subr.bf16.mxu0 0
      %1060 = vmatpush2.bf16.msra.mxu0 0
      %1061 = vmatprep.subr.bf16.mxu0 0
      %1062 = vmatpush2.bf16.msra.mxu0 0
      %1063 = vmatprep.mubr.bf16.mxu0 0
      %1064 = vmatmul.mubr.bf16.gmra.mxu0 %v1017
      %v1065 = vpop.f32.mrf.mxu0
      %v1066 = vadd.f32 0.0, %v1065
      %v1067 = vpop.f32.mrf.mxu0
      %v1068 = vpop.f32.mrf.mxu0
      %v1069 = vadd.f32 0.0, %v1068
      %v1070 = vpop.f32.mrf.mxu0
      %1071 = vmatprep.mubr.bf16.mxu0 0
      %1072 = vmatmul.mubr.bf16.gmra.mxu0 %v1020
      %v1073 = vpop.f32.mrf.mxu0
      %v1074 = vadd.f32 0.0, %v1073
      %v1075 = vpop.f32.mrf.mxu0
      %v1076 = vpop.f32.mrf.mxu0
      %v1077 = vadd.f32 0.0, %v1076
      %v1078 = vpop.f32.mrf.mxu0
      %1079 = vmatprep.mubr.bf16.mxu0 0
      %1080 = vmatmul.mubr.bf16.gmra.mxu0 %v1023
      %v1081 = vpop.f32.mrf.mxu0
      %v1082 = vadd.f32 0.0, %v1081
      %v1083 = vpop.f32.mrf.mxu0
      %v1084 = vpop.f32.mrf.mxu0
      %v1085 = vadd.f32 0.0, %v1084
      %v1086 = vpop.f32.mrf.mxu0
      %1087 = vmatprep.mubr.bf16.mxu0 0
      %1088 = vmatmul.mubr.bf16.gmra.mxu0 %v1026
      %v1089 = vpop.f32.mrf.mxu0
      %v1090 = vadd.f32 0.0, %v1089
      %v1091 = vpop.f32.mrf.mxu0
      %v1092 = vpop.f32.mrf.mxu0
      %v1093 = vadd.f32 0.0, %v1092
      %v1094 = vpop.f32.mrf.mxu0
      %1095 = vdwg.mxu0
      %v1096 = vadd.f32 %v978, %v1066
      %v1097 = vadd.f32 %v979, %v1069
      %v1098 = vadd.f32 %v980, %v1074
      %v1099 = vadd.f32 %v981, %v1077
      %v1100 = vadd.f32 %v982, %v1082
      %v1101 = vadd.f32 %v983, %v1085
      %v1102 = vadd.f32 %v984, %v1090
      %v1103 = vadd.f32 %v985, %v1093
      %v1104 = vld [vmem:[%s2] sm:$0x1]
      %v1106 = vlaneseq
      %v1107 = vshrl.u32 %v1106, 7
      %v1108 = vsub.s32 0, %v1107
      %v1109 = vrot.slane %v1104, %v1108
      %v1111 = vadd.f32 %v1096, %v1109
      %v1112 = vadd.f32 %v1097, %v1109
      %v1113 = vadd.f32 %v1098, %v1109
      %v1114 = vadd.f32 %v1099, %v1109
      %v1115 = vadd.f32 %v1100, %v1109
      %v1116 = vadd.f32 %v1101, %v1109
      %v1117 = vadd.f32 %v1102, %v1109
      %v1118 = vadd.f32 %v1103, %v1109
      %v1119 = vmul.f32 %v1111, 0.2
      %v1120 = vmul.f32 %v1112, 0.2
      %v1121 = vmul.f32 %v1113, 0.2
      %v1122 = vmul.f32 %v1114, 0.2
      %v1123 = vmul.f32 %v1115, 0.2
      %v1124 = vmul.f32 %v1116, 0.2
      %v1125 = vmul.f32 %v1117, 0.2
      %v1126 = vmul.f32 %v1118, 0.2
      %v1127 = vmax.f32 %v1111, %v1119
      %v1128 = vmax.f32 %v1112, %v1120
      %v1129 = vmax.f32 %v1113, %v1121
      %v1130 = vmax.f32 %v1114, %v1122
      %v1131 = vmax.f32 %v1115, %v1123
      %v1132 = vmax.f32 %v1116, %v1124
      %v1133 = vmax.f32 %v1117, %v1125
      %v1134 = vmax.f32 %v1118, %v1126
      %v1135 = vpack.c.bf16 %v1128, %v1127
      %v1136 = vpack.c.bf16 %v1130, %v1129
      %v1137 = vpack.c.bf16 %v1132, %v1131
      %v1138 = vpack.c.bf16 %v1134, %v1133
      %v1143 = vunpack.c.l.b16 %v1135
      %v1144 = vunpack.c.h.b16 %v1135
      %v1145 = vunpack.c.l.b16 %v1136
      %v1146 = vunpack.c.h.b16 %v1136
      %v1147 = vunpack.c.l.b16 %v1137
      %v1148 = vunpack.c.h.b16 %v1137
      %v1149 = vunpack.c.l.b16 %v1138
      %v1150 = vunpack.c.h.b16 %v1138
      %v1151 = vpack.c.b16 %v1143, %v1143
      %v1152 = vpack.c.b16 %v1144, %v1144
      %v1153 = vpack.c.b16 %v1145, %v1145
      %v1154 = vpack.c.b16 %v1146, %v1146
      %v1155 = vpack.c.b16 %v1147, %v1147
      %v1156 = vpack.c.b16 %v1148, %v1148
      %v1157 = vpack.c.b16 %v1149, %v1149
      %v1158 = vpack.c.b16 %v1150, %v1150
      %vm1167 = vcmask 519168
      %1168 = vst.msk [vmem:[%s170] sm:$0xf] %vm1167, %v1151
      %1169 = vst.msk [vmem:[%s170 + $0x4] sm:$0xf] %vm1167, %v1152
      %1170 = vst.msk [vmem:[%s170 + $0x8] sm:$0xf] %vm1167, %v1153
      %1171 = vst.msk [vmem:[%s170 + $0xc] sm:$0xf] %vm1167, %v1154
      %1172 = vst.msk [vmem:[%s170 + $0x10] sm:$0xf] %vm1167, %v1155
      %1173 = vst.msk [vmem:[%s170 + $0x14] sm:$0xf] %vm1167, %v1156
      %1174 = vst.msk [vmem:[%s170 + $0x18] sm:$0xf] %vm1167, %v1157
      %1175 = vst.msk [vmem:[%s170 + $0x1c] sm:$0xf] %vm1167, %v1158
      %p1176 = scmp.lt.s32.totalorder %s14, 1
      %s1177 = scalar_select %p1176, %s14, 1
      %s1178 = smul.addr %s1177, 8
      %s1179 = smul.addr %s1178, 4
      %s1180 = scalar_lea.vmem %s3, %s1179
      // Predicated region
      $region33: #{discriminator_forward.5} parent=31 // pred_check
        %p1181 = pneg %p100
      $region34: #{discriminator_forward.5} parent=31 // pred_check_branch
        %1183 = sbr.rel (%p1181) target = $region36
      $region35: #{discriminator_forward.5} parent=31 // pred_region
        _
      $region36: #{discriminator_forward.5} parent=31 // pred_fallthru
        _
    $region32: #{discriminator_forward.5} parent=5 // pred_fallthru
      _
    %p1184 = scmp.le.s32.totalorder 2, %s9
    // Predicated region
    $region37: #{discriminator_forward.5} parent=5 // pred_check
      %p1185 = pneg %p1184
    $region38: #{discriminator_forward.5} parent=5 // pred_check_branch
      %1187 = sbr.rel (%p1185) target = $region40
    $region39: #{discriminator_forward.5} parent=5 // pred_region
      %s1188 = ssub.s32 %s9, 2
      // Predicated region
      $region41: #{discriminator_forward.5} parent=39 // pred_check
        %p1189 = pneg %p106
      $region42: #{discriminator_forward.5} parent=39 // pred_check_branch
        %1191 = sbr.rel (%p1189) target = $region44
      $region43: #{discriminator_forward.5} parent=39 // pred_region
        %p1192 = scmp.lt.s32.totalorder %s15, 1
        %s1193 = scalar_select %p1192, %s15, 1
        %s1194 = smul.addr %s1193, 8
        %s1195 = smul.addr %s1194, 4
        %s1196 = scalar_lea.vmem %s3, %s1195
      $region44: #{discriminator_forward.5} parent=39 // pred_fallthru
        _
    $region40: #{discriminator_forward.5} parent=5 // pred_fallthru
      _
  $region6: #{discriminator_forward.5} parent=0 // loop_footer
    %s13 = sadd.s32 1, %s9
  $region7: #{discriminator_forward.5} parent=0 // loop_footer_branch
    %8 = sbr.rel target = $region3
  $region8: #{discriminator_forward.5} parent=0 // loop_exit
    _

// kernel: discriminator_forward.6
$region0: #{discriminator_forward.6}
  #allocation0 [shape = 'u32[]', space=smem, size = 0x4, offset = 0x4, fixed_abs, tag = 'smem constant byte address 0x4 - core index']
  #allocation1 [shape = 'u32[144,128]{1,0:T(1,128)}', space=vmem, size = 0x12000, scoped, tag = 'internal scratch']
  %s0 = inlined_call_operand.vmem [shape: bf16[2,4,20,128], index: 0, kind: input, shape index: {}]
  %s1 = inlined_call_operand.vmem [shape: bf16[8,128,128], index: 1, kind: input, shape index: {}]
  %s2 = inlined_call_operand.vmem [shape: bf16[2,16,128], index: 2, kind: output, shape index: {}]
  %s3 = sld [smem:[#allocation0]]
  $region41: #{discriminator_forward.6} parent=0
    _
  %s5 = ssub.s32 1, %s3
  %s6 = scalar_select 0, %s5, %s3
  loop: start=0, step=1, limit=4
  $region2: #{discriminator_forward.6} parent=0 // loop_pre_header
    _
  $region3: #{discriminator_forward.6} parent=0 // loop_header
    %s8 = sphi 0, %s12
    %p9 = scmp.ge.s32.totalorder %s8, 4
    %s18 = sphi 0, %s20
    %s21 = sphi 0, %s18
    %s22 = sphi 0, %s21
    %s38 = sphi 0, %s22
    %s42 = sphi 0, %s42
    %s44 = sphi 0, %s42
    %s45 = sphi 0, %s44
    %s59 = sphi 0, %s45
    %s65 = sphi 0, %s67
    %s68 = sphi 0, %s65
    %s69 = sphi 0, %s68
    %s85 = sphi 0, %s69
  $region4: #{discriminator_forward.6} parent=0 // loop_header_branch
    %11 = sbr.rel (%p9) target = $region8
  $region5: #{discriminator_forward.6} parent=0 // loop_body
    %s13 = ssub.s32 %s8, 1
    %s14 = ssub.s32 %s8, 2
    %s15 = sadd.s32 %s8, 1
    %s16 = ssub.s32 %s8, %s15
    %p17 = scmp.eq.s32.totalorder %s16, 0
    %s19 = sadd.s32 %s18, 1
    %s20 = scalar_select %p17, %s18, %s19
    %p23 = pneg %p17
    %p24 = scmp.eq.s32.totalorder %s8, 1
    %p25 = por %p23, %p24
    %p26 = scmp.ne.s32.totalorder %s18, %s21
    %p27 = scmp.eq.s32.totalorder %s8, 0
    %p28 = por %p26, %p27
    %p29 = scmp.ne.s32.totalorder %s18, %s21
    %p30 = scmp.eq.s32.totalorder %s13, 1
    %p31 = por %p29, %p30
    %p32 = scmp.ne.s32.totalorder %s21, %s22
    %p33 = scmp.eq.s32.totalorder %s13, 0
    %p34 = por %p32, %p33
    %p35 = scmp.ne.s32.totalorder %s21, %s22
    %p36 = scmp.eq.s32.totalorder %s14, 1
    %p37 = por %p35, %p36
    %p39 = scmp.ne.s32.totalorder %s22, %s38
    %p40 = scmp.eq.s32.totalorder %s14, 0
    %p41 = por %p39, %p40
    %s43 = sadd.s32 %s42, 1
    %p46 = scmp.eq.s32.totalorder %s8, 1
    %p47 = scmp.ne.s32.totalorder %s42, %s44
    %p48 = scmp.eq.s32.totalorder %s8, 0
    %p49 = por %p47, %p48
    %p50 = scmp.ne.s32.totalorder %s42, %s44
    %p51 = scmp.eq.s32.totalorder %s13, 1
    %p52 = por %p50, %p51
    %p53 = scmp.ne.s32.totalorder %s44, %s45
    %p54 = scmp.eq.s32.totalorder %s13, 0
    %p55 = por %p53, %p54
    %p56 = scmp.ne.s32.totalorder %s44, %s45
    %p57 = scmp.eq.s32.totalorder %s14, 1
    %p58 = por %p56, %p57
    %p60 = scmp.ne.s32.totalorder %s45, %s59
    %p61 = scmp.eq.s32.totalorder %s14, 0
    %p62 = por %p60, %p61
    %s63 = ssub.s32 %s8, %s15
    %p64 = scmp.eq.s32.totalorder %s63, 0
    %s66 = sadd.s32 %s65, 1
    %s67 = scalar_select %p64, %s65, %s66
    %p70 = pneg %p64
    %p71 = scmp.eq.s32.totalorder %s8, 1
    %p72 = por %p70, %p71
    %p73 = scmp.ne.s32.totalorder %s65, %s68
    %p74 = scmp.eq.s32.totalorder %s8, 0
    %p75 = por %p73, %p74
    %p76 = scmp.ne.s32.totalorder %s65, %s68
    %p77 = scmp.eq.s32.totalorder %s13, 1
    %p78 = por %p76, %p77
    %p79 = scmp.ne.s32.totalorder %s68, %s69
    %p80 = scmp.eq.s32.totalorder %s13, 0
    %p81 = por %p79, %p80
    %p82 = scmp.ne.s32.totalorder %s68, %s69
    %p83 = scmp.eq.s32.totalorder %s14, 1
    %p84 = por %p82, %p83
    %p86 = scmp.ne.s32.totalorder %s69, %s85
    %p87 = scmp.eq.s32.totalorder %s14, 0
    %p88 = por %p86, %p87
    %p89 = scmp.le.s32.totalorder 1, %s8
    %p90 = scmp.lt.s32.totalorder %s8, 3
    %p91 = pnand %p89, %p90
    %p92 = pneg %p91
    // Predicated region
    $region9: #{discriminator_forward.6} parent=5 // pred_check
      _
    $region10: #{discriminator_forward.6} parent=5 // pred_check_branch
      %94 = sbr.rel (%p91) target = $region12
    $region11: #{discriminator_forward.6} parent=5 // pred_region
      %s95 = ssub.s32 %s8, 1
      // Predicated region
      $region13: #{discriminator_forward.6} parent=11 // pred_check
        %p96 = pneg %p55
      $region14: #{discriminator_forward.6} parent=11 // pred_check_branch
        %98 = sbr.rel (%p96) target = $region16
      $region15: #{discriminator_forward.6} parent=11 // pred_region
        _
      $region16: #{discriminator_forward.6} parent=11 // pred_fallthru
        _
    $region12: #{discriminator_forward.6} parent=5 // pred_fallthru
      _
    %p99 = scmp.lt.s32.totalorder %s8, 2
    // Predicated region
    $region17: #{discriminator_forward.6} parent=5 // pred_check
      %p100 = pneg %p99
    $region18: #{discriminator_forward.6} parent=5 // pred_check_branch
      %102 = sbr.rel (%p100) target = $region20
    $region19: #{discriminator_forward.6} parent=5 // pred_region
      // Predicated region
      $region21: #{discriminator_forward.6} parent=19 // pred_check
        %p103 = pneg %p28
      $region22: #{discriminator_forward.6} parent=19 // pred_check_branch
        %105 = sbr.rel (%p103) target = $region24
      $region23: #{discriminator_forward.6} parent=19 // pred_region
        %p106 = scmp.lt.s32.totalorder %s8, 1
        %s107 = scalar_select %p106, %s8, 1
        %s108 = smul.addr %s107, 12
        %s109 = smul.addr %s108, 4
        %s110 = scalar_lea.vmem %s0, %s109
      $region24: #{discriminator_forward.6} parent=19 // pred_fallthru
        _
    $region20: #{discriminator_forward.6} parent=5 // pred_fallthru
      _
    %p111 = scmp.le.s32.totalorder 1, %s8
    %p112 = scmp.lt.s32.totalorder %s8, 3
    %p113 = pnand %p111, %p112
    %p114 = pneg %p113
    // Predicated region
    $region25: #{discriminator_forward.6} parent=5 // pred_check
      _
    $region26: #{discriminator_forward.6} parent=5 // pred_check_branch
      %116 = sbr.rel (%p113) target = $region28
    $region27: #{discriminator_forward.6} parent=5 // pred_region
      %s117 = ssub.s32 %s8, 1
      %p118 = scmp.lt.s32.totalorder %s13, 1
      %s119 = scalar_select %p118, %s13, 1
      %s120 = smul.addr %s119, 12
      %s121 = smul.addr %s120, 4
      %s122 = scalar_lea.vmem %s0, %s121
      %p123 = pneg %p34
      %p124 = pneg %p31
      %p125 = pneg %p55
      %p126 = pneg %p52
      %p127 = pneg %p81
      %p128 = pneg %p78
      %p129 = scmp.lt.s32.totalorder %s13, 1
      %s130 = scalar_select %p129, %s13, 1
      %s131 = smul.addr %s130, 2
      %s132 = smul.addr %s131, 4
      %s133 = scalar_lea.vmem %s2, %s132
      %p134 = scmp.lt.s32.totalorder %s13, 1
      %s135 = scalar_select %p134, %s13, 1
      %s136 = smul.addr %s135, 12
      %s137 = smul.addr %s136, 4
      %s138 = scalar_lea.vmem %s0, %s137
      %p139 = scmp.lt.s32.totalorder %s13, 1
      %s140 = scalar_select %p139, %s13, 1
      %s141 = smul.addr %s140, 2
      %s142 = smul.addr %s141, 4
      %s143 = scalar_lea.vmem %s2, %s142
      %v145 = vld [vmem:[%s138] sm:$0xf]
      %v146 = vld [vmem:[%s138 + $0x4] sm:$0xf]
      %v147 = vld [vmem:[%s1] sm:$0xf]
      %v148 = vld [vmem:[%s1 + $0x4] sm:$0xf]
      %v149 = vld [vmem:[%s1 + $0x8] sm:$0xf]
      %v150 = vld [vmem:[%s1 + $0xc] sm:$0xf]
      %v151 = vld [vmem:[%s1 + $0x10] sm:$0xf]
      %v152 = vld [vmem:[%s1 + $0x14] sm:$0xf]
      %v153 = vld [vmem:[%s1 + $0x18] sm:$0xf]
      %v154 = vld [vmem:[%s1 + $0x1c] sm:$0xf]
      %v155 = vld [vmem:[%s1 + $0x20] sm:$0xf]
      %v156 = vld [vmem:[%s1 + $0x24] sm:$0xf]
      %v157 = vld [vmem:[%s1 + $0x28] sm:$0xf]
      %v158 = vld [vmem:[%s1 + $0x2c] sm:$0xf]
      %v159 = vld [vmem:[%s1 + $0x30] sm:$0xf]
      %v160 = vld [vmem:[%s1 + $0x34] sm:$0xf]
      %v161 = vld [vmem:[%s1 + $0x38] sm:$0xf]
      %v162 = vld [vmem:[%s1 + $0x3c] sm:$0xf]
      %s163 = scalar_lea.vmem %s138, 12
      %v164 = vld [vmem:[%s163] sm:$0xf]
      %v165 = vld [vmem:[%s163 + $0x4] sm:$0xf]
      %s166 = scalar_lea.vmem %s1, 64
      %v167 = vld [vmem:[%s166] sm:$0xf]
      %v168 = vld [vmem:[%s166 + $0x4] sm:$0xf]
      %v169 = vld [vmem:[%s166 + $0x8] sm:$0xf]
      %v170 = vld [vmem:[%s166 + $0xc] sm:$0xf]
      %v171 = vld [vmem:[%s166 + $0x10] sm:$0xf]
      %v172 = vld [vmem:[%s166 + $0x14] sm:$0xf]
      %v173 = vld [vmem:[%s166 + $0x18] sm:$0xf]
      %v174 = vld [vmem:[%s166 + $0x1c] sm:$0xf]
      %v175 = vld [vmem:[%s166 + $0x20] sm:$0xf]
      %v176 = vld [vmem:[%s166 + $0x24] sm:$0xf]
      %v177 = vld [vmem:[%s166 + $0x28] sm:$0xf]
      %v178 = vld [vmem:[%s166 + $0x2c] sm:$0xf]
      %v179 = vld [vmem:[%s166 + $0x30] sm:$0xf]
      %v180 = vld [vmem:[%s166 + $0x34] sm:$0xf]
      %v181 = vld [vmem:[%s166 + $0x38] sm:$0xf]
      %v182 = vld [vmem:[%s166 + $0x3c] sm:$0xf]
      %v185 = vunpack.c.l.b16 %v164
      %v186 = vunpack.c.l.b16 %v165
      %v187 = vpack.c.b16 %v186, %v185
      %v205 = vunpack.c.l.b16 %v167
      %v206 = vunpack.c.l.b16 %v168
      %v207 = vunpack.c.l.b16 %v169
      %v208 = vunpack.c.l.b16 %v170
      %v209 = vunpack.c.l.b16 %v171
      %v210 = vunpack.c.l.b16 %v172
      %v211 = vunpack.c.l.b16 %v173
      %v212 = vunpack.c.l.b16 %v174
      %v213 = vunpack.c.l.b16 %v175
      %v214 = vunpack.c.l.b16 %v176
      %v215 = vunpack.c.l.b16 %v177
      %v216 = vunpack.c.l.b16 %v178
      %v217 = vunpack.c.l.b16 %v179
      %v218 = vunpack.c.l.b16 %v180
      %v219 = vunpack.c.l.b16 %v181
      %v220 = vunpack.c.l.b16 %v182
      %v221 = vpack.c.b16 %v206, %v205
      %v222 = vpack.c.b16 %v208, %v207
      %v223 = vpack.c.b16 %v210, %v209
      %v224 = vpack.c.b16 %v212, %v211
      %v225 = vpack.c.b16 %v214, %v213
      %v226 = vpack.c.b16 %v216, %v215
      %v227 = vpack.c.b16 %v218, %v217
      %v228 = vpack.c.b16 %v220, %v219
      %237 = vmatprep.subr.bf16.mxu0 0
      %238 = vmatpush1.bf16.msra.mxu0 %v228
      %239 = vmatprep.subr.bf16.mxu0 0
      %240 = vmatpush1.bf16.msra.mxu0 %v227
      %241 = vmatprep.subr.bf16.mxu0 0
      %242 = vmatpush1.bf16.msra.mxu0 %v226
      %243 = vmatprep.subr.bf16.mxu0 0
      %244 = vmatpush1.bf16.msra.mxu0 %v225
      %245 = vmatprep.subr.bf16.mxu0 0
      %246 = vmatpush1.bf16.msra.mxu0 %v224
      %247 = vmatprep.subr.bf16.mxu0 0
      %248 = vmatpush1.bf16.msra.mxu0 %v223
      %249 = vmatprep.subr.bf16.mxu0 0
      %250 = vmatpush1.bf16.msra.mxu0 %v222
      %251 = vmatprep.subr.bf16.mxu0 0
      %252 = vmatpush1.bf16.msra.mxu0 %v221
      %253 = vmatprep.subr.bf16.mxu0 0
      %254 = vmatpush2.bf16.msra.mxu0 0
      %255 = vmatprep.subr.bf16.mxu0 0
      %256 = vmatpush2.bf16.msra.mxu0 0
      %257 = vmatprep.subr.bf16.mxu0 0
      %258 = vmatpush2.bf16.msra.mxu0 0
      %259 = vmatprep.subr.bf16.mxu0 0
      %260 = vmatpush2.bf16.msra.mxu0 0
      %261 = vmatprep.subr.bf16.mxu0 0
      %262 = vmatpush2.bf16.msra.mxu0 0
      %263 = vmatprep.subr.bf16.mxu0 0
      %264 = vmatpush2.bf16.msra.mxu0 0
      %265 = vmatprep.subr.bf16.mxu0 0
      %266 = vmatpush2.bf16.msra.mxu0 0
      %267 = vmatprep.subr.bf16.mxu0 0
      %268 = vmatpush2.bf16.msra.mxu0 0
      %269 = vmatprep.mubr.bf16.mxu0 0
      %270 = vmatmul.mubr.bf16.gmra.mxu0 %v187
      %v271 = vpop.f32.mrf.mxu0
      %v272 = vadd.f32 0.0, %v271
      %v273 = vpop.f32.mrf.mxu0
      %v274 = vpop.f32.mrf.mxu0
      %v275 = vadd.f32 0.0, %v274
      %v276 = vpop.f32.mrf.mxu0
      %277 = vdwg.mxu0
      %v280 = vunpack.c.l.b16 %v145
      %v281 = vunpack.c.l.b16 %v146
      %v282 = vpack.c.b16 %v281, %v280
      %v300 = vunpack.c.l.b16 %v147
      %v301 = vunpack.c.l.b16 %v148
      %v302 = vunpack.c.l.b16 %v149
      %v303 = vunpack.c.l.b16 %v150
      %v304 = vunpack.c.l.b16 %v151
      %v305 = vunpack.c.l.b16 %v152
      %v306 = vunpack.c.l.b16 %v153
      %v307 = vunpack.c.l.b16 %v154
      %v308 = vunpack.c.l.b16 %v155
      %v309 = vunpack.c.l.b16 %v156
      %v310 = vunpack.c.l.b16 %v157
      %v311 = vunpack.c.l.b16 %v158
      %v312 = vunpack.c.l.b16 %v159
      %v313 = vunpack.c.l.b16 %v160
      %v314 = vunpack.c.l.b16 %v161
      %v315 = vunpack.c.l.b16 %v162
      %v316 = vpack.c.b16 %v301, %v300
      %v317 = vpack.c.b16 %v303, %v302
      %v318 = vpack.c.b16 %v305, %v304
      %v319 = vpack.c.b16 %v307, %v306
      %v320 = vpack.c.b16 %v309, %v308
      %v321 = vpack.c.b16 %v311, %v310
      %v322 = vpack.c.b16 %v313, %v312
      %v323 = vpack.c.b16 %v315, %v314
      %332 = vmatprep.subr.bf16.mxu0 0
      %333 = vmatpush1.bf16.msra.mxu0 %v323
      %334 = vmatprep.subr.bf16.mxu0 0
      %335 = vmatpush1.bf16.msra.mxu0 %v322
      %336 = vmatprep.subr.bf16.mxu0 0
      %337 = vmatpush1.bf16.msra.mxu0 %v321
      %338 = vmatprep.subr.bf16.mxu0 0
      %339 = vmatpush1.bf16.msra.mxu0 %v320
      %340 = vmatprep.subr.bf16.mxu0 0
      %341 = vmatpush1.bf16.msra.mxu0 %v319
      %342 = vmatprep.subr.bf16.mxu0 0
      %343 = vmatpush1.bf16.msra.mxu0 %v318
      %344 = vmatprep.subr.bf16.mxu0 0
      %345 = vmatpush1.bf16.msra.mxu0 %v317
      %346 = vmatprep.subr.bf16.mxu0 0
      %347 = vmatpush1.bf16.msra.mxu0 %v316
      %348 = vmatprep.subr.bf16.mxu0 0
      %349 = vmatpush2.bf16.msra.mxu0 0
      %350 = vmatprep.subr.bf16.mxu0 0
      %351 = vmatpush2.bf16.msra.mxu0 0
      %352 = vmatprep.subr.bf16.mxu0 0
      %353 = vmatpush2.bf16.msra.mxu0 0
      %354 = vmatprep.subr.bf16.mxu0 0
      %355 = vmatpush2.bf16.msra.mxu0 0
      %356 = vmatprep.subr.bf16.mxu0 0
      %357 = vmatpush2.bf16.msra.mxu0 0
      %358 = vmatprep.subr.bf16.mxu0 0
      %359 = vmatpush2.bf16.msra.mxu0 0
      %360 = vmatprep.subr.bf16.mxu0 0
      %361 = vmatpush2.bf16.msra.mxu0 0
      %362 = vmatprep.subr.bf16.mxu0 0
      %363 = vmatpush2.bf16.msra.mxu0 0
      %364 = vmatprep.mubr.bf16.mxu0 0
      %365 = vmatmul.mubr.bf16.gmra.mxu0 %v282
      %v366 = vpop.f32.mrf.mxu0
      %v367 = vadd.f32 %v272, %v366
      %v368 = vpop.f32.mrf.mxu0
      %v369 = vpop.f32.mrf.mxu0
      %v370 = vadd.f32 %v275, %v369
      %v371 = vpop.f32.mrf.mxu0
      %372 = vdwg.mxu0
      %s373 = scalar_lea.vmem %s138, 24
      %v374 = vld [vmem:[%s373] sm:$0xf]
      %v375 = vld [vmem:[%s373 + $0x4] sm:$0xf]
      %s376 = scalar_lea.vmem %s1, 128
      %v377 = vld [vmem:[%s376] sm:$0xf]
      %v378 = vld [vmem:[%s376 + $0x4] sm:$0xf]
      %v379 = vld [vmem:[%s376 + $0x8] sm:$0xf]
      %v380 = vld [vmem:[%s376 + $0xc] sm:$0xf]
      %v381 = vld [vmem:[%s376 + $0x10] sm:$0xf]
      %v382 = vld [vmem:[%s376 + $0x14] sm:$0xf]
      %v383 = vld [vmem:[%s376 + $0x18] sm:$0xf]
      %v384 = vld [vmem:[%s376 + $0x1c] sm:$0xf]
      %v385 = vld [vmem:[%s376 + $0x20] sm:$0xf]
      %v386 = vld [vmem:[%s376 + $0x24] sm:$0xf]
      %v387 = vld [vmem:[%s376 + $0x28] sm:$0xf]
      %v388 = vld [vmem:[%s376 + $0x2c] sm:$0xf]
      %v389 = vld [vmem:[%s376 + $0x30] sm:$0xf]
      %v390 = vld [vmem:[%s376 + $0x34] sm:$0xf]
      %v391 = vld [vmem:[%s376 + $0x38] sm:$0xf]
      %v392 = vld [vmem:[%s376 + $0x3c] sm:$0xf]
      %v395 = vunpack.c.l.b16 %v374
      %v396 = vunpack.c.l.b16 %v375
      %v397 = vpack.c.b16 %v396, %v395
      %v415 = vunpack.c.l.b16 %v377
      %v416 = vunpack.c.l.b16 %v378
      %v417 = vunpack.c.l.b16 %v379
      %v418 = vunpack.c.l.b16 %v380
      %v419 = vunpack.c.l.b16 %v381
      %v420 = vunpack.c.l.b16 %v382
      %v421 = vunpack.c.l.b16 %v383
      %v422 = vunpack.c.l.b16 %v384
      %v423 = vunpack.c.l.b16 %v385
      %v424 = vunpack.c.l.b16 %v386
      %v425 = vunpack.c.l.b16 %v387
      %v426 = vunpack.c.l.b16 %v388
      %v427 = vunpack.c.l.b16 %v389
      %v428 = vunpack.c.l.b16 %v390
      %v429 = vunpack.c.l.b16 %v391
      %v430 = vunpack.c.l.b16 %v392
      %v431 = vpack.c.b16 %v416, %v415
      %v432 = vpack.c.b16 %v418, %v417
      %v433 = vpack.c.b16 %v420, %v419
      %v434 = vpack.c.b16 %v422, %v421
      %v435 = vpack.c.b16 %v424, %v423
      %v436 = vpack.c.b16 %v426, %v425
      %v437 = vpack.c.b16 %v428, %v427
      %v438 = vpack.c.b16 %v430, %v429
      %447 = vmatprep.subr.bf16.mxu0 0
      %448 = vmatpush1.bf16.msra.mxu0 %v438
      %449 = vmatprep.subr.bf16.mxu0 0
      %450 = vmatpush1.bf16.msra.mxu0 %v437
      %451 = vmatprep.subr.bf16.mxu0 0
      %452 = vmatpush1.bf16.msra.mxu0 %v436
      %453 = vmatprep.subr.bf16.mxu0 0
      %454 = vmatpush1.bf16.msra.mxu0 %v435
      %455 = vmatprep.subr.bf16.mxu0 0
      %456 = vmatpush1.bf16.msra.mxu0 %v434
      %457 = vmatprep.subr.bf16.mxu0 0
      %458 = vmatpush1.bf16.msra.mxu0 %v433
      %459 = vmatprep.subr.bf16.mxu0 0
      %460 = vmatpush1.bf16.msra.mxu0 %v432
      %461 = vmatprep.subr.bf16.mxu0 0
      %462 = vmatpush1.bf16.msra.mxu0 %v431
      %463 = vmatprep.subr.bf16.mxu0 0
      %464 = vmatpush2.bf16.msra.mxu0 0
      %465 = vmatprep.subr.bf16.mxu0 0
      %466 = vmatpush2.bf16.msra.mxu0 0
      %467 = vmatprep.subr.bf16.mxu0 0
      %468 = vmatpush2.bf16.msra.mxu0 0
      %469 = vmatprep.subr.bf16.mxu0 0
      %470 = vmatpush2.bf16.msra.mxu0 0
      %471 = vmatprep.subr.bf16.mxu0 0
      %472 = vmatpush2.bf16.msra.mxu0 0
      %473 = vmatprep.subr.bf16.mxu0 0
      %474 = vmatpush2.bf16.msra.mxu0 0
      %475 = vmatprep.subr.bf16.mxu0 0
      %476 = vmatpush2.bf16.msra.mxu0 0
      %477 = vmatprep.subr.bf16.mxu0 0
      %478 = vmatpush2.bf16.msra.mxu0 0
      %479 = vmatprep.mubr.bf16.mxu0 0
      %480 = vmatmul.mubr.bf16.gmra.mxu0 %v397
      %v481 = vpop.f32.mrf.mxu0
      %v482 = vadd.f32 0.0, %v481
      %v483 = vpop.f32.mrf.mxu0
      %v484 = vpop.f32.mrf.mxu0
      %v485 = vadd.f32 0.0, %v484
      %v486 = vpop.f32.mrf.mxu0
      %487 = vdwg.mxu0
      %v488 = vadd.f32 %v367, %v482
      %v489 = vadd.f32 %v370, %v485
      %s490 = scalar_lea.vmem %s138, 36
      %v491 = vld [vmem:[%s490] sm:$0xf]
      %v492 = vld [vmem:[%s490 + $0x4] sm:$0xf]
      %s493 = scalar_lea.vmem %s1, 192
      %v494 = vld [vmem:[%s493] sm:$0xf]
      %v495 = vld [vmem:[%s493 + $0x4] sm:$0xf]
      %v496 = vld [vmem:[%s493 + $0x8] sm:$0xf]
      %v497 = vld [vmem:[%s493 + $0xc] sm:$0xf]
      %v498 = vld [vmem:[%s493 + $0x10] sm:$0xf]
      %v499 = vld [vmem:[%s493 + $0x14] sm:$0xf]
      %v500 = vld [vmem:[%s493 + $0x18] sm:$0xf]
      %v501 = vld [vmem:[%s493 + $0x1c] sm:$0xf]
      %v502 = vld [vmem:[%s493 + $0x20] sm:$0xf]
      %v503 = vld [vmem:[%s493 + $0x24] sm:$0xf]
      %v504 = vld [vmem:[%s493 + $0x28] sm:$0xf]
      %v505 = vld [vmem:[%s493 + $0x2c] sm:$0xf]
      %v506 = vld [vmem:[%s493 + $0x30] sm:$0xf]
      %v507 = vld [vmem:[%s493 + $0x34] sm:$0xf]
      %v508 = vld [vmem:[%s493 + $0x38] sm:$0xf]
      %v509 = vld [vmem:[%s493 + $0x3c] sm:$0xf]
      %v512 = vunpack.c.l.b16 %v491
      %v513 = vunpack.c.l.b16 %v492
      %v514 = vpack.c.b16 %v513, %v512
      %v532 = vunpack.c.l.b16 %v494
      %v533 = vunpack.c.l.b16 %v495
      %v534 = vunpack.c.l.b16 %v496
      %v535 = vunpack.c.l.b16 %v497
      %v536 = vunpack.c.l.b16 %v498
      %v537 = vunpack.c.l.b16 %v499
      %v538 = vunpack.c.l.b16 %v500
      %v539 = vunpack.c.l.b16 %v501
      %v540 = vunpack.c.l.b16 %v502
      %v541 = vunpack.c.l.b16 %v503
      %v542 = vunpack.c.l.b16 %v504
      %v543 = vunpack.c.l.b16 %v505
      %v544 = vunpack.c.l.b16 %v506
      %v545 = vunpack.c.l.b16 %v507
      %v546 = vunpack.c.l.b16 %v508
      %v547 = vunpack.c.l.b16 %v509
      %v548 = vpack.c.b16 %v533, %v532
      %v549 = vpack.c.b16 %v535, %v534
      %v550 = vpack.c.b16 %v537, %v536
      %v551 = vpack.c.b16 %v539, %v538
      %v552 = vpack.c.b16 %v541, %v540
      %v553 = vpack.c.b16 %v543, %v542
      %v554 = vpack.c.b16 %v545, %v544
      %v555 = vpack.c.b16 %v547, %v546
      %564 = vmatprep.subr.bf16.mxu0 0
      %565 = vmatpush1.bf16.msra.mxu0 %v555
      %566 = vmatprep.subr.bf16.mxu0 0
      %567 = vmatpush1.bf16.msra.mxu0 %v554
      %568 = vmatprep.subr.bf16.mxu0 0
      %569 = vmatpush1.bf16.msra.mxu0 %v553
      %570 = vmatprep.subr.bf16.mxu0 0
      %571 = vmatpush1.bf16.msra.mxu0 %v552
      %572 = vmatprep.subr.bf16.mxu0 0
      %573 = vmatpush1.bf16.msra.mxu0 %v551
      %574 = vmatprep.subr.bf16.mxu0 0
      %575 = vmatpush1.bf16.msra.mxu0 %v550
      %576 = vmatprep.subr.bf16.mxu0 0
      %577 = vmatpush1.bf16.msra.mxu0 %v549
      %578 = vmatprep.subr.bf16.mxu0 0
      %579 = vmatpush1.bf16.msra.mxu0 %v548
      %580 = vmatprep.subr.bf16.mxu0 0
      %581 = vmatpush2.bf16.msra.mxu0 0
      %582 = vmatprep.subr.bf16.mxu0 0
      %583 = vmatpush2.bf16.msra.mxu0 0
      %584 = vmatprep.subr.bf16.mxu0 0
      %585 = vmatpush2.bf16.msra.mxu0 0
      %586 = vmatprep.subr.bf16.mxu0 0
      %587 = vmatpush2.bf16.msra.mxu0 0
      %588 = vmatprep.subr.bf16.mxu0 0
      %589 = vmatpush2.bf16.msra.mxu0 0
      %590 = vmatprep.subr.bf16.mxu0 0
      %591 = vmatpush2.bf16.msra.mxu0 0
      %592 = vmatprep.subr.bf16.mxu0 0
      %593 = vmatpush2.bf16.msra.mxu0 0
      %594 = vmatprep.subr.bf16.mxu0 0
      %595 = vmatpush2.bf16.msra.mxu0 0
      %596 = vmatprep.mubr.bf16.mxu0 0
      %597 = vmatmul.mubr.bf16.gmra.mxu0 %v514
      %v598 = vpop.f32.mrf.mxu0
      %v599 = vadd.f32 0.0, %v598
      %v600 = vpop.f32.mrf.mxu0
      %v601 = vpop.f32.mrf.mxu0
      %v602 = vadd.f32 0.0, %v601
      %v603 = vpop.f32.mrf.mxu0
      %604 = vdwg.mxu0
      %v605 = vadd.f32 %v488, %v599
      %v606 = vadd.f32 %v489, %v602
      %v607 = vld [vmem:[%s138] sm:$0xc]
      %v608 = vld [vmem:[%s138 + $0x4] sm:$0xf]
      %v609 = vld [vmem:[%s138 + $0x8] sm:$0x3]
      %s610 = scalar_lea.vmem %s1, 256
      %v611 = vld [vmem:[%s610] sm:$0xf]
      %v612 = vld [vmem:[%s610 + $0x4] sm:$0xf]
      %v613 = vld [vmem:[%s610 + $0x8] sm:$0xf]
      %v614 = vld [vmem:[%s610 + $0xc] sm:$0xf]
      %v615 = vld [vmem:[%s610 + $0x10] sm:$0xf]
      %v616 = vld [vmem:[%s610 + $0x14] sm:$0xf]
      %v617 = vld [vmem:[%s610 + $0x18] sm:$0xf]
      %v618 = vld [vmem:[%s610 + $0x1c] sm:$0xf]
      %v619 = vld [vmem:[%s610 + $0x20] sm:$0xf]
      %v620 = vld [vmem:[%s610 + $0x24] sm:$0xf]
      %v621 = vld [vmem:[%s610 + $0x28] sm:$0xf]
      %v622 = vld [vmem:[%s610 + $0x2c] sm:$0xf]
      %v623 = vld [vmem:[%s610 + $0x30] sm:$0xf]
      %v624 = vld [vmem:[%s610 + $0x34] sm:$0xf]
      %v625 = vld [vmem:[%s610 + $0x38] sm:$0xf]
      %v626 = vld [vmem:[%s610 + $0x3c] sm:$0xf]
      %v630 = vunpack.c.l.b16 %v607
      %v631 = vunpack.c.l.b16 %v608
      %v632 = vunpack.c.l.b16 %v609
      %v633 = vpack.c.b16 %v631, %v630
      %v634 = vpack.c.b16 %v632, %v632
      %vm635 = vcmask 1045504
      %v636 = vrot.slane %v633, 2
      %v637 = vrot.slane %v634, 2
      %v638 = vsel %vm635, %v636, %v637
      %v656 = vunpack.c.l.b16 %v611
      %v657 = vunpack.c.l.b16 %v612
      %v658 = vunpack.c.l.b16 %v613
      %v659 = vunpack.c.l.b16 %v614
      %v660 = vunpack.c.l.b16 %v615
      %v661 = vunpack.c.l.b16 %v616
      %v662 = vunpack.c.l.b16 %v617
      %v663 = vunpack.c.l.b16 %v618
      %v664 = vunpack.c.l.b16 %v619
      %v665 = vunpack.c.l.b16 %v620
      %v666 = vunpack.c.l.b16 %v621
      %v667 = vunpack.c.l.b16 %v622
      %v668 = vunpack.c.l.b16 %v623
      %v669 = vunpack.c.l.b16 %v624
      %v670 = vunpack.c.l.b16 %v625
      %v671 = vunpack.c.l.b16 %v626
      %v672 = vpack.c.b16 %v657, %v656
      %v673 = vpack.c.b16 %v659, %v658
      %v674 = vpack.c.b16 %v661, %v660
      %v675 = vpack.c.b16 %v663, %v662
      %v676 = vpack.c.b16 %v665, %v664
      %v677 = vpack.c.b16 %v667, %v666
      %v678 = vpack.c.b16 %v669, %v668
      %v679 = vpack.c.b16 %v671, %v670
      %688 = vmatprep.subr.bf16.mxu0 0
      %689 = vmatpush1.bf16.msra.mxu0 %v679
      %690 = vmatprep.subr.bf16.mxu0 0
      %691 = vmatpush1.bf16.msra.mxu0 %v678
      %692 = vmatprep.subr.bf16.mxu0 0
      %693 = vmatpush1.bf16.msra.mxu0 %v677
      %694 = vmatprep.subr.bf16.mxu0 0
      %695 = vmatpush1.bf16.msra.mxu0 %v676
      %696 = vmatprep.subr.bf16.mxu0 0
      %697 = vmatpush1.bf16.msra.mxu0 %v675
      %698 = vmatprep.subr.bf16.mxu0 0
      %699 = vmatpush1.bf16.msra.mxu0 %v674
      %700 = vmatprep.subr.bf16.mxu0 0
      %701 = vmatpush1.bf16.msra.mxu0 %v673
      %702 = vmatprep.subr.bf16.mxu0 0
      %703 = vmatpush1.bf16.msra.mxu0 %v672
      %704 = vmatprep.subr.bf16.mxu0 0
      %705 = vmatpush2.bf16.msra.mxu0 0
      %706 = vmatprep.subr.bf16.mxu0 0
      %707 = vmatpush2.bf16.msra.mxu0 0
      %708 = vmatprep.subr.bf16.mxu0 0
      %709 = vmatpush2.bf16.msra.mxu0 0
      %710 = vmatprep.subr.bf16.mxu0 0
      %711 = vmatpush2.bf16.msra.mxu0 0
      %712 = vmatprep.subr.bf16.mxu0 0
      %713 = vmatpush2.bf16.msra.mxu0 0
      %714 = vmatprep.subr.bf16.mxu0 0
      %715 = vmatpush2.bf16.msra.mxu0 0
      %716 = vmatprep.subr.bf16.mxu0 0
      %717 = vmatpush2.bf16.msra.mxu0 0
      %718 = vmatprep.subr.bf16.mxu0 0
      %719 = vmatpush2.bf16.msra.mxu0 0
      %720 = vmatprep.mubr.bf16.mxu0 0
      %721 = vmatmul.mubr.bf16.gmra.mxu0 %v638
      %v722 = vpop.f32.mrf.mxu0
      %v723 = vadd.f32 0.0, %v722
      %v724 = vpop.f32.mrf.mxu0
      %v725 = vpop.f32.mrf.mxu0
      %v726 = vadd.f32 0.0, %v725
      %v727 = vpop.f32.mrf.mxu0
      %728 = vdwg.mxu0
      %v729 = vadd.f32 %v605, %v723
      %v730 = vadd.f32 %v606, %v726
      %v731 = vld [vmem:[%s163] sm:$0xc]
      %v732 = vld [vmem:[%s163 + $0x4] sm:$0xf]
      %v733 = vld [vmem:[%s163 + $0x8] sm:$0x3]
      %s734 = scalar_lea.vmem %s1, 320
      %v735 = vld [vmem:[%s734] sm:$0xf]
      %v736 = vld [vmem:[%s734 + $0x4] sm:$0xf]
      %v737 = vld [vmem:[%s734 + $0x8] sm:$0xf]
      %v738 = vld [vmem:[%s734 + $0xc] sm:$0xf]
      %v739 = vld [vmem:[%s734 + $0x10] sm:$0xf]
      %v740 = vld [vmem:[%s734 + $0x14] sm:$0xf]
      %v741 = vld [vmem:[%s734 + $0x18] sm:$0xf]
      %v742 = vld [vmem:[%s734 + $0x1c] sm:$0xf]
      %v743 = vld [vmem:[%s734 + $0x20] sm:$0xf]
      %v744 = vld [vmem:[%s734 + $0x24] sm:$0xf]
      %v745 = vld [vmem:[%s734 + $0x28] sm:$0xf]
      %v746 = vld [vmem:[%s734 + $0x2c] sm:$0xf]
      %v747 = vld [vmem:[%s734 + $0x30] sm:$0xf]
      %v748 = vld [vmem:[%s734 + $0x34] sm:$0xf]
      %v749 = vld [vmem:[%s734 + $0x38] sm:$0xf]
      %v750 = vld [vmem:[%s734 + $0x3c] sm:$0xf]
      %v754 = vunpack.c.l.b16 %v731
      %v755 = vunpack.c.l.b16 %v732
      %v756 = vunpack.c.l.b16 %v733
      %v757 = vpack.c.b16 %v755, %v754
      %v758 = vpack.c.b16 %v756, %v756
      %v759 = vrot.slane %v757, 2
      %v760 = vrot.slane %v758, 2
      %v761 = vsel %vm635, %v759, %v760
      %v779 = vunpack.c.l.b16 %v735
      %v780 = vunpack.c.l.b16 %v736
      %v781 = vunpack.c.l.b16 %v737
      %v782 = vunpack.c.l.b16 %v738
      %v783 = vunpack.c.l.b16 %v739
      %v784 = vunpack.c.l.b16 %v740
      %v785 = vunpack.c.l.b16 %v741
      %v786 = vunpack.c.l.b16 %v742
      %v787 = vunpack.c.l.b16 %v743
      %v788 = vunpack.c.l.b16 %v744
      %v789 = vunpack.c.l.b16 %v745
      %v790 = vunpack.c.l.b16 %v746
      %v791 = vunpack.c.l.b16 %v747
      %v792 = vunpack.c.l.b16 %v748
      %v793 = vunpack.c.l.b16 %v749
      %v794 = vunpack.c.l.b16 %v750
      %v795 = vpack.c.b16 %v780, %v779
      %v796 = vpack.c.b16 %v782, %v781
      %v797 = vpack.c.b16 %v784, %v783
      %v798 = vpack.c.b16 %v786, %v785
      %v799 = vpack.c.b16 %v788, %v787
      %v800 = vpack.c.b16 %v790, %v789
      %v801 = vpack.c.b16 %v792, %v791
      %v802 = vpack.c.b16 %v794, %v793
      %811 = vmatprep.subr.bf16.mxu0 0
      %812 = vmatpush1.bf16.msra.mxu0 %v802
      %813 = vmatprep.subr.bf16.mxu0 0
      %814 = vmatpush1.bf16.msra.mxu0 %v801
      %815 = vmatprep.subr.bf16.mxu0 0
      %816 = vmatpush1.bf16.msra.mxu0 %v800
      %817 = vmatprep.subr.bf16.mxu0 0
      %818 = vmatpush1.bf16.msra.mxu0 %v799
      %819 = vmatprep.subr.bf16.mxu0 0
      %820 = vmatpush1.bf16.msra.mxu0 %v798
      %821 = vmatprep.subr.bf16.mxu0 0
      %822 = vmatpush1.bf16.msra.mxu0 %v797
      %823 = vmatprep.subr.bf16.mxu0 0
      %824 = vmatpush1.bf16.msra.mxu0 %v796
      %825 = vmatprep.subr.bf16.mxu0 0
      %826 = vmatpush1.bf16.msra.mxu0 %v795
      %827 = vmatprep.subr.bf16.mxu0 0
      %828 = vmatpush2.bf16.msra.mxu0 0
      %829 = vmatprep.subr.bf16.mxu0 0
      %830 = vmatpush2.bf16.msra.mxu0 0
      %831 = vmatprep.subr.bf16.mxu0 0
      %832 = vmatpush2.bf16.msra.mxu0 0
      %833 = vmatprep.subr.bf16.mxu0 0
      %834 = vmatpush2.bf16.msra.mxu0 0
      %835 = vmatprep.subr.bf16.mxu0 0
      %836 = vmatpush2.bf16.msra.mxu0 0
      %837 = vmatprep.subr.bf16.mxu0 0
      %838 = vmatpush2.bf16.msra.mxu0 0
      %839 = vmatprep.subr.bf16.mxu0 0
      %840 = vmatpush2.bf16.msra.mxu0 0
      %841 = vmatprep.subr.bf16.mxu0 0
      %842 = vmatpush2.bf16.msra.mxu0 0
      %843 = vmatprep.mubr.bf16.mxu0 0
      %844 = vmatmul.mubr.bf16.gmra.mxu0 %v761
      %v845 = vpop.f32.mrf.mxu0
      %v846 = vadd.f32 0.0, %v845
      %v847 = vpop.f32.mrf.mxu0
      %v848 = vpop.f32.mrf.mxu0
      %v849 = vadd.f32 0.0, %v848
      %v850 = vpop.f32.mrf.mxu0
      %851 = vdwg.mxu0
      %v852 = vadd.f32 %v729, %v846
      %v853 = vadd.f32 %v730, %v849
      %v854 = vld [vmem:[%s373] sm:$0xc]
      %v855 = vld [vmem:[%s373 + $0x4] sm:$0xf]
      %v856 = vld [vmem:[%s373 + $0x8] sm:$0x3]
      %s857 = scalar_lea.vmem %s1, 384
      %v858 = vld [vmem:[%s857] sm:$0xf]
      %v859 = vld [vmem:[%s857 + $0x4] sm:$0xf]
      %v860 = vld [vmem:[%s857 + $0x8] sm:$0xf]
      %v861 = vld [vmem:[%s857 + $0xc] sm:$0xf]
      %v862 = vld [vmem:[%s857 + $0x10] sm:$0xf]
      %v863 = vld [vmem:[%s857 + $0x14] sm:$0xf]
      %v864 = vld [vmem:[%s857 + $0x18] sm:$0xf]
      %v865 = vld [vmem:[%s857 + $0x1c] sm:$0xf]
      %v866 = vld [vmem:[%s857 + $0x20] sm:$0xf]
      %v867 = vld [vmem:[%s857 + $0x24] sm:$0xf]
      %v868 = vld [vmem:[%s857 + $0x28] sm:$0xf]
      %v869 = vld [vmem:[%s857 + $0x2c] sm:$0xf]
      %v870 = vld [vmem:[%s857 + $0x30] sm:$0xf]
      %v871 = vld [vmem:[%s857 + $0x34] sm:$0xf]
      %v872 = vld [vmem:[%s857 + $0x38] sm:$0xf]
      %v873 = vld [vmem:[%s857 + $0x3c] sm:$0xf]
      %v877 = vunpack.c.l.b16 %v854
      %v878 = vunpack.c.l.b16 %v855
      %v879 = vunpack.c.l.b16 %v856
      %v880 = vpack.c.b16 %v878, %v877
      %v881 = vpack.c.b16 %v879, %v879
      %v882 = vrot.slane %v880, 2
      %v883 = vrot.slane %v881, 2
      %v884 = vsel %vm635, %v882, %v883
      %v902 = vunpack.c.l.b16 %v858
      %v903 = vunpack.c.l.b16 %v859
      %v904 = vunpack.c.l.b16 %v860
      %v905 = vunpack.c.l.b16 %v861
      %v906 = vunpack.c.l.b16 %v862
      %v907 = vunpack.c.l.b16 %v863
      %v908 = vunpack.c.l.b16 %v864
      %v909 = vunpack.c.l.b16 %v865
      %v910 = vunpack.c.l.b16 %v866
      %v911 = vunpack.c.l.b16 %v867
      %v912 = vunpack.c.l.b16 %v868
      %v913 = vunpack.c.l.b16 %v869
      %v914 = vunpack.c.l.b16 %v870
      %v915 = vunpack.c.l.b16 %v871
      %v916 = vunpack.c.l.b16 %v872
      %v917 = vunpack.c.l.b16 %v873
      %v918 = vpack.c.b16 %v903, %v902
      %v919 = vpack.c.b16 %v905, %v904
      %v920 = vpack.c.b16 %v907, %v906
      %v921 = vpack.c.b16 %v909, %v908
      %v922 = vpack.c.b16 %v911, %v910
      %v923 = vpack.c.b16 %v913, %v912
      %v924 = vpack.c.b16 %v915, %v914
      %v925 = vpack.c.b16 %v917, %v916
      %934 = vmatprep.subr.bf16.mxu0 0
      %935 = vmatpush1.bf16.msra.mxu0 %v925
      %936 = vmatprep.subr.bf16.mxu0 0
      %937 = vmatpush1.bf16.msra.mxu0 %v924
      %938 = vmatprep.subr.bf16.mxu0 0
      %939 = vmatpush1.bf16.msra.mxu0 %v923
      %940 = vmatprep.subr.bf16.mxu0 0
      %941 = vmatpush1.bf16.msra.mxu0 %v922
      %942 = vmatprep.subr.bf16.mxu0 0
      %943 = vmatpush1.bf16.msra.mxu0 %v921
      %944 = vmatprep.subr.bf16.mxu0 0
      %945 = vmatpush1.bf16.msra.mxu0 %v920
      %946 = vmatprep.subr.bf16.mxu0 0
      %947 = vmatpush1.bf16.msra.mxu0 %v919
      %948 = vmatprep.subr.bf16.mxu0 0
      %949 = vmatpush1.bf16.msra.mxu0 %v918
      %950 = vmatprep.subr.bf16.mxu0 0
      %951 = vmatpush2.bf16.msra.mxu0 0
      %952 = vmatprep.subr.bf16.mxu0 0
      %953 = vmatpush2.bf16.msra.mxu0 0
      %954 = vmatprep.subr.bf16.mxu0 0
      %955 = vmatpush2.bf16.msra.mxu0 0
      %956 = vmatprep.subr.bf16.mxu0 0
      %957 = vmatpush2.bf16.msra.mxu0 0
      %958 = vmatprep.subr.bf16.mxu0 0
      %959 = vmatpush2.bf16.msra.mxu0 0
      %960 = vmatprep.subr.bf16.mxu0 0
      %961 = vmatpush2.bf16.msra.mxu0 0
      %962 = vmatprep.subr.bf16.mxu0 0
      %963 = vmatpush2.bf16.msra.mxu0 0
      %964 = vmatprep.subr.bf16.mxu0 0
      %965 = vmatpush2.bf16.msra.mxu0 0
      %966 = vmatprep.mubr.bf16.mxu0 0
      %967 = vmatmul.mubr.bf16.gmra.mxu0 %v884
      %v968 = vpop.f32.mrf.mxu0
      %v969 = vadd.f32 0.0, %v968
      %v970 = vpop.f32.mrf.mxu0
      %v971 = vpop.f32.mrf.mxu0
      %v972 = vadd.f32 0.0, %v971
      %v973 = vpop.f32.mrf.mxu0
      %974 = vdwg.mxu0
      %v975 = vadd.f32 %v852, %v969
      %v976 = vadd.f32 %v853, %v972
      %v977 = vld [vmem:[%s490] sm:$0xc]
      %v978 = vld [vmem:[%s490 + $0x4] sm:$0xf]
      %v979 = vld [vmem:[%s490 + $0x8] sm:$0x3]
      %s980 = scalar_lea.vmem %s1, 448
      %v981 = vld [vmem:[%s980] sm:$0xf]
      %v982 = vld [vmem:[%s980 + $0x4] sm:$0xf]
      %v983 = vld [vmem:[%s980 + $0x8] sm:$0xf]
      %v984 = vld [vmem:[%s980 + $0xc] sm:$0xf]
      %v985 = vld [vmem:[%s980 + $0x10] sm:$0xf]
      %v986 = vld [vmem:[%s980 + $0x14] sm:$0xf]
      %v987 = vld [vmem:[%s980 + $0x18] sm:$0xf]
      %v988 = vld [vmem:[%s980 + $0x1c] sm:$0xf]
      %v989 = vld [vmem:[%s980 + $0x20] sm:$0xf]
      %v990 = vld [vmem:[%s980 + $0x24] sm:$0xf]
      %v991 = vld [vmem:[%s980 + $0x28] sm:$0xf]
      %v992 = vld [vmem:[%s980 + $0x2c] sm:$0xf]
      %v993 = vld [vmem:[%s980 + $0x30] sm:$0xf]
      %v994 = vld [vmem:[%s980 + $0x34] sm:$0xf]
      %v995 = vld [vmem:[%s980 + $0x38] sm:$0xf]
      %v996 = vld [vmem:[%s980 + $0x3c] sm:$0xf]
      %v1000 = vunpack.c.l.b16 %v977
      %v1001 = vunpack.c.l.b16 %v978
      %v1002 = vunpack.c.l.b16 %v979
      %v1003 = vpack.c.b16 %v1001, %v1000
      %v1004 = vpack.c.b16 %v1002, %v1002
      %v1005 = vrot.slane %v1003, 2
      %v1006 = vrot.slane %v1004, 2
      %v1007 = vsel %vm635, %v1005, %v1006
      %v1025 = vunpack.c.l.b16 %v981
      %v1026 = vunpack.c.l.b16 %v982
      %v1027 = vunpack.c.l.b16 %v983
      %v1028 = vunpack.c.l.b16 %v984
      %v1029 = vunpack.c.l.b16 %v985
      %v1030 = vunpack.c.l.b16 %v986
      %v1031 = vunpack.c.l.b16 %v987
      %v1032 = vunpack.c.l.b16 %v988
      %v1033 = vunpack.c.l.b16 %v989
      %v1034 = vunpack.c.l.b16 %v990
      %v1035 = vunpack.c.l.b16 %v991
      %v1036 = vunpack.c.l.b16 %v992
      %v1037 = vunpack.c.l.b16 %v993
      %v1038 = vunpack.c.l.b16 %v994
      %v1039 = vunpack.c.l.b16 %v995
      %v1040 = vunpack.c.l.b16 %v996
      %v1041 = vpack.c.b16 %v1026, %v1025
      %v1042 = vpack.c.b16 %v1028, %v1027
      %v1043 = vpack.c.b16 %v1030, %v1029
      %v1044 = vpack.c.b16 %v1032, %v1031
      %v1045 = vpack.c.b16 %v1034, %v1033
      %v1046 = vpack.c.b16 %v1036, %v1035
      %v1047 = vpack.c.b16 %v1038, %v1037
      %v1048 = vpack.c.b16 %v1040, %v1039
      %1057 = vmatprep.subr.bf16.mxu0 0
      %1058 = vmatpush1.bf16.msra.mxu0 %v1048
      %1059 = vmatprep.subr.bf16.mxu0 0
      %1060 = vmatpush1.bf16.msra.mxu0 %v1047
      %1061 = vmatprep.subr.bf16.mxu0 0
      %1062 = vmatpush1.bf16.msra.mxu0 %v1046
      %1063 = vmatprep.subr.bf16.mxu0 0
      %1064 = vmatpush1.bf16.msra.mxu0 %v1045
      %1065 = vmatprep.subr.bf16.mxu0 0
      %1066 = vmatpush1.bf16.msra.mxu0 %v1044
      %1067 = vmatprep.subr.bf16.mxu0 0
      %1068 = vmatpush1.bf16.msra.mxu0 %v1043
      %1069 = vmatprep.subr.bf16.mxu0 0
      %1070 = vmatpush1.bf16.msra.mxu0 %v1042
      %1071 = vmatprep.subr.bf16.mxu0 0
      %1072 = vmatpush1.bf16.msra.mxu0 %v1041
      %1073 = vmatprep.subr.bf16.mxu0 0
      %1074 = vmatpush2.bf16.msra.mxu0 0
      %1075 = vmatprep.subr.bf16.mxu0 0
      %1076 = vmatpush2.bf16.msra.mxu0 0
      %1077 = vmatprep.subr.bf16.mxu0 0
      %1078 = vmatpush2.bf16.msra.mxu0 0
      %1079 = vmatprep.subr.bf16.mxu0 0
      %1080 = vmatpush2.bf16.msra.mxu0 0
      %1081 = vmatprep.subr.bf16.mxu0 0
      %1082 = vmatpush2.bf16.msra.mxu0 0
      %1083 = vmatprep.subr.bf16.mxu0 0
      %1084 = vmatpush2.bf16.msra.mxu0 0
      %1085 = vmatprep.subr.bf16.mxu0 0
      %1086 = vmatpush2.bf16.msra.mxu0 0
      %1087 = vmatprep.subr.bf16.mxu0 0
      %1088 = vmatpush2.bf16.msra.mxu0 0
      %1089 = vmatprep.mubr.bf16.mxu0 0
      %1090 = vmatmul.mubr.bf16.gmra.mxu0 %v1007
      %v1091 = vpop.f32.mrf.mxu0
      %v1092 = vadd.f32 0.0, %v1091
      %v1093 = vpop.f32.mrf.mxu0
      %v1094 = vpop.f32.mrf.mxu0
      %v1095 = vadd.f32 0.0, %v1094
      %v1096 = vpop.f32.mrf.mxu0
      %1097 = vdwg.mxu0
      %v1098 = vadd.f32 %v975, %v1092
      %v1099 = vadd.f32 %v976, %v1095
      %v1100 = vadd.f32 %v1098, %v1099
      %v1101 = vrot.slane %v1100, 4
      %v1102 = vadd.f32 %v1100, %v1101
      %v1103 = vrot.slane %v1102, 2
      %v1104 = vadd.f32 %v1102, %v1103
      %v1105 = vrot.slane %v1104, 1
      %v1106 = vadd.f32 %v1104, %v1105
      %v1107 = vrcp.pop 16.0
      %v1108 = vmul.f32 %v1106, %v1107
      %v1109 = vsub.f32 %v1098, %v1108
      %v1110 = vsub.f32 %v1099, %v1108
      %v1111 = vmul.f32 %v1109, %v1109
      %v1112 = vmul.f32 %v1110, %v1110
      %v1113 = vadd.f32 %v1111, %v1112
      %v1114 = vrot.slane %v1113, 4
      %v1115 = vadd.f32 %v1113, %v1114
      %v1116 = vrot.slane %v1115, 2
      %v1117 = vadd.f32 %v1115, %v1116
      %v1118 = vrot.slane %v1117, 1
      %v1119 = vadd.f32 %v1117, %v1118
      %v1120 = vmul.f32 %v1119, %v1107
      %v1121 = vadd.f32 %v1120, 1e-05
      %v1122 = vrsqrt.pop %v1121
      %v1123 = vmul.f32 %v1109, %v1122
      %v1124 = vmul.f32 %v1110, %v1122
      %v1125 = vmul.f32 %v1123, 0.2
      %v1126 = vmul.f32 %v1124, 0.2
      %v1127 = vmax.f32 %v1123, %v1125
      %v1128 = vmax.f32 %v1124, %v1126
      %v1129 = vpack.c.bf16 %v1128, %v1127
      %v1131 = vunpack.c.l.b16 %v1129
      %v1132 = vunpack.c.h.b16 %v1129
      %v1133 = vpack.c.b16 %v1131, %v1131
      %v1134 = vpack.c.b16 %v1132, %v1132
      %1137 = vst [vmem:[%s143] sm:$0xf] %v1133
      %1138 = vst [vmem:[%s143 + $0x4] sm:$0xf] %v1134
      %p1139 = scmp.lt.s32.totalorder %s13, 1
      %s1140 = scalar_select %p1139, %s13, 1
      %s1141 = smul.addr %s1140, 2
      %s1142 = smul.addr %s1141, 4
      %s1143 = scalar_lea.vmem %s2, %s1142
      // Predicated region
      $region29: #{discriminator_forward.6} parent=27 // pred_check
        %p1144 = pneg %p78
      $region30: #{discriminator_forward.6} parent=27 // pred_check_branch
        %1146 = sbr.rel (%p1144) target = $region32
      $region31: #{discriminator_forward.6} parent=27 // pred_region
        _
      $region32: #{discriminator_forward.6} parent=27 // pred_fallthru
        _
    $region28: #{discriminator_forward.6} parent=5 // pred_fallthru
      _
    %p1147 = scmp.le.s32.totalorder 2, %s8
    // Predicated region
    $region33: #{discriminator_forward.6} parent=5 // pred_check
      %p1148 = pneg %p1147
    $region34: #{discriminator_forward.6} parent=5 // pred_check_branch
      %1150 = sbr.rel (%p1148) target = $region36
    $region35: #{discriminator_forward.6} parent=5 // pred_region
      %s1151 = ssub.s32 %s8, 2
      // Predicated region
      $region37: #{discriminator_forward.6} parent=35 // pred_check
        %p1152 = pneg %p84
      $region38: #{discriminator_forward.6} parent=35 // pred_check_branch
        %1154 = sbr.rel (%p1152) target = $region40
      $region39: #{discriminator_forward.6} parent=35 // pred_region
        %p1155 = scmp.lt.s32.totalorder %s14, 1
        %s1156 = scalar_select %p1155, %s14, 1
        %s1157 = smul.addr %s1156, 2
        %s1158 = smul.addr %s1157, 4
        %s1159 = scalar_lea.vmem %s2, %s1158
      $region40: #{discriminator_forward.6} parent=35 // pred_fallthru
        _
    $region36: #{discriminator_forward.6} parent=5 // pred_fallthru
      _
  $region6: #{discriminator_forward.6} parent=0 // loop_footer
    %s12 = sadd.s32 1, %s8
  $region7: #{discriminator_forward.6} parent=0 // loop_footer_branch
    %7 = sbr.rel target = $region3
  $region8: #{discriminator_forward.6} parent=0 // loop_exit
    _

// kernel: discriminator_forward.7
$region0: #{discriminator_forward.7}
  #allocation0 [shape = 'u32[]', space=smem, size = 0x4, offset = 0x4, fixed_abs, tag = 'smem constant byte address 0x4 - core index']
  #allocation1 [shape = 'u32[144,128]{1,0:T(1,128)}', space=vmem, size = 0x12000, scoped, tag = 'internal scratch']
  %s0 = inlined_call_operand.vmem [shape: bf16[2,4,6,256], index: 0, kind: input, shape index: {}]
  %s1 = inlined_call_operand.vmem [shape: bf16[8,256,256], index: 1, kind: input, shape index: {}]
  %s2 = inlined_call_operand.vmem [shape: bf16[2,4,256], index: 2, kind: output, shape index: {}]
  %s3 = sld [smem:[#allocation0]]
  $region41: #{discriminator_forward.7} parent=0
    _
  %s5 = ssub.s32 1, %s3
  %s6 = scalar_select 0, %s5, %s3
  loop: start=0, step=1, limit=4
  $region2: #{discriminator_forward.7} parent=0 // loop_pre_header
    _
  $region3: #{discriminator_forward.7} parent=0 // loop_header
    %s8 = sphi 0, %s12
    %p9 = scmp.ge.s32.totalorder %s8, 4
    %s18 = sphi 0, %s20
    %s21 = sphi 0, %s18
    %s22 = sphi 0, %s21
    %s38 = sphi 0, %s22
    %s42 = sphi 0, %s42
    %s44 = sphi 0, %s42
    %s45 = sphi 0, %s44
    %s59 = sphi 0, %s45
    %s65 = sphi 0, %s67
    %s68 = sphi 0, %s65
    %s69 = sphi 0, %s68
    %s85 = sphi 0, %s69
  $region4: #{discriminator_forward.7} parent=0 // loop_header_branch
    %11 = sbr.rel (%p9) target = $region8
  $region5: #{discriminator_forward.7} parent=0 // loop_body
    %s13 = ssub.s32 %s8, 1
    %s14 = ssub.s32 %s8, 2
    %s15 = sadd.s32 %s8, 1
    %s16 = ssub.s32 %s8, %s15
    %p17 = scmp.eq.s32.totalorder %s16, 0
    %s19 = sadd.s32 %s18, 1
    %s20 = scalar_select %p17, %s18, %s19
    %p23 = pneg %p17
    %p24 = scmp.eq.s32.totalorder %s8, 1
    %p25 = por %p23, %p24
    %p26 = scmp.ne.s32.totalorder %s18, %s21
    %p27 = scmp.eq.s32.totalorder %s8, 0
    %p28 = por %p26, %p27
    %p29 = scmp.ne.s32.totalorder %s18, %s21
    %p30 = scmp.eq.s32.totalorder %s13, 1
    %p31 = por %p29, %p30
    %p32 = scmp.ne.s32.totalorder %s21, %s22
    %p33 = scmp.eq.s32.totalorder %s13, 0
    %p34 = por %p32, %p33
    %p35 = scmp.ne.s32.totalorder %s21, %s22
    %p36 = scmp.eq.s32.totalorder %s14, 1
    %p37 = por %p35, %p36
    %p39 = scmp.ne.s32.totalorder %s22, %s38
    %p40 = scmp.eq.s32.totalorder %s14, 0
    %p41 = por %p39, %p40
    %s43 = sadd.s32 %s42, 1
    %p46 = scmp.eq.s32.totalorder %s8, 1
    %p47 = scmp.ne.s32.totalorder %s42, %s44
    %p48 = scmp.eq.s32.totalorder %s8, 0
    %p49 = por %p47, %p48
    %p50 = scmp.ne.s32.totalorder %s42, %s44
    %p51 = scmp.eq.s32.totalorder %s13, 1
    %p52 = por %p50, %p51
    %p53 = scmp.ne.s32.totalorder %s44, %s45
    %p54 = scmp.eq.s32.totalorder %s13, 0
    %p55 = por %p53, %p54
    %p56 = scmp.ne.s32.totalorder %s44, %s45
    %p57 = scmp.eq.s32.totalorder %s14, 1
    %p58 = por %p56, %p57
    %p60 = scmp.ne.s32.totalorder %s45, %s59
    %p61 = scmp.eq.s32.totalorder %s14, 0
    %p62 = por %p60, %p61
    %s63 = ssub.s32 %s8, %s15
    %p64 = scmp.eq.s32.totalorder %s63, 0
    %s66 = sadd.s32 %s65, 1
    %s67 = scalar_select %p64, %s65, %s66
    %p70 = pneg %p64
    %p71 = scmp.eq.s32.totalorder %s8, 1
    %p72 = por %p70, %p71
    %p73 = scmp.ne.s32.totalorder %s65, %s68
    %p74 = scmp.eq.s32.totalorder %s8, 0
    %p75 = por %p73, %p74
    %p76 = scmp.ne.s32.totalorder %s65, %s68
    %p77 = scmp.eq.s32.totalorder %s13, 1
    %p78 = por %p76, %p77
    %p79 = scmp.ne.s32.totalorder %s68, %s69
    %p80 = scmp.eq.s32.totalorder %s13, 0
    %p81 = por %p79, %p80
    %p82 = scmp.ne.s32.totalorder %s68, %s69
    %p83 = scmp.eq.s32.totalorder %s14, 1
    %p84 = por %p82, %p83
    %p86 = scmp.ne.s32.totalorder %s69, %s85
    %p87 = scmp.eq.s32.totalorder %s14, 0
    %p88 = por %p86, %p87
    %p89 = scmp.le.s32.totalorder 1, %s8
    %p90 = scmp.lt.s32.totalorder %s8, 3
    %p91 = pnand %p89, %p90
    %p92 = pneg %p91
    // Predicated region
    $region9: #{discriminator_forward.7} parent=5 // pred_check
      _
    $region10: #{discriminator_forward.7} parent=5 // pred_check_branch
      %94 = sbr.rel (%p91) target = $region12
    $region11: #{discriminator_forward.7} parent=5 // pred_region
      %s95 = ssub.s32 %s8, 1
      // Predicated region
      $region13: #{discriminator_forward.7} parent=11 // pred_check
        %p96 = pneg %p55
      $region14: #{discriminator_forward.7} parent=11 // pred_check_branch
        %98 = sbr.rel (%p96) target = $region16
      $region15: #{discriminator_forward.7} parent=11 // pred_region
        _
      $region16: #{discriminator_forward.7} parent=11 // pred_fallthru
        _
    $region12: #{discriminator_forward.7} parent=5 // pred_fallthru
      _
    %p99 = scmp.lt.s32.totalorder %s8, 2
    // Predicated region
    $region17: #{discriminator_forward.7} parent=5 // pred_check
      %p100 = pneg %p99
    $region18: #{discriminator_forward.7} parent=5 // pred_check_branch
      %102 = sbr.rel (%p100) target = $region20
    $region19: #{discriminator_forward.7} parent=5 // pred_region
      // Predicated region
      $region21: #{discriminator_forward.7} parent=19 // pred_check
        %p103 = pneg %p28
      $region22: #{discriminator_forward.7} parent=19 // pred_check_branch
        %105 = sbr.rel (%p103) target = $region24
      $region23: #{discriminator_forward.7} parent=19 // pred_region
        %p106 = scmp.lt.s32.totalorder %s8, 1
        %s107 = scalar_select %p106, %s8, 1
        %s108 = smul.addr %s107, 8
        %s109 = smul.addr %s108, 4
        %s110 = scalar_lea.vmem %s0, %s109
      $region24: #{discriminator_forward.7} parent=19 // pred_fallthru
        _
    $region20: #{discriminator_forward.7} parent=5 // pred_fallthru
      _
    %p111 = scmp.le.s32.totalorder 1, %s8
    %p112 = scmp.lt.s32.totalorder %s8, 3
    %p113 = pnand %p111, %p112
    %p114 = pneg %p113
    // Predicated region
    $region25: #{discriminator_forward.7} parent=5 // pred_check
      _
    $region26: #{discriminator_forward.7} parent=5 // pred_check_branch
      %116 = sbr.rel (%p113) target = $region28
    $region27: #{discriminator_forward.7} parent=5 // pred_region
      %s117 = ssub.s32 %s8, 1
      %p118 = scmp.lt.s32.totalorder %s13, 1
      %s119 = scalar_select %p118, %s13, 1
      %s120 = smul.addr %s119, 8
      %s121 = smul.addr %s120, 4
      %s122 = scalar_lea.vmem %s0, %s121
      %p123 = pneg %p34
      %p124 = pneg %p31
      %p125 = pneg %p55
      %p126 = pneg %p52
      %p127 = pneg %p81
      %p128 = pneg %p78
      %p129 = scmp.lt.s32.totalorder %s13, 1
      %s130 = scalar_select %p129, %s13, 1
      %s131 = smul.addr %s130, 2
      %s132 = smul.addr %s131, 2
      %s133 = scalar_lea.vmem %s2, %s132
      %p134 = scmp.lt.s32.totalorder %s13, 1
      %s135 = scalar_select %p134, %s13, 1
      %s136 = smul.addr %s135, 8
      %s137 = smul.addr %s136, 4
      %s138 = scalar_lea.vmem %s0, %s137
      %p139 = scmp.lt.s32.totalorder %s13, 1
      %s140 = scalar_select %p139, %s13, 1
      %s141 = smul.addr %s140, 2
      %s142 = smul.addr %s141, 2
      %s143 = scalar_lea.vmem %s2, %s142
      %v144 = vld [vmem:[%s138] sm:$0x33]
      %v145 = vld [vmem:[%s1] sm:$0xff]
      %v146 = vld [vmem:[%s1 + $0x8] sm:$0xff]
      %v147 = vld [vmem:[%s1 + $0x10] sm:$0xff]
      %v148 = vld [vmem:[%s1 + $0x18] sm:$0xff]
      %v149 = vld [vmem:[%s1 + $0x20] sm:$0xff]
      %v150 = vld [vmem:[%s1 + $0x28] sm:$0xff]
      %v151 = vld [vmem:[%s1 + $0x30] sm:$0xff]
      %v152 = vld [vmem:[%s1 + $0x38] sm:$0xff]
      %v153 = vld [vmem:[%s1 + $0x40] sm:$0xff]
      %v154 = vld [vmem:[%s1 + $0x48] sm:$0xff]
      %v155 = vld [vmem:[%s1 + $0x50] sm:$0xff]
      %v156 = vld [vmem:[%s1 + $0x58] sm:$0xff]
      %v157 = vld [vmem:[%s1 + $0x60] sm:$0xff]
      %v158 = vld [vmem:[%s1 + $0x68] sm:$0xff]
      %v159 = vld [vmem:[%s1 + $0x70] sm:$0xff]
      %v160 = vld [vmem:[%s1 + $0x78] sm:$0xff]
      %v161 = vld [vmem:[%s1 + $0x80] sm:$0xff]
      %v162 = vld [vmem:[%s1 + $0x88] sm:$0xff]
      %v163 = vld [vmem:[%s1 + $0x90] sm:$0xff]
      %v164 = vld [vmem:[%s1 + $0x98] sm:$0xff]
      %v165 = vld [vmem:[%s1 + $0xa0] sm:$0xff]
      %v166 = vld [vmem:[%s1 + $0xa8] sm:$0xff]
      %v167 = vld [vmem:[%s1 + $0xb0] sm:$0xff]
      %v168 = vld [vmem:[%s1 + $0xb8] sm:$0xff]
      %v169 = vld [vmem:[%s1 + $0xc0] sm:$0xff]
      %v170 = vld [vmem:[%s1 + $0xc8] sm:$0xff]
      %v171 = vld [vmem:[%s1 + $0xd0] sm:$0xff]
      %v172 = vld [vmem:[%s1 + $0xd8] sm:$0xff]
      %v173 = vld [vmem:[%s1 + $0xe0] sm:$0xff]
      %v174 = vld [vmem:[%s1 + $0xe8] sm:$0xff]
      %v175 = vld [vmem:[%s1 + $0xf0] sm:$0xff]
      %v176 = vld [vmem:[%s1 + $0xf8] sm:$0xff]
      %s177 = scalar_lea.vmem %s138, 8
      %v178 = vld [vmem:[%s177] sm:$0x33]
      %s179 = scalar_lea.vmem %s1, 256
      %v180 = vld [vmem:[%s179] sm:$0xff]
      %v181 = vld [vmem:[%s179 + $0x8] sm:$0xff]
      %v182 = vld [vmem:[%s179 + $0x10] sm:$0xff]
      %v183 = vld [vmem:[%s179 + $0x18] sm:$0xff]
      %v184 = vld [vmem:[%s179 + $0x20] sm:$0xff]
      %v185 = vld [vmem:[%s179 + $0x28] sm:$0xff]
      %v186 = vld [vmem:[%s179 + $0x30] sm:$0xff]
      %v187 = vld [vmem:[%s179 + $0x38] sm:$0xff]
      %v188 = vld [vmem:[%s179 + $0x40] sm:$0xff]
      %v189 = vld [vmem:[%s179 + $0x48] sm:$0xff]
      %v190 = vld [vmem:[%s179 + $0x50] sm:$0xff]
      %v191 = vld [vmem:[%s179 + $0x58] sm:$0xff]
      %v192 = vld [vmem:[%s179 + $0x60] sm:$0xff]
      %v193 = vld [vmem:[%s179 + $0x68] sm:$0xff]
      %v194 = vld [vmem:[%s179 + $0x70] sm:$0xff]
      %v195 = vld [vmem:[%s179 + $0x78] sm:$0xff]
      %v196 = vld [vmem:[%s179 + $0x80] sm:$0xff]
      %v197 = vld [vmem:[%s179 + $0x88] sm:$0xff]
      %v198 = vld [vmem:[%s179 + $0x90] sm:$0xff]
      %v199 = vld [vmem:[%s179 + $0x98] sm:$0xff]
      %v200 = vld [vmem:[%s179 + $0xa0] sm:$0xff]
      %v201 = vld [vmem:[%s179 + $0xa8] sm:$0xff]
      %v202 = vld [vmem:[%s179 + $0xb0] sm:$0xff]
      %v203 = vld [vmem:[%s179 + $0xb8] sm:$0xff]
      %v204 = vld [vmem:[%s179 + $0xc0] sm:$0xff]
      %v205 = vld [vmem:[%s179 + $0xc8] sm:$0xff]
      %v206 = vld [vmem:[%s179 + $0xd0] sm:$0xff]
      %v207 = vld [vmem:[%s179 + $0xd8] sm:$0xff]
      %v208 = vld [vmem:[%s179 + $0xe0] sm:$0xff]
      %v209 = vld [vmem:[%s179 + $0xe8] sm:$0xff]
      %v210 = vld [vmem:[%s179 + $0xf0] sm:$0xff]
      %v211 = vld [vmem:[%s179 + $0xf8] sm:$0xff]
      %v213 = vunpack.c.l.b16 %v178
      %v214 = vunpack.c.h.b16 %v178
      %v215 = vpack.c.b16 %v213, %v213
      %v216 = vpack.c.b16 %v214, %v214
      %v251 = vunpack.c.l.b16 %v180
      %v252 = vunpack.c.h.b16 %v180
      %v253 = vunpack.c.l.b16 %v181
      %v254 = vunpack.c.h.b16 %v181
      %v255 = vunpack.c.l.b16 %v182
      %v256 = vunpack.c.h.b16 %v182
      %v257 = vunpack.c.l.b16 %v183
      %v258 = vunpack.c.h.b16 %v183
      %v259 = vunpack.c.l.b16 %v184
      %v260 = vunpack.c.h.b16 %v184
      %v261 = vunpack.c.l.b16 %v185
      %v262 = vunpack.c.h.b16 %v185
      %v263 = vunpack.c.l.b16 %v186
      %v264 = vunpack.c.h.b16 %v186
      %v265 = vunpack.c.l.b16 %v187
      %v266 = vunpack.c.h.b16 %v187
      %v267 = vunpack.c.l.b16 %v188
      %v268 = vunpack.c.h.b16 %v188
      %v269 = vunpack.c.l.b16 %v189
      %v270 = vunpack.c.h.b16 %v189
      %v271 = vunpack.c.l.b16 %v190
      %v272 = vunpack.c.h.b16 %v190
      %v273 = vunpack.c.l.b16 %v191
      %v274 = vunpack.c.h.b16 %v191
      %v275 = vunpack.c.l.b16 %v192
      %v276 = vunpack.c.h.b16 %v192
      %v277 = vunpack.c.l.b16 %v193
      %v278 = vunpack.c.h.b16 %v193
      %v279 = vunpack.c.l.b16 %v194
      %v280 = vunpack.c.h.b16 %v194
      %v281 = vunpack.c.l.b16 %v195
      %v282 = vunpack.c.h.b16 %v195
      %v283 = vunpack.c.l.b16 %v196
      %v284 = vunpack.c.h.b16 %v196
      %v285 = vunpack.c.l.b16 %v197
      %v286 = vunpack.c.h.b16 %v197
      %v287 = vunpack.c.l.b16 %v198
      %v288 = vunpack.c.h.b16 %v198
      %v289 = vunpack.c.l.b16 %v199
      %v290 = vunpack.c.h.b16 %v199
      %v291 = vunpack.c.l.b16 %v200
      %v292 = vunpack.c.h.b16 %v200
      %v293 = vunpack.c.l.b16 %v201
      %v294 = vunpack.c.h.b16 %v201
      %v295 = vunpack.c.l.b16 %v202
      %v296 = vunpack.c.h.b16 %v202
      %v297 = vunpack.c.l.b16 %v203
      %v298 = vunpack.c.h.b16 %v203
      %v299 = vunpack.c.l.b16 %v204
      %v300 = vunpack.c.h.b16 %v204
      %v301 = vunpack.c.l.b16 %v205
      %v302 = vunpack.c.h.b16 %v205
      %v303 = vunpack.c.l.b16 %v206
      %v304 = vunpack.c.h.b16 %v206
      %v305 = vunpack.c.l.b16 %v207
      %v306 = vunpack.c.h.b16 %v207
      %v307 = vunpack.c.l.b16 %v208
      %v308 = vunpack.c.h.b16 %v208
      %v309 = vunpack.c.l.b16 %v209
      %v310 = vunpack.c.h.b16 %v209
      %v311 = vunpack.c.l.b16 %v210
      %v312 = vunpack.c.h.b16 %v210
      %v313 = vunpack.c.l.b16 %v211
      %v314 = vunpack.c.h.b16 %v211
      %v315 = vpack.c.b16 %v253, %v251
      %v316 = vpack.c.b16 %v254, %v252
      %v317 = vpack.c.b16 %v257, %v255
      %v318 = vpack.c.b16 %v258, %v256
      %v319 = vpack.c.b16 %v261, %v259
      %v320 = vpack.c.b16 %v262, %v260
      %v321 = vpack.c.b16 %v265, %v263
      %v322 = vpack.c.b16 %v266, %v264
      %v323 = vpack.c.b16 %v269, %v267
      %v324 = vpack.c.b16 %v270, %v268
      %v325 = vpack.c.b16 %v273, %v271
      %v326 = vpack.c.b16 %v274, %v272
      %v327 = vpack.c.b16 %v277, %v275
      %v328 = vpack.c.b16 %v278, %v276
      %v329 = vpack.c.b16 %v281, %v279
      %v330 = vpack.c.b16 %v282, %v280
      %v331 = vpack.c.b16 %v285, %v283
      %v332 = vpack.c.b16 %v286, %v284
      %v333 = vpack.c.b16 %v289, %v287
      %v334 = vpack.c.b16 %v290, %v288
      %v335 = vpack.c.b16 %v293, %v291
      %v336 = vpack.c.b16 %v294, %v292
      %v337 = vpack.c.b16 %v297, %v295
      %v338 = vpack.c.b16 %v298, %v296
      %v339 = vpack.c.b16 %v301, %v299
      %v340 = vpack.c.b16 %v302, %v300
      %v341 = vpack.c.b16 %v305, %v303
      %v342 = vpack.c.b16 %v306, %v304
      %v343 = vpack.c.b16 %v309, %v307
      %v344 = vpack.c.b16 %v310, %v308
      %v345 = vpack.c.b16 %v313, %v311
      %v346 = vpack.c.b16 %v314, %v312
      %379 = vmatprep.subr.bf16.mxu0 %v330
      %380 = vmatpush1.bf16.msra.mxu0 %v329
      %381 = vmatprep.subr.bf16.mxu0 %v328
      %382 = vmatpush1.bf16.msra.mxu0 %v327
      %383 = vmatprep.subr.bf16.mxu0 %v326
      %384 = vmatpush1.bf16.msra.mxu0 %v325
      %385 = vmatprep.subr.bf16.mxu0 %v324
      %386 = vmatpush1.bf16.msra.mxu0 %v323
      %387 = vmatprep.subr.bf16.mxu0 %v322
      %388 = vmatpush1.bf16.msra.mxu0 %v321
      %389 = vmatprep.subr.bf16.mxu0 %v320
      %390 = vmatpush1.bf16.msra.mxu0 %v319
      %391 = vmatprep.subr.bf16.mxu0 %v318
      %392 = vmatpush1.bf16.msra.mxu0 %v317
      %393 = vmatprep.subr.bf16.mxu0 %v316
      %394 = vmatpush1.bf16.msra.mxu0 %v315
      %395 = vmatprep.subr.bf16.mxu0 %v346
      %396 = vmatpush2.bf16.msra.mxu0 %v345
      %397 = vmatprep.subr.bf16.mxu0 %v344
      %398 = vmatpush2.bf16.msra.mxu0 %v343
      %399 = vmatprep.subr.bf16.mxu0 %v342
      %400 = vmatpush2.bf16.msra.mxu0 %v341
      %401 = vmatprep.subr.bf16.mxu0 %v340
      %402 = vmatpush2.bf16.msra.mxu0 %v339
      %403 = vmatprep.subr.bf16.mxu0 %v338
      %404 = vmatpush2.bf16.msra.mxu0 %v337
      %405 = vmatprep.subr.bf16.mxu0 %v336
      %406 = vmatpush2.bf16.msra.mxu0 %v335
      %407 = vmatprep.subr.bf16.mxu0 %v334
      %408 = vmatpush2.bf16.msra.mxu0 %v333
      %409 = vmatprep.subr.bf16.mxu0 %v332
      %410 = vmatpush2.bf16.msra.mxu0 %v331
      %411 = vmatprep.mubr.bf16.mxu0 %v216
      %412 = vmatmul.mubr.bf16.gmra.mxu0 %v215
      %v413 = vpop.f32.mrf.mxu0
      %v414 = vadd.f32 0.0, %v413
      %v415 = vpop.f32.mrf.mxu0
      %v416 = vadd.f32 0.0, %v415
      %v417 = vpop.f32.mrf.mxu0
      %v418 = vpop.f32.mrf.mxu0
      %419 = vdwg.mxu0
      %v421 = vunpack.c.l.b16 %v144
      %v422 = vunpack.c.h.b16 %v144
      %v423 = vpack.c.b16 %v421, %v421
      %v424 = vpack.c.b16 %v422, %v422
      %v459 = vunpack.c.l.b16 %v145
      %v460 = vunpack.c.h.b16 %v145
      %v461 = vunpack.c.l.b16 %v146
      %v462 = vunpack.c.h.b16 %v146
      %v463 = vunpack.c.l.b16 %v147
      %v464 = vunpack.c.h.b16 %v147
      %v465 = vunpack.c.l.b16 %v148
      %v466 = vunpack.c.h.b16 %v148
      %v467 = vunpack.c.l.b16 %v149
      %v468 = vunpack.c.h.b16 %v149
      %v469 = vunpack.c.l.b16 %v150
      %v470 = vunpack.c.h.b16 %v150
      %v471 = vunpack.c.l.b16 %v151
      %v472 = vunpack.c.h.b16 %v151
      %v473 = vunpack.c.l.b16 %v152
      %v474 = vunpack.c.h.b16 %v152
      %v475 = vunpack.c.l.b16 %v153
      %v476 = vunpack.c.h.b16 %v153
      %v477 = vunpack.c.l.b16 %v154
      %v478 = vunpack.c.h.b16 %v154
      %v479 = vunpack.c.l.b16 %v155
      %v480 = vunpack.c.h.b16 %v155
      %v481 = vunpack.c.l.b16 %v156
      %v482 = vunpack.c.h.b16 %v156
      %v483 = vunpack.c.l.b16 %v157
      %v484 = vunpack.c.h.b16 %v157
      %v485 = vunpack.c.l.b16 %v158
      %v486 = vunpack.c.h.b16 %v158
      %v487 = vunpack.c.l.b16 %v159
      %v488 = vunpack.c.h.b16 %v159
      %v489 = vunpack.c.l.b16 %v160
      %v490 = vunpack.c.h.b16 %v160
      %v491 = vunpack.c.l.b16 %v161
      %v492 = vunpack.c.h.b16 %v161
      %v493 = vunpack.c.l.b16 %v162
      %v494 = vunpack.c.h.b16 %v162
      %v495 = vunpack.c.l.b16 %v163
      %v496 = vunpack.c.h.b16 %v163
      %v497 = vunpack.c.l.b16 %v164
      %v498 = vunpack.c.h.b16 %v164
      %v499 = vunpack.c.l.b16 %v165
      %v500 = vunpack.c.h.b16 %v165
      %v501 = vunpack.c.l.b16 %v166
      %v502 = vunpack.c.h.b16 %v166
      %v503 = vunpack.c.l.b16 %v167
      %v504 = vunpack.c.h.b16 %v167
      %v505 = vunpack.c.l.b16 %v168
      %v506 = vunpack.c.h.b16 %v168
      %v507 = vunpack.c.l.b16 %v169
      %v508 = vunpack.c.h.b16 %v169
      %v509 = vunpack.c.l.b16 %v170
      %v510 = vunpack.c.h.b16 %v170
      %v511 = vunpack.c.l.b16 %v171
      %v512 = vunpack.c.h.b16 %v171
      %v513 = vunpack.c.l.b16 %v172
      %v514 = vunpack.c.h.b16 %v172
      %v515 = vunpack.c.l.b16 %v173
      %v516 = vunpack.c.h.b16 %v173
      %v517 = vunpack.c.l.b16 %v174
      %v518 = vunpack.c.h.b16 %v174
      %v519 = vunpack.c.l.b16 %v175
      %v520 = vunpack.c.h.b16 %v175
      %v521 = vunpack.c.l.b16 %v176
      %v522 = vunpack.c.h.b16 %v176
      %v523 = vpack.c.b16 %v461, %v459
      %v524 = vpack.c.b16 %v462, %v460
      %v525 = vpack.c.b16 %v465, %v463
      %v526 = vpack.c.b16 %v466, %v464
      %v527 = vpack.c.b16 %v469, %v467
      %v528 = vpack.c.b16 %v470, %v468
      %v529 = vpack.c.b16 %v473, %v471
      %v530 = vpack.c.b16 %v474, %v472
      %v531 = vpack.c.b16 %v477, %v475
      %v532 = vpack.c.b16 %v478, %v476
      %v533 = vpack.c.b16 %v481, %v479
      %v534 = vpack.c.b16 %v482, %v480
      %v535 = vpack.c.b16 %v485, %v483
      %v536 = vpack.c.b16 %v486, %v484
      %v537 = vpack.c.b16 %v489, %v487
      %v538 = vpack.c.b16 %v490, %v488
      %v539 = vpack.c.b16 %v493, %v491
      %v540 = vpack.c.b16 %v494, %v492
      %v541 = vpack.c.b16 %v497, %v495
      %v542 = vpack.c.b16 %v498, %v496
      %v543 = vpack.c.b16 %v501, %v499
      %v544 = vpack.c.b16 %v502, %v500
      %v545 = vpack.c.b16 %v505, %v503
      %v546 = vpack.c.b16 %v506, %v504
      %v547 = vpack.c.b16 %v509, %v507
      %v548 = vpack.c.b16 %v510, %v508
      %v549 = vpack.c.b16 %v513, %v511
      %v550 = vpack.c.b16 %v514, %v512
      %v551 = vpack.c.b16 %v517, %v515
      %v552 = vpack.c.b16 %v518, %v516
      %v553 = vpack.c.b16 %v521, %v519
      %v554 = vpack.c.b16 %v522, %v520
      %587 = vmatprep.subr.bf16.mxu0 %v538
      %588 = vmatpush1.bf16.msra.mxu0 %v537
      %589 = vmatprep.subr.bf16.mxu0 %v536
      %590 = vmatpush1.bf16.msra.mxu0 %v535
      %591 = vmatprep.subr.bf16.mxu0 %v534
      %592 = vmatpush1.bf16.msra.mxu0 %v533
      %593 = vmatprep.subr.bf16.mxu0 %v532
      %594 = vmatpush1.bf16.msra.mxu0 %v531
      %595 = vmatprep.subr.bf16.mxu0 %v530
      %596 = vmatpush1.bf16.msra.mxu0 %v529
      %597 = vmatprep.subr.bf16.mxu0 %v528
      %598 = vmatpush1.bf16.msra.mxu0 %v527
      %599 = vmatprep.subr.bf16.mxu0 %v526
      %600 = vmatpush1.bf16.msra.mxu0 %v525
      %601 = vmatprep.subr.bf16.mxu0 %v524
      %602 = vmatpush1.bf16.msra.mxu0 %v523
      %603 = vmatprep.subr.bf16.mxu0 %v554
      %604 = vmatpush2.bf16.msra.mxu0 %v553
      %605 = vmatprep.subr.bf16.mxu0 %v552
      %606 = vmatpush2.bf16.msra.mxu0 %v551
      %607 = vmatprep.subr.bf16.mxu0 %v550
      %608 = vmatpush2.bf16.msra.mxu0 %v549
      %609 = vmatprep.subr.bf16.mxu0 %v548
      %610 = vmatpush2.bf16.msra.mxu0 %v547
      %611 = vmatprep.subr.bf16.mxu0 %v546
      %612 = vmatpush2.bf16.msra.mxu0 %v545
      %613 = vmatprep.subr.bf16.mxu0 %v544
      %614 = vmatpush2.bf16.msra.mxu0 %v543
      %615 = vmatprep.subr.bf16.mxu0 %v542
      %616 = vmatpush2.bf16.msra.mxu0 %v541
      %617 = vmatprep.subr.bf16.mxu0 %v540
      %618 = vmatpush2.bf16.msra.mxu0 %v539
      %619 = vmatprep.mubr.bf16.mxu0 %v424
      %620 = vmatmul.mubr.bf16.gmra.mxu0 %v423
      %v621 = vpop.f32.mrf.mxu0
      %v622 = vadd.f32 %v414, %v621
      %v623 = vpop.f32.mrf.mxu0
      %v624 = vadd.f32 %v416, %v623
      %v625 = vpop.f32.mrf.mxu0
      %v626 = vpop.f32.mrf.mxu0
      %627 = vdwg.mxu0
      %s628 = scalar_lea.vmem %s138, 16
      %v629 = vld [vmem:[%s628] sm:$0x33]
      %s630 = scalar_lea.vmem %s1, 512
      %v631 = vld [vmem:[%s630] sm:$0xff]
      %v632 = vld [vmem:[%s630 + $0x8] sm:$0xff]
      %v633 = vld [vmem:[%s630 + $0x10] sm:$0xff]
      %v634 = vld [vmem:[%s630 + $0x18] sm:$0xff]
      %v635 = vld [vmem:[%s630 + $0x20] sm:$0xff]
      %v636 = vld [vmem:[%s630 + $0x28] sm:$0xff]
      %v637 = vld [vmem:[%s630 + $0x30] sm:$0xff]
      %v638 = vld [vmem:[%s630 + $0x38] sm:$0xff]
      %v639 = vld [vmem:[%s630 + $0x40] sm:$0xff]
      %v640 = vld [vmem:[%s630 + $0x48] sm:$0xff]
      %v641 = vld [vmem:[%s630 + $0x50] sm:$0xff]
      %v642 = vld [vmem:[%s630 + $0x58] sm:$0xff]
      %v643 = vld [vmem:[%s630 + $0x60] sm:$0xff]
      %v644 = vld [vmem:[%s630 + $0x68] sm:$0xff]
      %v645 = vld [vmem:[%s630 + $0x70] sm:$0xff]
      %v646 = vld [vmem:[%s630 + $0x78] sm:$0xff]
      %v647 = vld [vmem:[%s630 + $0x80] sm:$0xff]
      %v648 = vld [vmem:[%s630 + $0x88] sm:$0xff]
      %v649 = vld [vmem:[%s630 + $0x90] sm:$0xff]
      %v650 = vld [vmem:[%s630 + $0x98] sm:$0xff]
      %v651 = vld [vmem:[%s630 + $0xa0] sm:$0xff]
      %v652 = vld [vmem:[%s630 + $0xa8] sm:$0xff]
      %v653 = vld [vmem:[%s630 + $0xb0] sm:$0xff]
      %v654 = vld [vmem:[%s630 + $0xb8] sm:$0xff]
      %v655 = vld [vmem:[%s630 + $0xc0] sm:$0xff]
      %v656 = vld [vmem:[%s630 + $0xc8] sm:$0xff]
      %v657 = vld [vmem:[%s630 + $0xd0] sm:$0xff]
      %v658 = vld [vmem:[%s630 + $0xd8] sm:$0xff]
      %v659 = vld [vmem:[%s630 + $0xe0] sm:$0xff]
      %v660 = vld [vmem:[%s630 + $0xe8] sm:$0xff]
      %v661 = vld [vmem:[%s630 + $0xf0] sm:$0xff]
      %v662 = vld [vmem:[%s630 + $0xf8] sm:$0xff]
      %v664 = vunpack.c.l.b16 %v629
      %v665 = vunpack.c.h.b16 %v629
      %v666 = vpack.c.b16 %v664, %v664
      %v667 = vpack.c.b16 %v665, %v665
      %v702 = vunpack.c.l.b16 %v631
      %v703 = vunpack.c.h.b16 %v631
      %v704 = vunpack.c.l.b16 %v632
      %v705 = vunpack.c.h.b16 %v632
      %v706 = vunpack.c.l.b16 %v633
      %v707 = vunpack.c.h.b16 %v633
      %v708 = vunpack.c.l.b16 %v634
      %v709 = vunpack.c.h.b16 %v634
      %v710 = vunpack.c.l.b16 %v635
      %v711 = vunpack.c.h.b16 %v635
      %v712 = vunpack.c.l.b16 %v636
      %v713 = vunpack.c.h.b16 %v636
      %v714 = vunpack.c.l.b16 %v637
      %v715 = vunpack.c.h.b16 %v637
      %v716 = vunpack.c.l.b16 %v638
      %v717 = vunpack.c.h.b16 %v638
      %v718 = vunpack.c.l.b16 %v639
      %v719 = vunpack.c.h.b16 %v639
      %v720 = vunpack.c.l.b16 %v640
      %v721 = vunpack.c.h.b16 %v640
      %v722 = vunpack.c.l.b16 %v641
      %v723 = vunpack.c.h.b16 %v641
      %v724 = vunpack.c.l.b16 %v642
      %v725 = vunpack.c.h.b16 %v642
      %v726 = vunpack.c.l.b16 %v643
      %v727 = vunpack.c.h.b16 %v643
      %v728 = vunpack.c.l.b16 %v644
      %v729 = vunpack.c.h.b16 %v644
      %v730 = vunpack.c.l.b16 %v645
      %v731 = vunpack.c.h.b16 %v645
      %v732 = vunpack.c.l.b16 %v646
      %v733 = vunpack.c.h.b16 %v646
      %v734 = vunpack.c.l.b16 %v647
      %v735 = vunpack.c.h.b16 %v647
      %v736 = vunpack.c.l.b16 %v648
      %v737 = vunpack.c.h.b16 %v648
      %v738 = vunpack.c.l.b16 %v649
      %v739 = vunpack.c.h.b16 %v649
      %v740 = vunpack.c.l.b16 %v650
      %v741 = vunpack.c.h.b16 %v650
      %v742 = vunpack.c.l.b16 %v651
      %v743 = vunpack.c.h.b16 %v651
      %v744 = vunpack.c.l.b16 %v652
      %v745 = vunpack.c.h.b16 %v652
      %v746 = vunpack.c.l.b16 %v653
      %v747 = vunpack.c.h.b16 %v653
      %v748 = vunpack.c.l.b16 %v654
      %v749 = vunpack.c.h.b16 %v654
      %v750 = vunpack.c.l.b16 %v655
      %v751 = vunpack.c.h.b16 %v655
      %v752 = vunpack.c.l.b16 %v656
      %v753 = vunpack.c.h.b16 %v656
      %v754 = vunpack.c.l.b16 %v657
      %v755 = vunpack.c.h.b16 %v657
      %v756 = vunpack.c.l.b16 %v658
      %v757 = vunpack.c.h.b16 %v658
      %v758 = vunpack.c.l.b16 %v659
      %v759 = vunpack.c.h.b16 %v659
      %v760 = vunpack.c.l.b16 %v660
      %v761 = vunpack.c.h.b16 %v660
      %v762 = vunpack.c.l.b16 %v661
      %v763 = vunpack.c.h.b16 %v661
      %v764 = vunpack.c.l.b16 %v662
      %v765 = vunpack.c.h.b16 %v662
      %v766 = vpack.c.b16 %v704, %v702
      %v767 = vpack.c.b16 %v705, %v703
      %v768 = vpack.c.b16 %v708, %v706
      %v769 = vpack.c.b16 %v709, %v707
      %v770 = vpack.c.b16 %v712, %v710
      %v771 = vpack.c.b16 %v713, %v711
      %v772 = vpack.c.b16 %v716, %v714
      %v773 = vpack.c.b16 %v717, %v715
      %v774 = vpack.c.b16 %v720, %v718
      %v775 = vpack.c.b16 %v721, %v719
      %v776 = vpack.c.b16 %v724, %v722
      %v777 = vpack.c.b16 %v725, %v723
      %v778 = vpack.c.b16 %v728, %v726
      %v779 = vpack.c.b16 %v729, %v727
      %v780 = vpack.c.b16 %v732, %v730
      %v781 = vpack.c.b16 %v733, %v731
      %v782 = vpack.c.b16 %v736, %v734
      %v783 = vpack.c.b16 %v737, %v735
      %v784 = vpack.c.b16 %v740, %v738
      %v785 = vpack.c.b16 %v741, %v739
      %v786 = vpack.c.b16 %v744, %v742
      %v787 = vpack.c.b16 %v745, %v743
      %v788 = vpack.c.b16 %v748, %v746
      %v789 = vpack.c.b16 %v749, %v747
      %v790 = vpack.c.b16 %v752, %v750
      %v791 = vpack.c.b16 %v753, %v751
      %v792 = vpack.c.b16 %v756, %v754
      %v793 = vpack.c.b16 %v757, %v755
      %v794 = vpack.c.b16 %v760, %v758
      %v795 = vpack.c.b16 %v761, %v759
      %v796 = vpack.c.b16 %v764, %v762
      %v797 = vpack.c.b16 %v765, %v763
      %830 = vmatprep.subr.bf16.mxu0 %v781
      %831 = vmatpush1.bf16.msra.mxu0 %v780
      %832 = vmatprep.subr.bf16.mxu0 %v779
      %833 = vmatpush1.bf16.msra.mxu0 %v778
      %834 = vmatprep.subr.bf16.mxu0 %v777
      %835 = vmatpush1.bf16.msra.mxu0 %v776
      %836 = vmatprep.subr.bf16.mxu0 %v775
      %837 = vmatpush1.bf16.msra.mxu0 %v774
      %838 = vmatprep.subr.bf16.mxu0 %v773
      %839 = vmatpush1.bf16.msra.mxu0 %v772
      %840 = vmatprep.subr.bf16.mxu0 %v771
      %841 = vmatpush1.bf16.msra.mxu0 %v770
      %842 = vmatprep.subr.bf16.mxu0 %v769
      %843 = vmatpush1.bf16.msra.mxu0 %v768
      %844 = vmatprep.subr.bf16.mxu0 %v767
      %845 = vmatpush1.bf16.msra.mxu0 %v766
      %846 = vmatprep.subr.bf16.mxu0 %v797
      %847 = vmatpush2.bf16.msra.mxu0 %v796
      %848 = vmatprep.subr.bf16.mxu0 %v795
      %849 = vmatpush2.bf16.msra.mxu0 %v794
      %850 = vmatprep.subr.bf16.mxu0 %v793
      %851 = vmatpush2.bf16.msra.mxu0 %v792
      %852 = vmatprep.subr.bf16.mxu0 %v791
      %853 = vmatpush2.bf16.msra.mxu0 %v790
      %854 = vmatprep.subr.bf16.mxu0 %v789
      %855 = vmatpush2.bf16.msra.mxu0 %v788
      %856 = vmatprep.subr.bf16.mxu0 %v787
      %857 = vmatpush2.bf16.msra.mxu0 %v786
      %858 = vmatprep.subr.bf16.mxu0 %v785
      %859 = vmatpush2.bf16.msra.mxu0 %v784
      %860 = vmatprep.subr.bf16.mxu0 %v783
      %861 = vmatpush2.bf16.msra.mxu0 %v782
      %862 = vmatprep.mubr.bf16.mxu0 %v667
      %863 = vmatmul.mubr.bf16.gmra.mxu0 %v666
      %v864 = vpop.f32.mrf.mxu0
      %v865 = vadd.f32 0.0, %v864
      %v866 = vpop.f32.mrf.mxu0
      %v867 = vadd.f32 0.0, %v866
      %v868 = vpop.f32.mrf.mxu0
      %v869 = vpop.f32.mrf.mxu0
      %870 = vdwg.mxu0
      %v871 = vadd.f32 %v622, %v865
      %v872 = vadd.f32 %v624, %v867
      %s873 = scalar_lea.vmem %s138, 24
      %v874 = vld [vmem:[%s873] sm:$0x33]
      %s875 = scalar_lea.vmem %s1, 768
      %v876 = vld [vmem:[%s875] sm:$0xff]
      %v877 = vld [vmem:[%s875 + $0x8] sm:$0xff]
      %v878 = vld [vmem:[%s875 + $0x10] sm:$0xff]
      %v879 = vld [vmem:[%s875 + $0x18] sm:$0xff]
      %v880 = vld [vmem:[%s875 + $0x20] sm:$0xff]
      %v881 = vld [vmem:[%s875 + $0x28] sm:$0xff]
      %v882 = vld [vmem:[%s875 + $0x30] sm:$0xff]
      %v883 = vld [vmem:[%s875 + $0x38] sm:$0xff]
      %v884 = vld [vmem:[%s875 + $0x40] sm:$0xff]
      %v885 = vld [vmem:[%s875 + $0x48] sm:$0xff]
      %v886 = vld [vmem:[%s875 + $0x50] sm:$0xff]
      %v887 = vld [vmem:[%s875 + $0x58] sm:$0xff]
      %v888 = vld [vmem:[%s875 + $0x60] sm:$0xff]
      %v889 = vld [vmem:[%s875 + $0x68] sm:$0xff]
      %v890 = vld [vmem:[%s875 + $0x70] sm:$0xff]
      %v891 = vld [vmem:[%s875 + $0x78] sm:$0xff]
      %v892 = vld [vmem:[%s875 + $0x80] sm:$0xff]
      %v893 = vld [vmem:[%s875 + $0x88] sm:$0xff]
      %v894 = vld [vmem:[%s875 + $0x90] sm:$0xff]
      %v895 = vld [vmem:[%s875 + $0x98] sm:$0xff]
      %v896 = vld [vmem:[%s875 + $0xa0] sm:$0xff]
      %v897 = vld [vmem:[%s875 + $0xa8] sm:$0xff]
      %v898 = vld [vmem:[%s875 + $0xb0] sm:$0xff]
      %v899 = vld [vmem:[%s875 + $0xb8] sm:$0xff]
      %v900 = vld [vmem:[%s875 + $0xc0] sm:$0xff]
      %v901 = vld [vmem:[%s875 + $0xc8] sm:$0xff]
      %v902 = vld [vmem:[%s875 + $0xd0] sm:$0xff]
      %v903 = vld [vmem:[%s875 + $0xd8] sm:$0xff]
      %v904 = vld [vmem:[%s875 + $0xe0] sm:$0xff]
      %v905 = vld [vmem:[%s875 + $0xe8] sm:$0xff]
      %v906 = vld [vmem:[%s875 + $0xf0] sm:$0xff]
      %v907 = vld [vmem:[%s875 + $0xf8] sm:$0xff]
      %v909 = vunpack.c.l.b16 %v874
      %v910 = vunpack.c.h.b16 %v874
      %v911 = vpack.c.b16 %v909, %v909
      %v912 = vpack.c.b16 %v910, %v910
      %v947 = vunpack.c.l.b16 %v876
      %v948 = vunpack.c.h.b16 %v876
      %v949 = vunpack.c.l.b16 %v877
      %v950 = vunpack.c.h.b16 %v877
      %v951 = vunpack.c.l.b16 %v878
      %v952 = vunpack.c.h.b16 %v878
      %v953 = vunpack.c.l.b16 %v879
      %v954 = vunpack.c.h.b16 %v879
      %v955 = vunpack.c.l.b16 %v880
      %v956 = vunpack.c.h.b16 %v880
      %v957 = vunpack.c.l.b16 %v881
      %v958 = vunpack.c.h.b16 %v881
      %v959 = vunpack.c.l.b16 %v882
      %v960 = vunpack.c.h.b16 %v882
      %v961 = vunpack.c.l.b16 %v883
      %v962 = vunpack.c.h.b16 %v883
      %v963 = vunpack.c.l.b16 %v884
      %v964 = vunpack.c.h.b16 %v884
      %v965 = vunpack.c.l.b16 %v885
      %v966 = vunpack.c.h.b16 %v885
      %v967 = vunpack.c.l.b16 %v886
      %v968 = vunpack.c.h.b16 %v886
      %v969 = vunpack.c.l.b16 %v887
      %v970 = vunpack.c.h.b16 %v887
      %v971 = vunpack.c.l.b16 %v888
      %v972 = vunpack.c.h.b16 %v888
      %v973 = vunpack.c.l.b16 %v889
      %v974 = vunpack.c.h.b16 %v889
      %v975 = vunpack.c.l.b16 %v890
      %v976 = vunpack.c.h.b16 %v890
      %v977 = vunpack.c.l.b16 %v891
      %v978 = vunpack.c.h.b16 %v891
      %v979 = vunpack.c.l.b16 %v892
      %v980 = vunpack.c.h.b16 %v892
      %v981 = vunpack.c.l.b16 %v893
      %v982 = vunpack.c.h.b16 %v893
      %v983 = vunpack.c.l.b16 %v894
      %v984 = vunpack.c.h.b16 %v894
      %v985 = vunpack.c.l.b16 %v895
      %v986 = vunpack.c.h.b16 %v895
      %v987 = vunpack.c.l.b16 %v896
      %v988 = vunpack.c.h.b16 %v896
      %v989 = vunpack.c.l.b16 %v897
      %v990 = vunpack.c.h.b16 %v897
      %v991 = vunpack.c.l.b16 %v898
      %v992 = vunpack.c.h.b16 %v898
      %v993 = vunpack.c.l.b16 %v899
      %v994 = vunpack.c.h.b16 %v899
      %v995 = vunpack.c.l.b16 %v900
      %v996 = vunpack.c.h.b16 %v900
      %v997 = vunpack.c.l.b16 %v901
      %v998 = vunpack.c.h.b16 %v901
      %v999 = vunpack.c.l.b16 %v902
      %v1000 = vunpack.c.h.b16 %v902
      %v1001 = vunpack.c.l.b16 %v903
      %v1002 = vunpack.c.h.b16 %v903
      %v1003 = vunpack.c.l.b16 %v904
      %v1004 = vunpack.c.h.b16 %v904
      %v1005 = vunpack.c.l.b16 %v905
      %v1006 = vunpack.c.h.b16 %v905
      %v1007 = vunpack.c.l.b16 %v906
      %v1008 = vunpack.c.h.b16 %v906
      %v1009 = vunpack.c.l.b16 %v907
      %v1010 = vunpack.c.h.b16 %v907
      %v1011 = vpack.c.b16 %v949, %v947
      %v1012 = vpack.c.b16 %v950, %v948
      %v1013 = vpack.c.b16 %v953, %v951
      %v1014 = vpack.c.b16 %v954, %v952
      %v1015 = vpack.c.b16 %v957, %v955
      %v1016 = vpack.c.b16 %v958, %v956
      %v1017 = vpack.c.b16 %v961, %v959
      %v1018 = vpack.c.b16 %v962, %v960
      %v1019 = vpack.c.b16 %v965, %v963
      %v1020 = vpack.c.b16 %v966, %v964
      %v1021 = vpack.c.b16 %v969, %v967
      %v1022 = vpack.c.b16 %v970, %v968
      %v1023 = vpack.c.b16 %v973, %v971
      %v1024 = vpack.c.b16 %v974, %v972
      %v1025 = vpack.c.b16 %v977, %v975
      %v1026 = vpack.c.b16 %v978, %v976
      %v1027 = vpack.c.b16 %v981, %v979
      %v1028 = vpack.c.b16 %v982, %v980
      %v1029 = vpack.c.b16 %v985, %v983
      %v1030 = vpack.c.b16 %v986, %v984
      %v1031 = vpack.c.b16 %v989, %v987
      %v1032 = vpack.c.b16 %v990, %v988
      %v1033 = vpack.c.b16 %v993, %v991
      %v1034 = vpack.c.b16 %v994, %v992
      %v1035 = vpack.c.b16 %v997, %v995
      %v1036 = vpack.c.b16 %v998, %v996
      %v1037 = vpack.c.b16 %v1001, %v999
      %v1038 = vpack.c.b16 %v1002, %v1000
      %v1039 = vpack.c.b16 %v1005, %v1003
      %v1040 = vpack.c.b16 %v1006, %v1004
      %v1041 = vpack.c.b16 %v1009, %v1007
      %v1042 = vpack.c.b16 %v1010, %v1008
      %1075 = vmatprep.subr.bf16.mxu0 %v1026
      %1076 = vmatpush1.bf16.msra.mxu0 %v1025
      %1077 = vmatprep.subr.bf16.mxu0 %v1024
      %1078 = vmatpush1.bf16.msra.mxu0 %v1023
      %1079 = vmatprep.subr.bf16.mxu0 %v1022
      %1080 = vmatpush1.bf16.msra.mxu0 %v1021
      %1081 = vmatprep.subr.bf16.mxu0 %v1020
      %1082 = vmatpush1.bf16.msra.mxu0 %v1019
      %1083 = vmatprep.subr.bf16.mxu0 %v1018
      %1084 = vmatpush1.bf16.msra.mxu0 %v1017
      %1085 = vmatprep.subr.bf16.mxu0 %v1016
      %1086 = vmatpush1.bf16.msra.mxu0 %v1015
      %1087 = vmatprep.subr.bf16.mxu0 %v1014
      %1088 = vmatpush1.bf16.msra.mxu0 %v1013
      %1089 = vmatprep.subr.bf16.mxu0 %v1012
      %1090 = vmatpush1.bf16.msra.mxu0 %v1011
      %1091 = vmatprep.subr.bf16.mxu0 %v1042
      %1092 = vmatpush2.bf16.msra.mxu0 %v1041
      %1093 = vmatprep.subr.bf16.mxu0 %v1040
      %1094 = vmatpush2.bf16.msra.mxu0 %v1039
      %1095 = vmatprep.subr.bf16.mxu0 %v1038
      %1096 = vmatpush2.bf16.msra.mxu0 %v1037
      %1097 = vmatprep.subr.bf16.mxu0 %v1036
      %1098 = vmatpush2.bf16.msra.mxu0 %v1035
      %1099 = vmatprep.subr.bf16.mxu0 %v1034
      %1100 = vmatpush2.bf16.msra.mxu0 %v1033
      %1101 = vmatprep.subr.bf16.mxu0 %v1032
      %1102 = vmatpush2.bf16.msra.mxu0 %v1031
      %1103 = vmatprep.subr.bf16.mxu0 %v1030
      %1104 = vmatpush2.bf16.msra.mxu0 %v1029
      %1105 = vmatprep.subr.bf16.mxu0 %v1028
      %1106 = vmatpush2.bf16.msra.mxu0 %v1027
      %1107 = vmatprep.mubr.bf16.mxu0 %v912
      %1108 = vmatmul.mubr.bf16.gmra.mxu0 %v911
      %v1109 = vpop.f32.mrf.mxu0
      %v1110 = vadd.f32 0.0, %v1109
      %v1111 = vpop.f32.mrf.mxu0
      %v1112 = vadd.f32 0.0, %v1111
      %v1113 = vpop.f32.mrf.mxu0
      %v1114 = vpop.f32.mrf.mxu0
      %1115 = vdwg.mxu0
      %v1116 = vadd.f32 %v871, %v1110
      %v1117 = vadd.f32 %v872, %v1112
      %v1118 = vld [vmem:[%s138] sm:$0x66]
      %s1119 = scalar_lea.vmem %s1, 1024
      %v1120 = vld [vmem:[%s1119] sm:$0xff]
      %v1121 = vld [vmem:[%s1119 + $0x8] sm:$0xff]
      %v1122 = vld [vmem:[%s1119 + $0x10] sm:$0xff]
      %v1123 = vld [vmem:[%s1119 + $0x18] sm:$0xff]
      %v1124 = vld [vmem:[%s1119 + $0x20] sm:$0xff]
      %v1125 = vld [vmem:[%s1119 + $0x28] sm:$0xff]
      %v1126 = vld [vmem:[%s1119 + $0x30] sm:$0xff]
      %v1127 = vld [vmem:[%s1119 + $0x38] sm:$0xff]
      %v1128 = vld [vmem:[%s1119 + $0x40] sm:$0xff]
      %v1129 = vld [vmem:[%s1119 + $0x48] sm:$0xff]
      %v1130 = vld [vmem:[%s1119 + $0x50] sm:$0xff]
      %v1131 = vld [vmem:[%s1119 + $0x58] sm:$0xff]
      %v1132 = vld [vmem:[%s1119 + $0x60] sm:$0xff]
      %v1133 = vld [vmem:[%s1119 + $0x68] sm:$0xff]
      %v1134 = vld [vmem:[%s1119 + $0x70] sm:$0xff]
      %v1135 = vld [vmem:[%s1119 + $0x78] sm:$0xff]
      %v1136 = vld [vmem:[%s1119 + $0x80] sm:$0xff]
      %v1137 = vld [vmem:[%s1119 + $0x88] sm:$0xff]
      %v1138 = vld [vmem:[%s1119 + $0x90] sm:$0xff]
      %v1139 = vld [vmem:[%s1119 + $0x98] sm:$0xff]
      %v1140 = vld [vmem:[%s1119 + $0xa0] sm:$0xff]
      %v1141 = vld [vmem:[%s1119 + $0xa8] sm:$0xff]
      %v1142 = vld [vmem:[%s1119 + $0xb0] sm:$0xff]
      %v1143 = vld [vmem:[%s1119 + $0xb8] sm:$0xff]
      %v1144 = vld [vmem:[%s1119 + $0xc0] sm:$0xff]
      %v1145 = vld [vmem:[%s1119 + $0xc8] sm:$0xff]
      %v1146 = vld [vmem:[%s1119 + $0xd0] sm:$0xff]
      %v1147 = vld [vmem:[%s1119 + $0xd8] sm:$0xff]
      %v1148 = vld [vmem:[%s1119 + $0xe0] sm:$0xff]
      %v1149 = vld [vmem:[%s1119 + $0xe8] sm:$0xff]
      %v1150 = vld [vmem:[%s1119 + $0xf0] sm:$0xff]
      %v1151 = vld [vmem:[%s1119 + $0xf8] sm:$0xff]
      %v1153 = vunpack.c.l.b16 %v1118
      %v1154 = vunpack.c.h.b16 %v1118
      %v1155 = vpack.c.b16 %v1153, %v1153
      %v1156 = vpack.c.b16 %v1154, %v1154
      %v1157 = vrot.slane %v1155, 1
      %v1158 = vrot.slane %v1156, 1
      %v1193 = vunpack.c.l.b16 %v1120
      %v1194 = vunpack.c.h.b16 %v1120
      %v1195 = vunpack.c.l.b16 %v1121
      %v1196 = vunpack.c.h.b16 %v1121
      %v1197 = vunpack.c.l.b16 %v1122
      %v1198 = vunpack.c.h.b16 %v1122
      %v1199 = vunpack.c.l.b16 %v1123
      %v1200 = vunpack.c.h.b16 %v1123
      %v1201 = vunpack.c.l.b16 %v1124
      %v1202 = vunpack.c.h.b16 %v1124
      %v1203 = vunpack.c.l.b16 %v1125
      %v1204 = vunpack.c.h.b16 %v1125
      %v1205 = vunpack.c.l.b16 %v1126
      %v1206 = vunpack.c.h.b16 %v1126
      %v1207 = vunpack.c.l.b16 %v1127
      %v1208 = vunpack.c.h.b16 %v1127
      %v1209 = vunpack.c.l.b16 %v1128
      %v1210 = vunpack.c.h.b16 %v1128
      %v1211 = vunpack.c.l.b16 %v1129
      %v1212 = vunpack.c.h.b16 %v1129
      %v1213 = vunpack.c.l.b16 %v1130
      %v1214 = vunpack.c.h.b16 %v1130
      %v1215 = vunpack.c.l.b16 %v1131
      %v1216 = vunpack.c.h.b16 %v1131
      %v1217 = vunpack.c.l.b16 %v1132
      %v1218 = vunpack.c.h.b16 %v1132
      %v1219 = vunpack.c.l.b16 %v1133
      %v1220 = vunpack.c.h.b16 %v1133
      %v1221 = vunpack.c.l.b16 %v1134
      %v1222 = vunpack.c.h.b16 %v1134
      %v1223 = vunpack.c.l.b16 %v1135
      %v1224 = vunpack.c.h.b16 %v1135
      %v1225 = vunpack.c.l.b16 %v1136
      %v1226 = vunpack.c.h.b16 %v1136
      %v1227 = vunpack.c.l.b16 %v1137
      %v1228 = vunpack.c.h.b16 %v1137
      %v1229 = vunpack.c.l.b16 %v1138
      %v1230 = vunpack.c.h.b16 %v1138
      %v1231 = vunpack.c.l.b16 %v1139
      %v1232 = vunpack.c.h.b16 %v1139
      %v1233 = vunpack.c.l.b16 %v1140
      %v1234 = vunpack.c.h.b16 %v1140
      %v1235 = vunpack.c.l.b16 %v1141
      %v1236 = vunpack.c.h.b16 %v1141
      %v1237 = vunpack.c.l.b16 %v1142
      %v1238 = vunpack.c.h.b16 %v1142
      %v1239 = vunpack.c.l.b16 %v1143
      %v1240 = vunpack.c.h.b16 %v1143
      %v1241 = vunpack.c.l.b16 %v1144
      %v1242 = vunpack.c.h.b16 %v1144
      %v1243 = vunpack.c.l.b16 %v1145
      %v1244 = vunpack.c.h.b16 %v1145
      %v1245 = vunpack.c.l.b16 %v1146
      %v1246 = vunpack.c.h.b16 %v1146
      %v1247 = vunpack.c.l.b16 %v1147
      %v1248 = vunpack.c.h.b16 %v1147
      %v1249 = vunpack.c.l.b16 %v1148
      %v1250 = vunpack.c.h.b16 %v1148
      %v1251 = vunpack.c.l.b16 %v1149
      %v1252 = vunpack.c.h.b16 %v1149
      %v1253 = vunpack.c.l.b16 %v1150
      %v1254 = vunpack.c.h.b16 %v1150
      %v1255 = vunpack.c.l.b16 %v1151
      %v1256 = vunpack.c.h.b16 %v1151
      %v1257 = vpack.c.b16 %v1195, %v1193
      %v1258 = vpack.c.b16 %v1196, %v1194
      %v1259 = vpack.c.b16 %v1199, %v1197
      %v1260 = vpack.c.b16 %v1200, %v1198
      %v1261 = vpack.c.b16 %v1203, %v1201
      %v1262 = vpack.c.b16 %v1204, %v1202
      %v1263 = vpack.c.b16 %v1207, %v1205
      %v1264 = vpack.c.b16 %v1208, %v1206
      %v1265 = vpack.c.b16 %v1211, %v1209
      %v1266 = vpack.c.b16 %v1212, %v1210
      %v1267 = vpack.c.b16 %v1215, %v1213
      %v1268 = vpack.c.b16 %v1216, %v1214
      %v1269 = vpack.c.b16 %v1219, %v1217
      %v1270 = vpack.c.b16 %v1220, %v1218
      %v1271 = vpack.c.b16 %v1223, %v1221
      %v1272 = vpack.c.b16 %v1224, %v1222
      %v1273 = vpack.c.b16 %v1227, %v1225
      %v1274 = vpack.c.b16 %v1228, %v1226
      %v1275 = vpack.c.b16 %v1231, %v1229
      %v1276 = vpack.c.b16 %v1232, %v1230
      %v1277 = vpack.c.b16 %v1235, %v1233
      %v1278 = vpack.c.b16 %v1236, %v1234
      %v1279 = vpack.c.b16 %v1239, %v1237
      %v1280 = vpack.c.b16 %v1240, %v1238
      %v1281 = vpack.c.b16 %v1243, %v1241
      %v1282 = vpack.c.b16 %v1244, %v1242
      %v1283 = vpack.c.b16 %v1247, %v1245
      %v1284 = vpack.c.b16 %v1248, %v1246
      %v1285 = vpack.c.b16 %v1251, %v1249
      %v1286 = vpack.c.b16 %v1252, %v1250
      %v1287 = vpack.c.b16 %v1255, %v1253
      %v1288 = vpack.c.b16 %v1256, %v1254
      %1321 = vmatprep.subr.bf16.mxu0 %v1272
      %1322 = vmatpush1.bf16.msra.mxu0 %v1271
      %1323 = vmatprep.subr.bf16.mxu0 %v1270
      %1324 = vmatpush1.bf16.msra.mxu0 %v1269
      %1325 = vmatprep.subr.bf16.mxu0 %v1268
      %1326 = vmatpush1.bf16.msra.mxu0 %v1267
      %1327 = vmatprep.subr.bf16.mxu0 %v1266
      %1328 = vmatpush1.bf16.msra.mxu0 %v1265
      %1329 = vmatprep.subr.bf16.mxu0 %v1264
      %1330 = vmatpush1.bf16.msra.mxu0 %v1263
      %1331 = vmatprep.subr.bf16.mxu0 %v1262
      %1332 = vmatpush1.bf16.msra.mxu0 %v1261
      %1333 = vmatprep.subr.bf16.mxu0 %v1260
      %1334 = vmatpush1.bf16.msra.mxu0 %v1259
      %1335 = vmatprep.subr.bf16.mxu0 %v1258
      %1336 = vmatpush1.bf16.msra.mxu0 %v1257
      %1337 = vmatprep.subr.bf16.mxu0 %v1288
      %1338 = vmatpush2.bf16.msra.mxu0 %v1287
      %1339 = vmatprep.subr.bf16.mxu0 %v1286
      %1340 = vmatpush2.bf16.msra.mxu0 %v1285
      %1341 = vmatprep.subr.bf16.mxu0 %v1284
      %1342 = vmatpush2.bf16.msra.mxu0 %v1283
      %1343 = vmatprep.subr.bf16.mxu0 %v1282
      %1344 = vmatpush2.bf16.msra.mxu0 %v1281
      %1345 = vmatprep.subr.bf16.mxu0 %v1280
      %1346 = vmatpush2.bf16.msra.mxu0 %v1279
      %1347 = vmatprep.subr.bf16.mxu0 %v1278
      %1348 = vmatpush2.bf16.msra.mxu0 %v1277
      %1349 = vmatprep.subr.bf16.mxu0 %v1276
      %1350 = vmatpush2.bf16.msra.mxu0 %v1275
      %1351 = vmatprep.subr.bf16.mxu0 %v1274
      %1352 = vmatpush2.bf16.msra.mxu0 %v1273
      %1353 = vmatprep.mubr.bf16.mxu0 %v1158
      %1354 = vmatmul.mubr.bf16.gmra.mxu0 %v1157
      %v1355 = vpop.f32.mrf.mxu0
      %v1356 = vadd.f32 0.0, %v1355
      %v1357 = vpop.f32.mrf.mxu0
      %v1358 = vadd.f32 0.0, %v1357
      %v1359 = vpop.f32.mrf.mxu0
      %v1360 = vpop.f32.mrf.mxu0
      %1361 = vdwg.mxu0
      %v1362 = vadd.f32 %v1116, %v1356
      %v1363 = vadd.f32 %v1117, %v1358
      %v1364 = vld [vmem:[%s177] sm:$0x66]
      %s1365 = scalar_lea.vmem %s1, 1280
      %v1366 = vld [vmem:[%s1365] sm:$0xff]
      %v1367 = vld [vmem:[%s1365 + $0x8] sm:$0xff]
      %v1368 = vld [vmem:[%s1365 + $0x10] sm:$0xff]
      %v1369 = vld [vmem:[%s1365 + $0x18] sm:$0xff]
      %v1370 = vld [vmem:[%s1365 + $0x20] sm:$0xff]
      %v1371 = vld [vmem:[%s1365 + $0x28] sm:$0xff]
      %v1372 = vld [vmem:[%s1365 + $0x30] sm:$0xff]
      %v1373 = vld [vmem:[%s1365 + $0x38] sm:$0xff]
      %v1374 = vld [vmem:[%s1365 + $0x40] sm:$0xff]
      %v1375 = vld [vmem:[%s1365 + $0x48] sm:$0xff]
      %v1376 = vld [vmem:[%s1365 + $0x50] sm:$0xff]
      %v1377 = vld [vmem:[%s1365 + $0x58] sm:$0xff]
      %v1378 = vld [vmem:[%s1365 + $0x60] sm:$0xff]
      %v1379 = vld [vmem:[%s1365 + $0x68] sm:$0xff]
      %v1380 = vld [vmem:[%s1365 + $0x70] sm:$0xff]
      %v1381 = vld [vmem:[%s1365 + $0x78] sm:$0xff]
      %v1382 = vld [vmem:[%s1365 + $0x80] sm:$0xff]
      %v1383 = vld [vmem:[%s1365 + $0x88] sm:$0xff]
      %v1384 = vld [vmem:[%s1365 + $0x90] sm:$0xff]
      %v1385 = vld [vmem:[%s1365 + $0x98] sm:$0xff]
      %v1386 = vld [vmem:[%s1365 + $0xa0] sm:$0xff]
      %v1387 = vld [vmem:[%s1365 + $0xa8] sm:$0xff]
      %v1388 = vld [vmem:[%s1365 + $0xb0] sm:$0xff]
      %v1389 = vld [vmem:[%s1365 + $0xb8] sm:$0xff]
      %v1390 = vld [vmem:[%s1365 + $0xc0] sm:$0xff]
      %v1391 = vld [vmem:[%s1365 + $0xc8] sm:$0xff]
      %v1392 = vld [vmem:[%s1365 + $0xd0] sm:$0xff]
      %v1393 = vld [vmem:[%s1365 + $0xd8] sm:$0xff]
      %v1394 = vld [vmem:[%s1365 + $0xe0] sm:$0xff]
      %v1395 = vld [vmem:[%s1365 + $0xe8] sm:$0xff]
      %v1396 = vld [vmem:[%s1365 + $0xf0] sm:$0xff]
      %v1397 = vld [vmem:[%s1365 + $0xf8] sm:$0xff]
      %v1399 = vunpack.c.l.b16 %v1364
      %v1400 = vunpack.c.h.b16 %v1364
      %v1401 = vpack.c.b16 %v1399, %v1399
      %v1402 = vpack.c.b16 %v1400, %v1400
      %v1403 = vrot.slane %v1401, 1
      %v1404 = vrot.slane %v1402, 1
      %v1439 = vunpack.c.l.b16 %v1366
      %v1440 = vunpack.c.h.b16 %v1366
      %v1441 = vunpack.c.l.b16 %v1367
      %v1442 = vunpack.c.h.b16 %v1367
      %v1443 = vunpack.c.l.b16 %v1368
      %v1444 = vunpack.c.h.b16 %v1368
      %v1445 = vunpack.c.l.b16 %v1369
      %v1446 = vunpack.c.h.b16 %v1369
      %v1447 = vunpack.c.l.b16 %v1370
      %v1448 = vunpack.c.h.b16 %v1370
      %v1449 = vunpack.c.l.b16 %v1371
      %v1450 = vunpack.c.h.b16 %v1371
      %v1451 = vunpack.c.l.b16 %v1372
      %v1452 = vunpack.c.h.b16 %v1372
      %v1453 = vunpack.c.l.b16 %v1373
      %v1454 = vunpack.c.h.b16 %v1373
      %v1455 = vunpack.c.l.b16 %v1374
      %v1456 = vunpack.c.h.b16 %v1374
      %v1457 = vunpack.c.l.b16 %v1375
      %v1458 = vunpack.c.h.b16 %v1375
      %v1459 = vunpack.c.l.b16 %v1376
      %v1460 = vunpack.c.h.b16 %v1376
      %v1461 = vunpack.c.l.b16 %v1377
      %v1462 = vunpack.c.h.b16 %v1377
      %v1463 = vunpack.c.l.b16 %v1378
      %v1464 = vunpack.c.h.b16 %v1378
      %v1465 = vunpack.c.l.b16 %v1379
      %v1466 = vunpack.c.h.b16 %v1379
      %v1467 = vunpack.c.l.b16 %v1380
      %v1468 = vunpack.c.h.b16 %v1380
      %v1469 = vunpack.c.l.b16 %v1381
      %v1470 = vunpack.c.h.b16 %v1381
      %v1471 = vunpack.c.l.b16 %v1382
      %v1472 = vunpack.c.h.b16 %v1382
      %v1473 = vunpack.c.l.b16 %v1383
      %v1474 = vunpack.c.h.b16 %v1383
      %v1475 = vunpack.c.l.b16 %v1384
      %v1476 = vunpack.c.h.b16 %v1384
      %v1477 = vunpack.c.l.b16 %v1385
      %v1478 = vunpack.c.h.b16 %v1385
      %v1479 = vunpack.c.l.b16 %v1386
      %v1480 = vunpack.c.h.b16 %v1386
      %v1481 = vunpack.c.l.b16 %v1387
      %v1482 = vunpack.c.h.b16 %v1387
      %v1483 = vunpack.c.l.b16 %v1388
      %v1484 = vunpack.c.h.b16 %v1388
      %v1485 = vunpack.c.l.b16 %v1389
      %v1486 = vunpack.c.h.b16 %v1389
      %v1487 = vunpack.c.l.b16 %v1390
      %v1488 = vunpack.c.h.b16 %v1390
      %v1489 = vunpack.c.l.b16 %v1391
      %v1490 = vunpack.c.h.b16 %v1391
      %v1491 = vunpack.c.l.b16 %v1392
      %v1492 = vunpack.c.h.b16 %v1392
      %v1493 = vunpack.c.l.b16 %v1393
      %v1494 = vunpack.c.h.b16 %v1393
      %v1495 = vunpack.c.l.b16 %v1394
      %v1496 = vunpack.c.h.b16 %v1394
      %v1497 = vunpack.c.l.b16 %v1395
      %v1498 = vunpack.c.h.b16 %v1395
      %v1499 = vunpack.c.l.b16 %v1396
      %v1500 = vunpack.c.h.b16 %v1396
      %v1501 = vunpack.c.l.b16 %v1397
      %v1502 = vunpack.c.h.b16 %v1397
      %v1503 = vpack.c.b16 %v1441, %v1439
      %v1504 = vpack.c.b16 %v1442, %v1440
      %v1505 = vpack.c.b16 %v1445, %v1443
      %v1506 = vpack.c.b16 %v1446, %v1444
      %v1507 = vpack.c.b16 %v1449, %v1447
      %v1508 = vpack.c.b16 %v1450, %v1448
      %v1509 = vpack.c.b16 %v1453, %v1451
      %v1510 = vpack.c.b16 %v1454, %v1452
      %v1511 = vpack.c.b16 %v1457, %v1455
      %v1512 = vpack.c.b16 %v1458, %v1456
      %v1513 = vpack.c.b16 %v1461, %v1459
      %v1514 = vpack.c.b16 %v1462, %v1460
      %v1515 = vpack.c.b16 %v1465, %v1463
      %v1516 = vpack.c.b16 %v1466, %v1464
      %v1517 = vpack.c.b16 %v1469, %v1467
      %v1518 = vpack.c.b16 %v1470, %v1468
      %v1519 = vpack.c.b16 %v1473, %v1471
      %v1520 = vpack.c.b16 %v1474, %v1472
      %v1521 = vpack.c.b16 %v1477, %v1475
      %v1522 = vpack.c.b16 %v1478, %v1476
      %v1523 = vpack.c.b16 %v1481, %v1479
      %v1524 = vpack.c.b16 %v1482, %v1480
      %v1525 = vpack.c.b16 %v1485, %v1483
      %v1526 = vpack.c.b16 %v1486, %v1484
      %v1527 = vpack.c.b16 %v1489, %v1487
      %v1528 = vpack.c.b16 %v1490, %v1488
      %v1529 = vpack.c.b16 %v1493, %v1491
      %v1530 = vpack.c.b16 %v1494, %v1492
      %v1531 = vpack.c.b16 %v1497, %v1495
      %v1532 = vpack.c.b16 %v1498, %v1496
      %v1533 = vpack.c.b16 %v1501, %v1499
      %v1534 = vpack.c.b16 %v1502, %v1500
      %1567 = vmatprep.subr.bf16.mxu0 %v1518
      %1568 = vmatpush1.bf16.msra.mxu0 %v1517
      %1569 = vmatprep.subr.bf16.mxu0 %v1516
      %1570 = vmatpush1.bf16.msra.mxu0 %v1515
      %1571 = vmatprep.subr.bf16.mxu0 %v1514
      %1572 = vmatpush1.bf16.msra.mxu0 %v1513
      %1573 = vmatprep.subr.bf16.mxu0 %v1512
      %1574 = vmatpush1.bf16.msra.mxu0 %v1511
      %1575 = vmatprep.subr.bf16.mxu0 %v1510
      %1576 = vmatpush1.bf16.msra.mxu0 %v1509
      %1577 = vmatprep.subr.bf16.mxu0 %v1508
      %1578 = vmatpush1.bf16.msra.mxu0 %v1507
      %1579 = vmatprep.subr.bf16.mxu0 %v1506
      %1580 = vmatpush1.bf16.msra.mxu0 %v1505
      %1581 = vmatprep.subr.bf16.mxu0 %v1504
      %1582 = vmatpush1.bf16.msra.mxu0 %v1503
      %1583 = vmatprep.subr.bf16.mxu0 %v1534
      %1584 = vmatpush2.bf16.msra.mxu0 %v1533
      %1585 = vmatprep.subr.bf16.mxu0 %v1532
      %1586 = vmatpush2.bf16.msra.mxu0 %v1531
      %1587 = vmatprep.subr.bf16.mxu0 %v1530
      %1588 = vmatpush2.bf16.msra.mxu0 %v1529
      %1589 = vmatprep.subr.bf16.mxu0 %v1528
      %1590 = vmatpush2.bf16.msra.mxu0 %v1527
      %1591 = vmatprep.subr.bf16.mxu0 %v1526
      %1592 = vmatpush2.bf16.msra.mxu0 %v1525
      %1593 = vmatprep.subr.bf16.mxu0 %v1524
      %1594 = vmatpush2.bf16.msra.mxu0 %v1523
      %1595 = vmatprep.subr.bf16.mxu0 %v1522
      %1596 = vmatpush2.bf16.msra.mxu0 %v1521
      %1597 = vmatprep.subr.bf16.mxu0 %v1520
      %1598 = vmatpush2.bf16.msra.mxu0 %v1519
      %1599 = vmatprep.mubr.bf16.mxu0 %v1404
      %1600 = vmatmul.mubr.bf16.gmra.mxu0 %v1403
      %v1601 = vpop.f32.mrf.mxu0
      %v1602 = vadd.f32 0.0, %v1601
      %v1603 = vpop.f32.mrf.mxu0
      %v1604 = vadd.f32 0.0, %v1603
      %v1605 = vpop.f32.mrf.mxu0
      %v1606 = vpop.f32.mrf.mxu0
      %1607 = vdwg.mxu0
      %v1608 = vadd.f32 %v1362, %v1602
      %v1609 = vadd.f32 %v1363, %v1604
      %v1610 = vld [vmem:[%s628] sm:$0x66]
      %s1611 = scalar_lea.vmem %s1, 1536
      %v1612 = vld [vmem:[%s1611] sm:$0xff]
      %v1613 = vld [vmem:[%s1611 + $0x8] sm:$0xff]
      %v1614 = vld [vmem:[%s1611 + $0x10] sm:$0xff]
      %v1615 = vld [vmem:[%s1611 + $0x18] sm:$0xff]
      %v1616 = vld [vmem:[%s1611 + $0x20] sm:$0xff]
      %v1617 = vld [vmem:[%s1611 + $0x28] sm:$0xff]
      %v1618 = vld [vmem:[%s1611 + $0x30] sm:$0xff]
      %v1619 = vld [vmem:[%s1611 + $0x38] sm:$0xff]
      %v1620 = vld [vmem:[%s1611 + $0x40] sm:$0xff]
      %v1621 = vld [vmem:[%s1611 + $0x48] sm:$0xff]
      %v1622 = vld [vmem:[%s1611 + $0x50] sm:$0xff]
      %v1623 = vld [vmem:[%s1611 + $0x58] sm:$0xff]
      %v1624 = vld [vmem:[%s1611 + $0x60] sm:$0xff]
      %v1625 = vld [vmem:[%s1611 + $0x68] sm:$0xff]
      %v1626 = vld [vmem:[%s1611 + $0x70] sm:$0xff]
      %v1627 = vld [vmem:[%s1611 + $0x78] sm:$0xff]
      %v1628 = vld [vmem:[%s1611 + $0x80] sm:$0xff]
      %v1629 = vld [vmem:[%s1611 + $0x88] sm:$0xff]
      %v1630 = vld [vmem:[%s1611 + $0x90] sm:$0xff]
      %v1631 = vld [vmem:[%s1611 + $0x98] sm:$0xff]
      %v1632 = vld [vmem:[%s1611 + $0xa0] sm:$0xff]
      %v1633 = vld [vmem:[%s1611 + $0xa8] sm:$0xff]
      %v1634 = vld [vmem:[%s1611 + $0xb0] sm:$0xff]
      %v1635 = vld [vmem:[%s1611 + $0xb8] sm:$0xff]
      %v1636 = vld [vmem:[%s1611 + $0xc0] sm:$0xff]
      %v1637 = vld [vmem:[%s1611 + $0xc8] sm:$0xff]
      %v1638 = vld [vmem:[%s1611 + $0xd0] sm:$0xff]
      %v1639 = vld [vmem:[%s1611 + $0xd8] sm:$0xff]
      %v1640 = vld [vmem:[%s1611 + $0xe0] sm:$0xff]
      %v1641 = vld [vmem:[%s1611 + $0xe8] sm:$0xff]
      %v1642 = vld [vmem:[%s1611 + $0xf0] sm:$0xff]
      %v1643 = vld [vmem:[%s1611 + $0xf8] sm:$0xff]
      %v1645 = vunpack.c.l.b16 %v1610
      %v1646 = vunpack.c.h.b16 %v1610
      %v1647 = vpack.c.b16 %v1645, %v1645
      %v1648 = vpack.c.b16 %v1646, %v1646
      %v1649 = vrot.slane %v1647, 1
      %v1650 = vrot.slane %v1648, 1
      %v1685 = vunpack.c.l.b16 %v1612
      %v1686 = vunpack.c.h.b16 %v1612
      %v1687 = vunpack.c.l.b16 %v1613
      %v1688 = vunpack.c.h.b16 %v1613
      %v1689 = vunpack.c.l.b16 %v1614
      %v1690 = vunpack.c.h.b16 %v1614
      %v1691 = vunpack.c.l.b16 %v1615
      %v1692 = vunpack.c.h.b16 %v1615
      %v1693 = vunpack.c.l.b16 %v1616
      %v1694 = vunpack.c.h.b16 %v1616
      %v1695 = vunpack.c.l.b16 %v1617
      %v1696 = vunpack.c.h.b16 %v1617
      %v1697 = vunpack.c.l.b16 %v1618
      %v1698 = vunpack.c.h.b16 %v1618
      %v1699 = vunpack.c.l.b16 %v1619
      %v1700 = vunpack.c.h.b16 %v1619
      %v1701 = vunpack.c.l.b16 %v1620
      %v1702 = vunpack.c.h.b16 %v1620
      %v1703 = vunpack.c.l.b16 %v1621
      %v1704 = vunpack.c.h.b16 %v1621
      %v1705 = vunpack.c.l.b16 %v1622
      %v1706 = vunpack.c.h.b16 %v1622
      %v1707 = vunpack.c.l.b16 %v1623
      %v1708 = vunpack.c.h.b16 %v1623
      %v1709 = vunpack.c.l.b16 %v1624
      %v1710 = vunpack.c.h.b16 %v1624
      %v1711 = vunpack.c.l.b16 %v1625
      %v1712 = vunpack.c.h.b16 %v1625
      %v1713 = vunpack.c.l.b16 %v1626
      %v1714 = vunpack.c.h.b16 %v1626
      %v1715 = vunpack.c.l.b16 %v1627
      %v1716 = vunpack.c.h.b16 %v1627
      %v1717 = vunpack.c.l.b16 %v1628
      %v1718 = vunpack.c.h.b16 %v1628
      %v1719 = vunpack.c.l.b16 %v1629
      %v1720 = vunpack.c.h.b16 %v1629
      %v1721 = vunpack.c.l.b16 %v1630
      %v1722 = vunpack.c.h.b16 %v1630
      %v1723 = vunpack.c.l.b16 %v1631
      %v1724 = vunpack.c.h.b16 %v1631
      %v1725 = vunpack.c.l.b16 %v1632
      %v1726 = vunpack.c.h.b16 %v1632
      %v1727 = vunpack.c.l.b16 %v1633
      %v1728 = vunpack.c.h.b16 %v1633
      %v1729 = vunpack.c.l.b16 %v1634
      %v1730 = vunpack.c.h.b16 %v1634
      %v1731 = vunpack.c.l.b16 %v1635
      %v1732 = vunpack.c.h.b16 %v1635
      %v1733 = vunpack.c.l.b16 %v1636
      %v1734 = vunpack.c.h.b16 %v1636
      %v1735 = vunpack.c.l.b16 %v1637
      %v1736 = vunpack.c.h.b16 %v1637
      %v1737 = vunpack.c.l.b16 %v1638
      %v1738 = vunpack.c.h.b16 %v1638
      %v1739 = vunpack.c.l.b16 %v1639
      %v1740 = vunpack.c.h.b16 %v1639
      %v1741 = vunpack.c.l.b16 %v1640
      %v1742 = vunpack.c.h.b16 %v1640
      %v1743 = vunpack.c.l.b16 %v1641
      %v1744 = vunpack.c.h.b16 %v1641
      %v1745 = vunpack.c.l.b16 %v1642
      %v1746 = vunpack.c.h.b16 %v1642
      %v1747 = vunpack.c.l.b16 %v1643
      %v1748 = vunpack.c.h.b16 %v1643
      %v1749 = vpack.c.b16 %v1687, %v1685
      %v1750 = vpack.c.b16 %v1688, %v1686
      %v1751 = vpack.c.b16 %v1691, %v1689
      %v1752 = vpack.c.b16 %v1692, %v1690
      %v1753 = vpack.c.b16 %v1695, %v1693
      %v1754 = vpack.c.b16 %v1696, %v1694
      %v1755 = vpack.c.b16 %v1699, %v1697
      %v1756 = vpack.c.b16 %v1700, %v1698
      %v1757 = vpack.c.b16 %v1703, %v1701
      %v1758 = vpack.c.b16 %v1704, %v1702
      %v1759 = vpack.c.b16 %v1707, %v1705
      %v1760 = vpack.c.b16 %v1708, %v1706
      %v1761 = vpack.c.b16 %v1711, %v1709
      %v1762 = vpack.c.b16 %v1712, %v1710
      %v1763 = vpack.c.b16 %v1715, %v1713
      %v1764 = vpack.c.b16 %v1716, %v1714
      %v1765 = vpack.c.b16 %v1719, %v1717
      %v1766 = vpack.c.b16 %v1720, %v1718
      %v1767 = vpack.c.b16 %v1723, %v1721
      %v1768 = vpack.c.b16 %v1724, %v1722
      %v1769 = vpack.c.b16 %v1727, %v1725
      %v1770 = vpack.c.b16 %v1728, %v1726
      %v1771 = vpack.c.b16 %v1731, %v1729
      %v1772 = vpack.c.b16 %v1732, %v1730
      %v1773 = vpack.c.b16 %v1735, %v1733
      %v1774 = vpack.c.b16 %v1736, %v1734
      %v1775 = vpack.c.b16 %v1739, %v1737
      %v1776 = vpack.c.b16 %v1740, %v1738
      %v1777 = vpack.c.b16 %v1743, %v1741
      %v1778 = vpack.c.b16 %v1744, %v1742
      %v1779 = vpack.c.b16 %v1747, %v1745
      %v1780 = vpack.c.b16 %v1748, %v1746
      %1813 = vmatprep.subr.bf16.mxu0 %v1764
      %1814 = vmatpush1.bf16.msra.mxu0 %v1763
      %1815 = vmatprep.subr.bf16.mxu0 %v1762
      %1816 = vmatpush1.bf16.msra.mxu0 %v1761
      %1817 = vmatprep.subr.bf16.mxu0 %v1760
      %1818 = vmatpush1.bf16.msra.mxu0 %v1759
      %1819 = vmatprep.subr.bf16.mxu0 %v1758
      %1820 = vmatpush1.bf16.msra.mxu0 %v1757
      %1821 = vmatprep.subr.bf16.mxu0 %v1756
      %1822 = vmatpush1.bf16.msra.mxu0 %v1755
      %1823 = vmatprep.subr.bf16.mxu0 %v1754
      %1824 = vmatpush1.bf16.msra.mxu0 %v1753
      %1825 = vmatprep.subr.bf16.mxu0 %v1752
      %1826 = vmatpush1.bf16.msra.mxu0 %v1751
      %1827 = vmatprep.subr.bf16.mxu0 %v1750
      %1828 = vmatpush1.bf16.msra.mxu0 %v1749
      %1829 = vmatprep.subr.bf16.mxu0 %v1780
      %1830 = vmatpush2.bf16.msra.mxu0 %v1779
      %1831 = vmatprep.subr.bf16.mxu0 %v1778
      %1832 = vmatpush2.bf16.msra.mxu0 %v1777
      %1833 = vmatprep.subr.bf16.mxu0 %v1776
      %1834 = vmatpush2.bf16.msra.mxu0 %v1775
      %1835 = vmatprep.subr.bf16.mxu0 %v1774
      %1836 = vmatpush2.bf16.msra.mxu0 %v1773
      %1837 = vmatprep.subr.bf16.mxu0 %v1772
      %1838 = vmatpush2.bf16.msra.mxu0 %v1771
      %1839 = vmatprep.subr.bf16.mxu0 %v1770
      %1840 = vmatpush2.bf16.msra.mxu0 %v1769
      %1841 = vmatprep.subr.bf16.mxu0 %v1768
      %1842 = vmatpush2.bf16.msra.mxu0 %v1767
      %1843 = vmatprep.subr.bf16.mxu0 %v1766
      %1844 = vmatpush2.bf16.msra.mxu0 %v1765
      %1845 = vmatprep.mubr.bf16.mxu0 %v1650
      %1846 = vmatmul.mubr.bf16.gmra.mxu0 %v1649
      %v1847 = vpop.f32.mrf.mxu0
      %v1848 = vadd.f32 0.0, %v1847
      %v1849 = vpop.f32.mrf.mxu0
      %v1850 = vadd.f32 0.0, %v1849
      %v1851 = vpop.f32.mrf.mxu0
      %v1852 = vpop.f32.mrf.mxu0
      %1853 = vdwg.mxu0
      %v1854 = vadd.f32 %v1608, %v1848
      %v1855 = vadd.f32 %v1609, %v1850
      %v1856 = vld [vmem:[%s873] sm:$0x66]
      %s1857 = scalar_lea.vmem %s1, 1792
      %v1858 = vld [vmem:[%s1857] sm:$0xff]
      %v1859 = vld [vmem:[%s1857 + $0x8] sm:$0xff]
      %v1860 = vld [vmem:[%s1857 + $0x10] sm:$0xff]
      %v1861 = vld [vmem:[%s1857 + $0x18] sm:$0xff]
      %v1862 = vld [vmem:[%s1857 + $0x20] sm:$0xff]
      %v1863 = vld [vmem:[%s1857 + $0x28] sm:$0xff]
      %v1864 = vld [vmem:[%s1857 + $0x30] sm:$0xff]
      %v1865 = vld [vmem:[%s1857 + $0x38] sm:$0xff]
      %v1866 = vld [vmem:[%s1857 + $0x40] sm:$0xff]
      %v1867 = vld [vmem:[%s1857 + $0x48] sm:$0xff]
      %v1868 = vld [vmem:[%s1857 + $0x50] sm:$0xff]
      %v1869 = vld [vmem:[%s1857 + $0x58] sm:$0xff]
      %v1870 = vld [vmem:[%s1857 + $0x60] sm:$0xff]
      %v1871 = vld [vmem:[%s1857 + $0x68] sm:$0xff]
      %v1872 = vld [vmem:[%s1857 + $0x70] sm:$0xff]
      %v1873 = vld [vmem:[%s1857 + $0x78] sm:$0xff]
      %v1874 = vld [vmem:[%s1857 + $0x80] sm:$0xff]
      %v1875 = vld [vmem:[%s1857 + $0x88] sm:$0xff]
      %v1876 = vld [vmem:[%s1857 + $0x90] sm:$0xff]
      %v1877 = vld [vmem:[%s1857 + $0x98] sm:$0xff]
      %v1878 = vld [vmem:[%s1857 + $0xa0] sm:$0xff]
      %v1879 = vld [vmem:[%s1857 + $0xa8] sm:$0xff]
      %v1880 = vld [vmem:[%s1857 + $0xb0] sm:$0xff]
      %v1881 = vld [vmem:[%s1857 + $0xb8] sm:$0xff]
      %v1882 = vld [vmem:[%s1857 + $0xc0] sm:$0xff]
      %v1883 = vld [vmem:[%s1857 + $0xc8] sm:$0xff]
      %v1884 = vld [vmem:[%s1857 + $0xd0] sm:$0xff]
      %v1885 = vld [vmem:[%s1857 + $0xd8] sm:$0xff]
      %v1886 = vld [vmem:[%s1857 + $0xe0] sm:$0xff]
      %v1887 = vld [vmem:[%s1857 + $0xe8] sm:$0xff]
      %v1888 = vld [vmem:[%s1857 + $0xf0] sm:$0xff]
      %v1889 = vld [vmem:[%s1857 + $0xf8] sm:$0xff]
      %v1891 = vunpack.c.l.b16 %v1856
      %v1892 = vunpack.c.h.b16 %v1856
      %v1893 = vpack.c.b16 %v1891, %v1891
      %v1894 = vpack.c.b16 %v1892, %v1892
      %v1895 = vrot.slane %v1893, 1
      %v1896 = vrot.slane %v1894, 1
      %v1931 = vunpack.c.l.b16 %v1858
      %v1932 = vunpack.c.h.b16 %v1858
      %v1933 = vunpack.c.l.b16 %v1859
      %v1934 = vunpack.c.h.b16 %v1859
      %v1935 = vunpack.c.l.b16 %v1860
      %v1936 = vunpack.c.h.b16 %v1860
      %v1937 = vunpack.c.l.b16 %v1861
      %v1938 = vunpack.c.h.b16 %v1861
      %v1939 = vunpack.c.l.b16 %v1862
      %v1940 = vunpack.c.h.b16 %v1862
      %v1941 = vunpack.c.l.b16 %v1863
      %v1942 = vunpack.c.h.b16 %v1863
      %v1943 = vunpack.c.l.b16 %v1864
      %v1944 = vunpack.c.h.b16 %v1864
      %v1945 = vunpack.c.l.b16 %v1865
      %v1946 = vunpack.c.h.b16 %v1865
      %v1947 = vunpack.c.l.b16 %v1866
      %v1948 = vunpack.c.h.b16 %v1866
      %v1949 = vunpack.c.l.b16 %v1867
      %v1950 = vunpack.c.h.b16 %v1867
      %v1951 = vunpack.c.l.b16 %v1868
      %v1952 = vunpack.c.h.b16 %v1868
      %v1953 = vunpack.c.l.b16 %v1869
      %v1954 = vunpack.c.h.b16 %v1869
      %v1955 = vunpack.c.l.b16 %v1870
      %v1956 = vunpack.c.h.b16 %v1870
      %v1957 = vunpack.c.l.b16 %v1871
      %v1958 = vunpack.c.h.b16 %v1871
      %v1959 = vunpack.c.l.b16 %v1872
      %v1960 = vunpack.c.h.b16 %v1872
      %v1961 = vunpack.c.l.b16 %v1873
      %v1962 = vunpack.c.h.b16 %v1873
      %v1963 = vunpack.c.l.b16 %v1874
      %v1964 = vunpack.c.h.b16 %v1874
      %v1965 = vunpack.c.l.b16 %v1875
      %v1966 = vunpack.c.h.b16 %v1875
      %v1967 = vunpack.c.l.b16 %v1876
      %v1968 = vunpack.c.h.b16 %v1876
      %v1969 = vunpack.c.l.b16 %v1877
      %v1970 = vunpack.c.h.b16 %v1877
      %v1971 = vunpack.c.l.b16 %v1878
      %v1972 = vunpack.c.h.b16 %v1878
      %v1973 = vunpack.c.l.b16 %v1879
      %v1974 = vunpack.c.h.b16 %v1879
      %v1975 = vunpack.c.l.b16 %v1880
      %v1976 = vunpack.c.h.b16 %v1880
      %v1977 = vunpack.c.l.b16 %v1881
      %v1978 = vunpack.c.h.b16 %v1881
      %v1979 = vunpack.c.l.b16 %v1882
      %v1980 = vunpack.c.h.b16 %v1882
      %v1981 = vunpack.c.l.b16 %v1883
      %v1982 = vunpack.c.h.b16 %v1883
      %v1983 = vunpack.c.l.b16 %v1884
      %v1984 = vunpack.c.h.b16 %v1884
      %v1985 = vunpack.c.l.b16 %v1885
      %v1986 = vunpack.c.h.b16 %v1885
      %v1987 = vunpack.c.l.b16 %v1886
      %v1988 = vunpack.c.h.b16 %v1886
      %v1989 = vunpack.c.l.b16 %v1887
      %v1990 = vunpack.c.h.b16 %v1887
      %v1991 = vunpack.c.l.b16 %v1888
      %v1992 = vunpack.c.h.b16 %v1888
      %v1993 = vunpack.c.l.b16 %v1889
      %v1994 = vunpack.c.h.b16 %v1889
      %v1995 = vpack.c.b16 %v1933, %v1931
      %v1996 = vpack.c.b16 %v1934, %v1932
      %v1997 = vpack.c.b16 %v1937, %v1935
      %v1998 = vpack.c.b16 %v1938, %v1936
      %v1999 = vpack.c.b16 %v1941, %v1939
      %v2000 = vpack.c.b16 %v1942, %v1940
      %v2001 = vpack.c.b16 %v1945, %v1943
      %v2002 = vpack.c.b16 %v1946, %v1944
      %v2003 = vpack.c.b16 %v1949, %v1947
      %v2004 = vpack.c.b16 %v1950, %v1948
      %v2005 = vpack.c.b16 %v1953, %v1951
      %v2006 = vpack.c.b16 %v1954, %v1952
      %v2007 = vpack.c.b16 %v1957, %v1955
      %v2008 = vpack.c.b16 %v1958, %v1956
      %v2009 = vpack.c.b16 %v1961, %v1959
      %v2010 = vpack.c.b16 %v1962, %v1960
      %v2011 = vpack.c.b16 %v1965, %v1963
      %v2012 = vpack.c.b16 %v1966, %v1964
      %v2013 = vpack.c.b16 %v1969, %v1967
      %v2014 = vpack.c.b16 %v1970, %v1968
      %v2015 = vpack.c.b16 %v1973, %v1971
      %v2016 = vpack.c.b16 %v1974, %v1972
      %v2017 = vpack.c.b16 %v1977, %v1975
      %v2018 = vpack.c.b16 %v1978, %v1976
      %v2019 = vpack.c.b16 %v1981, %v1979
      %v2020 = vpack.c.b16 %v1982, %v1980
      %v2021 = vpack.c.b16 %v1985, %v1983
      %v2022 = vpack.c.b16 %v1986, %v1984
      %v2023 = vpack.c.b16 %v1989, %v1987
      %v2024 = vpack.c.b16 %v1990, %v1988
      %v2025 = vpack.c.b16 %v1993, %v1991
      %v2026 = vpack.c.b16 %v1994, %v1992
      %2059 = vmatprep.subr.bf16.mxu0 %v2010
      %2060 = vmatpush1.bf16.msra.mxu0 %v2009
      %2061 = vmatprep.subr.bf16.mxu0 %v2008
      %2062 = vmatpush1.bf16.msra.mxu0 %v2007
      %2063 = vmatprep.subr.bf16.mxu0 %v2006
      %2064 = vmatpush1.bf16.msra.mxu0 %v2005
      %2065 = vmatprep.subr.bf16.mxu0 %v2004
      %2066 = vmatpush1.bf16.msra.mxu0 %v2003
      %2067 = vmatprep.subr.bf16.mxu0 %v2002
      %2068 = vmatpush1.bf16.msra.mxu0 %v2001
      %2069 = vmatprep.subr.bf16.mxu0 %v2000
      %2070 = vmatpush1.bf16.msra.mxu0 %v1999
      %2071 = vmatprep.subr.bf16.mxu0 %v1998
      %2072 = vmatpush1.bf16.msra.mxu0 %v1997
      %2073 = vmatprep.subr.bf16.mxu0 %v1996
      %2074 = vmatpush1.bf16.msra.mxu0 %v1995
      %2075 = vmatprep.subr.bf16.mxu0 %v2026
      %2076 = vmatpush2.bf16.msra.mxu0 %v2025
      %2077 = vmatprep.subr.bf16.mxu0 %v2024
      %2078 = vmatpush2.bf16.msra.mxu0 %v2023
      %2079 = vmatprep.subr.bf16.mxu0 %v2022
      %2080 = vmatpush2.bf16.msra.mxu0 %v2021
      %2081 = vmatprep.subr.bf16.mxu0 %v2020
      %2082 = vmatpush2.bf16.msra.mxu0 %v2019
      %2083 = vmatprep.subr.bf16.mxu0 %v2018
      %2084 = vmatpush2.bf16.msra.mxu0 %v2017
      %2085 = vmatprep.subr.bf16.mxu0 %v2016
      %2086 = vmatpush2.bf16.msra.mxu0 %v2015
      %2087 = vmatprep.subr.bf16.mxu0 %v2014
      %2088 = vmatpush2.bf16.msra.mxu0 %v2013
      %2089 = vmatprep.subr.bf16.mxu0 %v2012
      %2090 = vmatpush2.bf16.msra.mxu0 %v2011
      %2091 = vmatprep.mubr.bf16.mxu0 %v1896
      %2092 = vmatmul.mubr.bf16.gmra.mxu0 %v1895
      %v2093 = vpop.f32.mrf.mxu0
      %v2094 = vadd.f32 0.0, %v2093
      %v2095 = vpop.f32.mrf.mxu0
      %v2096 = vadd.f32 0.0, %v2095
      %v2097 = vpop.f32.mrf.mxu0
      %v2098 = vpop.f32.mrf.mxu0
      %2099 = vdwg.mxu0
      %v2100 = vadd.f32 %v1854, %v2094
      %v2101 = vadd.f32 %v1855, %v2096
      %vm2102 = vcmask 1043456
      %v2103 = vsel %vm2102, %v2100, 0.0
      %v2104 = vrot.slane %v2103, 4
      %v2105 = vadd.f32 %v2103, %v2104
      %v2106 = vrot.slane %v2105, 2
      %v2107 = vadd.f32 %v2105, %v2106
      %v2108 = vrot.slane %v2107, 1
      %v2109 = vadd.f32 %v2107, %v2108
      %v2110 = vsel %vm2102, %v2101, 0.0
      %v2111 = vrot.slane %v2110, 4
      %v2112 = vadd.f32 %v2110, %v2111
      %v2113 = vrot.slane %v2112, 2
      %v2114 = vadd.f32 %v2112, %v2113
      %v2115 = vrot.slane %v2114, 1
      %v2116 = vadd.f32 %v2114, %v2115
      %v2117 = vrcp.pop 4.0
      %v2118 = vmul.f32 %v2109, %v2117
      %v2119 = vmul.f32 %v2116, %v2117
      %v2120 = vsub.f32 %v2100, %v2118
      %v2121 = vsub.f32 %v2101, %v2119
      %v2122 = vmul.f32 %v2120, %v2120
      %v2123 = vmul.f32 %v2121, %v2121
      %v2124 = vsel %vm2102, %v2122, 0.0
      %v2125 = vrot.slane %v2124, 4
      %v2126 = vadd.f32 %v2124, %v2125
      %v2127 = vrot.slane %v2126, 2
      %v2128 = vadd.f32 %v2126, %v2127
      %v2129 = vrot.slane %v2128, 1
      %v2130 = vadd.f32 %v2128, %v2129
      %v2131 = vsel %vm2102, %v2123, 0.0
      %v2132 = vrot.slane %v2131, 4
      %v2133 = vadd.f32 %v2131, %v2132
      %v2134 = vrot.slane %v2133, 2
      %v2135 = vadd.f32 %v2133, %v2134
      %v2136 = vrot.slane %v2135, 1
      %v2137 = vadd.f32 %v2135, %v2136
      %v2138 = vmul.f32 %v2130, %v2117
      %v2139 = vmul.f32 %v2137, %v2117
      %v2140 = vadd.f32 %v2138, 1e-05
      %v2141 = vadd.f32 %v2139, 1e-05
      %v2142 = vrsqrt.pop %v2140
      %v2143 = vrsqrt.pop %v2141
      %v2144 = vmul.f32 %v2120, %v2142
      %v2145 = vmul.f32 %v2121, %v2143
      %v2146 = vmul.f32 %v2144, 0.2
      %v2147 = vmul.f32 %v2145, 0.2
      %v2148 = vmax.f32 %v2144, %v2146
      %v2149 = vmax.f32 %v2145, %v2147
      %v2150 = vpack.c.bf16 %v2148, %v2148
      %v2151 = vpack.c.bf16 %v2149, %v2149
      %v2154 = vcombine.low %v2150, %v2151
      %v2156 = vunpack.c.l.s4 1983009808
      %v2157 = vunpack.c.0.s8 %v2156
      %v2158 = vlaneseq
      %v2159 = vshrl.u32 %v2158, 7
      %v2160 = vsub.s32 %v2157, %v2159
      %v2161 = vrot.slane %v2154, %v2160
      %2163 = vst [vmem:[%s143] sm:$0xf] %v2161
      %p2164 = scmp.lt.s32.totalorder %s13, 1
      %s2165 = scalar_select %p2164, %s13, 1
      %s2166 = smul.addr %s2165, 2
      %s2167 = smul.addr %s2166, 2
      %s2168 = scalar_lea.vmem %s2, %s2167
      // Predicated region
      $region29: #{discriminator_forward.7} parent=27 // pred_check
        %p2169 = pneg %p78
      $region30: #{discriminator_forward.7} parent=27 // pred_check_branch
        %2171 = sbr.rel (%p2169) target = $region32
      $region31: #{discriminator_forward.7} parent=27 // pred_region
        _
      $region32: #{discriminator_forward.7} parent=27 // pred_fallthru
        _
    $region28: #{discriminator_forward.7} parent=5 // pred_fallthru
      _
    %p2172 = scmp.le.s32.totalorder 2, %s8
    // Predicated region
    $region33: #{discriminator_forward.7} parent=5 // pred_check
      %p2173 = pneg %p2172
    $region34: #{discriminator_forward.7} parent=5 // pred_check_branch
      %2175 = sbr.rel (%p2173) target = $region36
    $region35: #{discriminator_forward.7} parent=5 // pred_region
      %s2176 = ssub.s32 %s8, 2
      // Predicated region
      $region37: #{discriminator_forward.7} parent=35 // pred_check
        %p2177 = pneg %p84
      $region38: #{discriminator_forward.7} parent=35 // pred_check_branch
        %2179 = sbr.rel (%p2177) target = $region40
      $region39: #{discriminator_forward.7} parent=35 // pred_region
        %p2180 = scmp.lt.s32.totalorder %s14, 1
        %s2181 = scalar_select %p2180, %s14, 1
        %s2182 = smul.addr %s2181, 2
        %s2183 = smul.addr %s2182, 2
        %s2184 = scalar_lea.vmem %s2, %s2183
      $region40: #{discriminator_forward.7} parent=35 // pred_fallthru
        _
    $region36: #{discriminator_forward.7} parent=5 // pred_fallthru
      _
  $region6: #{discriminator_forward.7} parent=0 // loop_footer
    %s12 = sadd.s32 1, %s8
  $region7: #{discriminator_forward.7} parent=0 // loop_footer_branch
    %7 = sbr.rel target = $region3
  $region8: #{discriminator_forward.7} parent=0 // loop_exit
    _

// kernel: discriminator_forward.9
$region0: #{discriminator_forward.9}
  #allocation0 [shape = 'u32[]', space=smem, size = 0x4, offset = 0x4, fixed_abs, tag = 'smem constant byte address 0x4 - core index']
  #allocation1 [shape = 'u32[144,128]{1,0:T(1,128)}', space=vmem, size = 0x12000, scoped, tag = 'internal scratch']
  #allocation2 [shape = 'f32[1,1]{1,0:T(1,128)S(1)}', space=vmem, size = 0x200, scoped, tag = 'scoped memory for discriminator_forward.9']
  %s0 = inlined_call_operand.vmem [shape: bf16[2,1,8,1536], index: 0, kind: input, shape index: {}]
  %s1 = inlined_call_operand.vmem [shape: f32[3,1,1536], index: 1, kind: input, shape index: {}]
  %s2 = inlined_call_operand.<no memory space> [shape: f32[1,1], index: 2, kind: input, shape index: {}]
  %s3 = inlined_call_operand.vmem [shape: f32[2,1,1], index: 3, kind: output, shape index: {}]
  %s4 = sld [smem:[#allocation0]]
  $region45: #{discriminator_forward.9} parent=0
    _
  %s6 = ssub.s32 1, %s4
  %s7 = scalar_select 0, %s6, %s4
  %v8 = vstv %s2
  %9 = vst [vmem:[#allocation2] sm:$0x1] %v8
  loop: start=0, step=1, limit=4
  $region2: #{discriminator_forward.9} parent=0 // loop_pre_header
    _
  $region3: #{discriminator_forward.9} parent=0 // loop_header
    %s11 = sphi 0, %s15
    %p12 = scmp.ge.s32.totalorder %s11, 4
    %s21 = sphi 0, %s23
    %s24 = sphi 0, %s21
    %s25 = sphi 0, %s24
    %s41 = sphi 0, %s25
    %s45 = sphi 0, %s45
    %s47 = sphi 0, %s45
    %s48 = sphi 0, %s47
    %s62 = sphi 0, %s48
    %s66 = sphi 0, %s66
    %s68 = sphi 0, %s66
    %s69 = sphi 0, %s68
    %s83 = sphi 0, %s69
    %s89 = sphi 0, %s91
    %s92 = sphi 0, %s89
    %s93 = sphi 0, %s92
    %s109 = sphi 0, %s93
  $region4: #{discriminator_forward.9} parent=0 // loop_header_branch
    %14 = sbr.rel (%p12) target = $region8
  $region5: #{discriminator_forward.9} parent=0 // loop_body
    %s16 = ssub.s32 %s11, 1
    %s17 = ssub.s32 %s11, 2
    %s18 = sadd.s32 %s11, 1
    %s19 = ssub.s32 %s11, %s18
    %p20 = scmp.eq.s32.totalorder %s19, 0
    %s22 = sadd.s32 %s21, 1
    %s23 = scalar_select %p20, %s21, %s22
    %p26 = pneg %p20
    %p27 = scmp.eq.s32.totalorder %s11, 1
    %p28 = por %p26, %p27
    %p29 = scmp.ne.s32.totalorder %s21, %s24
    %p30 = scmp.eq.s32.totalorder %s11, 0
    %p31 = por %p29, %p30
    %p32 = scmp.ne.s32.totalorder %s21, %s24
    %p33 = scmp.eq.s32.totalorder %s16, 1
    %p34 = por %p32, %p33
    %p35 = scmp.ne.s32.totalorder %s24, %s25
    %p36 = scmp.eq.s32.totalorder %s16, 0
    %p37 = por %p35, %p36
    %p38 = scmp.ne.s32.totalorder %s24, %s25
    %p39 = scmp.eq.s32.totalorder %s17, 1
    %p40 = por %p38, %p39
    %p42 = scmp.ne.s32.totalorder %s25, %s41
    %p43 = scmp.eq.s32.totalorder %s17, 0
    %p44 = por %p42, %p43
    %s46 = sadd.s32 %s45, 1
    %p49 = scmp.eq.s32.totalorder %s11, 1
    %p50 = scmp.ne.s32.totalorder %s45, %s47
    %p51 = scmp.eq.s32.totalorder %s11, 0
    %p52 = por %p50, %p51
    %p53 = scmp.ne.s32.totalorder %s45, %s47
    %p54 = scmp.eq.s32.totalorder %s16, 1
    %p55 = por %p53, %p54
    %p56 = scmp.ne.s32.totalorder %s47, %s48
    %p57 = scmp.eq.s32.totalorder %s16, 0
    %p58 = por %p56, %p57
    %p59 = scmp.ne.s32.totalorder %s47, %s48
    %p60 = scmp.eq.s32.totalorder %s17, 1
    %p61 = por %p59, %p60
    %p63 = scmp.ne.s32.totalorder %s48, %s62
    %p64 = scmp.eq.s32.totalorder %s17, 0
    %p65 = por %p63, %p64
    %s67 = sadd.s32 %s66, 1
    %p70 = scmp.eq.s32.totalorder %s11, 1
    %p71 = scmp.ne.s32.totalorder %s66, %s68
    %p72 = scmp.eq.s32.totalorder %s11, 0
    %p73 = por %p71, %p72
    %p74 = scmp.ne.s32.totalorder %s66, %s68
    %p75 = scmp.eq.s32.totalorder %s16, 1
    %p76 = por %p74, %p75
    %p77 = scmp.ne.s32.totalorder %s68, %s69
    %p78 = scmp.eq.s32.totalorder %s16, 0
    %p79 = por %p77, %p78
    %p80 = scmp.ne.s32.totalorder %s68, %s69
    %p81 = scmp.eq.s32.totalorder %s17, 1
    %p82 = por %p80, %p81
    %p84 = scmp.ne.s32.totalorder %s69, %s83
    %p85 = scmp.eq.s32.totalorder %s17, 0
    %p86 = por %p84, %p85
    %s87 = ssub.s32 %s11, %s18
    %p88 = scmp.eq.s32.totalorder %s87, 0
    %s90 = sadd.s32 %s89, 1
    %s91 = scalar_select %p88, %s89, %s90
    %p94 = pneg %p88
    %p95 = scmp.eq.s32.totalorder %s11, 1
    %p96 = por %p94, %p95
    %p97 = scmp.ne.s32.totalorder %s89, %s92
    %p98 = scmp.eq.s32.totalorder %s11, 0
    %p99 = por %p97, %p98
    %p100 = scmp.ne.s32.totalorder %s89, %s92
    %p101 = scmp.eq.s32.totalorder %s16, 1
    %p102 = por %p100, %p101
    %p103 = scmp.ne.s32.totalorder %s92, %s93
    %p104 = scmp.eq.s32.totalorder %s16, 0
    %p105 = por %p103, %p104
    %p106 = scmp.ne.s32.totalorder %s92, %s93
    %p107 = scmp.eq.s32.totalorder %s17, 1
    %p108 = por %p106, %p107
    %p110 = scmp.ne.s32.totalorder %s93, %s109
    %p111 = scmp.eq.s32.totalorder %s17, 0
    %p112 = por %p110, %p111
    %p113 = scmp.le.s32.totalorder 1, %s11
    %p114 = scmp.lt.s32.totalorder %s11, 3
    %p115 = pnand %p113, %p114
    %p116 = pneg %p115
    // Predicated region
    $region9: #{discriminator_forward.9} parent=5 // pred_check
      _
    $region10: #{discriminator_forward.9} parent=5 // pred_check_branch
      %118 = sbr.rel (%p115) target = $region12
    $region11: #{discriminator_forward.9} parent=5 // pred_region
      %s119 = ssub.s32 %s11, 1
      // Predicated region
      $region13: #{discriminator_forward.9} parent=11 // pred_check
        %p120 = pneg %p58
      $region14: #{discriminator_forward.9} parent=11 // pred_check_branch
        %122 = sbr.rel (%p120) target = $region16
      $region15: #{discriminator_forward.9} parent=11 // pred_region
        _
      $region16: #{discriminator_forward.9} parent=11 // pred_fallthru
        _
      // Predicated region
      $region17: #{discriminator_forward.9} parent=11 // pred_check
        %p123 = pneg %p79
      $region18: #{discriminator_forward.9} parent=11 // pred_check_branch
        %125 = sbr.rel (%p123) target = $region20
      $region19: #{discriminator_forward.9} parent=11 // pred_region
        _
      $region20: #{discriminator_forward.9} parent=11 // pred_fallthru
        _
    $region12: #{discriminator_forward.9} parent=5 // pred_fallthru
      _
    %p126 = scmp.lt.s32.totalorder %s11, 2
    // Predicated region
    $region21: #{discriminator_forward.9} parent=5 // pred_check
      %p127 = pneg %p126
    $region22: #{discriminator_forward.9} parent=5 // pred_check_branch
      %129 = sbr.rel (%p127) target = $region24
    $region23: #{discriminator_forward.9} parent=5 // pred_region
      // Predicated region
      $region25: #{discriminator_forward.9} parent=23 // pred_check
        %p130 = pneg %p31
      $region26: #{discriminator_forward.9} parent=23 // pred_check_branch
        %132 = sbr.rel (%p130) target = $region28
      $region27: #{discriminator_forward.9} parent=23 // pred_region
        %p133 = scmp.lt.s32.totalorder %s11, 1
        %s134 = scalar_select %p133, %s11, 1
        %s135 = smul.addr %s134, 12
        %s136 = smul.addr %s135, 4
        %s137 = scalar_lea.vmem %s0, %s136
      $region28: #{discriminator_forward.9} parent=23 // pred_fallthru
        _
    $region24: #{discriminator_forward.9} parent=5 // pred_fallthru
      _
    %p138 = scmp.le.s32.totalorder 1, %s11
    %p139 = scmp.lt.s32.totalorder %s11, 3
    %p140 = pnand %p138, %p139
    %p141 = pneg %p140
    // Predicated region
    $region29: #{discriminator_forward.9} parent=5 // pred_check
      _
    $region30: #{discriminator_forward.9} parent=5 // pred_check_branch
      %143 = sbr.rel (%p140) target = $region32
    $region31: #{discriminator_forward.9} parent=5 // pred_region
      %s144 = ssub.s32 %s11, 1
      %p145 = scmp.lt.s32.totalorder %s16, 1
      %s146 = scalar_select %p145, %s16, 1
      %s147 = smul.addr %s146, 12
      %s148 = smul.addr %s147, 4
      %s149 = scalar_lea.vmem %s0, %s148
      %p150 = pneg %p37
      %p151 = pneg %p34
      %p152 = pneg %p58
      %p153 = pneg %p55
      %p154 = pneg %p79
      %p155 = pneg %p76
      %p156 = pneg %p105
      %p157 = pneg %p102
      %p158 = scmp.lt.s32.totalorder %s16, 1
      %s159 = scalar_select %p158, %s16, 1
      %s160 = scalar_lea.vmem %s3, %s159
      %p161 = scmp.lt.s32.totalorder %s16, 1
      %s162 = scalar_select %p161, %s16, 1
      %s163 = smul.addr %s162, 12
      %s164 = smul.addr %s163, 4
      %s165 = scalar_lea.vmem %s0, %s164
      %p166 = scmp.lt.s32.totalorder %s16, 1
      %s167 = scalar_select %p166, %s16, 1
      %s168 = scalar_lea.vmem %s3, %s167
      %v169 = vld [vmem:[%s165] sm:$0x33]
      %v170 = vld [vmem:[%s165 + $0x8] sm:$0x33]
      %v171 = vld [vmem:[%s165 + $0x10] sm:$0x33]
      %v172 = vld [vmem:[%s165 + $0x18] sm:$0x33]
      %v173 = vld [vmem:[%s165 + $0x20] sm:$0x33]
      %v174 = vld [vmem:[%s165 + $0x28] sm:$0x33]
      %v175 = vunpack.c.l.bf16 %v169
      %v176 = vunpack.c.h.bf16 %v169
      %v177 = vunpack.c.l.bf16 %v170
      %v178 = vunpack.c.h.bf16 %v170
      %v179 = vunpack.c.l.bf16 %v171
      %v180 = vunpack.c.h.bf16 %v171
      %v181 = vunpack.c.l.bf16 %v172
      %v182 = vunpack.c.h.bf16 %v172
      %v183 = vunpack.c.l.bf16 %v173
      %v184 = vunpack.c.h.bf16 %v173
      %v185 = vunpack.c.l.bf16 %v174
      %v186 = vunpack.c.h.bf16 %v174
      %v187 = vld [vmem:[%s1] sm:$0xff]
      %v188 = vld [vmem:[%s1 + $0x8] sm:$0xf]
      %v191 = vlaneseq
      %v192 = vshrl.u32 %v191, 7
      %v193 = vsub.s32 0, %v192
      %v194 = vrot.slane %v187, %v193
      %v195 = vlaneseq
      %v196 = vshrl.u32 %v195, 7
      %v197 = vsub.s32 1, %v196
      %v198 = vrot.slane %v187, %v197
      %v199 = vlaneseq
      %v200 = vshrl.u32 %v199, 7
      %v201 = vsub.s32 2, %v200
      %v202 = vrot.slane %v187, %v201
      %v203 = vlaneseq
      %v204 = vshrl.u32 %v203, 7
      %v205 = vsub.s32 3, %v204
      %v206 = vrot.slane %v187, %v205
      %v207 = vlaneseq
      %v208 = vshrl.u32 %v207, 7
      %v209 = vsub.s32 4, %v208
      %v210 = vrot.slane %v187, %v209
      %v211 = vlaneseq
      %v212 = vshrl.u32 %v211, 7
      %v213 = vsub.s32 5, %v212
      %v214 = vrot.slane %v187, %v213
      %v215 = vlaneseq
      %v216 = vshrl.u32 %v215, 7
      %v217 = vsub.s32 6, %v216
      %v218 = vrot.slane %v187, %v217
      %v219 = vlaneseq
      %v220 = vshrl.u32 %v219, 7
      %v221 = vsub.s32 7, %v220
      %v222 = vrot.slane %v187, %v221
      %v223 = vlaneseq
      %v224 = vshrl.u32 %v223, 7
      %v225 = vsub.s32 0, %v224
      %v226 = vrot.slane %v188, %v225
      %v227 = vlaneseq
      %v228 = vshrl.u32 %v227, 7
      %v229 = vsub.s32 1, %v228
      %v230 = vrot.slane %v188, %v229
      %v231 = vlaneseq
      %v232 = vshrl.u32 %v231, 7
      %v233 = vsub.s32 2, %v232
      %v234 = vrot.slane %v188, %v233
      %v235 = vlaneseq
      %v236 = vshrl.u32 %v235, 7
      %v237 = vsub.s32 3, %v236
      %v238 = vrot.slane %v188, %v237
      %v251 = vmul.f32 %v175, %v194
      %v252 = vmul.f32 %v176, %v198
      %v253 = vmul.f32 %v177, %v202
      %v254 = vmul.f32 %v178, %v206
      %v255 = vmul.f32 %v179, %v210
      %v256 = vmul.f32 %v180, %v214
      %v257 = vmul.f32 %v181, %v218
      %v258 = vmul.f32 %v182, %v222
      %v259 = vmul.f32 %v183, %v226
      %v260 = vmul.f32 %v184, %v230
      %v261 = vmul.f32 %v185, %v234
      %v262 = vmul.f32 %v186, %v238
      %vm263 = vcmask 1043456
      %v264 = vsel %vm263, %v251, 0.0
      %v265 = vsel %vm263, %v252, 0.0
      %v266 = vadd.f32 %v264, %v265
      %v267 = vsel %vm263, %v253, 0.0
      %v268 = vadd.f32 %v266, %v267
      %v269 = vsel %vm263, %v254, 0.0
      %v270 = vadd.f32 %v268, %v269
      %v271 = vsel %vm263, %v255, 0.0
      %v272 = vadd.f32 %v270, %v271
      %v273 = vsel %vm263, %v256, 0.0
      %v274 = vadd.f32 %v272, %v273
      %v275 = vsel %vm263, %v257, 0.0
      %v276 = vadd.f32 %v274, %v275
      %v277 = vsel %vm263, %v258, 0.0
      %v278 = vadd.f32 %v276, %v277
      %v279 = vsel %vm263, %v259, 0.0
      %v280 = vadd.f32 %v278, %v279
      %v281 = vsel %vm263, %v260, 0.0
      %v282 = vadd.f32 %v280, %v281
      %v283 = vsel %vm263, %v261, 0.0
      %v284 = vadd.f32 %v282, %v283
      %v285 = vsel %vm263, %v262, 0.0
      %v286 = vadd.f32 %v284, %v285
      %287 = vadd.xlane.f32.xlu0 %v286
      %v288 = vpop.xlane.xlu0 %287
      %v289 = vadd.f32 %v288, 0.0
      %v290 = vld [vmem:[%s165] sm:$0x66]
      %v291 = vld [vmem:[%s165 + $0x8] sm:$0x66]
      %v292 = vld [vmem:[%s165 + $0x10] sm:$0x66]
      %v293 = vld [vmem:[%s165 + $0x18] sm:$0x66]
      %v294 = vld [vmem:[%s165 + $0x20] sm:$0x66]
      %v295 = vld [vmem:[%s165 + $0x28] sm:$0x66]
      %v296 = vunpack.c.l.bf16 %v290
      %v297 = vunpack.c.h.bf16 %v290
      %v298 = vunpack.c.l.bf16 %v291
      %v299 = vunpack.c.h.bf16 %v291
      %v300 = vunpack.c.l.bf16 %v292
      %v301 = vunpack.c.h.bf16 %v292
      %v302 = vunpack.c.l.bf16 %v293
      %v303 = vunpack.c.h.bf16 %v293
      %v304 = vunpack.c.l.bf16 %v294
      %v305 = vunpack.c.h.bf16 %v294
      %v306 = vunpack.c.l.bf16 %v295
      %v307 = vunpack.c.h.bf16 %v295
      %s308 = scalar_lea.vmem %s1, 12
      %v309 = vld [vmem:[%s308] sm:$0xff]
      %v310 = vld [vmem:[%s308 + $0x8] sm:$0xf]
      %v313 = vlaneseq
      %v314 = vshrl.u32 %v313, 7
      %v315 = vsub.s32 0, %v314
      %v316 = vrot.slane %v309, %v315
      %v317 = vlaneseq
      %v318 = vshrl.u32 %v317, 7
      %v319 = vsub.s32 1, %v318
      %v320 = vrot.slane %v309, %v319
      %v321 = vlaneseq
      %v322 = vshrl.u32 %v321, 7
      %v323 = vsub.s32 2, %v322
      %v324 = vrot.slane %v309, %v323
      %v325 = vlaneseq
      %v326 = vshrl.u32 %v325, 7
      %v327 = vsub.s32 3, %v326
      %v328 = vrot.slane %v309, %v327
      %v329 = vlaneseq
      %v330 = vshrl.u32 %v329, 7
      %v331 = vsub.s32 4, %v330
      %v332 = vrot.slane %v309, %v331
      %v333 = vlaneseq
      %v334 = vshrl.u32 %v333, 7
      %v335 = vsub.s32 5, %v334
      %v336 = vrot.slane %v309, %v335
      %v337 = vlaneseq
      %v338 = vshrl.u32 %v337, 7
      %v339 = vsub.s32 6, %v338
      %v340 = vrot.slane %v309, %v339
      %v341 = vlaneseq
      %v342 = vshrl.u32 %v341, 7
      %v343 = vsub.s32 7, %v342
      %v344 = vrot.slane %v309, %v343
      %v345 = vlaneseq
      %v346 = vshrl.u32 %v345, 7
      %v347 = vsub.s32 0, %v346
      %v348 = vrot.slane %v310, %v347
      %v349 = vlaneseq
      %v350 = vshrl.u32 %v349, 7
      %v351 = vsub.s32 1, %v350
      %v352 = vrot.slane %v310, %v351
      %v353 = vlaneseq
      %v354 = vshrl.u32 %v353, 7
      %v355 = vsub.s32 2, %v354
      %v356 = vrot.slane %v310, %v355
      %v357 = vlaneseq
      %v358 = vshrl.u32 %v357, 7
      %v359 = vsub.s32 3, %v358
      %v360 = vrot.slane %v310, %v359
      %v373 = vmul.f32 %v296, %v316
      %v374 = vmul.f32 %v297, %v320
      %v375 = vmul.f32 %v298, %v324
      %v376 = vmul.f32 %v299, %v328
      %v377 = vmul.f32 %v300, %v332
      %v378 = vmul.f32 %v301, %v336
      %v379 = vmul.f32 %v302, %v340
      %v380 = vmul.f32 %v303, %v344
      %v381 = vmul.f32 %v304, %v348
      %v382 = vmul.f32 %v305, %v352
      %v383 = vmul.f32 %v306, %v356
      %v384 = vmul.f32 %v307, %v360
      %vm385 = vcmask 1045506
      %v386 = vsel %vm385, %v373, 0.0
      %v387 = vsel %vm385, %v374, 0.0
      %v388 = vadd.f32 %v386, %v387
      %v389 = vsel %vm385, %v375, 0.0
      %v390 = vadd.f32 %v388, %v389
      %v391 = vsel %vm385, %v376, 0.0
      %v392 = vadd.f32 %v390, %v391
      %v393 = vsel %vm385, %v377, 0.0
      %v394 = vadd.f32 %v392, %v393
      %v395 = vsel %vm385, %v378, 0.0
      %v396 = vadd.f32 %v394, %v395
      %v397 = vsel %vm385, %v379, 0.0
      %v398 = vadd.f32 %v396, %v397
      %v399 = vsel %vm385, %v380, 0.0
      %v400 = vadd.f32 %v398, %v399
      %v401 = vsel %vm385, %v381, 0.0
      %v402 = vadd.f32 %v400, %v401
      %v403 = vsel %vm385, %v382, 0.0
      %v404 = vadd.f32 %v402, %v403
      %v405 = vsel %vm385, %v383, 0.0
      %v406 = vadd.f32 %v404, %v405
      %v407 = vsel %vm385, %v384, 0.0
      %v408 = vadd.f32 %v406, %v407
      %409 = vadd.xlane.f32.xlu0 %v408
      %v410 = vpop.xlane.xlu0 %409
      %v412 = vrot.slane %v410, 2
      %v414 = vadd.f32 %v289, %v412
      %v415 = vld [vmem:[%s165] sm:$0xcc]
      %v416 = vld [vmem:[%s165 + $0x8] sm:$0xcc]
      %v417 = vld [vmem:[%s165 + $0x10] sm:$0xcc]
      %v418 = vld [vmem:[%s165 + $0x18] sm:$0xcc]
      %v419 = vld [vmem:[%s165 + $0x20] sm:$0xcc]
      %v420 = vld [vmem:[%s165 + $0x28] sm:$0xcc]
      %v421 = vunpack.c.l.bf16 %v415
      %v422 = vunpack.c.h.bf16 %v415
      %v423 = vunpack.c.l.bf16 %v416
      %v424 = vunpack.c.h.bf16 %v416
      %v425 = vunpack.c.l.bf16 %v417
      %v426 = vunpack.c.h.bf16 %v417
      %v427 = vunpack.c.l.bf16 %v418
      %v428 = vunpack.c.h.bf16 %v418
      %v429 = vunpack.c.l.bf16 %v419
      %v430 = vunpack.c.h.bf16 %v419
      %v431 = vunpack.c.l.bf16 %v420
      %v432 = vunpack.c.h.bf16 %v420
      %s433 = scalar_lea.vmem %s1, 24
      %v434 = vld [vmem:[%s433] sm:$0xff]
      %v435 = vld [vmem:[%s433 + $0x8] sm:$0xf]
      %v438 = vlaneseq
      %v439 = vshrl.u32 %v438, 7
      %v440 = vsub.s32 0, %v439
      %v441 = vrot.slane %v434, %v440
      %v442 = vlaneseq
      %v443 = vshrl.u32 %v442, 7
      %v444 = vsub.s32 1, %v443
      %v445 = vrot.slane %v434, %v444
      %v446 = vlaneseq
      %v447 = vshrl.u32 %v446, 7
      %v448 = vsub.s32 2, %v447
      %v449 = vrot.slane %v434, %v448
      %v450 = vlaneseq
      %v451 = vshrl.u32 %v450, 7
      %v452 = vsub.s32 3, %v451
      %v453 = vrot.slane %v434, %v452
      %v454 = vlaneseq
      %v455 = vshrl.u32 %v454, 7
      %v456 = vsub.s32 4, %v455
      %v457 = vrot.slane %v434, %v456
      %v458 = vlaneseq
      %v459 = vshrl.u32 %v458, 7
      %v460 = vsub.s32 5, %v459
      %v461 = vrot.slane %v434, %v460
      %v462 = vlaneseq
      %v463 = vshrl.u32 %v462, 7
      %v464 = vsub.s32 6, %v463
      %v465 = vrot.slane %v434, %v464
      %v466 = vlaneseq
      %v467 = vshrl.u32 %v466, 7
      %v468 = vsub.s32 7, %v467
      %v469 = vrot.slane %v434, %v468
      %v470 = vlaneseq
      %v471 = vshrl.u32 %v470, 7
      %v472 = vsub.s32 0, %v471
      %v473 = vrot.slane %v435, %v472
      %v474 = vlaneseq
      %v475 = vshrl.u32 %v474, 7
      %v476 = vsub.s32 1, %v475
      %v477 = vrot.slane %v435, %v476
      %v478 = vlaneseq
      %v479 = vshrl.u32 %v478, 7
      %v480 = vsub.s32 2, %v479
      %v481 = vrot.slane %v435, %v480
      %v482 = vlaneseq
      %v483 = vshrl.u32 %v482, 7
      %v484 = vsub.s32 3, %v483
      %v485 = vrot.slane %v435, %v484
      %v498 = vmul.f32 %v421, %v441
      %v499 = vmul.f32 %v422, %v445
      %v500 = vmul.f32 %v423, %v449
      %v501 = vmul.f32 %v424, %v453
      %v502 = vmul.f32 %v425, %v457
      %v503 = vmul.f32 %v426, %v461
      %v504 = vmul.f32 %v427, %v465
      %v505 = vmul.f32 %v428, %v469
      %v506 = vmul.f32 %v429, %v473
      %v507 = vmul.f32 %v430, %v477
      %v508 = vmul.f32 %v431, %v481
      %v509 = vmul.f32 %v432, %v485
      %vm510 = vcmask 1047556
      %v511 = vsel %vm510, %v498, 0.0
      %v512 = vsel %vm510, %v499, 0.0
      %v513 = vadd.f32 %v511, %v512
      %v514 = vsel %vm510, %v500, 0.0
      %v515 = vadd.f32 %v513, %v514
      %v516 = vsel %vm510, %v501, 0.0
      %v517 = vadd.f32 %v515, %v516
      %v518 = vsel %vm510, %v502, 0.0
      %v519 = vadd.f32 %v517, %v518
      %v520 = vsel %vm510, %v503, 0.0
      %v521 = vadd.f32 %v519, %v520
      %v522 = vsel %vm510, %v504, 0.0
      %v523 = vadd.f32 %v521, %v522
      %v524 = vsel %vm510, %v505, 0.0
      %v525 = vadd.f32 %v523, %v524
      %v526 = vsel %vm510, %v506, 0.0
      %v527 = vadd.f32 %v525, %v526
      %v528 = vsel %vm510, %v507, 0.0
      %v529 = vadd.f32 %v527, %v528
      %v530 = vsel %vm510, %v508, 0.0
      %v531 = vadd.f32 %v529, %v530
      %v532 = vsel %vm510, %v509, 0.0
      %v533 = vadd.f32 %v531, %v532
      %534 = vadd.xlane.f32.xlu0 %v533
      %v535 = vpop.xlane.xlu0 %534
      %v537 = vrot.slane %v535, 4
      %v539 = vadd.f32 %v414, %v537
      %v540 = vld [vmem:[#allocation2] sm:$0x1]
      %v542 = vlaneseq
      %v543 = vshrl.u32 %v542, 7
      %v544 = vsub.s32 0, %v543
      %v545 = vrot.slane %v540, %v544
      %v547 = vadd.f32 %v539, %v545
      %v548 = vsub.f32 0.0, %v547
      %v549 = vmul.f32 %v548, 1.442695
      %v550 = vpow.pop %v549
      %v551 = vadd.f32 %v550, 1.0
      %v552 = vrcp.pop %v551
      %vm553 = vcmask 3072
      %v554 = vsel %vm553, %v552, 0.0
      %v555 = vrot.slane %v554, 4
      %v556 = vadd.f32 %v554, %v555
      %v557 = vrot.slane %v556, 2
      %v558 = vadd.f32 %v556, %v557
      %v559 = vrot.slane %v558, 1
      %v560 = vadd.f32 %v558, %v559
      %vm561 = vcmask 0
      %562 = vst.msk [vmem:[%s168] sm:$0x1] %vm561, %v560
      %p563 = scmp.lt.s32.totalorder %s16, 1
      %s564 = scalar_select %p563, %s16, 1
      %s565 = scalar_lea.vmem %s3, %s564
      // Predicated region
      $region33: #{discriminator_forward.9} parent=31 // pred_check
        %p566 = pneg %p102
      $region34: #{discriminator_forward.9} parent=31 // pred_check_branch
        %568 = sbr.rel (%p566) target = $region36
      $region35: #{discriminator_forward.9} parent=31 // pred_region
        _
      $region36: #{discriminator_forward.9} parent=31 // pred_fallthru
        _
    $region32: #{discriminator_forward.9} parent=5 // pred_fallthru
      _
    %p569 = scmp.le.s32.totalorder 2, %s11
    // Predicated region
    $region37: #{discriminator_forward.9} parent=5 // pred_check
      %p570 = pneg %p569
    $region38: #{discriminator_forward.9} parent=5 // pred_check_branch
      %572 = sbr.rel (%p570) target = $region40
    $region39: #{discriminator_forward.9} parent=5 // pred_region
      %s573 = ssub.s32 %s11, 2
      // Predicated region
      $region41: #{discriminator_forward.9} parent=39 // pred_check
        %p574 = pneg %p108
      $region42: #{discriminator_forward.9} parent=39 // pred_check_branch
        %576 = sbr.rel (%p574) target = $region44
      $region43: #{discriminator_forward.9} parent=39 // pred_region
        %p577 = scmp.lt.s32.totalorder %s17, 1
        %s578 = scalar_select %p577, %s17, 1
        %s579 = scalar_lea.vmem %s3, %s578
      $region44: #{discriminator_forward.9} parent=39 // pred_fallthru
        _
    $region40: #{discriminator_forward.9} parent=5 // pred_fallthru
      _
  $region6: #{discriminator_forward.9} parent=0 // loop_footer
    %s15 = sadd.s32 1, %s11
  $region7: #{discriminator_forward.9} parent=0 // loop_footer_branch
    %10 = sbr.rel target = $region3
  $region8: #{discriminator_forward.9} parent=0 // loop_exit
    _

// kernel: discriminator_forward.8
$region0: #{discriminator_forward.8}
  #allocation0 [shape = 'u32[]', space=smem, size = 0x4, offset = 0x4, fixed_abs, tag = 'smem constant byte address 0x4 - core index']
  #allocation1 [shape = 'u32[144,128]{1,0:T(1,128)}', space=vmem, size = 0x12000, scoped, tag = 'internal scratch']
  %s0 = inlined_call_operand.vmem [shape: bf16[2,1,8,768], index: 0, kind: input, shape index: {}]
  %s1 = inlined_call_operand.vmem [shape: bf16[3,768,512], index: 1, kind: input, shape index: {}]
  %s2 = inlined_call_operand.vmem [shape: bf16[2,4,512], index: 2, kind: output, shape index: {}]
  %s3 = sld [smem:[#allocation0]]
  $region41: #{discriminator_forward.8} parent=0
    _
  %s5 = ssub.s32 1, %s3
  %s6 = scalar_select 0, %s5, %s3
  loop: start=0, step=1, limit=4
  $region2: #{discriminator_forward.8} parent=0 // loop_pre_header
    _
  $region3: #{discriminator_forward.8} parent=0 // loop_header
    %s8 = sphi 0, %s12
    %p9 = scmp.ge.s32.totalorder %s8, 4
    %s18 = sphi 0, %s20
    %s21 = sphi 0, %s18
    %s22 = sphi 0, %s21
    %s38 = sphi 0, %s22
    %s42 = sphi 0, %s42
    %s44 = sphi 0, %s42
    %s45 = sphi 0, %s44
    %s59 = sphi 0, %s45
    %s65 = sphi 0, %s67
    %s68 = sphi 0, %s65
    %s69 = sphi 0, %s68
    %s85 = sphi 0, %s69
  $region4: #{discriminator_forward.8} parent=0 // loop_header_branch
    %11 = sbr.rel (%p9) target = $region8
  $region5: #{discriminator_forward.8} parent=0 // loop_body
    %s13 = ssub.s32 %s8, 1
    %s14 = ssub.s32 %s8, 2
    %s15 = sadd.s32 %s8, 1
    %s16 = ssub.s32 %s8, %s15
    %p17 = scmp.eq.s32.totalorder %s16, 0
    %s19 = sadd.s32 %s18, 1
    %s20 = scalar_select %p17, %s18, %s19
    %p23 = pneg %p17
    %p24 = scmp.eq.s32.totalorder %s8, 1
    %p25 = por %p23, %p24
    %p26 = scmp.ne.s32.totalorder %s18, %s21
    %p27 = scmp.eq.s32.totalorder %s8, 0
    %p28 = por %p26, %p27
    %p29 = scmp.ne.s32.totalorder %s18, %s21
    %p30 = scmp.eq.s32.totalorder %s13, 1
    %p31 = por %p29, %p30
    %p32 = scmp.ne.s32.totalorder %s21, %s22
    %p33 = scmp.eq.s32.totalorder %s13, 0
    %p34 = por %p32, %p33
    %p35 = scmp.ne.s32.totalorder %s21, %s22
    %p36 = scmp.eq.s32.totalorder %s14, 1
    %p37 = por %p35, %p36
    %p39 = scmp.ne.s32.totalorder %s22, %s38
    %p40 = scmp.eq.s32.totalorder %s14, 0
    %p41 = por %p39, %p40
    %s43 = sadd.s32 %s42, 1
    %p46 = scmp.eq.s32.totalorder %s8, 1
    %p47 = scmp.ne.s32.totalorder %s42, %s44
    %p48 = scmp.eq.s32.totalorder %s8, 0
    %p49 = por %p47, %p48
    %p50 = scmp.ne.s32.totalorder %s42, %s44
    %p51 = scmp.eq.s32.totalorder %s13, 1
    %p52 = por %p50, %p51
    %p53 = scmp.ne.s32.totalorder %s44, %s45
    %p54 = scmp.eq.s32.totalorder %s13, 0
    %p55 = por %p53, %p54
    %p56 = scmp.ne.s32.totalorder %s44, %s45
    %p57 = scmp.eq.s32.totalorder %s14, 1
    %p58 = por %p56, %p57
    %p60 = scmp.ne.s32.totalorder %s45, %s59
    %p61 = scmp.eq.s32.totalorder %s14, 0
    %p62 = por %p60, %p61
    %s63 = ssub.s32 %s8, %s15
    %p64 = scmp.eq.s32.totalorder %s63, 0
    %s66 = sadd.s32 %s65, 1
    %s67 = scalar_select %p64, %s65, %s66
    %p70 = pneg %p64
    %p71 = scmp.eq.s32.totalorder %s8, 1
    %p72 = por %p70, %p71
    %p73 = scmp.ne.s32.totalorder %s65, %s68
    %p74 = scmp.eq.s32.totalorder %s8, 0
    %p75 = por %p73, %p74
    %p76 = scmp.ne.s32.totalorder %s65, %s68
    %p77 = scmp.eq.s32.totalorder %s13, 1
    %p78 = por %p76, %p77
    %p79 = scmp.ne.s32.totalorder %s68, %s69
    %p80 = scmp.eq.s32.totalorder %s13, 0
    %p81 = por %p79, %p80
    %p82 = scmp.ne.s32.totalorder %s68, %s69
    %p83 = scmp.eq.s32.totalorder %s14, 1
    %p84 = por %p82, %p83
    %p86 = scmp.ne.s32.totalorder %s69, %s85
    %p87 = scmp.eq.s32.totalorder %s14, 0
    %p88 = por %p86, %p87
    %p89 = scmp.le.s32.totalorder 1, %s8
    %p90 = scmp.lt.s32.totalorder %s8, 3
    %p91 = pnand %p89, %p90
    %p92 = pneg %p91
    // Predicated region
    $region9: #{discriminator_forward.8} parent=5 // pred_check
      _
    $region10: #{discriminator_forward.8} parent=5 // pred_check_branch
      %94 = sbr.rel (%p91) target = $region12
    $region11: #{discriminator_forward.8} parent=5 // pred_region
      %s95 = ssub.s32 %s8, 1
      // Predicated region
      $region13: #{discriminator_forward.8} parent=11 // pred_check
        %p96 = pneg %p55
      $region14: #{discriminator_forward.8} parent=11 // pred_check_branch
        %98 = sbr.rel (%p96) target = $region16
      $region15: #{discriminator_forward.8} parent=11 // pred_region
        _
      $region16: #{discriminator_forward.8} parent=11 // pred_fallthru
        _
    $region12: #{discriminator_forward.8} parent=5 // pred_fallthru
      _
    %p99 = scmp.lt.s32.totalorder %s8, 2
    // Predicated region
    $region17: #{discriminator_forward.8} parent=5 // pred_check
      %p100 = pneg %p99
    $region18: #{discriminator_forward.8} parent=5 // pred_check_branch
      %102 = sbr.rel (%p100) target = $region20
    $region19: #{discriminator_forward.8} parent=5 // pred_region
      // Predicated region
      $region21: #{discriminator_forward.8} parent=19 // pred_check
        %p103 = pneg %p28
      $region22: #{discriminator_forward.8} parent=19 // pred_check_branch
        %105 = sbr.rel (%p103) target = $region24
      $region23: #{discriminator_forward.8} parent=19 // pred_region
        %p106 = scmp.lt.s32.totalorder %s8, 1
        %s107 = scalar_select %p106, %s8, 1
        %s108 = smul.addr %s107, 6
        %s109 = smul.addr %s108, 4
        %s110 = scalar_lea.vmem %s0, %s109
      $region24: #{discriminator_forward.8} parent=19 // pred_fallthru
        _
    $region20: #{discriminator_forward.8} parent=5 // pred_fallthru
      _
    %p111 = scmp.le.s32.totalorder 1, %s8
    %p112 = scmp.lt.s32.totalorder %s8, 3
    %p113 = pnand %p111, %p112
    %p114 = pneg %p113
    // Predicated region
    $region25: #{discriminator_forward.8} parent=5 // pred_check
      _
    $region26: #{discriminator_forward.8} parent=5 // pred_check_branch
      %116 = sbr.rel (%p113) target = $region28
    $region27: #{discriminator_forward.8} parent=5 // pred_region
      %s117 = ssub.s32 %s8, 1
      %p118 = scmp.lt.s32.totalorder %s13, 1
      %s119 = scalar_select %p118, %s13, 1
      %s120 = smul.addr %s119, 6
      %s121 = smul.addr %s120, 4
      %s122 = scalar_lea.vmem %s0, %s121
      %p123 = pneg %p34
      %p124 = pneg %p31
      %p125 = pneg %p55
      %p126 = pneg %p52
      %p127 = pneg %p81
      %p128 = pneg %p78
      %p129 = scmp.lt.s32.totalorder %s13, 1
      %s130 = scalar_select %p129, %s13, 1
      %s131 = smul.addr %s130, 4
      %s132 = smul.addr %s131, 2
      %s133 = scalar_lea.vmem %s2, %s132
      %p134 = scmp.lt.s32.totalorder %s13, 1
      %s135 = scalar_select %p134, %s13, 1
      %s136 = smul.addr %s135, 6
      %s137 = smul.addr %s136, 4
      %s138 = scalar_lea.vmem %s0, %s137
      %p139 = scmp.lt.s32.totalorder %s13, 1
      %s140 = scalar_select %p139, %s13, 1
      %s141 = smul.addr %s140, 4
      %s142 = smul.addr %s141, 2
      %s143 = scalar_lea.vmem %s2, %s142
      %v144 = vld [vmem:[%s138] sm:$0x33]
      %v145 = vld [vmem:[%s138 + $0x8] sm:$0x33]
      %v146 = vld [vmem:[%s138 + $0x10] sm:$0x33]
      %v147 = vld [vmem:[%s1] sm:$0xff]
      %v148 = vld [vmem:[%s1 + $0x8] sm:$0xff]
      %v149 = vld [vmem:[%s1 + $0x10] sm:$0xff]
      %v150 = vld [vmem:[%s1 + $0x18] sm:$0xff]
      %v151 = vld [vmem:[%s1 + $0x20] sm:$0xff]
      %v152 = vld [vmem:[%s1 + $0x28] sm:$0xff]
      %v153 = vld [vmem:[%s1 + $0x30] sm:$0xff]
      %v154 = vld [vmem:[%s1 + $0x38] sm:$0xff]
      %v155 = vld [vmem:[%s1 + $0x40] sm:$0xff]
      %v156 = vld [vmem:[%s1 + $0x48] sm:$0xff]
      %v157 = vld [vmem:[%s1 + $0x50] sm:$0xff]
      %v158 = vld [vmem:[%s1 + $0x58] sm:$0xff]
      %v159 = vld [vmem:[%s1 + $0x60] sm:$0xff]
      %v160 = vld [vmem:[%s1 + $0x68] sm:$0xff]
      %v161 = vld [vmem:[%s1 + $0x70] sm:$0xff]
      %v162 = vld [vmem:[%s1 + $0x78] sm:$0xff]
      %v163 = vld [vmem:[%s1 + $0x80] sm:$0xff]
      %v164 = vld [vmem:[%s1 + $0x88] sm:$0xff]
      %v165 = vld [vmem:[%s1 + $0x90] sm:$0xff]
      %v166 = vld [vmem:[%s1 + $0x98] sm:$0xff]
      %v167 = vld [vmem:[%s1 + $0xa0] sm:$0xff]
      %v168 = vld [vmem:[%s1 + $0xa8] sm:$0xff]
      %v169 = vld [vmem:[%s1 + $0xb0] sm:$0xff]
      %v170 = vld [vmem:[%s1 + $0xb8] sm:$0xff]
      %v171 = vld [vmem:[%s1 + $0xc0] sm:$0xff]
      %v172 = vld [vmem:[%s1 + $0xc8] sm:$0xff]
      %v173 = vld [vmem:[%s1 + $0xd0] sm:$0xff]
      %v174 = vld [vmem:[%s1 + $0xd8] sm:$0xff]
      %v175 = vld [vmem:[%s1 + $0xe0] sm:$0xff]
      %v176 = vld [vmem:[%s1 + $0xe8] sm:$0xff]
      %v177 = vld [vmem:[%s1 + $0xf0] sm:$0xff]
      %v178 = vld [vmem:[%s1 + $0xf8] sm:$0xff]
      %v179 = vld [vmem:[%s1 + $0x100] sm:$0xff]
      %v180 = vld [vmem:[%s1 + $0x108] sm:$0xff]
      %v181 = vld [vmem:[%s1 + $0x110] sm:$0xff]
      %v182 = vld [vmem:[%s1 + $0x118] sm:$0xff]
      %v183 = vld [vmem:[%s1 + $0x120] sm:$0xff]
      %v184 = vld [vmem:[%s1 + $0x128] sm:$0xff]
      %v185 = vld [vmem:[%s1 + $0x130] sm:$0xff]
      %v186 = vld [vmem:[%s1 + $0x138] sm:$0xff]
      %v187 = vld [vmem:[%s1 + $0x140] sm:$0xff]
      %v188 = vld [vmem:[%s1 + $0x148] sm:$0xff]
      %v189 = vld [vmem:[%s1 + $0x150] sm:$0xff]
      %v190 = vld [vmem:[%s1 + $0x158] sm:$0xff]
      %v191 = vld [vmem:[%s1 + $0x160] sm:$0xff]
      %v192 = vld [vmem:[%s1 + $0x168] sm:$0xff]
      %v193 = vld [vmem:[%s1 + $0x170] sm:$0xff]
      %v194 = vld [vmem:[%s1 + $0x178] sm:$0xff]
      %v195 = vld [vmem:[%s1 + $0x180] sm:$0xff]
      %v196 = vld [vmem:[%s1 + $0x188] sm:$0xff]
      %v197 = vld [vmem:[%s1 + $0x190] sm:$0xff]
      %v198 = vld [vmem:[%s1 + $0x198] sm:$0xff]
      %v199 = vld [vmem:[%s1 + $0x1a0] sm:$0xff]
      %v200 = vld [vmem:[%s1 + $0x1a8] sm:$0xff]
      %v201 = vld [vmem:[%s1 + $0x1b0] sm:$0xff]
      %v202 = vld [vmem:[%s1 + $0x1b8] sm:$0xff]
      %v203 = vld [vmem:[%s1 + $0x1c0] sm:$0xff]
      %v204 = vld [vmem:[%s1 + $0x1c8] sm:$0xff]
      %v205 = vld [vmem:[%s1 + $0x1d0] sm:$0xff]
      %v206 = vld [vmem:[%s1 + $0x1d8] sm:$0xff]
      %v207 = vld [vmem:[%s1 + $0x1e0] sm:$0xff]
      %v208 = vld [vmem:[%s1 + $0x1e8] sm:$0xff]
      %v209 = vld [vmem:[%s1 + $0x1f0] sm:$0xff]
      %v210 = vld [vmem:[%s1 + $0x1f8] sm:$0xff]
      %v211 = vld [vmem:[%s1 + $0x200] sm:$0xff]
      %v212 = vld [vmem:[%s1 + $0x208] sm:$0xff]
      %v213 = vld [vmem:[%s1 + $0x210] sm:$0xff]
      %v214 = vld [vmem:[%s1 + $0x218] sm:$0xff]
      %v215 = vld [vmem:[%s1 + $0x220] sm:$0xff]
      %v216 = vld [vmem:[%s1 + $0x228] sm:$0xff]
      %v217 = vld [vmem:[%s1 + $0x230] sm:$0xff]
      %v218 = vld [vmem:[%s1 + $0x238] sm:$0xff]
      %v219 = vld [vmem:[%s1 + $0x240] sm:$0xff]
      %v220 = vld [vmem:[%s1 + $0x248] sm:$0xff]
      %v221 = vld [vmem:[%s1 + $0x250] sm:$0xff]
      %v222 = vld [vmem:[%s1 + $0x258] sm:$0xff]
      %v223 = vld [vmem:[%s1 + $0x260] sm:$0xff]
      %v224 = vld [vmem:[%s1 + $0x268] sm:$0xff]
      %v225 = vld [vmem:[%s1 + $0x270] sm:$0xff]
      %v226 = vld [vmem:[%s1 + $0x278] sm:$0xff]
      %v227 = vld [vmem:[%s1 + $0x280] sm:$0xff]
      %v228 = vld [vmem:[%s1 + $0x288] sm:$0xff]
      %v229 = vld [vmem:[%s1 + $0x290] sm:$0xff]
      %v230 = vld [vmem:[%s1 + $0x298] sm:$0xff]
      %v231 = vld [vmem:[%s1 + $0x2a0] sm:$0xff]
      %v232 = vld [vmem:[%s1 + $0x2a8] sm:$0xff]
      %v233 = vld [vmem:[%s1 + $0x2b0] sm:$0xff]
      %v234 = vld [vmem:[%s1 + $0x2b8] sm:$0xff]
      %v235 = vld [vmem:[%s1 + $0x2c0] sm:$0xff]
      %v236 = vld [vmem:[%s1 + $0x2c8] sm:$0xff]
      %v237 = vld [vmem:[%s1 + $0x2d0] sm:$0xff]
      %v238 = vld [vmem:[%s1 + $0x2d8] sm:$0xff]
      %v239 = vld [vmem:[%s1 + $0x2e0] sm:$0xff]
      %v240 = vld [vmem:[%s1 + $0x2e8] sm:$0xff]
      %v241 = vld [vmem:[%s1 + $0x2f0] sm:$0xff]
      %v242 = vld [vmem:[%s1 + $0x2f8] sm:$0xff]
      %v243 = vld [vmem:[%s1 + $0x300] sm:$0xff]
      %v244 = vld [vmem:[%s1 + $0x308] sm:$0xff]
      %v245 = vld [vmem:[%s1 + $0x310] sm:$0xff]
      %v246 = vld [vmem:[%s1 + $0x318] sm:$0xff]
      %v247 = vld [vmem:[%s1 + $0x320] sm:$0xff]
      %v248 = vld [vmem:[%s1 + $0x328] sm:$0xff]
      %v249 = vld [vmem:[%s1 + $0x330] sm:$0xff]
      %v250 = vld [vmem:[%s1 + $0x338] sm:$0xff]
      %v251 = vld [vmem:[%s1 + $0x340] sm:$0xff]
      %v252 = vld [vmem:[%s1 + $0x348] sm:$0xff]
      %v253 = vld [vmem:[%s1 + $0x350] sm:$0xff]
      %v254 = vld [vmem:[%s1 + $0x358] sm:$0xff]
      %v255 = vld [vmem:[%s1 + $0x360] sm:$0xff]
      %v256 = vld [vmem:[%s1 + $0x368] sm:$0xff]
      %v257 = vld [vmem:[%s1 + $0x370] sm:$0xff]
      %v258 = vld [vmem:[%s1 + $0x378] sm:$0xff]
      %v259 = vld [vmem:[%s1 + $0x380] sm:$0xff]
      %v260 = vld [vmem:[%s1 + $0x388] sm:$0xff]
      %v261 = vld [vmem:[%s1 + $0x390] sm:$0xff]
      %v262 = vld [vmem:[%s1 + $0x398] sm:$0xff]
      %v263 = vld [vmem:[%s1 + $0x3a0] sm:$0xff]
      %v264 = vld [vmem:[%s1 + $0x3a8] sm:$0xff]
      %v265 = vld [vmem:[%s1 + $0x3b0] sm:$0xff]
      %v266 = vld [vmem:[%s1 + $0x3b8] sm:$0xff]
      %v267 = vld [vmem:[%s1 + $0x3c0] sm:$0xff]
      %v268 = vld [vmem:[%s1 + $0x3c8] sm:$0xff]
      %v269 = vld [vmem:[%s1 + $0x3d0] sm:$0xff]
      %v270 = vld [vmem:[%s1 + $0x3d8] sm:$0xff]
      %v271 = vld [vmem:[%s1 + $0x3e0] sm:$0xff]
      %v272 = vld [vmem:[%s1 + $0x3e8] sm:$0xff]
      %v273 = vld [vmem:[%s1 + $0x3f0] sm:$0xff]
      %v274 = vld [vmem:[%s1 + $0x3f8] sm:$0xff]
      %v275 = vld [vmem:[%s1 + $0x400] sm:$0xff]
      %v276 = vld [vmem:[%s1 + $0x408] sm:$0xff]
      %v277 = vld [vmem:[%s1 + $0x410] sm:$0xff]
      %v278 = vld [vmem:[%s1 + $0x418] sm:$0xff]
      %v279 = vld [vmem:[%s1 + $0x420] sm:$0xff]
      %v280 = vld [vmem:[%s1 + $0x428] sm:$0xff]
      %v281 = vld [vmem:[%s1 + $0x430] sm:$0xff]
      %v282 = vld [vmem:[%s1 + $0x438] sm:$0xff]
      %v283 = vld [vmem:[%s1 + $0x440] sm:$0xff]
      %v284 = vld [vmem:[%s1 + $0x448] sm:$0xff]
      %v285 = vld [vmem:[%s1 + $0x450] sm:$0xff]
      %v286 = vld [vmem:[%s1 + $0x458] sm:$0xff]
      %v287 = vld [vmem:[%s1 + $0x460] sm:$0xff]
      %v288 = vld [vmem:[%s1 + $0x468] sm:$0xff]
      %v289 = vld [vmem:[%s1 + $0x470] sm:$0xff]
      %v290 = vld [vmem:[%s1 + $0x478] sm:$0xff]
      %v291 = vld [vmem:[%s1 + $0x480] sm:$0xff]
      %v292 = vld [vmem:[%s1 + $0x488] sm:$0xff]
      %v293 = vld [vmem:[%s1 + $0x490] sm:$0xff]
      %v294 = vld [vmem:[%s1 + $0x498] sm:$0xff]
      %v295 = vld [vmem:[%s1 + $0x4a0] sm:$0xff]
      %v296 = vld [vmem:[%s1 + $0x4a8] sm:$0xff]
      %v297 = vld [vmem:[%s1 + $0x4b0] sm:$0xff]
      %v298 = vld [vmem:[%s1 + $0x4b8] sm:$0xff]
      %v299 = vld [vmem:[%s1 + $0x4c0] sm:$0xff]
      %v300 = vld [vmem:[%s1 + $0x4c8] sm:$0xff]
      %v301 = vld [vmem:[%s1 + $0x4d0] sm:$0xff]
      %v302 = vld [vmem:[%s1 + $0x4d8] sm:$0xff]
      %v303 = vld [vmem:[%s1 + $0x4e0] sm:$0xff]
      %v304 = vld [vmem:[%s1 + $0x4e8] sm:$0xff]
      %v305 = vld [vmem:[%s1 + $0x4f0] sm:$0xff]
      %v306 = vld [vmem:[%s1 + $0x4f8] sm:$0xff]
      %v307 = vld [vmem:[%s1 + $0x500] sm:$0xff]
      %v308 = vld [vmem:[%s1 + $0x508] sm:$0xff]
      %v309 = vld [vmem:[%s1 + $0x510] sm:$0xff]
      %v310 = vld [vmem:[%s1 + $0x518] sm:$0xff]
      %v311 = vld [vmem:[%s1 + $0x520] sm:$0xff]
      %v312 = vld [vmem:[%s1 + $0x528] sm:$0xff]
      %v313 = vld [vmem:[%s1 + $0x530] sm:$0xff]
      %v314 = vld [vmem:[%s1 + $0x538] sm:$0xff]
      %v315 = vld [vmem:[%s1 + $0x540] sm:$0xff]
      %v316 = vld [vmem:[%s1 + $0x548] sm:$0xff]
      %v317 = vld [vmem:[%s1 + $0x550] sm:$0xff]
      %v318 = vld [vmem:[%s1 + $0x558] sm:$0xff]
      %v319 = vld [vmem:[%s1 + $0x560] sm:$0xff]
      %v320 = vld [vmem:[%s1 + $0x568] sm:$0xff]
      %v321 = vld [vmem:[%s1 + $0x570] sm:$0xff]
      %v322 = vld [vmem:[%s1 + $0x578] sm:$0xff]
      %v323 = vld [vmem:[%s1 + $0x580] sm:$0xff]
      %v324 = vld [vmem:[%s1 + $0x588] sm:$0xff]
      %v325 = vld [vmem:[%s1 + $0x590] sm:$0xff]
      %v326 = vld [vmem:[%s1 + $0x598] sm:$0xff]
      %v327 = vld [vmem:[%s1 + $0x5a0] sm:$0xff]
      %v328 = vld [vmem:[%s1 + $0x5a8] sm:$0xff]
      %v329 = vld [vmem:[%s1 + $0x5b0] sm:$0xff]
      %v330 = vld [vmem:[%s1 + $0x5b8] sm:$0xff]
      %v331 = vld [vmem:[%s1 + $0x5c0] sm:$0xff]
      %v332 = vld [vmem:[%s1 + $0x5c8] sm:$0xff]
      %v333 = vld [vmem:[%s1 + $0x5d0] sm:$0xff]
      %v334 = vld [vmem:[%s1 + $0x5d8] sm:$0xff]
      %v335 = vld [vmem:[%s1 + $0x5e0] sm:$0xff]
      %v336 = vld [vmem:[%s1 + $0x5e8] sm:$0xff]
      %v337 = vld [vmem:[%s1 + $0x5f0] sm:$0xff]
      %v338 = vld [vmem:[%s1 + $0x5f8] sm:$0xff]
      %v339 = vld [vmem:[%s138] sm:$0x66]
      %v340 = vld [vmem:[%s138 + $0x8] sm:$0x66]
      %v341 = vld [vmem:[%s138 + $0x10] sm:$0x66]
      %s342 = scalar_lea.vmem %s1, 1536
      %v343 = vld [vmem:[%s342] sm:$0xff]
      %v344 = vld [vmem:[%s342 + $0x8] sm:$0xff]
      %v345 = vld [vmem:[%s342 + $0x10] sm:$0xff]
      %v346 = vld [vmem:[%s342 + $0x18] sm:$0xff]
      %v347 = vld [vmem:[%s342 + $0x20] sm:$0xff]
      %v348 = vld [vmem:[%s342 + $0x28] sm:$0xff]
      %v349 = vld [vmem:[%s342 + $0x30] sm:$0xff]
      %v350 = vld [vmem:[%s342 + $0x38] sm:$0xff]
      %v351 = vld [vmem:[%s342 + $0x40] sm:$0xff]
      %v352 = vld [vmem:[%s342 + $0x48] sm:$0xff]
      %v353 = vld [vmem:[%s342 + $0x50] sm:$0xff]
      %v354 = vld [vmem:[%s342 + $0x58] sm:$0xff]
      %v355 = vld [vmem:[%s342 + $0x60] sm:$0xff]
      %v356 = vld [vmem:[%s342 + $0x68] sm:$0xff]
      %v357 = vld [vmem:[%s342 + $0x70] sm:$0xff]
      %v358 = vld [vmem:[%s342 + $0x78] sm:$0xff]
      %v359 = vld [vmem:[%s342 + $0x80] sm:$0xff]
      %v360 = vld [vmem:[%s342 + $0x88] sm:$0xff]
      %v361 = vld [vmem:[%s342 + $0x90] sm:$0xff]
      %v362 = vld [vmem:[%s342 + $0x98] sm:$0xff]
      %v363 = vld [vmem:[%s342 + $0xa0] sm:$0xff]
      %v364 = vld [vmem:[%s342 + $0xa8] sm:$0xff]
      %v365 = vld [vmem:[%s342 + $0xb0] sm:$0xff]
      %v366 = vld [vmem:[%s342 + $0xb8] sm:$0xff]
      %v367 = vld [vmem:[%s342 + $0xc0] sm:$0xff]
      %v368 = vld [vmem:[%s342 + $0xc8] sm:$0xff]
      %v369 = vld [vmem:[%s342 + $0xd0] sm:$0xff]
      %v370 = vld [vmem:[%s342 + $0xd8] sm:$0xff]
      %v371 = vld [vmem:[%s342 + $0xe0] sm:$0xff]
      %v372 = vld [vmem:[%s342 + $0xe8] sm:$0xff]
      %v373 = vld [vmem:[%s342 + $0xf0] sm:$0xff]
      %v374 = vld [vmem:[%s342 + $0xf8] sm:$0xff]
      %v375 = vld [vmem:[%s342 + $0x100] sm:$0xff]
      %v376 = vld [vmem:[%s342 + $0x108] sm:$0xff]
      %v377 = vld [vmem:[%s342 + $0x110] sm:$0xff]
      %v378 = vld [vmem:[%s342 + $0x118] sm:$0xff]
      %v379 = vld [vmem:[%s342 + $0x120] sm:$0xff]
      %v380 = vld [vmem:[%s342 + $0x128] sm:$0xff]
      %v381 = vld [vmem:[%s342 + $0x130] sm:$0xff]
      %v382 = vld [vmem:[%s342 + $0x138] sm:$0xff]
      %v383 = vld [vmem:[%s342 + $0x140] sm:$0xff]
      %v384 = vld [vmem:[%s342 + $0x148] sm:$0xff]
      %v385 = vld [vmem:[%s342 + $0x150] sm:$0xff]
      %v386 = vld [vmem:[%s342 + $0x158] sm:$0xff]
      %v387 = vld [vmem:[%s342 + $0x160] sm:$0xff]
      %v388 = vld [vmem:[%s342 + $0x168] sm:$0xff]
      %v389 = vld [vmem:[%s342 + $0x170] sm:$0xff]
      %v390 = vld [vmem:[%s342 + $0x178] sm:$0xff]
      %v391 = vld [vmem:[%s342 + $0x180] sm:$0xff]
      %v392 = vld [vmem:[%s342 + $0x188] sm:$0xff]
      %v393 = vld [vmem:[%s342 + $0x190] sm:$0xff]
      %v394 = vld [vmem:[%s342 + $0x198] sm:$0xff]
      %v395 = vld [vmem:[%s342 + $0x1a0] sm:$0xff]
      %v396 = vld [vmem:[%s342 + $0x1a8] sm:$0xff]
      %v397 = vld [vmem:[%s342 + $0x1b0] sm:$0xff]
      %v398 = vld [vmem:[%s342 + $0x1b8] sm:$0xff]
      %v399 = vld [vmem:[%s342 + $0x1c0] sm:$0xff]
      %v400 = vld [vmem:[%s342 + $0x1c8] sm:$0xff]
      %v401 = vld [vmem:[%s342 + $0x1d0] sm:$0xff]
      %v402 = vld [vmem:[%s342 + $0x1d8] sm:$0xff]
      %v403 = vld [vmem:[%s342 + $0x1e0] sm:$0xff]
      %v404 = vld [vmem:[%s342 + $0x1e8] sm:$0xff]
      %v405 = vld [vmem:[%s342 + $0x1f0] sm:$0xff]
      %v406 = vld [vmem:[%s342 + $0x1f8] sm:$0xff]
      %v407 = vld [vmem:[%s342 + $0x200] sm:$0xff]
      %v408 = vld [vmem:[%s342 + $0x208] sm:$0xff]
      %v409 = vld [vmem:[%s342 + $0x210] sm:$0xff]
      %v410 = vld [vmem:[%s342 + $0x218] sm:$0xff]
      %v411 = vld [vmem:[%s342 + $0x220] sm:$0xff]
      %v412 = vld [vmem:[%s342 + $0x228] sm:$0xff]
      %v413 = vld [vmem:[%s342 + $0x230] sm:$0xff]
      %v414 = vld [vmem:[%s342 + $0x238] sm:$0xff]
      %v415 = vld [vmem:[%s342 + $0x240] sm:$0xff]
      %v416 = vld [vmem:[%s342 + $0x248] sm:$0xff]
      %v417 = vld [vmem:[%s342 + $0x250] sm:$0xff]
      %v418 = vld [vmem:[%s342 + $0x258] sm:$0xff]
      %v419 = vld [vmem:[%s342 + $0x260] sm:$0xff]
      %v420 = vld [vmem:[%s342 + $0x268] sm:$0xff]
      %v421 = vld [vmem:[%s342 + $0x270] sm:$0xff]
      %v422 = vld [vmem:[%s342 + $0x278] sm:$0xff]
      %v423 = vld [vmem:[%s342 + $0x280] sm:$0xff]
      %v424 = vld [vmem:[%s342 + $0x288] sm:$0xff]
      %v425 = vld [vmem:[%s342 + $0x290] sm:$0xff]
      %v426 = vld [vmem:[%s342 + $0x298] sm:$0xff]
      %v427 = vld [vmem:[%s342 + $0x2a0] sm:$0xff]
      %v428 = vld [vmem:[%s342 + $0x2a8] sm:$0xff]
      %v429 = vld [vmem:[%s342 + $0x2b0] sm:$0xff]
      %v430 = vld [vmem:[%s342 + $0x2b8] sm:$0xff]
      %v431 = vld [vmem:[%s342 + $0x2c0] sm:$0xff]
      %v432 = vld [vmem:[%s342 + $0x2c8] sm:$0xff]
      %v433 = vld [vmem:[%s342 + $0x2d0] sm:$0xff]
      %v434 = vld [vmem:[%s342 + $0x2d8] sm:$0xff]
      %v435 = vld [vmem:[%s342 + $0x2e0] sm:$0xff]
      %v436 = vld [vmem:[%s342 + $0x2e8] sm:$0xff]
      %v437 = vld [vmem:[%s342 + $0x2f0] sm:$0xff]
      %v438 = vld [vmem:[%s342 + $0x2f8] sm:$0xff]
      %v439 = vld [vmem:[%s342 + $0x300] sm:$0xff]
      %v440 = vld [vmem:[%s342 + $0x308] sm:$0xff]
      %v441 = vld [vmem:[%s342 + $0x310] sm:$0xff]
      %v442 = vld [vmem:[%s342 + $0x318] sm:$0xff]
      %v443 = vld [vmem:[%s342 + $0x320] sm:$0xff]
      %v444 = vld [vmem:[%s342 + $0x328] sm:$0xff]
      %v445 = vld [vmem:[%s342 + $0x330] sm:$0xff]
      %v446 = vld [vmem:[%s342 + $0x338] sm:$0xff]
      %v447 = vld [vmem:[%s342 + $0x340] sm:$0xff]
      %v448 = vld [vmem:[%s342 + $0x348] sm:$0xff]
      %v449 = vld [vmem:[%s342 + $0x350] sm:$0xff]
      %v450 = vld [vmem:[%s342 + $0x358] sm:$0xff]
      %v451 = vld [vmem:[%s342 + $0x360] sm:$0xff]
      %v452 = vld [vmem:[%s342 + $0x368] sm:$0xff]
      %v453 = vld [vmem:[%s342 + $0x370] sm:$0xff]
      %v454 = vld [vmem:[%s342 + $0x378] sm:$0xff]
      %v455 = vld [vmem:[%s342 + $0x380] sm:$0xff]
      %v456 = vld [vmem:[%s342 + $0x388] sm:$0xff]
      %v457 = vld [vmem:[%s342 + $0x390] sm:$0xff]
      %v458 = vld [vmem:[%s342 + $0x398] sm:$0xff]
      %v459 = vld [vmem:[%s342 + $0x3a0] sm:$0xff]
      %v460 = vld [vmem:[%s342 + $0x3a8] sm:$0xff]
      %v461 = vld [vmem:[%s342 + $0x3b0] sm:$0xff]
      %v462 = vld [vmem:[%s342 + $0x3b8] sm:$0xff]
      %v463 = vld [vmem:[%s342 + $0x3c0] sm:$0xff]
      %v464 = vld [vmem:[%s342 + $0x3c8] sm:$0xff]
      %v465 = vld [vmem:[%s342 + $0x3d0] sm:$0xff]
      %v466 = vld [vmem:[%s342 + $0x3d8] sm:$0xff]
      %v467 = vld [vmem:[%s342 + $0x3e0] sm:$0xff]
      %v468 = vld [vmem:[%s342 + $0x3e8] sm:$0xff]
      %v469 = vld [vmem:[%s342 + $0x3f0] sm:$0xff]
      %v470 = vld [vmem:[%s342 + $0x3f8] sm:$0xff]
      %v471 = vld [vmem:[%s342 + $0x400] sm:$0xff]
      %v472 = vld [vmem:[%s342 + $0x408] sm:$0xff]
      %v473 = vld [vmem:[%s342 + $0x410] sm:$0xff]
      %v474 = vld [vmem:[%s342 + $0x418] sm:$0xff]
      %v475 = vld [vmem:[%s342 + $0x420] sm:$0xff]
      %v476 = vld [vmem:[%s342 + $0x428] sm:$0xff]
      %v477 = vld [vmem:[%s342 + $0x430] sm:$0xff]
      %v478 = vld [vmem:[%s342 + $0x438] sm:$0xff]
      %v479 = vld [vmem:[%s342 + $0x440] sm:$0xff]
      %v480 = vld [vmem:[%s342 + $0x448] sm:$0xff]
      %v481 = vld [vmem:[%s342 + $0x450] sm:$0xff]
      %v482 = vld [vmem:[%s342 + $0x458] sm:$0xff]
      %v483 = vld [vmem:[%s342 + $0x460] sm:$0xff]
      %v484 = vld [vmem:[%s342 + $0x468] sm:$0xff]
      %v485 = vld [vmem:[%s342 + $0x470] sm:$0xff]
      %v486 = vld [vmem:[%s342 + $0x478] sm:$0xff]
      %v487 = vld [vmem:[%s342 + $0x480] sm:$0xff]
      %v488 = vld [vmem:[%s342 + $0x488] sm:$0xff]
      %v489 = vld [vmem:[%s342 + $0x490] sm:$0xff]
      %v490 = vld [vmem:[%s342 + $0x498] sm:$0xff]
      %v491 = vld [vmem:[%s342 + $0x4a0] sm:$0xff]
      %v492 = vld [vmem:[%s342 + $0x4a8] sm:$0xff]
      %v493 = vld [vmem:[%s342 + $0x4b0] sm:$0xff]
      %v494 = vld [vmem:[%s342 + $0x4b8] sm:$0xff]
      %v495 = vld [vmem:[%s342 + $0x4c0] sm:$0xff]
      %v496 = vld [vmem:[%s342 + $0x4c8] sm:$0xff]
      %v497 = vld [vmem:[%s342 + $0x4d0] sm:$0xff]
      %v498 = vld [vmem:[%s342 + $0x4d8] sm:$0xff]
      %v499 = vld [vmem:[%s342 + $0x4e0] sm:$0xff]
      %v500 = vld [vmem:[%s342 + $0x4e8] sm:$0xff]
      %v501 = vld [vmem:[%s342 + $0x4f0] sm:$0xff]
      %v502 = vld [vmem:[%s342 + $0x4f8] sm:$0xff]
      %v503 = vld [vmem:[%s342 + $0x500] sm:$0xff]
      %v504 = vld [vmem:[%s342 + $0x508] sm:$0xff]
      %v505 = vld [vmem:[%s342 + $0x510] sm:$0xff]
      %v506 = vld [vmem:[%s342 + $0x518] sm:$0xff]
      %v507 = vld [vmem:[%s342 + $0x520] sm:$0xff]
      %v508 = vld [vmem:[%s342 + $0x528] sm:$0xff]
      %v509 = vld [vmem:[%s342 + $0x530] sm:$0xff]
      %v510 = vld [vmem:[%s342 + $0x538] sm:$0xff]
      %v511 = vld [vmem:[%s342 + $0x540] sm:$0xff]
      %v512 = vld [vmem:[%s342 + $0x548] sm:$0xff]
      %v513 = vld [vmem:[%s342 + $0x550] sm:$0xff]
      %v514 = vld [vmem:[%s342 + $0x558] sm:$0xff]
      %v515 = vld [vmem:[%s342 + $0x560] sm:$0xff]
      %v516 = vld [vmem:[%s342 + $0x568] sm:$0xff]
      %v517 = vld [vmem:[%s342 + $0x570] sm:$0xff]
      %v518 = vld [vmem:[%s342 + $0x578] sm:$0xff]
      %v519 = vld [vmem:[%s342 + $0x580] sm:$0xff]
      %v520 = vld [vmem:[%s342 + $0x588] sm:$0xff]
      %v521 = vld [vmem:[%s342 + $0x590] sm:$0xff]
      %v522 = vld [vmem:[%s342 + $0x598] sm:$0xff]
      %v523 = vld [vmem:[%s342 + $0x5a0] sm:$0xff]
      %v524 = vld [vmem:[%s342 + $0x5a8] sm:$0xff]
      %v525 = vld [vmem:[%s342 + $0x5b0] sm:$0xff]
      %v526 = vld [vmem:[%s342 + $0x5b8] sm:$0xff]
      %v527 = vld [vmem:[%s342 + $0x5c0] sm:$0xff]
      %v528 = vld [vmem:[%s342 + $0x5c8] sm:$0xff]
      %v529 = vld [vmem:[%s342 + $0x5d0] sm:$0xff]
      %v530 = vld [vmem:[%s342 + $0x5d8] sm:$0xff]
      %v531 = vld [vmem:[%s342 + $0x5e0] sm:$0xff]
      %v532 = vld [vmem:[%s342 + $0x5e8] sm:$0xff]
      %v533 = vld [vmem:[%s342 + $0x5f0] sm:$0xff]
      %v534 = vld [vmem:[%s342 + $0x5f8] sm:$0xff]
      %v538 = vunpack.c.l.b16 %v339
      %v539 = vunpack.c.h.b16 %v339
      %v540 = vunpack.c.l.b16 %v340
      %v541 = vunpack.c.h.b16 %v340
      %v542 = vunpack.c.l.b16 %v341
      %v543 = vunpack.c.h.b16 %v341
      %v544 = vpack.c.b16 %v538, %v538
      %v545 = vpack.c.b16 %v539, %v539
      %v546 = vpack.c.b16 %v540, %v540
      %v547 = vpack.c.b16 %v541, %v541
      %v548 = vpack.c.b16 %v542, %v542
      %v549 = vpack.c.b16 %v543, %v543
      %v550 = vrot.slane %v544, 1
      %v551 = vrot.slane %v545, 1
      %v552 = vrot.slane %v546, 1
      %v553 = vrot.slane %v547, 1
      %v554 = vrot.slane %v548, 1
      %v555 = vrot.slane %v549, 1
      %v754 = vunpack.c.l.b16 %v343
      %v755 = vunpack.c.h.b16 %v343
      %v756 = vunpack.c.l.b16 %v344
      %v757 = vunpack.c.h.b16 %v344
      %v758 = vunpack.c.l.b16 %v345
      %v759 = vunpack.c.h.b16 %v345
      %v760 = vunpack.c.l.b16 %v346
      %v761 = vunpack.c.h.b16 %v346
      %v762 = vunpack.c.l.b16 %v347
      %v763 = vunpack.c.h.b16 %v347
      %v764 = vunpack.c.l.b16 %v348
      %v765 = vunpack.c.h.b16 %v348
      %v766 = vunpack.c.l.b16 %v349
      %v767 = vunpack.c.h.b16 %v349
      %v768 = vunpack.c.l.b16 %v350
      %v769 = vunpack.c.h.b16 %v350
      %v770 = vunpack.c.l.b16 %v351
      %v771 = vunpack.c.h.b16 %v351
      %v772 = vunpack.c.l.b16 %v352
      %v773 = vunpack.c.h.b16 %v352
      %v774 = vunpack.c.l.b16 %v353
      %v775 = vunpack.c.h.b16 %v353
      %v776 = vunpack.c.l.b16 %v354
      %v777 = vunpack.c.h.b16 %v354
      %v778 = vunpack.c.l.b16 %v355
      %v779 = vunpack.c.h.b16 %v355
      %v780 = vunpack.c.l.b16 %v356
      %v781 = vunpack.c.h.b16 %v356
      %v782 = vunpack.c.l.b16 %v357
      %v783 = vunpack.c.h.b16 %v357
      %v784 = vunpack.c.l.b16 %v358
      %v785 = vunpack.c.h.b16 %v358
      %v786 = vunpack.c.l.b16 %v359
      %v787 = vunpack.c.h.b16 %v359
      %v788 = vunpack.c.l.b16 %v360
      %v789 = vunpack.c.h.b16 %v360
      %v790 = vunpack.c.l.b16 %v361
      %v791 = vunpack.c.h.b16 %v361
      %v792 = vunpack.c.l.b16 %v362
      %v793 = vunpack.c.h.b16 %v362
      %v794 = vunpack.c.l.b16 %v363
      %v795 = vunpack.c.h.b16 %v363
      %v796 = vunpack.c.l.b16 %v364
      %v797 = vunpack.c.h.b16 %v364
      %v798 = vunpack.c.l.b16 %v365
      %v799 = vunpack.c.h.b16 %v365
      %v800 = vunpack.c.l.b16 %v366
      %v801 = vunpack.c.h.b16 %v366
      %v802 = vunpack.c.l.b16 %v367
      %v803 = vunpack.c.h.b16 %v367
      %v804 = vunpack.c.l.b16 %v368
      %v805 = vunpack.c.h.b16 %v368
      %v806 = vunpack.c.l.b16 %v369
      %v807 = vunpack.c.h.b16 %v369
      %v808 = vunpack.c.l.b16 %v370
      %v809 = vunpack.c.h.b16 %v370
      %v810 = vunpack.c.l.b16 %v371
      %v811 = vunpack.c.h.b16 %v371
      %v812 = vunpack.c.l.b16 %v372
      %v813 = vunpack.c.h.b16 %v372
      %v814 = vunpack.c.l.b16 %v373
      %v815 = vunpack.c.h.b16 %v373
      %v816 = vunpack.c.l.b16 %v374
      %v817 = vunpack.c.h.b16 %v374
      %v818 = vunpack.c.l.b16 %v375
      %v819 = vunpack.c.h.b16 %v375
      %v820 = vunpack.c.l.b16 %v376
      %v821 = vunpack.c.h.b16 %v376
      %v822 = vunpack.c.l.b16 %v377
      %v823 = vunpack.c.h.b16 %v377
      %v824 = vunpack.c.l.b16 %v378
      %v825 = vunpack.c.h.b16 %v378
      %v826 = vunpack.c.l.b16 %v379
      %v827 = vunpack.c.h.b16 %v379
      %v828 = vunpack.c.l.b16 %v380
      %v829 = vunpack.c.h.b16 %v380
      %v830 = vunpack.c.l.b16 %v381
      %v831 = vunpack.c.h.b16 %v381
      %v832 = vunpack.c.l.b16 %v382
      %v833 = vunpack.c.h.b16 %v382
      %v834 = vunpack.c.l.b16 %v383
      %v835 = vunpack.c.h.b16 %v383
      %v836 = vunpack.c.l.b16 %v384
      %v837 = vunpack.c.h.b16 %v384
      %v838 = vunpack.c.l.b16 %v385
      %v839 = vunpack.c.h.b16 %v385
      %v840 = vunpack.c.l.b16 %v386
      %v841 = vunpack.c.h.b16 %v386
      %v842 = vunpack.c.l.b16 %v387
      %v843 = vunpack.c.h.b16 %v387
      %v844 = vunpack.c.l.b16 %v388
      %v845 = vunpack.c.h.b16 %v388
      %v846 = vunpack.c.l.b16 %v389
      %v847 = vunpack.c.h.b16 %v389
      %v848 = vunpack.c.l.b16 %v390
      %v849 = vunpack.c.h.b16 %v390
      %v850 = vunpack.c.l.b16 %v391
      %v851 = vunpack.c.h.b16 %v391
      %v852 = vunpack.c.l.b16 %v392
      %v853 = vunpack.c.h.b16 %v392
      %v854 = vunpack.c.l.b16 %v393
      %v855 = vunpack.c.h.b16 %v393
      %v856 = vunpack.c.l.b16 %v394
      %v857 = vunpack.c.h.b16 %v394
      %v858 = vunpack.c.l.b16 %v395
      %v859 = vunpack.c.h.b16 %v395
      %v860 = vunpack.c.l.b16 %v396
      %v861 = vunpack.c.h.b16 %v396
      %v862 = vunpack.c.l.b16 %v397
      %v863 = vunpack.c.h.b16 %v397
      %v864 = vunpack.c.l.b16 %v398
      %v865 = vunpack.c.h.b16 %v398
      %v866 = vunpack.c.l.b16 %v399
      %v867 = vunpack.c.h.b16 %v399
      %v868 = vunpack.c.l.b16 %v400
      %v869 = vunpack.c.h.b16 %v400
      %v870 = vunpack.c.l.b16 %v401
      %v871 = vunpack.c.h.b16 %v401
      %v872 = vunpack.c.l.b16 %v402
      %v873 = vunpack.c.h.b16 %v402
      %v874 = vunpack.c.l.b16 %v403
      %v875 = vunpack.c.h.b16 %v403
      %v876 = vunpack.c.l.b16 %v404
      %v877 = vunpack.c.h.b16 %v404
      %v878 = vunpack.c.l.b16 %v405
      %v879 = vunpack.c.h.b16 %v405
      %v880 = vunpack.c.l.b16 %v406
      %v881 = vunpack.c.h.b16 %v406
      %v882 = vunpack.c.l.b16 %v407
      %v883 = vunpack.c.h.b16 %v407
      %v884 = vunpack.c.l.b16 %v408
      %v885 = vunpack.c.h.b16 %v408
      %v886 = vunpack.c.l.b16 %v409
      %v887 = vunpack.c.h.b16 %v409
      %v888 = vunpack.c.l.b16 %v410
      %v889 = vunpack.c.h.b16 %v410
      %v890 = vunpack.c.l.b16 %v411
      %v891 = vunpack.c.h.b16 %v411
      %v892 = vunpack.c.l.b16 %v412
      %v893 = vunpack.c.h.b16 %v412
      %v894 = vunpack.c.l.b16 %v413
      %v895 = vunpack.c.h.b16 %v413
      %v896 = vunpack.c.l.b16 %v414
      %v897 = vunpack.c.h.b16 %v414
      %v898 = vunpack.c.l.b16 %v415
      %v899 = vunpack.c.h.b16 %v415
      %v900 = vunpack.c.l.b16 %v416
      %v901 = vunpack.c.h.b16 %v416
      %v902 = vunpack.c.l.b16 %v417
      %v903 = vunpack.c.h.b16 %v417
      %v904 = vunpack.c.l.b16 %v418
      %v905 = vunpack.c.h.b16 %v418
      %v906 = vunpack.c.l.b16 %v419
      %v907 = vunpack.c.h.b16 %v419
      %v908 = vunpack.c.l.b16 %v420
      %v909 = vunpack.c.h.b16 %v420
      %v910 = vunpack.c.l.b16 %v421
      %v911 = vunpack.c.h.b16 %v421
      %v912 = vunpack.c.l.b16 %v422
      %v913 = vunpack.c.h.b16 %v422
      %v914 = vunpack.c.l.b16 %v423
      %v915 = vunpack.c.h.b16 %v423
      %v916 = vunpack.c.l.b16 %v424
      %v917 = vunpack.c.h.b16 %v424
      %v918 = vunpack.c.l.b16 %v425
      %v919 = vunpack.c.h.b16 %v425
      %v920 = vunpack.c.l.b16 %v426
      %v921 = vunpack.c.h.b16 %v426
      %v922 = vunpack.c.l.b16 %v427
      %v923 = vunpack.c.h.b16 %v427
      %v924 = vunpack.c.l.b16 %v428
      %v925 = vunpack.c.h.b16 %v428
      %v926 = vunpack.c.l.b16 %v429
      %v927 = vunpack.c.h.b16 %v429
      %v928 = vunpack.c.l.b16 %v430
      %v929 = vunpack.c.h.b16 %v430
      %v930 = vunpack.c.l.b16 %v431
      %v931 = vunpack.c.h.b16 %v431
      %v932 = vunpack.c.l.b16 %v432
      %v933 = vunpack.c.h.b16 %v432
      %v934 = vunpack.c.l.b16 %v433
      %v935 = vunpack.c.h.b16 %v433
      %v936 = vunpack.c.l.b16 %v434
      %v937 = vunpack.c.h.b16 %v434
      %v938 = vunpack.c.l.b16 %v435
      %v939 = vunpack.c.h.b16 %v435
      %v940 = vunpack.c.l.b16 %v436
      %v941 = vunpack.c.h.b16 %v436
      %v942 = vunpack.c.l.b16 %v437
      %v943 = vunpack.c.h.b16 %v437
      %v944 = vunpack.c.l.b16 %v438
      %v945 = vunpack.c.h.b16 %v438
      %v946 = vunpack.c.l.b16 %v439
      %v947 = vunpack.c.h.b16 %v439
      %v948 = vunpack.c.l.b16 %v440
      %v949 = vunpack.c.h.b16 %v440
      %v950 = vunpack.c.l.b16 %v441
      %v951 = vunpack.c.h.b16 %v441
      %v952 = vunpack.c.l.b16 %v442
      %v953 = vunpack.c.h.b16 %v442
      %v954 = vunpack.c.l.b16 %v443
      %v955 = vunpack.c.h.b16 %v443
      %v956 = vunpack.c.l.b16 %v444
      %v957 = vunpack.c.h.b16 %v444
      %v958 = vunpack.c.l.b16 %v445
      %v959 = vunpack.c.h.b16 %v445
      %v960 = vunpack.c.l.b16 %v446
      %v961 = vunpack.c.h.b16 %v446
      %v962 = vunpack.c.l.b16 %v447
      %v963 = vunpack.c.h.b16 %v447
      %v964 = vunpack.c.l.b16 %v448
      %v965 = vunpack.c.h.b16 %v448
      %v966 = vunpack.c.l.b16 %v449
      %v967 = vunpack.c.h.b16 %v449
      %v968 = vunpack.c.l.b16 %v450
      %v969 = vunpack.c.h.b16 %v450
      %v970 = vunpack.c.l.b16 %v451
      %v971 = vunpack.c.h.b16 %v451
      %v972 = vunpack.c.l.b16 %v452
      %v973 = vunpack.c.h.b16 %v452
      %v974 = vunpack.c.l.b16 %v453
      %v975 = vunpack.c.h.b16 %v453
      %v976 = vunpack.c.l.b16 %v454
      %v977 = vunpack.c.h.b16 %v454
      %v978 = vunpack.c.l.b16 %v455
      %v979 = vunpack.c.h.b16 %v455
      %v980 = vunpack.c.l.b16 %v456
      %v981 = vunpack.c.h.b16 %v456
      %v982 = vunpack.c.l.b16 %v457
      %v983 = vunpack.c.h.b16 %v457
      %v984 = vunpack.c.l.b16 %v458
      %v985 = vunpack.c.h.b16 %v458
      %v986 = vunpack.c.l.b16 %v459
      %v987 = vunpack.c.h.b16 %v459
      %v988 = vunpack.c.l.b16 %v460
      %v989 = vunpack.c.h.b16 %v460
      %v990 = vunpack.c.l.b16 %v461
      %v991 = vunpack.c.h.b16 %v461
      %v992 = vunpack.c.l.b16 %v462
      %v993 = vunpack.c.h.b16 %v462
      %v994 = vunpack.c.l.b16 %v463
      %v995 = vunpack.c.h.b16 %v463
      %v996 = vunpack.c.l.b16 %v464
      %v997 = vunpack.c.h.b16 %v464
      %v998 = vunpack.c.l.b16 %v465
      %v999 = vunpack.c.h.b16 %v465
      %v1000 = vunpack.c.l.b16 %v466
      %v1001 = vunpack.c.h.b16 %v466
      %v1002 = vunpack.c.l.b16 %v467
      %v1003 = vunpack.c.h.b16 %v467
      %v1004 = vunpack.c.l.b16 %v468
      %v1005 = vunpack.c.h.b16 %v468
      %v1006 = vunpack.c.l.b16 %v469
      %v1007 = vunpack.c.h.b16 %v469
      %v1008 = vunpack.c.l.b16 %v470
      %v1009 = vunpack.c.h.b16 %v470
      %v1010 = vunpack.c.l.b16 %v471
      %v1011 = vunpack.c.h.b16 %v471
      %v1012 = vunpack.c.l.b16 %v472
      %v1013 = vunpack.c.h.b16 %v472
      %v1014 = vunpack.c.l.b16 %v473
      %v1015 = vunpack.c.h.b16 %v473
      %v1016 = vunpack.c.l.b16 %v474
      %v1017 = vunpack.c.h.b16 %v474
      %v1018 = vunpack.c.l.b16 %v475
      %v1019 = vunpack.c.h.b16 %v475
      %v1020 = vunpack.c.l.b16 %v476
      %v1021 = vunpack.c.h.b16 %v476
      %v1022 = vunpack.c.l.b16 %v477
      %v1023 = vunpack.c.h.b16 %v477
      %v1024 = vunpack.c.l.b16 %v478
      %v1025 = vunpack.c.h.b16 %v478
      %v1026 = vunpack.c.l.b16 %v479
      %v1027 = vunpack.c.h.b16 %v479
      %v1028 = vunpack.c.l.b16 %v480
      %v1029 = vunpack.c.h.b16 %v480
      %v1030 = vunpack.c.l.b16 %v481
      %v1031 = vunpack.c.h.b16 %v481
      %v1032 = vunpack.c.l.b16 %v482
      %v1033 = vunpack.c.h.b16 %v482
      %v1034 = vunpack.c.l.b16 %v483
      %v1035 = vunpack.c.h.b16 %v483
      %v1036 = vunpack.c.l.b16 %v484
      %v1037 = vunpack.c.h.b16 %v484
      %v1038 = vunpack.c.l.b16 %v485
      %v1039 = vunpack.c.h.b16 %v485
      %v1040 = vunpack.c.l.b16 %v486
      %v1041 = vunpack.c.h.b16 %v486
      %v1042 = vunpack.c.l.b16 %v487
      %v1043 = vunpack.c.h.b16 %v487
      %v1044 = vunpack.c.l.b16 %v488
      %v1045 = vunpack.c.h.b16 %v488
      %v1046 = vunpack.c.l.b16 %v489
      %v1047 = vunpack.c.h.b16 %v489
      %v1048 = vunpack.c.l.b16 %v490
      %v1049 = vunpack.c.h.b16 %v490
      %v1050 = vunpack.c.l.b16 %v491
      %v1051 = vunpack.c.h.b16 %v491
      %v1052 = vunpack.c.l.b16 %v492
      %v1053 = vunpack.c.h.b16 %v492
      %v1054 = vunpack.c.l.b16 %v493
      %v1055 = vunpack.c.h.b16 %v493
      %v1056 = vunpack.c.l.b16 %v494
      %v1057 = vunpack.c.h.b16 %v494
      %v1058 = vunpack.c.l.b16 %v495
      %v1059 = vunpack.c.h.b16 %v495
      %v1060 = vunpack.c.l.b16 %v496
      %v1061 = vunpack.c.h.b16 %v496
      %v1062 = vunpack.c.l.b16 %v497
      %v1063 = vunpack.c.h.b16 %v497
      %v1064 = vunpack.c.l.b16 %v498
      %v1065 = vunpack.c.h.b16 %v498
      %v1066 = vunpack.c.l.b16 %v499
      %v1067 = vunpack.c.h.b16 %v499
      %v1068 = vunpack.c.l.b16 %v500
      %v1069 = vunpack.c.h.b16 %v500
      %v1070 = vunpack.c.l.b16 %v501
      %v1071 = vunpack.c.h.b16 %v501
      %v1072 = vunpack.c.l.b16 %v502
      %v1073 = vunpack.c.h.b16 %v502
      %v1074 = vunpack.c.l.b16 %v503
      %v1075 = vunpack.c.h.b16 %v503
      %v1076 = vunpack.c.l.b16 %v504
      %v1077 = vunpack.c.h.b16 %v504
      %v1078 = vunpack.c.l.b16 %v505
      %v1079 = vunpack.c.h.b16 %v505
      %v1080 = vunpack.c.l.b16 %v506
      %v1081 = vunpack.c.h.b16 %v506
      %v1082 = vunpack.c.l.b16 %v507
      %v1083 = vunpack.c.h.b16 %v507
      %v1084 = vunpack.c.l.b16 %v508
      %v1085 = vunpack.c.h.b16 %v508
      %v1086 = vunpack.c.l.b16 %v509
      %v1087 = vunpack.c.h.b16 %v509
      %v1088 = vunpack.c.l.b16 %v510
      %v1089 = vunpack.c.h.b16 %v510
      %v1090 = vunpack.c.l.b16 %v511
      %v1091 = vunpack.c.h.b16 %v511
      %v1092 = vunpack.c.l.b16 %v512
      %v1093 = vunpack.c.h.b16 %v512
      %v1094 = vunpack.c.l.b16 %v513
      %v1095 = vunpack.c.h.b16 %v513
      %v1096 = vunpack.c.l.b16 %v514
      %v1097 = vunpack.c.h.b16 %v514
      %v1098 = vunpack.c.l.b16 %v515
      %v1099 = vunpack.c.h.b16 %v515
      %v1100 = vunpack.c.l.b16 %v516
      %v1101 = vunpack.c.h.b16 %v516
      %v1102 = vunpack.c.l.b16 %v517
      %v1103 = vunpack.c.h.b16 %v517
      %v1104 = vunpack.c.l.b16 %v518
      %v1105 = vunpack.c.h.b16 %v518
      %v1106 = vunpack.c.l.b16 %v519
      %v1107 = vunpack.c.h.b16 %v519
      %v1108 = vunpack.c.l.b16 %v520
      %v1109 = vunpack.c.h.b16 %v520
      %v1110 = vunpack.c.l.b16 %v521
      %v1111 = vunpack.c.h.b16 %v521
      %v1112 = vunpack.c.l.b16 %v522
      %v1113 = vunpack.c.h.b16 %v522
      %v1114 = vunpack.c.l.b16 %v523
      %v1115 = vunpack.c.h.b16 %v523
      %v1116 = vunpack.c.l.b16 %v524
      %v1117 = vunpack.c.h.b16 %v524
      %v1118 = vunpack.c.l.b16 %v525
      %v1119 = vunpack.c.h.b16 %v525
      %v1120 = vunpack.c.l.b16 %v526
      %v1121 = vunpack.c.h.b16 %v526
      %v1122 = vunpack.c.l.b16 %v527
      %v1123 = vunpack.c.h.b16 %v527
      %v1124 = vunpack.c.l.b16 %v528
      %v1125 = vunpack.c.h.b16 %v528
      %v1126 = vunpack.c.l.b16 %v529
      %v1127 = vunpack.c.h.b16 %v529
      %v1128 = vunpack.c.l.b16 %v530
      %v1129 = vunpack.c.h.b16 %v530
      %v1130 = vunpack.c.l.b16 %v531
      %v1131 = vunpack.c.h.b16 %v531
      %v1132 = vunpack.c.l.b16 %v532
      %v1133 = vunpack.c.h.b16 %v532
      %v1134 = vunpack.c.l.b16 %v533
      %v1135 = vunpack.c.h.b16 %v533
      %v1136 = vunpack.c.l.b16 %v534
      %v1137 = vunpack.c.h.b16 %v534
      %v1138 = vpack.c.b16 %v758, %v754
      %v1139 = vpack.c.b16 %v759, %v755
      %v1140 = vpack.c.b16 %v760, %v756
      %v1141 = vpack.c.b16 %v761, %v757
      %v1142 = vpack.c.b16 %v766, %v762
      %v1143 = vpack.c.b16 %v767, %v763
      %v1144 = vpack.c.b16 %v768, %v764
      %v1145 = vpack.c.b16 %v769, %v765
      %v1146 = vpack.c.b16 %v774, %v770
      %v1147 = vpack.c.b16 %v775, %v771
      %v1148 = vpack.c.b16 %v776, %v772
      %v1149 = vpack.c.b16 %v777, %v773
      %v1150 = vpack.c.b16 %v782, %v778
      %v1151 = vpack.c.b16 %v783, %v779
      %v1152 = vpack.c.b16 %v784, %v780
      %v1153 = vpack.c.b16 %v785, %v781
      %v1154 = vpack.c.b16 %v790, %v786
      %v1155 = vpack.c.b16 %v791, %v787
      %v1156 = vpack.c.b16 %v792, %v788
      %v1157 = vpack.c.b16 %v793, %v789
      %v1158 = vpack.c.b16 %v798, %v794
      %v1159 = vpack.c.b16 %v799, %v795
      %v1160 = vpack.c.b16 %v800, %v796
      %v1161 = vpack.c.b16 %v801, %v797
      %v1162 = vpack.c.b16 %v806, %v802
      %v1163 = vpack.c.b16 %v807, %v803
      %v1164 = vpack.c.b16 %v808, %v804
      %v1165 = vpack.c.b16 %v809, %v805
      %v1166 = vpack.c.b16 %v814, %v810
      %v1167 = vpack.c.b16 %v815, %v811
      %v1168 = vpack.c.b16 %v816, %v812
      %v1169 = vpack.c.b16 %v817, %v813
      %v1170 = vpack.c.b16 %v822, %v818
      %v1171 = vpack.c.b16 %v823, %v819
      %v1172 = vpack.c.b16 %v824, %v820
      %v1173 = vpack.c.b16 %v825, %v821
      %v1174 = vpack.c.b16 %v830, %v826
      %v1175 = vpack.c.b16 %v831, %v827
      %v1176 = vpack.c.b16 %v832, %v828
      %v1177 = vpack.c.b16 %v833, %v829
      %v1178 = vpack.c.b16 %v838, %v834
      %v1179 = vpack.c.b16 %v839, %v835
      %v1180 = vpack.c.b16 %v840, %v836
      %v1181 = vpack.c.b16 %v841, %v837
      %v1182 = vpack.c.b16 %v846, %v842
      %v1183 = vpack.c.b16 %v847, %v843
      %v1184 = vpack.c.b16 %v848, %v844
      %v1185 = vpack.c.b16 %v849, %v845
      %v1186 = vpack.c.b16 %v854, %v850
      %v1187 = vpack.c.b16 %v855, %v851
      %v1188 = vpack.c.b16 %v856, %v852
      %v1189 = vpack.c.b16 %v857, %v853
      %v1190 = vpack.c.b16 %v862, %v858
      %v1191 = vpack.c.b16 %v863, %v859
      %v1192 = vpack.c.b16 %v864, %v860
      %v1193 = vpack.c.b16 %v865, %v861
      %v1194 = vpack.c.b16 %v870, %v866
      %v1195 = vpack.c.b16 %v871, %v867
      %v1196 = vpack.c.b16 %v872, %v868
      %v1197 = vpack.c.b16 %v873, %v869
      %v1198 = vpack.c.b16 %v878, %v874
      %v1199 = vpack.c.b16 %v879, %v875
      %v1200 = vpack.c.b16 %v880, %v876
      %v1201 = vpack.c.b16 %v881, %v877
      %v1202 = vpack.c.b16 %v886, %v882
      %v1203 = vpack.c.b16 %v887, %v883
      %v1204 = vpack.c.b16 %v888, %v884
      %v1205 = vpack.c.b16 %v889, %v885
      %v1206 = vpack.c.b16 %v894, %v890
      %v1207 = vpack.c.b16 %v895, %v891
      %v1208 = vpack.c.b16 %v896, %v892
      %v1209 = vpack.c.b16 %v897, %v893
      %v1210 = vpack.c.b16 %v902, %v898
      %v1211 = vpack.c.b16 %v903, %v899
      %v1212 = vpack.c.b16 %v904, %v900
      %v1213 = vpack.c.b16 %v905, %v901
      %v1214 = vpack.c.b16 %v910, %v906
      %v1215 = vpack.c.b16 %v911, %v907
      %v1216 = vpack.c.b16 %v912, %v908
      %v1217 = vpack.c.b16 %v913, %v909
      %v1218 = vpack.c.b16 %v918, %v914
      %v1219 = vpack.c.b16 %v919, %v915
      %v1220 = vpack.c.b16 %v920, %v916
      %v1221 = vpack.c.b16 %v921, %v917
      %v1222 = vpack.c.b16 %v926, %v922
      %v1223 = vpack.c.b16 %v927, %v923
      %v1224 = vpack.c.b16 %v928, %v924
      %v1225 = vpack.c.b16 %v929, %v925
      %v1226 = vpack.c.b16 %v934, %v930
      %v1227 = vpack.c.b16 %v935, %v931
      %v1228 = vpack.c.b16 %v936, %v932
      %v1229 = vpack.c.b16 %v937, %v933
      %v1230 = vpack.c.b16 %v942, %v938
      %v1231 = vpack.c.b16 %v943, %v939
      %v1232 = vpack.c.b16 %v944, %v940
      %v1233 = vpack.c.b16 %v945, %v941
      %v1234 = vpack.c.b16 %v950, %v946
      %v1235 = vpack.c.b16 %v951, %v947
      %v1236 = vpack.c.b16 %v952, %v948
      %v1237 = vpack.c.b16 %v953, %v949
      %v1238 = vpack.c.b16 %v958, %v954
      %v1239 = vpack.c.b16 %v959, %v955
      %v1240 = vpack.c.b16 %v960, %v956
      %v1241 = vpack.c.b16 %v961, %v957
      %v1242 = vpack.c.b16 %v966, %v962
      %v1243 = vpack.c.b16 %v967, %v963
      %v1244 = vpack.c.b16 %v968, %v964
      %v1245 = vpack.c.b16 %v969, %v965
      %v1246 = vpack.c.b16 %v974, %v970
      %v1247 = vpack.c.b16 %v975, %v971
      %v1248 = vpack.c.b16 %v976, %v972
      %v1249 = vpack.c.b16 %v977, %v973
      %v1250 = vpack.c.b16 %v982, %v978
      %v1251 = vpack.c.b16 %v983, %v979
      %v1252 = vpack.c.b16 %v984, %v980
      %v1253 = vpack.c.b16 %v985, %v981
      %v1254 = vpack.c.b16 %v990, %v986
      %v1255 = vpack.c.b16 %v991, %v987
      %v1256 = vpack.c.b16 %v992, %v988
      %v1257 = vpack.c.b16 %v993, %v989
      %v1258 = vpack.c.b16 %v998, %v994
      %v1259 = vpack.c.b16 %v999, %v995
      %v1260 = vpack.c.b16 %v1000, %v996
      %v1261 = vpack.c.b16 %v1001, %v997
      %v1262 = vpack.c.b16 %v1006, %v1002
      %v1263 = vpack.c.b16 %v1007, %v1003
      %v1264 = vpack.c.b16 %v1008, %v1004
      %v1265 = vpack.c.b16 %v1009, %v1005
      %v1266 = vpack.c.b16 %v1014, %v1010
      %v1267 = vpack.c.b16 %v1015, %v1011
      %v1268 = vpack.c.b16 %v1016, %v1012
      %v1269 = vpack.c.b16 %v1017, %v1013
      %v1270 = vpack.c.b16 %v1022, %v1018
      %v1271 = vpack.c.b16 %v1023, %v1019
      %v1272 = vpack.c.b16 %v1024, %v1020
      %v1273 = vpack.c.b16 %v1025, %v1021
      %v1274 = vpack.c.b16 %v1030, %v1026
      %v1275 = vpack.c.b16 %v1031, %v1027
      %v1276 = vpack.c.b16 %v1032, %v1028
      %v1277 = vpack.c.b16 %v1033, %v1029
      %v1278 = vpack.c.b16 %v1038, %v1034
      %v1279 = vpack.c.b16 %v1039, %v1035
      %v1280 = vpack.c.b16 %v1040, %v1036
      %v1281 = vpack.c.b16 %v1041, %v1037
      %v1282 = vpack.c.b16 %v1046, %v1042
      %v1283 = vpack.c.b16 %v1047, %v1043
      %v1284 = vpack.c.b16 %v1048, %v1044
      %v1285 = vpack.c.b16 %v1049, %v1045
      %v1286 = vpack.c.b16 %v1054, %v1050
      %v1287 = vpack.c.b16 %v1055, %v1051
      %v1288 = vpack.c.b16 %v1056, %v1052
      %v1289 = vpack.c.b16 %v1057, %v1053
      %v1290 = vpack.c.b16 %v1062, %v1058
      %v1291 = vpack.c.b16 %v1063, %v1059
      %v1292 = vpack.c.b16 %v1064, %v1060
      %v1293 = vpack.c.b16 %v1065, %v1061
      %v1294 = vpack.c.b16 %v1070, %v1066
      %v1295 = vpack.c.b16 %v1071, %v1067
      %v1296 = vpack.c.b16 %v1072, %v1068
      %v1297 = vpack.c.b16 %v1073, %v1069
      %v1298 = vpack.c.b16 %v1078, %v1074
      %v1299 = vpack.c.b16 %v1079, %v1075
      %v1300 = vpack.c.b16 %v1080, %v1076
      %v1301 = vpack.c.b16 %v1081, %v1077
      %v1302 = vpack.c.b16 %v1086, %v1082
      %v1303 = vpack.c.b16 %v1087, %v1083
      %v1304 = vpack.c.b16 %v1088, %v1084
      %v1305 = vpack.c.b16 %v1089, %v1085
      %v1306 = vpack.c.b16 %v1094, %v1090
      %v1307 = vpack.c.b16 %v1095, %v1091
      %v1308 = vpack.c.b16 %v1096, %v1092
      %v1309 = vpack.c.b16 %v1097, %v1093
      %v1310 = vpack.c.b16 %v1102, %v1098
      %v1311 = vpack.c.b16 %v1103, %v1099
      %v1312 = vpack.c.b16 %v1104, %v1100
      %v1313 = vpack.c.b16 %v1105, %v1101
      %v1314 = vpack.c.b16 %v1110, %v1106
      %v1315 = vpack.c.b16 %v1111, %v1107
      %v1316 = vpack.c.b16 %v1112, %v1108
      %v1317 = vpack.c.b16 %v1113, %v1109
      %v1318 = vpack.c.b16 %v1118, %v1114
      %v1319 = vpack.c.b16 %v1119, %v1115
      %v1320 = vpack.c.b16 %v1120, %v1116
      %v1321 = vpack.c.b16 %v1121, %v1117
      %v1322 = vpack.c.b16 %v1126, %v1122
      %v1323 = vpack.c.b16 %v1127, %v1123
      %v1324 = vpack.c.b16 %v1128, %v1124
      %v1325 = vpack.c.b16 %v1129, %v1125
      %v1326 = vpack.c.b16 %v1134, %v1130
      %v1327 = vpack.c.b16 %v1135, %v1131
      %v1328 = vpack.c.b16 %v1136, %v1132
      %v1329 = vpack.c.b16 %v1137, %v1133
      %1522 = vmatprep.subr.bf16.mxu0 %v1167
      %1523 = vmatpush1.bf16.msra.mxu0 %v1166
      %1524 = vmatprep.subr.bf16.mxu0 %v1163
      %1525 = vmatpush1.bf16.msra.mxu0 %v1162
      %1526 = vmatprep.subr.bf16.mxu0 %v1159
      %1527 = vmatpush1.bf16.msra.mxu0 %v1158
      %1528 = vmatprep.subr.bf16.mxu0 %v1155
      %1529 = vmatpush1.bf16.msra.mxu0 %v1154
      %1530 = vmatprep.subr.bf16.mxu0 %v1151
      %1531 = vmatpush1.bf16.msra.mxu0 %v1150
      %1532 = vmatprep.subr.bf16.mxu0 %v1147
      %1533 = vmatpush1.bf16.msra.mxu0 %v1146
      %1534 = vmatprep.subr.bf16.mxu0 %v1143
      %1535 = vmatpush1.bf16.msra.mxu0 %v1142
      %1536 = vmatprep.subr.bf16.mxu0 %v1139
      %1537 = vmatpush1.bf16.msra.mxu0 %v1138
      %1538 = vmatprep.subr.bf16.mxu0 %v1199
      %1539 = vmatpush2.bf16.msra.mxu0 %v1198
      %1540 = vmatprep.subr.bf16.mxu0 %v1195
      %1541 = vmatpush2.bf16.msra.mxu0 %v1194
      %1542 = vmatprep.subr.bf16.mxu0 %v1191
      %1543 = vmatpush2.bf16.msra.mxu0 %v1190
      %1544 = vmatprep.subr.bf16.mxu0 %v1187
      %1545 = vmatpush2.bf16.msra.mxu0 %v1186
      %1546 = vmatprep.subr.bf16.mxu0 %v1183
      %1547 = vmatpush2.bf16.msra.mxu0 %v1182
      %1548 = vmatprep.subr.bf16.mxu0 %v1179
      %1549 = vmatpush2.bf16.msra.mxu0 %v1178
      %1550 = vmatprep.subr.bf16.mxu0 %v1175
      %1551 = vmatpush2.bf16.msra.mxu0 %v1174
      %1552 = vmatprep.subr.bf16.mxu0 %v1171
      %1553 = vmatpush2.bf16.msra.mxu0 %v1170
      %1554 = vmatprep.mubr.bf16.mxu0 %v551
      %1555 = vmatmul.mubr.bf16.gmra.mxu0 %v550
      %v1556 = vpop.f32.mrf.mxu0
      %v1557 = vadd.f32 0.0, %v1556
      %v1558 = vpop.f32.mrf.mxu0
      %v1559 = vadd.f32 0.0, %v1558
      %v1560 = vpop.f32.mrf.mxu0
      %v1561 = vpop.f32.mrf.mxu0
      %1562 = vdwg.mxu0
      %1563 = vmatprep.subr.bf16.mxu0 %v1231
      %1564 = vmatpush1.bf16.msra.mxu0 %v1230
      %1565 = vmatprep.subr.bf16.mxu0 %v1227
      %1566 = vmatpush1.bf16.msra.mxu0 %v1226
      %1567 = vmatprep.subr.bf16.mxu0 %v1223
      %1568 = vmatpush1.bf16.msra.mxu0 %v1222
      %1569 = vmatprep.subr.bf16.mxu0 %v1219
      %1570 = vmatpush1.bf16.msra.mxu0 %v1218
      %1571 = vmatprep.subr.bf16.mxu0 %v1215
      %1572 = vmatpush1.bf16.msra.mxu0 %v1214
      %1573 = vmatprep.subr.bf16.mxu0 %v1211
      %1574 = vmatpush1.bf16.msra.mxu0 %v1210
      %1575 = vmatprep.subr.bf16.mxu0 %v1207
      %1576 = vmatpush1.bf16.msra.mxu0 %v1206
      %1577 = vmatprep.subr.bf16.mxu0 %v1203
      %1578 = vmatpush1.bf16.msra.mxu0 %v1202
      %1579 = vmatprep.subr.bf16.mxu0 %v1263
      %1580 = vmatpush2.bf16.msra.mxu0 %v1262
      %1581 = vmatprep.subr.bf16.mxu0 %v1259
      %1582 = vmatpush2.bf16.msra.mxu0 %v1258
      %1583 = vmatprep.subr.bf16.mxu0 %v1255
      %1584 = vmatpush2.bf16.msra.mxu0 %v1254
      %1585 = vmatprep.subr.bf16.mxu0 %v1251
      %1586 = vmatpush2.bf16.msra.mxu0 %v1250
      %1587 = vmatprep.subr.bf16.mxu0 %v1247
      %1588 = vmatpush2.bf16.msra.mxu0 %v1246
      %1589 = vmatprep.subr.bf16.mxu0 %v1243
      %1590 = vmatpush2.bf16.msra.mxu0 %v1242
      %1591 = vmatprep.subr.bf16.mxu0 %v1239
      %1592 = vmatpush2.bf16.msra.mxu0 %v1238
      %1593 = vmatprep.subr.bf16.mxu0 %v1235
      %1594 = vmatpush2.bf16.msra.mxu0 %v1234
      %1595 = vmatprep.mubr.bf16.mxu0 %v553
      %1596 = vmatmul.mubr.bf16.gmra.mxu0 %v552
      %v1597 = vpop.f32.mrf.mxu0
      %v1598 = vadd.f32 %v1557, %v1597
      %v1599 = vpop.f32.mrf.mxu0
      %v1600 = vadd.f32 %v1559, %v1599
      %v1601 = vpop.f32.mrf.mxu0
      %v1602 = vpop.f32.mrf.mxu0
      %1603 = vdwg.mxu0
      %1604 = vmatprep.subr.bf16.mxu0 %v1295
      %1605 = vmatpush1.bf16.msra.mxu0 %v1294
      %1606 = vmatprep.subr.bf16.mxu0 %v1291
      %1607 = vmatpush1.bf16.msra.mxu0 %v1290
      %1608 = vmatprep.subr.bf16.mxu0 %v1287
      %1609 = vmatpush1.bf16.msra.mxu0 %v1286
      %1610 = vmatprep.subr.bf16.mxu0 %v1283
      %1611 = vmatpush1.bf16.msra.mxu0 %v1282
      %1612 = vmatprep.subr.bf16.mxu0 %v1279
      %1613 = vmatpush1.bf16.msra.mxu0 %v1278
      %1614 = vmatprep.subr.bf16.mxu0 %v1275
      %1615 = vmatpush1.bf16.msra.mxu0 %v1274
      %1616 = vmatprep.subr.bf16.mxu0 %v1271
      %1617 = vmatpush1.bf16.msra.mxu0 %v1270
      %1618 = vmatprep.subr.bf16.mxu0 %v1267
      %1619 = vmatpush1.bf16.msra.mxu0 %v1266
      %1620 = vmatprep.subr.bf16.mxu0 %v1327
      %1621 = vmatpush2.bf16.msra.mxu0 %v1326
      %1622 = vmatprep.subr.bf16.mxu0 %v1323
      %1623 = vmatpush2.bf16.msra.mxu0 %v1322
      %1624 = vmatprep.subr.bf16.mxu0 %v1319
      %1625 = vmatpush2.bf16.msra.mxu0 %v1318
      %1626 = vmatprep.subr.bf16.mxu0 %v1315
      %1627 = vmatpush2.bf16.msra.mxu0 %v1314
      %1628 = vmatprep.subr.bf16.mxu0 %v1311
      %1629 = vmatpush2.bf16.msra.mxu0 %v1310
      %1630 = vmatprep.subr.bf16.mxu0 %v1307
      %1631 = vmatpush2.bf16.msra.mxu0 %v1306
      %1632 = vmatprep.subr.bf16.mxu0 %v1303
      %1633 = vmatpush2.bf16.msra.mxu0 %v1302
      %1634 = vmatprep.subr.bf16.mxu0 %v1299
      %1635 = vmatpush2.bf16.msra.mxu0 %v1298
      %1636 = vmatprep.mubr.bf16.mxu0 %v555
      %1637 = vmatmul.mubr.bf16.gmra.mxu0 %v554
      %v1638 = vpop.f32.mrf.mxu0
      %v1639 = vadd.f32 %v1598, %v1638
      %v1640 = vpop.f32.mrf.mxu0
      %v1641 = vadd.f32 %v1600, %v1640
      %v1642 = vpop.f32.mrf.mxu0
      %v1643 = vpop.f32.mrf.mxu0
      %1644 = vdwg.mxu0
      %1645 = vmatprep.subr.bf16.mxu0 %v1169
      %1646 = vmatpush1.bf16.msra.mxu0 %v1168
      %1647 = vmatprep.subr.bf16.mxu0 %v1165
      %1648 = vmatpush1.bf16.msra.mxu0 %v1164
      %1649 = vmatprep.subr.bf16.mxu0 %v1161
      %1650 = vmatpush1.bf16.msra.mxu0 %v1160
      %1651 = vmatprep.subr.bf16.mxu0 %v1157
      %1652 = vmatpush1.bf16.msra.mxu0 %v1156
      %1653 = vmatprep.subr.bf16.mxu0 %v1153
      %1654 = vmatpush1.bf16.msra.mxu0 %v1152
      %1655 = vmatprep.subr.bf16.mxu0 %v1149
      %1656 = vmatpush1.bf16.msra.mxu0 %v1148
      %1657 = vmatprep.subr.bf16.mxu0 %v1145
      %1658 = vmatpush1.bf16.msra.mxu0 %v1144
      %1659 = vmatprep.subr.bf16.mxu0 %v1141
      %1660 = vmatpush1.bf16.msra.mxu0 %v1140
      %1661 = vmatprep.subr.bf16.mxu0 %v1201
      %1662 = vmatpush2.bf16.msra.mxu0 %v1200
      %1663 = vmatprep.subr.bf16.mxu0 %v1197
      %1664 = vmatpush2.bf16.msra.mxu0 %v1196
      %1665 = vmatprep.subr.bf16.mxu0 %v1193
      %1666 = vmatpush2.bf16.msra.mxu0 %v1192
      %1667 = vmatprep.subr.bf16.mxu0 %v1189
      %1668 = vmatpush2.bf16.msra.mxu0 %v1188
      %1669 = vmatprep.subr.bf16.mxu0 %v1185
      %1670 = vmatpush2.bf16.msra.mxu0 %v1184
      %1671 = vmatprep.subr.bf16.mxu0 %v1181
      %1672 = vmatpush2.bf16.msra.mxu0 %v1180
      %1673 = vmatprep.subr.bf16.mxu0 %v1177
      %1674 = vmatpush2.bf16.msra.mxu0 %v1176
      %1675 = vmatprep.subr.bf16.mxu0 %v1173
      %1676 = vmatpush2.bf16.msra.mxu0 %v1172
      %1677 = vmatprep.mubr.bf16.mxu0 %v551
      %1678 = vmatmul.mubr.bf16.gmra.mxu0 %v550
      %v1679 = vpop.f32.mrf.mxu0
      %v1680 = vadd.f32 0.0, %v1679
      %v1681 = vpop.f32.mrf.mxu0
      %v1682 = vadd.f32 0.0, %v1681
      %v1683 = vpop.f32.mrf.mxu0
      %v1684 = vpop.f32.mrf.mxu0
      %1685 = vdwg.mxu0
      %1686 = vmatprep.subr.bf16.mxu0 %v1233
      %1687 = vmatpush1.bf16.msra.mxu0 %v1232
      %1688 = vmatprep.subr.bf16.mxu0 %v1229
      %1689 = vmatpush1.bf16.msra.mxu0 %v1228
      %1690 = vmatprep.subr.bf16.mxu0 %v1225
      %1691 = vmatpush1.bf16.msra.mxu0 %v1224
      %1692 = vmatprep.subr.bf16.mxu0 %v1221
      %1693 = vmatpush1.bf16.msra.mxu0 %v1220
      %1694 = vmatprep.subr.bf16.mxu0 %v1217
      %1695 = vmatpush1.bf16.msra.mxu0 %v1216
      %1696 = vmatprep.subr.bf16.mxu0 %v1213
      %1697 = vmatpush1.bf16.msra.mxu0 %v1212
      %1698 = vmatprep.subr.bf16.mxu0 %v1209
      %1699 = vmatpush1.bf16.msra.mxu0 %v1208
      %1700 = vmatprep.subr.bf16.mxu0 %v1205
      %1701 = vmatpush1.bf16.msra.mxu0 %v1204
      %1702 = vmatprep.subr.bf16.mxu0 %v1265
      %1703 = vmatpush2.bf16.msra.mxu0 %v1264
      %1704 = vmatprep.subr.bf16.mxu0 %v1261
      %1705 = vmatpush2.bf16.msra.mxu0 %v1260
      %1706 = vmatprep.subr.bf16.mxu0 %v1257
      %1707 = vmatpush2.bf16.msra.mxu0 %v1256
      %1708 = vmatprep.subr.bf16.mxu0 %v1253
      %1709 = vmatpush2.bf16.msra.mxu0 %v1252
      %1710 = vmatprep.subr.bf16.mxu0 %v1249
      %1711 = vmatpush2.bf16.msra.mxu0 %v1248
      %1712 = vmatprep.subr.bf16.mxu0 %v1245
      %1713 = vmatpush2.bf16.msra.mxu0 %v1244
      %1714 = vmatprep.subr.bf16.mxu0 %v1241
      %1715 = vmatpush2.bf16.msra.mxu0 %v1240
      %1716 = vmatprep.subr.bf16.mxu0 %v1237
      %1717 = vmatpush2.bf16.msra.mxu0 %v1236
      %1718 = vmatprep.mubr.bf16.mxu0 %v553
      %1719 = vmatmul.mubr.bf16.gmra.mxu0 %v552
      %v1720 = vpop.f32.mrf.mxu0
      %v1721 = vadd.f32 %v1680, %v1720
      %v1722 = vpop.f32.mrf.mxu0
      %v1723 = vadd.f32 %v1682, %v1722
      %v1724 = vpop.f32.mrf.mxu0
      %v1725 = vpop.f32.mrf.mxu0
      %1726 = vdwg.mxu0
      %1727 = vmatprep.subr.bf16.mxu0 %v1297
      %1728 = vmatpush1.bf16.msra.mxu0 %v1296
      %1729 = vmatprep.subr.bf16.mxu0 %v1293
      %1730 = vmatpush1.bf16.msra.mxu0 %v1292
      %1731 = vmatprep.subr.bf16.mxu0 %v1289
      %1732 = vmatpush1.bf16.msra.mxu0 %v1288
      %1733 = vmatprep.subr.bf16.mxu0 %v1285
      %1734 = vmatpush1.bf16.msra.mxu0 %v1284
      %1735 = vmatprep.subr.bf16.mxu0 %v1281
      %1736 = vmatpush1.bf16.msra.mxu0 %v1280
      %1737 = vmatprep.subr.bf16.mxu0 %v1277
      %1738 = vmatpush1.bf16.msra.mxu0 %v1276
      %1739 = vmatprep.subr.bf16.mxu0 %v1273
      %1740 = vmatpush1.bf16.msra.mxu0 %v1272
      %1741 = vmatprep.subr.bf16.mxu0 %v1269
      %1742 = vmatpush1.bf16.msra.mxu0 %v1268
      %1743 = vmatprep.subr.bf16.mxu0 %v1329
      %1744 = vmatpush2.bf16.msra.mxu0 %v1328
      %1745 = vmatprep.subr.bf16.mxu0 %v1325
      %1746 = vmatpush2.bf16.msra.mxu0 %v1324
      %1747 = vmatprep.subr.bf16.mxu0 %v1321
      %1748 = vmatpush2.bf16.msra.mxu0 %v1320
      %1749 = vmatprep.subr.bf16.mxu0 %v1317
      %1750 = vmatpush2.bf16.msra.mxu0 %v1316
      %1751 = vmatprep.subr.bf16.mxu0 %v1313
      %1752 = vmatpush2.bf16.msra.mxu0 %v1312
      %1753 = vmatprep.subr.bf16.mxu0 %v1309
      %1754 = vmatpush2.bf16.msra.mxu0 %v1308
      %1755 = vmatprep.subr.bf16.mxu0 %v1305
      %1756 = vmatpush2.bf16.msra.mxu0 %v1304
      %1757 = vmatprep.subr.bf16.mxu0 %v1301
      %1758 = vmatpush2.bf16.msra.mxu0 %v1300
      %1759 = vmatprep.mubr.bf16.mxu0 %v555
      %1760 = vmatmul.mubr.bf16.gmra.mxu0 %v554
      %v1761 = vpop.f32.mrf.mxu0
      %v1762 = vadd.f32 %v1721, %v1761
      %v1763 = vpop.f32.mrf.mxu0
      %v1764 = vadd.f32 %v1723, %v1763
      %v1765 = vpop.f32.mrf.mxu0
      %v1766 = vpop.f32.mrf.mxu0
      %1767 = vdwg.mxu0
      %v1771 = vunpack.c.l.b16 %v144
      %v1772 = vunpack.c.h.b16 %v144
      %v1773 = vunpack.c.l.b16 %v145
      %v1774 = vunpack.c.h.b16 %v145
      %v1775 = vunpack.c.l.b16 %v146
      %v1776 = vunpack.c.h.b16 %v146
      %v1777 = vpack.c.b16 %v1771, %v1771
      %v1778 = vpack.c.b16 %v1772, %v1772
      %v1779 = vpack.c.b16 %v1773, %v1773
      %v1780 = vpack.c.b16 %v1774, %v1774
      %v1781 = vpack.c.b16 %v1775, %v1775
      %v1782 = vpack.c.b16 %v1776, %v1776
      %v1981 = vunpack.c.l.b16 %v147
      %v1982 = vunpack.c.h.b16 %v147
      %v1983 = vunpack.c.l.b16 %v148
      %v1984 = vunpack.c.h.b16 %v148
      %v1985 = vunpack.c.l.b16 %v149
      %v1986 = vunpack.c.h.b16 %v149
      %v1987 = vunpack.c.l.b16 %v150
      %v1988 = vunpack.c.h.b16 %v150
      %v1989 = vunpack.c.l.b16 %v151
      %v1990 = vunpack.c.h.b16 %v151
      %v1991 = vunpack.c.l.b16 %v152
      %v1992 = vunpack.c.h.b16 %v152
      %v1993 = vunpack.c.l.b16 %v153
      %v1994 = vunpack.c.h.b16 %v153
      %v1995 = vunpack.c.l.b16 %v154
      %v1996 = vunpack.c.h.b16 %v154
      %v1997 = vunpack.c.l.b16 %v155
      %v1998 = vunpack.c.h.b16 %v155
      %v1999 = vunpack.c.l.b16 %v156
      %v2000 = vunpack.c.h.b16 %v156
      %v2001 = vunpack.c.l.b16 %v157
      %v2002 = vunpack.c.h.b16 %v157
      %v2003 = vunpack.c.l.b16 %v158
      %v2004 = vunpack.c.h.b16 %v158
      %v2005 = vunpack.c.l.b16 %v159
      %v2006 = vunpack.c.h.b16 %v159
      %v2007 = vunpack.c.l.b16 %v160
      %v2008 = vunpack.c.h.b16 %v160
      %v2009 = vunpack.c.l.b16 %v161
      %v2010 = vunpack.c.h.b16 %v161
      %v2011 = vunpack.c.l.b16 %v162
      %v2012 = vunpack.c.h.b16 %v162
      %v2013 = vunpack.c.l.b16 %v163
      %v2014 = vunpack.c.h.b16 %v163
      %v2015 = vunpack.c.l.b16 %v164
      %v2016 = vunpack.c.h.b16 %v164
      %v2017 = vunpack.c.l.b16 %v165
      %v2018 = vunpack.c.h.b16 %v165
      %v2019 = vunpack.c.l.b16 %v166
      %v2020 = vunpack.c.h.b16 %v166
      %v2021 = vunpack.c.l.b16 %v167
      %v2022 = vunpack.c.h.b16 %v167
      %v2023 = vunpack.c.l.b16 %v168
      %v2024 = vunpack.c.h.b16 %v168
      %v2025 = vunpack.c.l.b16 %v169
      %v2026 = vunpack.c.h.b16 %v169
      %v2027 = vunpack.c.l.b16 %v170
      %v2028 = vunpack.c.h.b16 %v170
      %v2029 = vunpack.c.l.b16 %v171
      %v2030 = vunpack.c.h.b16 %v171
      %v2031 = vunpack.c.l.b16 %v172
      %v2032 = vunpack.c.h.b16 %v172
      %v2033 = vunpack.c.l.b16 %v173
      %v2034 = vunpack.c.h.b16 %v173
      %v2035 = vunpack.c.l.b16 %v174
      %v2036 = vunpack.c.h.b16 %v174
      %v2037 = vunpack.c.l.b16 %v175
      %v2038 = vunpack.c.h.b16 %v175
      %v2039 = vunpack.c.l.b16 %v176
      %v2040 = vunpack.c.h.b16 %v176
      %v2041 = vunpack.c.l.b16 %v177
      %v2042 = vunpack.c.h.b16 %v177
      %v2043 = vunpack.c.l.b16 %v178
      %v2044 = vunpack.c.h.b16 %v178
      %v2045 = vunpack.c.l.b16 %v179
      %v2046 = vunpack.c.h.b16 %v179
      %v2047 = vunpack.c.l.b16 %v180
      %v2048 = vunpack.c.h.b16 %v180
      %v2049 = vunpack.c.l.b16 %v181
      %v2050 = vunpack.c.h.b16 %v181
      %v2051 = vunpack.c.l.b16 %v182
      %v2052 = vunpack.c.h.b16 %v182
      %v2053 = vunpack.c.l.b16 %v183
      %v2054 = vunpack.c.h.b16 %v183
      %v2055 = vunpack.c.l.b16 %v184
      %v2056 = vunpack.c.h.b16 %v184
      %v2057 = vunpack.c.l.b16 %v185
      %v2058 = vunpack.c.h.b16 %v185
      %v2059 = vunpack.c.l.b16 %v186
      %v2060 = vunpack.c.h.b16 %v186
      %v2061 = vunpack.c.l.b16 %v187
      %v2062 = vunpack.c.h.b16 %v187
      %v2063 = vunpack.c.l.b16 %v188
      %v2064 = vunpack.c.h.b16 %v188
      %v2065 = vunpack.c.l.b16 %v189
      %v2066 = vunpack.c.h.b16 %v189
      %v2067 = vunpack.c.l.b16 %v190
      %v2068 = vunpack.c.h.b16 %v190
      %v2069 = vunpack.c.l.b16 %v191
      %v2070 = vunpack.c.h.b16 %v191
      %v2071 = vunpack.c.l.b16 %v192
      %v2072 = vunpack.c.h.b16 %v192
      %v2073 = vunpack.c.l.b16 %v193
      %v2074 = vunpack.c.h.b16 %v193
      %v2075 = vunpack.c.l.b16 %v194
      %v2076 = vunpack.c.h.b16 %v194
      %v2077 = vunpack.c.l.b16 %v195
      %v2078 = vunpack.c.h.b16 %v195
      %v2079 = vunpack.c.l.b16 %v196
      %v2080 = vunpack.c.h.b16 %v196
      %v2081 = vunpack.c.l.b16 %v197
      %v2082 = vunpack.c.h.b16 %v197
      %v2083 = vunpack.c.l.b16 %v198
      %v2084 = vunpack.c.h.b16 %v198
      %v2085 = vunpack.c.l.b16 %v199
      %v2086 = vunpack.c.h.b16 %v199
      %v2087 = vunpack.c.l.b16 %v200
      %v2088 = vunpack.c.h.b16 %v200
      %v2089 = vunpack.c.l.b16 %v201
      %v2090 = vunpack.c.h.b16 %v201
      %v2091 = vunpack.c.l.b16 %v202
      %v2092 = vunpack.c.h.b16 %v202
      %v2093 = vunpack.c.l.b16 %v203
      %v2094 = vunpack.c.h.b16 %v203
      %v2095 = vunpack.c.l.b16 %v204
      %v2096 = vunpack.c.h.b16 %v204
      %v2097 = vunpack.c.l.b16 %v205
      %v2098 = vunpack.c.h.b16 %v205
      %v2099 = vunpack.c.l.b16 %v206
      %v2100 = vunpack.c.h.b16 %v206
      %v2101 = vunpack.c.l.b16 %v207
      %v2102 = vunpack.c.h.b16 %v207
      %v2103 = vunpack.c.l.b16 %v208
      %v2104 = vunpack.c.h.b16 %v208
      %v2105 = vunpack.c.l.b16 %v209
      %v2106 = vunpack.c.h.b16 %v209
      %v2107 = vunpack.c.l.b16 %v210
      %v2108 = vunpack.c.h.b16 %v210
      %v2109 = vunpack.c.l.b16 %v211
      %v2110 = vunpack.c.h.b16 %v211
      %v2111 = vunpack.c.l.b16 %v212
      %v2112 = vunpack.c.h.b16 %v212
      %v2113 = vunpack.c.l.b16 %v213
      %v2114 = vunpack.c.h.b16 %v213
      %v2115 = vunpack.c.l.b16 %v214
      %v2116 = vunpack.c.h.b16 %v214
      %v2117 = vunpack.c.l.b16 %v215
      %v2118 = vunpack.c.h.b16 %v215
      %v2119 = vunpack.c.l.b16 %v216
      %v2120 = vunpack.c.h.b16 %v216
      %v2121 = vunpack.c.l.b16 %v217
      %v2122 = vunpack.c.h.b16 %v217
      %v2123 = vunpack.c.l.b16 %v218
      %v2124 = vunpack.c.h.b16 %v218
      %v2125 = vunpack.c.l.b16 %v219
      %v2126 = vunpack.c.h.b16 %v219
      %v2127 = vunpack.c.l.b16 %v220
      %v2128 = vunpack.c.h.b16 %v220
      %v2129 = vunpack.c.l.b16 %v221
      %v2130 = vunpack.c.h.b16 %v221
      %v2131 = vunpack.c.l.b16 %v222
      %v2132 = vunpack.c.h.b16 %v222
      %v2133 = vunpack.c.l.b16 %v223
      %v2134 = vunpack.c.h.b16 %v223
      %v2135 = vunpack.c.l.b16 %v224
      %v2136 = vunpack.c.h.b16 %v224
      %v2137 = vunpack.c.l.b16 %v225
      %v2138 = vunpack.c.h.b16 %v225
      %v2139 = vunpack.c.l.b16 %v226
      %v2140 = vunpack.c.h.b16 %v226
      %v2141 = vunpack.c.l.b16 %v227
      %v2142 = vunpack.c.h.b16 %v227
      %v2143 = vunpack.c.l.b16 %v228
      %v2144 = vunpack.c.h.b16 %v228
      %v2145 = vunpack.c.l.b16 %v229
      %v2146 = vunpack.c.h.b16 %v229
      %v2147 = vunpack.c.l.b16 %v230
      %v2148 = vunpack.c.h.b16 %v230
      %v2149 = vunpack.c.l.b16 %v231
      %v2150 = vunpack.c.h.b16 %v231
      %v2151 = vunpack.c.l.b16 %v232
      %v2152 = vunpack.c.h.b16 %v232
      %v2153 = vunpack.c.l.b16 %v233
      %v2154 = vunpack.c.h.b16 %v233
      %v2155 = vunpack.c.l.b16 %v234
      %v2156 = vunpack.c.h.b16 %v234
      %v2157 = vunpack.c.l.b16 %v235
      %v2158 = vunpack.c.h.b16 %v235
      %v2159 = vunpack.c.l.b16 %v236
      %v2160 = vunpack.c.h.b16 %v236
      %v2161 = vunpack.c.l.b16 %v237
      %v2162 = vunpack.c.h.b16 %v237
      %v2163 = vunpack.c.l.b16 %v238
      %v2164 = vunpack.c.h.b16 %v238
      %v2165 = vunpack.c.l.b16 %v239
      %v2166 = vunpack.c.h.b16 %v239
      %v2167 = vunpack.c.l.b16 %v240
      %v2168 = vunpack.c.h.b16 %v240
      %v2169 = vunpack.c.l.b16 %v241
      %v2170 = vunpack.c.h.b16 %v241
      %v2171 = vunpack.c.l.b16 %v242
      %v2172 = vunpack.c.h.b16 %v242
      %v2173 = vunpack.c.l.b16 %v243
      %v2174 = vunpack.c.h.b16 %v243
      %v2175 = vunpack.c.l.b16 %v244
      %v2176 = vunpack.c.h.b16 %v244
      %v2177 = vunpack.c.l.b16 %v245
      %v2178 = vunpack.c.h.b16 %v245
      %v2179 = vunpack.c.l.b16 %v246
      %v2180 = vunpack.c.h.b16 %v246
      %v2181 = vunpack.c.l.b16 %v247
      %v2182 = vunpack.c.h.b16 %v247
      %v2183 = vunpack.c.l.b16 %v248
      %v2184 = vunpack.c.h.b16 %v248
      %v2185 = vunpack.c.l.b16 %v249
      %v2186 = vunpack.c.h.b16 %v249
      %v2187 = vunpack.c.l.b16 %v250
      %v2188 = vunpack.c.h.b16 %v250
      %v2189 = vunpack.c.l.b16 %v251
      %v2190 = vunpack.c.h.b16 %v251
      %v2191 = vunpack.c.l.b16 %v252
      %v2192 = vunpack.c.h.b16 %v252
      %v2193 = vunpack.c.l.b16 %v253
      %v2194 = vunpack.c.h.b16 %v253
      %v2195 = vunpack.c.l.b16 %v254
      %v2196 = vunpack.c.h.b16 %v254
      %v2197 = vunpack.c.l.b16 %v255
      %v2198 = vunpack.c.h.b16 %v255
      %v2199 = vunpack.c.l.b16 %v256
      %v2200 = vunpack.c.h.b16 %v256
      %v2201 = vunpack.c.l.b16 %v257
      %v2202 = vunpack.c.h.b16 %v257
      %v2203 = vunpack.c.l.b16 %v258
      %v2204 = vunpack.c.h.b16 %v258
      %v2205 = vunpack.c.l.b16 %v259
      %v2206 = vunpack.c.h.b16 %v259
      %v2207 = vunpack.c.l.b16 %v260
      %v2208 = vunpack.c.h.b16 %v260
      %v2209 = vunpack.c.l.b16 %v261
      %v2210 = vunpack.c.h.b16 %v261
      %v2211 = vunpack.c.l.b16 %v262
      %v2212 = vunpack.c.h.b16 %v262
      %v2213 = vunpack.c.l.b16 %v263
      %v2214 = vunpack.c.h.b16 %v263
      %v2215 = vunpack.c.l.b16 %v264
      %v2216 = vunpack.c.h.b16 %v264
      %v2217 = vunpack.c.l.b16 %v265
      %v2218 = vunpack.c.h.b16 %v265
      %v2219 = vunpack.c.l.b16 %v266
      %v2220 = vunpack.c.h.b16 %v266
      %v2221 = vunpack.c.l.b16 %v267
      %v2222 = vunpack.c.h.b16 %v267
      %v2223 = vunpack.c.l.b16 %v268
      %v2224 = vunpack.c.h.b16 %v268
      %v2225 = vunpack.c.l.b16 %v269
      %v2226 = vunpack.c.h.b16 %v269
      %v2227 = vunpack.c.l.b16 %v270
      %v2228 = vunpack.c.h.b16 %v270
      %v2229 = vunpack.c.l.b16 %v271
      %v2230 = vunpack.c.h.b16 %v271
      %v2231 = vunpack.c.l.b16 %v272
      %v2232 = vunpack.c.h.b16 %v272
      %v2233 = vunpack.c.l.b16 %v273
      %v2234 = vunpack.c.h.b16 %v273
      %v2235 = vunpack.c.l.b16 %v274
      %v2236 = vunpack.c.h.b16 %v274
      %v2237 = vunpack.c.l.b16 %v275
      %v2238 = vunpack.c.h.b16 %v275
      %v2239 = vunpack.c.l.b16 %v276
      %v2240 = vunpack.c.h.b16 %v276
      %v2241 = vunpack.c.l.b16 %v277
      %v2242 = vunpack.c.h.b16 %v277
      %v2243 = vunpack.c.l.b16 %v278
      %v2244 = vunpack.c.h.b16 %v278
      %v2245 = vunpack.c.l.b16 %v279
      %v2246 = vunpack.c.h.b16 %v279
      %v2247 = vunpack.c.l.b16 %v280
      %v2248 = vunpack.c.h.b16 %v280
      %v2249 = vunpack.c.l.b16 %v281
      %v2250 = vunpack.c.h.b16 %v281
      %v2251 = vunpack.c.l.b16 %v282
      %v2252 = vunpack.c.h.b16 %v282
      %v2253 = vunpack.c.l.b16 %v283
      %v2254 = vunpack.c.h.b16 %v283
      %v2255 = vunpack.c.l.b16 %v284
      %v2256 = vunpack.c.h.b16 %v284
      %v2257 = vunpack.c.l.b16 %v285
      %v2258 = vunpack.c.h.b16 %v285
      %v2259 = vunpack.c.l.b16 %v286
      %v2260 = vunpack.c.h.b16 %v286
      %v2261 = vunpack.c.l.b16 %v287
      %v2262 = vunpack.c.h.b16 %v287
      %v2263 = vunpack.c.l.b16 %v288
      %v2264 = vunpack.c.h.b16 %v288
      %v2265 = vunpack.c.l.b16 %v289
      %v2266 = vunpack.c.h.b16 %v289
      %v2267 = vunpack.c.l.b16 %v290
      %v2268 = vunpack.c.h.b16 %v290
      %v2269 = vunpack.c.l.b16 %v291
      %v2270 = vunpack.c.h.b16 %v291
      %v2271 = vunpack.c.l.b16 %v292
      %v2272 = vunpack.c.h.b16 %v292
      %v2273 = vunpack.c.l.b16 %v293
      %v2274 = vunpack.c.h.b16 %v293
      %v2275 = vunpack.c.l.b16 %v294
      %v2276 = vunpack.c.h.b16 %v294
      %v2277 = vunpack.c.l.b16 %v295
      %v2278 = vunpack.c.h.b16 %v295
      %v2279 = vunpack.c.l.b16 %v296
      %v2280 = vunpack.c.h.b16 %v296
      %v2281 = vunpack.c.l.b16 %v297
      %v2282 = vunpack.c.h.b16 %v297
      %v2283 = vunpack.c.l.b16 %v298
      %v2284 = vunpack.c.h.b16 %v298
      %v2285 = vunpack.c.l.b16 %v299
      %v2286 = vunpack.c.h.b16 %v299
      %v2287 = vunpack.c.l.b16 %v300
      %v2288 = vunpack.c.h.b16 %v300
      %v2289 = vunpack.c.l.b16 %v301
      %v2290 = vunpack.c.h.b16 %v301
      %v2291 = vunpack.c.l.b16 %v302
      %v2292 = vunpack.c.h.b16 %v302
      %v2293 = vunpack.c.l.b16 %v303
      %v2294 = vunpack.c.h.b16 %v303
      %v2295 = vunpack.c.l.b16 %v304
      %v2296 = vunpack.c.h.b16 %v304
      %v2297 = vunpack.c.l.b16 %v305
      %v2298 = vunpack.c.h.b16 %v305
      %v2299 = vunpack.c.l.b16 %v306
      %v2300 = vunpack.c.h.b16 %v306
      %v2301 = vunpack.c.l.b16 %v307
      %v2302 = vunpack.c.h.b16 %v307
      %v2303 = vunpack.c.l.b16 %v308
      %v2304 = vunpack.c.h.b16 %v308
      %v2305 = vunpack.c.l.b16 %v309
      %v2306 = vunpack.c.h.b16 %v309
      %v2307 = vunpack.c.l.b16 %v310
      %v2308 = vunpack.c.h.b16 %v310
      %v2309 = vunpack.c.l.b16 %v311
      %v2310 = vunpack.c.h.b16 %v311
      %v2311 = vunpack.c.l.b16 %v312
      %v2312 = vunpack.c.h.b16 %v312
      %v2313 = vunpack.c.l.b16 %v313
      %v2314 = vunpack.c.h.b16 %v313
      %v2315 = vunpack.c.l.b16 %v314
      %v2316 = vunpack.c.h.b16 %v314
      %v2317 = vunpack.c.l.b16 %v315
      %v2318 = vunpack.c.h.b16 %v315
      %v2319 = vunpack.c.l.b16 %v316
      %v2320 = vunpack.c.h.b16 %v316
      %v2321 = vunpack.c.l.b16 %v317
      %v2322 = vunpack.c.h.b16 %v317
      %v2323 = vunpack.c.l.b16 %v318
      %v2324 = vunpack.c.h.b16 %v318
      %v2325 = vunpack.c.l.b16 %v319
      %v2326 = vunpack.c.h.b16 %v319
      %v2327 = vunpack.c.l.b16 %v320
      %v2328 = vunpack.c.h.b16 %v320
      %v2329 = vunpack.c.l.b16 %v321
      %v2330 = vunpack.c.h.b16 %v321
      %v2331 = vunpack.c.l.b16 %v322
      %v2332 = vunpack.c.h.b16 %v322
      %v2333 = vunpack.c.l.b16 %v323
      %v2334 = vunpack.c.h.b16 %v323
      %v2335 = vunpack.c.l.b16 %v324
      %v2336 = vunpack.c.h.b16 %v324
      %v2337 = vunpack.c.l.b16 %v325
      %v2338 = vunpack.c.h.b16 %v325
      %v2339 = vunpack.c.l.b16 %v326
      %v2340 = vunpack.c.h.b16 %v326
      %v2341 = vunpack.c.l.b16 %v327
      %v2342 = vunpack.c.h.b16 %v327
      %v2343 = vunpack.c.l.b16 %v328
      %v2344 = vunpack.c.h.b16 %v328
      %v2345 = vunpack.c.l.b16 %v329
      %v2346 = vunpack.c.h.b16 %v329
      %v2347 = vunpack.c.l.b16 %v330
      %v2348 = vunpack.c.h.b16 %v330
      %v2349 = vunpack.c.l.b16 %v331
      %v2350 = vunpack.c.h.b16 %v331
      %v2351 = vunpack.c.l.b16 %v332
      %v2352 = vunpack.c.h.b16 %v332
      %v2353 = vunpack.c.l.b16 %v333
      %v2354 = vunpack.c.h.b16 %v333
      %v2355 = vunpack.c.l.b16 %v334
      %v2356 = vunpack.c.h.b16 %v334
      %v2357 = vunpack.c.l.b16 %v335
      %v2358 = vunpack.c.h.b16 %v335
      %v2359 = vunpack.c.l.b16 %v336
      %v2360 = vunpack.c.h.b16 %v336
      %v2361 = vunpack.c.l.b16 %v337
      %v2362 = vunpack.c.h.b16 %v337
      %v2363 = vunpack.c.l.b16 %v338
      %v2364 = vunpack.c.h.b16 %v338
      %v2365 = vpack.c.b16 %v1985, %v1981
      %v2366 = vpack.c.b16 %v1986, %v1982
      %v2367 = vpack.c.b16 %v1987, %v1983
      %v2368 = vpack.c.b16 %v1988, %v1984
      %v2369 = vpack.c.b16 %v1993, %v1989
      %v2370 = vpack.c.b16 %v1994, %v1990
      %v2371 = vpack.c.b16 %v1995, %v1991
      %v2372 = vpack.c.b16 %v1996, %v1992
      %v2373 = vpack.c.b16 %v2001, %v1997
      %v2374 = vpack.c.b16 %v2002, %v1998
      %v2375 = vpack.c.b16 %v2003, %v1999
      %v2376 = vpack.c.b16 %v2004, %v2000
      %v2377 = vpack.c.b16 %v2009, %v2005
      %v2378 = vpack.c.b16 %v2010, %v2006
      %v2379 = vpack.c.b16 %v2011, %v2007
      %v2380 = vpack.c.b16 %v2012, %v2008
      %v2381 = vpack.c.b16 %v2017, %v2013
      %v2382 = vpack.c.b16 %v2018, %v2014
      %v2383 = vpack.c.b16 %v2019, %v2015
      %v2384 = vpack.c.b16 %v2020, %v2016
      %v2385 = vpack.c.b16 %v2025, %v2021
      %v2386 = vpack.c.b16 %v2026, %v2022
      %v2387 = vpack.c.b16 %v2027, %v2023
      %v2388 = vpack.c.b16 %v2028, %v2024
      %v2389 = vpack.c.b16 %v2033, %v2029
      %v2390 = vpack.c.b16 %v2034, %v2030
      %v2391 = vpack.c.b16 %v2035, %v2031
      %v2392 = vpack.c.b16 %v2036, %v2032
      %v2393 = vpack.c.b16 %v2041, %v2037
      %v2394 = vpack.c.b16 %v2042, %v2038
      %v2395 = vpack.c.b16 %v2043, %v2039
      %v2396 = vpack.c.b16 %v2044, %v2040
      %v2397 = vpack.c.b16 %v2049, %v2045
      %v2398 = vpack.c.b16 %v2050, %v2046
      %v2399 = vpack.c.b16 %v2051, %v2047
      %v2400 = vpack.c.b16 %v2052, %v2048
      %v2401 = vpack.c.b16 %v2057, %v2053
      %v2402 = vpack.c.b16 %v2058, %v2054
      %v2403 = vpack.c.b16 %v2059, %v2055
      %v2404 = vpack.c.b16 %v2060, %v2056
      %v2405 = vpack.c.b16 %v2065, %v2061
      %v2406 = vpack.c.b16 %v2066, %v2062
      %v2407 = vpack.c.b16 %v2067, %v2063
      %v2408 = vpack.c.b16 %v2068, %v2064
      %v2409 = vpack.c.b16 %v2073, %v2069
      %v2410 = vpack.c.b16 %v2074, %v2070
      %v2411 = vpack.c.b16 %v2075, %v2071
      %v2412 = vpack.c.b16 %v2076, %v2072
      %v2413 = vpack.c.b16 %v2081, %v2077
      %v2414 = vpack.c.b16 %v2082, %v2078
      %v2415 = vpack.c.b16 %v2083, %v2079
      %v2416 = vpack.c.b16 %v2084, %v2080
      %v2417 = vpack.c.b16 %v2089, %v2085
      %v2418 = vpack.c.b16 %v2090, %v2086
      %v2419 = vpack.c.b16 %v2091, %v2087
      %v2420 = vpack.c.b16 %v2092, %v2088
      %v2421 = vpack.c.b16 %v2097, %v2093
      %v2422 = vpack.c.b16 %v2098, %v2094
      %v2423 = vpack.c.b16 %v2099, %v2095
      %v2424 = vpack.c.b16 %v2100, %v2096
      %v2425 = vpack.c.b16 %v2105, %v2101
      %v2426 = vpack.c.b16 %v2106, %v2102
      %v2427 = vpack.c.b16 %v2107, %v2103
      %v2428 = vpack.c.b16 %v2108, %v2104
      %v2429 = vpack.c.b16 %v2113, %v2109
      %v2430 = vpack.c.b16 %v2114, %v2110
      %v2431 = vpack.c.b16 %v2115, %v2111
      %v2432 = vpack.c.b16 %v2116, %v2112
      %v2433 = vpack.c.b16 %v2121, %v2117
      %v2434 = vpack.c.b16 %v2122, %v2118
      %v2435 = vpack.c.b16 %v2123, %v2119
      %v2436 = vpack.c.b16 %v2124, %v2120
      %v2437 = vpack.c.b16 %v2129, %v2125
      %v2438 = vpack.c.b16 %v2130, %v2126
      %v2439 = vpack.c.b16 %v2131, %v2127
      %v2440 = vpack.c.b16 %v2132, %v2128
      %v2441 = vpack.c.b16 %v2137, %v2133
      %v2442 = vpack.c.b16 %v2138, %v2134
      %v2443 = vpack.c.b16 %v2139, %v2135
      %v2444 = vpack.c.b16 %v2140, %v2136
      %v2445 = vpack.c.b16 %v2145, %v2141
      %v2446 = vpack.c.b16 %v2146, %v2142
      %v2447 = vpack.c.b16 %v2147, %v2143
      %v2448 = vpack.c.b16 %v2148, %v2144
      %v2449 = vpack.c.b16 %v2153, %v2149
      %v2450 = vpack.c.b16 %v2154, %v2150
      %v2451 = vpack.c.b16 %v2155, %v2151
      %v2452 = vpack.c.b16 %v2156, %v2152
      %v2453 = vpack.c.b16 %v2161, %v2157
      %v2454 = vpack.c.b16 %v2162, %v2158
      %v2455 = vpack.c.b16 %v2163, %v2159
      %v2456 = vpack.c.b16 %v2164, %v2160
      %v2457 = vpack.c.b16 %v2169, %v2165
      %v2458 = vpack.c.b16 %v2170, %v2166
      %v2459 = vpack.c.b16 %v2171, %v2167
      %v2460 = vpack.c.b16 %v2172, %v2168
      %v2461 = vpack.c.b16 %v2177, %v2173
      %v2462 = vpack.c.b16 %v2178, %v2174
      %v2463 = vpack.c.b16 %v2179, %v2175
      %v2464 = vpack.c.b16 %v2180, %v2176
      %v2465 = vpack.c.b16 %v2185, %v2181
      %v2466 = vpack.c.b16 %v2186, %v2182
      %v2467 = vpack.c.b16 %v2187, %v2183
      %v2468 = vpack.c.b16 %v2188, %v2184
      %v2469 = vpack.c.b16 %v2193, %v2189
      %v2470 = vpack.c.b16 %v2194, %v2190
      %v2471 = vpack.c.b16 %v2195, %v2191
      %v2472 = vpack.c.b16 %v2196, %v2192
      %v2473 = vpack.c.b16 %v2201, %v2197
      %v2474 = vpack.c.b16 %v2202, %v2198
      %v2475 = vpack.c.b16 %v2203, %v2199
      %v2476 = vpack.c.b16 %v2204, %v2200
      %v2477 = vpack.c.b16 %v2209, %v2205
      %v2478 = vpack.c.b16 %v2210, %v2206
      %v2479 = vpack.c.b16 %v2211, %v2207
      %v2480 = vpack.c.b16 %v2212, %v2208
      %v2481 = vpack.c.b16 %v2217, %v2213
      %v2482 = vpack.c.b16 %v2218, %v2214
      %v2483 = vpack.c.b16 %v2219, %v2215
      %v2484 = vpack.c.b16 %v2220, %v2216
      %v2485 = vpack.c.b16 %v2225, %v2221
      %v2486 = vpack.c.b16 %v2226, %v2222
      %v2487 = vpack.c.b16 %v2227, %v2223
      %v2488 = vpack.c.b16 %v2228, %v2224
      %v2489 = vpack.c.b16 %v2233, %v2229
      %v2490 = vpack.c.b16 %v2234, %v2230
      %v2491 = vpack.c.b16 %v2235, %v2231
      %v2492 = vpack.c.b16 %v2236, %v2232
      %v2493 = vpack.c.b16 %v2241, %v2237
      %v2494 = vpack.c.b16 %v2242, %v2238
      %v2495 = vpack.c.b16 %v2243, %v2239
      %v2496 = vpack.c.b16 %v2244, %v2240
      %v2497 = vpack.c.b16 %v2249, %v2245
      %v2498 = vpack.c.b16 %v2250, %v2246
      %v2499 = vpack.c.b16 %v2251, %v2247
      %v2500 = vpack.c.b16 %v2252, %v2248
      %v2501 = vpack.c.b16 %v2257, %v2253
      %v2502 = vpack.c.b16 %v2258, %v2254
      %v2503 = vpack.c.b16 %v2259, %v2255
      %v2504 = vpack.c.b16 %v2260, %v2256
      %v2505 = vpack.c.b16 %v2265, %v2261
      %v2506 = vpack.c.b16 %v2266, %v2262
      %v2507 = vpack.c.b16 %v2267, %v2263
      %v2508 = vpack.c.b16 %v2268, %v2264
      %v2509 = vpack.c.b16 %v2273, %v2269
      %v2510 = vpack.c.b16 %v2274, %v2270
      %v2511 = vpack.c.b16 %v2275, %v2271
      %v2512 = vpack.c.b16 %v2276, %v2272
      %v2513 = vpack.c.b16 %v2281, %v2277
      %v2514 = vpack.c.b16 %v2282, %v2278
      %v2515 = vpack.c.b16 %v2283, %v2279
      %v2516 = vpack.c.b16 %v2284, %v2280
      %v2517 = vpack.c.b16 %v2289, %v2285
      %v2518 = vpack.c.b16 %v2290, %v2286
      %v2519 = vpack.c.b16 %v2291, %v2287
      %v2520 = vpack.c.b16 %v2292, %v2288
      %v2521 = vpack.c.b16 %v2297, %v2293
      %v2522 = vpack.c.b16 %v2298, %v2294
      %v2523 = vpack.c.b16 %v2299, %v2295
      %v2524 = vpack.c.b16 %v2300, %v2296
      %v2525 = vpack.c.b16 %v2305, %v2301
      %v2526 = vpack.c.b16 %v2306, %v2302
      %v2527 = vpack.c.b16 %v2307, %v2303
      %v2528 = vpack.c.b16 %v2308, %v2304
      %v2529 = vpack.c.b16 %v2313, %v2309
      %v2530 = vpack.c.b16 %v2314, %v2310
      %v2531 = vpack.c.b16 %v2315, %v2311
      %v2532 = vpack.c.b16 %v2316, %v2312
      %v2533 = vpack.c.b16 %v2321, %v2317
      %v2534 = vpack.c.b16 %v2322, %v2318
      %v2535 = vpack.c.b16 %v2323, %v2319
      %v2536 = vpack.c.b16 %v2324, %v2320
      %v2537 = vpack.c.b16 %v2329, %v2325
      %v2538 = vpack.c.b16 %v2330, %v2326
      %v2539 = vpack.c.b16 %v2331, %v2327
      %v2540 = vpack.c.b16 %v2332, %v2328
      %v2541 = vpack.c.b16 %v2337, %v2333
      %v2542 = vpack.c.b16 %v2338, %v2334
      %v2543 = vpack.c.b16 %v2339, %v2335
      %v2544 = vpack.c.b16 %v2340, %v2336
      %v2545 = vpack.c.b16 %v2345, %v2341
      %v2546 = vpack.c.b16 %v2346, %v2342
      %v2547 = vpack.c.b16 %v2347, %v2343
      %v2548 = vpack.c.b16 %v2348, %v2344
      %v2549 = vpack.c.b16 %v2353, %v2349
      %v2550 = vpack.c.b16 %v2354, %v2350
      %v2551 = vpack.c.b16 %v2355, %v2351
      %v2552 = vpack.c.b16 %v2356, %v2352
      %v2553 = vpack.c.b16 %v2361, %v2357
      %v2554 = vpack.c.b16 %v2362, %v2358
      %v2555 = vpack.c.b16 %v2363, %v2359
      %v2556 = vpack.c.b16 %v2364, %v2360
      %2749 = vmatprep.subr.bf16.mxu0 %v2394
      %2750 = vmatpush1.bf16.msra.mxu0 %v2393
      %2751 = vmatprep.subr.bf16.mxu0 %v2390
      %2752 = vmatpush1.bf16.msra.mxu0 %v2389
      %2753 = vmatprep.subr.bf16.mxu0 %v2386
      %2754 = vmatpush1.bf16.msra.mxu0 %v2385
      %2755 = vmatprep.subr.bf16.mxu0 %v2382
      %2756 = vmatpush1.bf16.msra.mxu0 %v2381
      %2757 = vmatprep.subr.bf16.mxu0 %v2378
      %2758 = vmatpush1.bf16.msra.mxu0 %v2377
      %2759 = vmatprep.subr.bf16.mxu0 %v2374
      %2760 = vmatpush1.bf16.msra.mxu0 %v2373
      %2761 = vmatprep.subr.bf16.mxu0 %v2370
      %2762 = vmatpush1.bf16.msra.mxu0 %v2369
      %2763 = vmatprep.subr.bf16.mxu0 %v2366
      %2764 = vmatpush1.bf16.msra.mxu0 %v2365
      %2765 = vmatprep.subr.bf16.mxu0 %v2426
      %2766 = vmatpush2.bf16.msra.mxu0 %v2425
      %2767 = vmatprep.subr.bf16.mxu0 %v2422
      %2768 = vmatpush2.bf16.msra.mxu0 %v2421
      %2769 = vmatprep.subr.bf16.mxu0 %v2418
      %2770 = vmatpush2.bf16.msra.mxu0 %v2417
      %2771 = vmatprep.subr.bf16.mxu0 %v2414
      %2772 = vmatpush2.bf16.msra.mxu0 %v2413
      %2773 = vmatprep.subr.bf16.mxu0 %v2410
      %2774 = vmatpush2.bf16.msra.mxu0 %v2409
      %2775 = vmatprep.subr.bf16.mxu0 %v2406
      %2776 = vmatpush2.bf16.msra.mxu0 %v2405
      %2777 = vmatprep.subr.bf16.mxu0 %v2402
      %2778 = vmatpush2.bf16.msra.mxu0 %v2401
      %2779 = vmatprep.subr.bf16.mxu0 %v2398
      %2780 = vmatpush2.bf16.msra.mxu0 %v2397
      %2781 = vmatprep.mubr.bf16.mxu0 %v1778
      %2782 = vmatmul.mubr.bf16.gmra.mxu0 %v1777
      %v2783 = vpop.f32.mrf.mxu0
      %v2784 = vadd.f32 %v1639, %v2783
      %v2785 = vpop.f32.mrf.mxu0
      %v2786 = vadd.f32 %v1641, %v2785
      %v2787 = vpop.f32.mrf.mxu0
      %v2788 = vpop.f32.mrf.mxu0
      %2789 = vdwg.mxu0
      %2790 = vmatprep.subr.bf16.mxu0 %v2458
      %2791 = vmatpush1.bf16.msra.mxu0 %v2457
      %2792 = vmatprep.subr.bf16.mxu0 %v2454
      %2793 = vmatpush1.bf16.msra.mxu0 %v2453
      %2794 = vmatprep.subr.bf16.mxu0 %v2450
      %2795 = vmatpush1.bf16.msra.mxu0 %v2449
      %2796 = vmatprep.subr.bf16.mxu0 %v2446
      %2797 = vmatpush1.bf16.msra.mxu0 %v2445
      %2798 = vmatprep.subr.bf16.mxu0 %v2442
      %2799 = vmatpush1.bf16.msra.mxu0 %v2441
      %2800 = vmatprep.subr.bf16.mxu0 %v2438
      %2801 = vmatpush1.bf16.msra.mxu0 %v2437
      %2802 = vmatprep.subr.bf16.mxu0 %v2434
      %2803 = vmatpush1.bf16.msra.mxu0 %v2433
      %2804 = vmatprep.subr.bf16.mxu0 %v2430
      %2805 = vmatpush1.bf16.msra.mxu0 %v2429
      %2806 = vmatprep.subr.bf16.mxu0 %v2490
      %2807 = vmatpush2.bf16.msra.mxu0 %v2489
      %2808 = vmatprep.subr.bf16.mxu0 %v2486
      %2809 = vmatpush2.bf16.msra.mxu0 %v2485
      %2810 = vmatprep.subr.bf16.mxu0 %v2482
      %2811 = vmatpush2.bf16.msra.mxu0 %v2481
      %2812 = vmatprep.subr.bf16.mxu0 %v2478
      %2813 = vmatpush2.bf16.msra.mxu0 %v2477
      %2814 = vmatprep.subr.bf16.mxu0 %v2474
      %2815 = vmatpush2.bf16.msra.mxu0 %v2473
      %2816 = vmatprep.subr.bf16.mxu0 %v2470
      %2817 = vmatpush2.bf16.msra.mxu0 %v2469
      %2818 = vmatprep.subr.bf16.mxu0 %v2466
      %2819 = vmatpush2.bf16.msra.mxu0 %v2465
      %2820 = vmatprep.subr.bf16.mxu0 %v2462
      %2821 = vmatpush2.bf16.msra.mxu0 %v2461
      %2822 = vmatprep.mubr.bf16.mxu0 %v1780
      %2823 = vmatmul.mubr.bf16.gmra.mxu0 %v1779
      %v2824 = vpop.f32.mrf.mxu0
      %v2825 = vadd.f32 %v2784, %v2824
      %v2826 = vpop.f32.mrf.mxu0
      %v2827 = vadd.f32 %v2786, %v2826
      %v2828 = vpop.f32.mrf.mxu0
      %v2829 = vpop.f32.mrf.mxu0
      %2830 = vdwg.mxu0
      %2831 = vmatprep.subr.bf16.mxu0 %v2522
      %2832 = vmatpush1.bf16.msra.mxu0 %v2521
      %2833 = vmatprep.subr.bf16.mxu0 %v2518
      %2834 = vmatpush1.bf16.msra.mxu0 %v2517
      %2835 = vmatprep.subr.bf16.mxu0 %v2514
      %2836 = vmatpush1.bf16.msra.mxu0 %v2513
      %2837 = vmatprep.subr.bf16.mxu0 %v2510
      %2838 = vmatpush1.bf16.msra.mxu0 %v2509
      %2839 = vmatprep.subr.bf16.mxu0 %v2506
      %2840 = vmatpush1.bf16.msra.mxu0 %v2505
      %2841 = vmatprep.subr.bf16.mxu0 %v2502
      %2842 = vmatpush1.bf16.msra.mxu0 %v2501
      %2843 = vmatprep.subr.bf16.mxu0 %v2498
      %2844 = vmatpush1.bf16.msra.mxu0 %v2497
      %2845 = vmatprep.subr.bf16.mxu0 %v2494
      %2846 = vmatpush1.bf16.msra.mxu0 %v2493
      %2847 = vmatprep.subr.bf16.mxu0 %v2554
      %2848 = vmatpush2.bf16.msra.mxu0 %v2553
      %2849 = vmatprep.subr.bf16.mxu0 %v2550
      %2850 = vmatpush2.bf16.msra.mxu0 %v2549
      %2851 = vmatprep.subr.bf16.mxu0 %v2546
      %2852 = vmatpush2.bf16.msra.mxu0 %v2545
      %2853 = vmatprep.subr.bf16.mxu0 %v2542
      %2854 = vmatpush2.bf16.msra.mxu0 %v2541
      %2855 = vmatprep.subr.bf16.mxu0 %v2538
      %2856 = vmatpush2.bf16.msra.mxu0 %v2537
      %2857 = vmatprep.subr.bf16.mxu0 %v2534
      %2858 = vmatpush2.bf16.msra.mxu0 %v2533
      %2859 = vmatprep.subr.bf16.mxu0 %v2530
      %2860 = vmatpush2.bf16.msra.mxu0 %v2529
      %2861 = vmatprep.subr.bf16.mxu0 %v2526
      %2862 = vmatpush2.bf16.msra.mxu0 %v2525
      %2863 = vmatprep.mubr.bf16.mxu0 %v1782
      %2864 = vmatmul.mubr.bf16.gmra.mxu0 %v1781
      %v2865 = vpop.f32.mrf.mxu0
      %v2866 = vadd.f32 %v2825, %v2865
      %v2867 = vpop.f32.mrf.mxu0
      %v2868 = vadd.f32 %v2827, %v2867
      %v2869 = vpop.f32.mrf.mxu0
      %v2870 = vpop.f32.mrf.mxu0
      %2871 = vdwg.mxu0
      %2872 = vmatprep.subr.bf16.mxu0 %v2396
      %2873 = vmatpush1.bf16.msra.mxu0 %v2395
      %2874 = vmatprep.subr.bf16.mxu0 %v2392
      %2875 = vmatpush1.bf16.msra.mxu0 %v2391
      %2876 = vmatprep.subr.bf16.mxu0 %v2388
      %2877 = vmatpush1.bf16.msra.mxu0 %v2387
      %2878 = vmatprep.subr.bf16.mxu0 %v2384
      %2879 = vmatpush1.bf16.msra.mxu0 %v2383
      %2880 = vmatprep.subr.bf16.mxu0 %v2380
      %2881 = vmatpush1.bf16.msra.mxu0 %v2379
      %2882 = vmatprep.subr.bf16.mxu0 %v2376
      %2883 = vmatpush1.bf16.msra.mxu0 %v2375
      %2884 = vmatprep.subr.bf16.mxu0 %v2372
      %2885 = vmatpush1.bf16.msra.mxu0 %v2371
      %2886 = vmatprep.subr.bf16.mxu0 %v2368
      %2887 = vmatpush1.bf16.msra.mxu0 %v2367
      %2888 = vmatprep.subr.bf16.mxu0 %v2428
      %2889 = vmatpush2.bf16.msra.mxu0 %v2427
      %2890 = vmatprep.subr.bf16.mxu0 %v2424
      %2891 = vmatpush2.bf16.msra.mxu0 %v2423
      %2892 = vmatprep.subr.bf16.mxu0 %v2420
      %2893 = vmatpush2.bf16.msra.mxu0 %v2419
      %2894 = vmatprep.subr.bf16.mxu0 %v2416
      %2895 = vmatpush2.bf16.msra.mxu0 %v2415
      %2896 = vmatprep.subr.bf16.mxu0 %v2412
      %2897 = vmatpush2.bf16.msra.mxu0 %v2411
      %2898 = vmatprep.subr.bf16.mxu0 %v2408
      %2899 = vmatpush2.bf16.msra.mxu0 %v2407
      %2900 = vmatprep.subr.bf16.mxu0 %v2404
      %2901 = vmatpush2.bf16.msra.mxu0 %v2403
      %2902 = vmatprep.subr.bf16.mxu0 %v2400
      %2903 = vmatpush2.bf16.msra.mxu0 %v2399
      %2904 = vmatprep.mubr.bf16.mxu0 %v1778
      %2905 = vmatmul.mubr.bf16.gmra.mxu0 %v1777
      %v2906 = vpop.f32.mrf.mxu0
      %v2907 = vadd.f32 %v1762, %v2906
      %v2908 = vpop.f32.mrf.mxu0
      %v2909 = vadd.f32 %v1764, %v2908
      %v2910 = vpop.f32.mrf.mxu0
      %v2911 = vpop.f32.mrf.mxu0
      %2912 = vdwg.mxu0
      %2913 = vmatprep.subr.bf16.mxu0 %v2460
      %2914 = vmatpush1.bf16.msra.mxu0 %v2459
      %2915 = vmatprep.subr.bf16.mxu0 %v2456
      %2916 = vmatpush1.bf16.msra.mxu0 %v2455
      %2917 = vmatprep.subr.bf16.mxu0 %v2452
      %2918 = vmatpush1.bf16.msra.mxu0 %v2451
      %2919 = vmatprep.subr.bf16.mxu0 %v2448
      %2920 = vmatpush1.bf16.msra.mxu0 %v2447
      %2921 = vmatprep.subr.bf16.mxu0 %v2444
      %2922 = vmatpush1.bf16.msra.mxu0 %v2443
      %2923 = vmatprep.subr.bf16.mxu0 %v2440
      %2924 = vmatpush1.bf16.msra.mxu0 %v2439
      %2925 = vmatprep.subr.bf16.mxu0 %v2436
      %2926 = vmatpush1.bf16.msra.mxu0 %v2435
      %2927 = vmatprep.subr.bf16.mxu0 %v2432
      %2928 = vmatpush1.bf16.msra.mxu0 %v2431
      %2929 = vmatprep.subr.bf16.mxu0 %v2492
      %2930 = vmatpush2.bf16.msra.mxu0 %v2491
      %2931 = vmatprep.subr.bf16.mxu0 %v2488
      %2932 = vmatpush2.bf16.msra.mxu0 %v2487
      %2933 = vmatprep.subr.bf16.mxu0 %v2484
      %2934 = vmatpush2.bf16.msra.mxu0 %v2483
      %2935 = vmatprep.subr.bf16.mxu0 %v2480
      %2936 = vmatpush2.bf16.msra.mxu0 %v2479
      %2937 = vmatprep.subr.bf16.mxu0 %v2476
      %2938 = vmatpush2.bf16.msra.mxu0 %v2475
      %2939 = vmatprep.subr.bf16.mxu0 %v2472
      %2940 = vmatpush2.bf16.msra.mxu0 %v2471
      %2941 = vmatprep.subr.bf16.mxu0 %v2468
      %2942 = vmatpush2.bf16.msra.mxu0 %v2467
      %2943 = vmatprep.subr.bf16.mxu0 %v2464
      %2944 = vmatpush2.bf16.msra.mxu0 %v2463
      %2945 = vmatprep.mubr.bf16.mxu0 %v1780
      %2946 = vmatmul.mubr.bf16.gmra.mxu0 %v1779
      %v2947 = vpop.f32.mrf.mxu0
      %v2948 = vadd.f32 %v2907, %v2947
      %v2949 = vpop.f32.mrf.mxu0
      %v2950 = vadd.f32 %v2909, %v2949
      %v2951 = vpop.f32.mrf.mxu0
      %v2952 = vpop.f32.mrf.mxu0
      %2953 = vdwg.mxu0
      %2954 = vmatprep.subr.bf16.mxu0 %v2524
      %2955 = vmatpush1.bf16.msra.mxu0 %v2523
      %2956 = vmatprep.subr.bf16.mxu0 %v2520
      %2957 = vmatpush1.bf16.msra.mxu0 %v2519
      %2958 = vmatprep.subr.bf16.mxu0 %v2516
      %2959 = vmatpush1.bf16.msra.mxu0 %v2515
      %2960 = vmatprep.subr.bf16.mxu0 %v2512
      %2961 = vmatpush1.bf16.msra.mxu0 %v2511
      %2962 = vmatprep.subr.bf16.mxu0 %v2508
      %2963 = vmatpush1.bf16.msra.mxu0 %v2507
      %2964 = vmatprep.subr.bf16.mxu0 %v2504
      %2965 = vmatpush1.bf16.msra.mxu0 %v2503
      %2966 = vmatprep.subr.bf16.mxu0 %v2500
      %2967 = vmatpush1.bf16.msra.mxu0 %v2499
      %2968 = vmatprep.subr.bf16.mxu0 %v2496
      %2969 = vmatpush1.bf16.msra.mxu0 %v2495
      %2970 = vmatprep.subr.bf16.mxu0 %v2556
      %2971 = vmatpush2.bf16.msra.mxu0 %v2555
      %2972 = vmatprep.subr.bf16.mxu0 %v2552
      %2973 = vmatpush2.bf16.msra.mxu0 %v2551
      %2974 = vmatprep.subr.bf16.mxu0 %v2548
      %2975 = vmatpush2.bf16.msra.mxu0 %v2547
      %2976 = vmatprep.subr.bf16.mxu0 %v2544
      %2977 = vmatpush2.bf16.msra.mxu0 %v2543
      %2978 = vmatprep.subr.bf16.mxu0 %v2540
      %2979 = vmatpush2.bf16.msra.mxu0 %v2539
      %2980 = vmatprep.subr.bf16.mxu0 %v2536
      %2981 = vmatpush2.bf16.msra.mxu0 %v2535
      %2982 = vmatprep.subr.bf16.mxu0 %v2532
      %2983 = vmatpush2.bf16.msra.mxu0 %v2531
      %2984 = vmatprep.subr.bf16.mxu0 %v2528
      %2985 = vmatpush2.bf16.msra.mxu0 %v2527
      %2986 = vmatprep.mubr.bf16.mxu0 %v1782
      %2987 = vmatmul.mubr.bf16.gmra.mxu0 %v1781
      %v2988 = vpop.f32.mrf.mxu0
      %v2989 = vadd.f32 %v2948, %v2988
      %v2990 = vpop.f32.mrf.mxu0
      %v2991 = vadd.f32 %v2950, %v2990
      %v2992 = vpop.f32.mrf.mxu0
      %v2993 = vpop.f32.mrf.mxu0
      %2994 = vdwg.mxu0
      %v2995 = vld [vmem:[%s138] sm:$0xcc]
      %v2996 = vld [vmem:[%s138 + $0x8] sm:$0xcc]
      %v2997 = vld [vmem:[%s138 + $0x10] sm:$0xcc]
      %s2998 = scalar_lea.vmem %s1, 3072
      %v2999 = vld [vmem:[%s2998] sm:$0xff]
      %v3000 = vld [vmem:[%s2998 + $0x8] sm:$0xff]
      %v3001 = vld [vmem:[%s2998 + $0x10] sm:$0xff]
      %v3002 = vld [vmem:[%s2998 + $0x18] sm:$0xff]
      %v3003 = vld [vmem:[%s2998 + $0x20] sm:$0xff]
      %v3004 = vld [vmem:[%s2998 + $0x28] sm:$0xff]
      %v3005 = vld [vmem:[%s2998 + $0x30] sm:$0xff]
      %v3006 = vld [vmem:[%s2998 + $0x38] sm:$0xff]
      %v3007 = vld [vmem:[%s2998 + $0x40] sm:$0xff]
      %v3008 = vld [vmem:[%s2998 + $0x48] sm:$0xff]
      %v3009 = vld [vmem:[%s2998 + $0x50] sm:$0xff]
      %v3010 = vld [vmem:[%s2998 + $0x58] sm:$0xff]
      %v3011 = vld [vmem:[%s2998 + $0x60] sm:$0xff]
      %v3012 = vld [vmem:[%s2998 + $0x68] sm:$0xff]
      %v3013 = vld [vmem:[%s2998 + $0x70] sm:$0xff]
      %v3014 = vld [vmem:[%s2998 + $0x78] sm:$0xff]
      %v3015 = vld [vmem:[%s2998 + $0x80] sm:$0xff]
      %v3016 = vld [vmem:[%s2998 + $0x88] sm:$0xff]
      %v3017 = vld [vmem:[%s2998 + $0x90] sm:$0xff]
      %v3018 = vld [vmem:[%s2998 + $0x98] sm:$0xff]
      %v3019 = vld [vmem:[%s2998 + $0xa0] sm:$0xff]
      %v3020 = vld [vmem:[%s2998 + $0xa8] sm:$0xff]
      %v3021 = vld [vmem:[%s2998 + $0xb0] sm:$0xff]
      %v3022 = vld [vmem:[%s2998 + $0xb8] sm:$0xff]
      %v3023 = vld [vmem:[%s2998 + $0xc0] sm:$0xff]
      %v3024 = vld [vmem:[%s2998 + $0xc8] sm:$0xff]
      %v3025 = vld [vmem:[%s2998 + $0xd0] sm:$0xff]
      %v3026 = vld [vmem:[%s2998 + $0xd8] sm:$0xff]
      %v3027 = vld [vmem:[%s2998 + $0xe0] sm:$0xff]
      %v3028 = vld [vmem:[%s2998 + $0xe8] sm:$0xff]
      %v3029 = vld [vmem:[%s2998 + $0xf0] sm:$0xff]
      %v3030 = vld [vmem:[%s2998 + $0xf8] sm:$0xff]
      %v3031 = vld [vmem:[%s2998 + $0x100] sm:$0xff]
      %v3032 = vld [vmem:[%s2998 + $0x108] sm:$0xff]
      %v3033 = vld [vmem:[%s2998 + $0x110] sm:$0xff]
      %v3034 = vld [vmem:[%s2998 + $0x118] sm:$0xff]
      %v3035 = vld [vmem:[%s2998 + $0x120] sm:$0xff]
      %v3036 = vld [vmem:[%s2998 + $0x128] sm:$0xff]
      %v3037 = vld [vmem:[%s2998 + $0x130] sm:$0xff]
      %v3038 = vld [vmem:[%s2998 + $0x138] sm:$0xff]
      %v3039 = vld [vmem:[%s2998 + $0x140] sm:$0xff]
      %v3040 = vld [vmem:[%s2998 + $0x148] sm:$0xff]
      %v3041 = vld [vmem:[%s2998 + $0x150] sm:$0xff]
      %v3042 = vld [vmem:[%s2998 + $0x158] sm:$0xff]
      %v3043 = vld [vmem:[%s2998 + $0x160] sm:$0xff]
      %v3044 = vld [vmem:[%s2998 + $0x168] sm:$0xff]
      %v3045 = vld [vmem:[%s2998 + $0x170] sm:$0xff]
      %v3046 = vld [vmem:[%s2998 + $0x178] sm:$0xff]
      %v3047 = vld [vmem:[%s2998 + $0x180] sm:$0xff]
      %v3048 = vld [vmem:[%s2998 + $0x188] sm:$0xff]
      %v3049 = vld [vmem:[%s2998 + $0x190] sm:$0xff]
      %v3050 = vld [vmem:[%s2998 + $0x198] sm:$0xff]
      %v3051 = vld [vmem:[%s2998 + $0x1a0] sm:$0xff]
      %v3052 = vld [vmem:[%s2998 + $0x1a8] sm:$0xff]
      %v3053 = vld [vmem:[%s2998 + $0x1b0] sm:$0xff]
      %v3054 = vld [vmem:[%s2998 + $0x1b8] sm:$0xff]
      %v3055 = vld [vmem:[%s2998 + $0x1c0] sm:$0xff]
      %v3056 = vld [vmem:[%s2998 + $0x1c8] sm:$0xff]
      %v3057 = vld [vmem:[%s2998 + $0x1d0] sm:$0xff]
      %v3058 = vld [vmem:[%s2998 + $0x1d8] sm:$0xff]
      %v3059 = vld [vmem:[%s2998 + $0x1e0] sm:$0xff]
      %v3060 = vld [vmem:[%s2998 + $0x1e8] sm:$0xff]
      %v3061 = vld [vmem:[%s2998 + $0x1f0] sm:$0xff]
      %v3062 = vld [vmem:[%s2998 + $0x1f8] sm:$0xff]
      %v3063 = vld [vmem:[%s2998 + $0x200] sm:$0xff]
      %v3064 = vld [vmem:[%s2998 + $0x208] sm:$0xff]
      %v3065 = vld [vmem:[%s2998 + $0x210] sm:$0xff]
      %v3066 = vld [vmem:[%s2998 + $0x218] sm:$0xff]
      %v3067 = vld [vmem:[%s2998 + $0x220] sm:$0xff]
      %v3068 = vld [vmem:[%s2998 + $0x228] sm:$0xff]
      %v3069 = vld [vmem:[%s2998 + $0x230] sm:$0xff]
      %v3070 = vld [vmem:[%s2998 + $0x238] sm:$0xff]
      %v3071 = vld [vmem:[%s2998 + $0x240] sm:$0xff]
      %v3072 = vld [vmem:[%s2998 + $0x248] sm:$0xff]
      %v3073 = vld [vmem:[%s2998 + $0x250] sm:$0xff]
      %v3074 = vld [vmem:[%s2998 + $0x258] sm:$0xff]
      %v3075 = vld [vmem:[%s2998 + $0x260] sm:$0xff]
      %v3076 = vld [vmem:[%s2998 + $0x268] sm:$0xff]
      %v3077 = vld [vmem:[%s2998 + $0x270] sm:$0xff]
      %v3078 = vld [vmem:[%s2998 + $0x278] sm:$0xff]
      %v3079 = vld [vmem:[%s2998 + $0x280] sm:$0xff]
      %v3080 = vld [vmem:[%s2998 + $0x288] sm:$0xff]
      %v3081 = vld [vmem:[%s2998 + $0x290] sm:$0xff]
      %v3082 = vld [vmem:[%s2998 + $0x298] sm:$0xff]
      %v3083 = vld [vmem:[%s2998 + $0x2a0] sm:$0xff]
      %v3084 = vld [vmem:[%s2998 + $0x2a8] sm:$0xff]
      %v3085 = vld [vmem:[%s2998 + $0x2b0] sm:$0xff]
      %v3086 = vld [vmem:[%s2998 + $0x2b8] sm:$0xff]
      %v3087 = vld [vmem:[%s2998 + $0x2c0] sm:$0xff]
      %v3088 = vld [vmem:[%s2998 + $0x2c8] sm:$0xff]
      %v3089 = vld [vmem:[%s2998 + $0x2d0] sm:$0xff]
      %v3090 = vld [vmem:[%s2998 + $0x2d8] sm:$0xff]
      %v3091 = vld [vmem:[%s2998 + $0x2e0] sm:$0xff]
      %v3092 = vld [vmem:[%s2998 + $0x2e8] sm:$0xff]
      %v3093 = vld [vmem:[%s2998 + $0x2f0] sm:$0xff]
      %v3094 = vld [vmem:[%s2998 + $0x2f8] sm:$0xff]
      %v3095 = vld [vmem:[%s2998 + $0x300] sm:$0xff]
      %v3096 = vld [vmem:[%s2998 + $0x308] sm:$0xff]
      %v3097 = vld [vmem:[%s2998 + $0x310] sm:$0xff]
      %v3098 = vld [vmem:[%s2998 + $0x318] sm:$0xff]
      %v3099 = vld [vmem:[%s2998 + $0x320] sm:$0xff]
      %v3100 = vld [vmem:[%s2998 + $0x328] sm:$0xff]
      %v3101 = vld [vmem:[%s2998 + $0x330] sm:$0xff]
      %v3102 = vld [vmem:[%s2998 + $0x338] sm:$0xff]
      %v3103 = vld [vmem:[%s2998 + $0x340] sm:$0xff]
      %v3104 = vld [vmem:[%s2998 + $0x348] sm:$0xff]
      %v3105 = vld [vmem:[%s2998 + $0x350] sm:$0xff]
      %v3106 = vld [vmem:[%s2998 + $0x358] sm:$0xff]
      %v3107 = vld [vmem:[%s2998 + $0x360] sm:$0xff]
      %v3108 = vld [vmem:[%s2998 + $0x368] sm:$0xff]
      %v3109 = vld [vmem:[%s2998 + $0x370] sm:$0xff]
      %v3110 = vld [vmem:[%s2998 + $0x378] sm:$0xff]
      %v3111 = vld [vmem:[%s2998 + $0x380] sm:$0xff]
      %v3112 = vld [vmem:[%s2998 + $0x388] sm:$0xff]
      %v3113 = vld [vmem:[%s2998 + $0x390] sm:$0xff]
      %v3114 = vld [vmem:[%s2998 + $0x398] sm:$0xff]
      %v3115 = vld [vmem:[%s2998 + $0x3a0] sm:$0xff]
      %v3116 = vld [vmem:[%s2998 + $0x3a8] sm:$0xff]
      %v3117 = vld [vmem:[%s2998 + $0x3b0] sm:$0xff]
      %v3118 = vld [vmem:[%s2998 + $0x3b8] sm:$0xff]
      %v3119 = vld [vmem:[%s2998 + $0x3c0] sm:$0xff]
      %v3120 = vld [vmem:[%s2998 + $0x3c8] sm:$0xff]
      %v3121 = vld [vmem:[%s2998 + $0x3d0] sm:$0xff]
      %v3122 = vld [vmem:[%s2998 + $0x3d8] sm:$0xff]
      %v3123 = vld [vmem:[%s2998 + $0x3e0] sm:$0xff]
      %v3124 = vld [vmem:[%s2998 + $0x3e8] sm:$0xff]
      %v3125 = vld [vmem:[%s2998 + $0x3f0] sm:$0xff]
      %v3126 = vld [vmem:[%s2998 + $0x3f8] sm:$0xff]
      %v3127 = vld [vmem:[%s2998 + $0x400] sm:$0xff]
      %v3128 = vld [vmem:[%s2998 + $0x408] sm:$0xff]
      %v3129 = vld [vmem:[%s2998 + $0x410] sm:$0xff]
      %v3130 = vld [vmem:[%s2998 + $0x418] sm:$0xff]
      %v3131 = vld [vmem:[%s2998 + $0x420] sm:$0xff]
      %v3132 = vld [vmem:[%s2998 + $0x428] sm:$0xff]
      %v3133 = vld [vmem:[%s2998 + $0x430] sm:$0xff]
      %v3134 = vld [vmem:[%s2998 + $0x438] sm:$0xff]
      %v3135 = vld [vmem:[%s2998 + $0x440] sm:$0xff]
      %v3136 = vld [vmem:[%s2998 + $0x448] sm:$0xff]
      %v3137 = vld [vmem:[%s2998 + $0x450] sm:$0xff]
      %v3138 = vld [vmem:[%s2998 + $0x458] sm:$0xff]
      %v3139 = vld [vmem:[%s2998 + $0x460] sm:$0xff]
      %v3140 = vld [vmem:[%s2998 + $0x468] sm:$0xff]
      %v3141 = vld [vmem:[%s2998 + $0x470] sm:$0xff]
      %v3142 = vld [vmem:[%s2998 + $0x478] sm:$0xff]
      %v3143 = vld [vmem:[%s2998 + $0x480] sm:$0xff]
      %v3144 = vld [vmem:[%s2998 + $0x488] sm:$0xff]
      %v3145 = vld [vmem:[%s2998 + $0x490] sm:$0xff]
      %v3146 = vld [vmem:[%s2998 + $0x498] sm:$0xff]
      %v3147 = vld [vmem:[%s2998 + $0x4a0] sm:$0xff]
      %v3148 = vld [vmem:[%s2998 + $0x4a8] sm:$0xff]
      %v3149 = vld [vmem:[%s2998 + $0x4b0] sm:$0xff]
      %v3150 = vld [vmem:[%s2998 + $0x4b8] sm:$0xff]
      %v3151 = vld [vmem:[%s2998 + $0x4c0] sm:$0xff]
      %v3152 = vld [vmem:[%s2998 + $0x4c8] sm:$0xff]
      %v3153 = vld [vmem:[%s2998 + $0x4d0] sm:$0xff]
      %v3154 = vld [vmem:[%s2998 + $0x4d8] sm:$0xff]
      %v3155 = vld [vmem:[%s2998 + $0x4e0] sm:$0xff]
      %v3156 = vld [vmem:[%s2998 + $0x4e8] sm:$0xff]
      %v3157 = vld [vmem:[%s2998 + $0x4f0] sm:$0xff]
      %v3158 = vld [vmem:[%s2998 + $0x4f8] sm:$0xff]
      %v3159 = vld [vmem:[%s2998 + $0x500] sm:$0xff]
      %v3160 = vld [vmem:[%s2998 + $0x508] sm:$0xff]
      %v3161 = vld [vmem:[%s2998 + $0x510] sm:$0xff]
      %v3162 = vld [vmem:[%s2998 + $0x518] sm:$0xff]
      %v3163 = vld [vmem:[%s2998 + $0x520] sm:$0xff]
      %v3164 = vld [vmem:[%s2998 + $0x528] sm:$0xff]
      %v3165 = vld [vmem:[%s2998 + $0x530] sm:$0xff]
      %v3166 = vld [vmem:[%s2998 + $0x538] sm:$0xff]
      %v3167 = vld [vmem:[%s2998 + $0x540] sm:$0xff]
      %v3168 = vld [vmem:[%s2998 + $0x548] sm:$0xff]
      %v3169 = vld [vmem:[%s2998 + $0x550] sm:$0xff]
      %v3170 = vld [vmem:[%s2998 + $0x558] sm:$0xff]
      %v3171 = vld [vmem:[%s2998 + $0x560] sm:$0xff]
      %v3172 = vld [vmem:[%s2998 + $0x568] sm:$0xff]
      %v3173 = vld [vmem:[%s2998 + $0x570] sm:$0xff]
      %v3174 = vld [vmem:[%s2998 + $0x578] sm:$0xff]
      %v3175 = vld [vmem:[%s2998 + $0x580] sm:$0xff]
      %v3176 = vld [vmem:[%s2998 + $0x588] sm:$0xff]
      %v3177 = vld [vmem:[%s2998 + $0x590] sm:$0xff]
      %v3178 = vld [vmem:[%s2998 + $0x598] sm:$0xff]
      %v3179 = vld [vmem:[%s2998 + $0x5a0] sm:$0xff]
      %v3180 = vld [vmem:[%s2998 + $0x5a8] sm:$0xff]
      %v3181 = vld [vmem:[%s2998 + $0x5b0] sm:$0xff]
      %v3182 = vld [vmem:[%s2998 + $0x5b8] sm:$0xff]
      %v3183 = vld [vmem:[%s2998 + $0x5c0] sm:$0xff]
      %v3184 = vld [vmem:[%s2998 + $0x5c8] sm:$0xff]
      %v3185 = vld [vmem:[%s2998 + $0x5d0] sm:$0xff]
      %v3186 = vld [vmem:[%s2998 + $0x5d8] sm:$0xff]
      %v3187 = vld [vmem:[%s2998 + $0x5e0] sm:$0xff]
      %v3188 = vld [vmem:[%s2998 + $0x5e8] sm:$0xff]
      %v3189 = vld [vmem:[%s2998 + $0x5f0] sm:$0xff]
      %v3190 = vld [vmem:[%s2998 + $0x5f8] sm:$0xff]
      %v3194 = vunpack.c.l.b16 %v2995
      %v3195 = vunpack.c.h.b16 %v2995
      %v3196 = vunpack.c.l.b16 %v2996
      %v3197 = vunpack.c.h.b16 %v2996
      %v3198 = vunpack.c.l.b16 %v2997
      %v3199 = vunpack.c.h.b16 %v2997
      %v3200 = vpack.c.b16 %v3194, %v3194
      %v3201 = vpack.c.b16 %v3195, %v3195
      %v3202 = vpack.c.b16 %v3196, %v3196
      %v3203 = vpack.c.b16 %v3197, %v3197
      %v3204 = vpack.c.b16 %v3198, %v3198
      %v3205 = vpack.c.b16 %v3199, %v3199
      %v3206 = vrot.slane %v3200, 2
      %v3207 = vrot.slane %v3201, 2
      %v3208 = vrot.slane %v3202, 2
      %v3209 = vrot.slane %v3203, 2
      %v3210 = vrot.slane %v3204, 2
      %v3211 = vrot.slane %v3205, 2
      %v3410 = vunpack.c.l.b16 %v2999
      %v3411 = vunpack.c.h.b16 %v2999
      %v3412 = vunpack.c.l.b16 %v3000
      %v3413 = vunpack.c.h.b16 %v3000
      %v3414 = vunpack.c.l.b16 %v3001
      %v3415 = vunpack.c.h.b16 %v3001
      %v3416 = vunpack.c.l.b16 %v3002
      %v3417 = vunpack.c.h.b16 %v3002
      %v3418 = vunpack.c.l.b16 %v3003
      %v3419 = vunpack.c.h.b16 %v3003
      %v3420 = vunpack.c.l.b16 %v3004
      %v3421 = vunpack.c.h.b16 %v3004
      %v3422 = vunpack.c.l.b16 %v3005
      %v3423 = vunpack.c.h.b16 %v3005
      %v3424 = vunpack.c.l.b16 %v3006
      %v3425 = vunpack.c.h.b16 %v3006
      %v3426 = vunpack.c.l.b16 %v3007
      %v3427 = vunpack.c.h.b16 %v3007
      %v3428 = vunpack.c.l.b16 %v3008
      %v3429 = vunpack.c.h.b16 %v3008
      %v3430 = vunpack.c.l.b16 %v3009
      %v3431 = vunpack.c.h.b16 %v3009
      %v3432 = vunpack.c.l.b16 %v3010
      %v3433 = vunpack.c.h.b16 %v3010
      %v3434 = vunpack.c.l.b16 %v3011
      %v3435 = vunpack.c.h.b16 %v3011
      %v3436 = vunpack.c.l.b16 %v3012
      %v3437 = vunpack.c.h.b16 %v3012
      %v3438 = vunpack.c.l.b16 %v3013
      %v3439 = vunpack.c.h.b16 %v3013
      %v3440 = vunpack.c.l.b16 %v3014
      %v3441 = vunpack.c.h.b16 %v3014
      %v3442 = vunpack.c.l.b16 %v3015
      %v3443 = vunpack.c.h.b16 %v3015
      %v3444 = vunpack.c.l.b16 %v3016
      %v3445 = vunpack.c.h.b16 %v3016
      %v3446 = vunpack.c.l.b16 %v3017
      %v3447 = vunpack.c.h.b16 %v3017
      %v3448 = vunpack.c.l.b16 %v3018
      %v3449 = vunpack.c.h.b16 %v3018
      %v3450 = vunpack.c.l.b16 %v3019
      %v3451 = vunpack.c.h.b16 %v3019
      %v3452 = vunpack.c.l.b16 %v3020
      %v3453 = vunpack.c.h.b16 %v3020
      %v3454 = vunpack.c.l.b16 %v3021
      %v3455 = vunpack.c.h.b16 %v3021
      %v3456 = vunpack.c.l.b16 %v3022
      %v3457 = vunpack.c.h.b16 %v3022
      %v3458 = vunpack.c.l.b16 %v3023
      %v3459 = vunpack.c.h.b16 %v3023
      %v3460 = vunpack.c.l.b16 %v3024
      %v3461 = vunpack.c.h.b16 %v3024
      %v3462 = vunpack.c.l.b16 %v3025
      %v3463 = vunpack.c.h.b16 %v3025
      %v3464 = vunpack.c.l.b16 %v3026
      %v3465 = vunpack.c.h.b16 %v3026
      %v3466 = vunpack.c.l.b16 %v3027
      %v3467 = vunpack.c.h.b16 %v3027
      %v3468 = vunpack.c.l.b16 %v3028
      %v3469 = vunpack.c.h.b16 %v3028
      %v3470 = vunpack.c.l.b16 %v3029
      %v3471 = vunpack.c.h.b16 %v3029
      %v3472 = vunpack.c.l.b16 %v3030
      %v3473 = vunpack.c.h.b16 %v3030
      %v3474 = vunpack.c.l.b16 %v3031
      %v3475 = vunpack.c.h.b16 %v3031
      %v3476 = vunpack.c.l.b16 %v3032
      %v3477 = vunpack.c.h.b16 %v3032
      %v3478 = vunpack.c.l.b16 %v3033
      %v3479 = vunpack.c.h.b16 %v3033
      %v3480 = vunpack.c.l.b16 %v3034
      %v3481 = vunpack.c.h.b16 %v3034
      %v3482 = vunpack.c.l.b16 %v3035
      %v3483 = vunpack.c.h.b16 %v3035
      %v3484 = vunpack.c.l.b16 %v3036
      %v3485 = vunpack.c.h.b16 %v3036
      %v3486 = vunpack.c.l.b16 %v3037
      %v3487 = vunpack.c.h.b16 %v3037
      %v3488 = vunpack.c.l.b16 %v3038
      %v3489 = vunpack.c.h.b16 %v3038
      %v3490 = vunpack.c.l.b16 %v3039
      %v3491 = vunpack.c.h.b16 %v3039
      %v3492 = vunpack.c.l.b16 %v3040
      %v3493 = vunpack.c.h.b16 %v3040
      %v3494 = vunpack.c.l.b16 %v3041
      %v3495 = vunpack.c.h.b16 %v3041
      %v3496 = vunpack.c.l.b16 %v3042
      %v3497 = vunpack.c.h.b16 %v3042
      %v3498 = vunpack.c.l.b16 %v3043
      %v3499 = vunpack.c.h.b16 %v3043
      %v3500 = vunpack.c.l.b16 %v3044
      %v3501 = vunpack.c.h.b16 %v3044
      %v3502 = vunpack.c.l.b16 %v3045
      %v3503 = vunpack.c.h.b16 %v3045
      %v3504 = vunpack.c.l.b16 %v3046
      %v3505 = vunpack.c.h.b16 %v3046
      %v3506 = vunpack.c.l.b16 %v3047
      %v3507 = vunpack.c.h.b16 %v3047
      %v3508 = vunpack.c.l.b16 %v3048
      %v3509 = vunpack.c.h.b16 %v3048
      %v3510 = vunpack.c.l.b16 %v3049
      %v3511 = vunpack.c.h.b16 %v3049
      %v3512 = vunpack.c.l.b16 %v3050
      %v3513 = vunpack.c.h.b16 %v3050
      %v3514 = vunpack.c.l.b16 %v3051
      %v3515 = vunpack.c.h.b16 %v3051
      %v3516 = vunpack.c.l.b16 %v3052
      %v3517 = vunpack.c.h.b16 %v3052
      %v3518 = vunpack.c.l.b16 %v3053
      %v3519 = vunpack.c.h.b16 %v3053
      %v3520 = vunpack.c.l.b16 %v3054
      %v3521 = vunpack.c.h.b16 %v3054
      %v3522 = vunpack.c.l.b16 %v3055
      %v3523 = vunpack.c.h.b16 %v3055
      %v3524 = vunpack.c.l.b16 %v3056
      %v3525 = vunpack.c.h.b16 %v3056
      %v3526 = vunpack.c.l.b16 %v3057
      %v3527 = vunpack.c.h.b16 %v3057
      %v3528 = vunpack.c.l.b16 %v3058
      %v3529 = vunpack.c.h.b16 %v3058
      %v3530 = vunpack.c.l.b16 %v3059
      %v3531 = vunpack.c.h.b16 %v3059
      %v3532 = vunpack.c.l.b16 %v3060
      %v3533 = vunpack.c.h.b16 %v3060
      %v3534 = vunpack.c.l.b16 %v3061
      %v3535 = vunpack.c.h.b16 %v3061
      %v3536 = vunpack.c.l.b16 %v3062
      %v3537 = vunpack.c.h.b16 %v3062
      %v3538 = vunpack.c.l.b16 %v3063
      %v3539 = vunpack.c.h.b16 %v3063
      %v3540 = vunpack.c.l.b16 %v3064
      %v3541 = vunpack.c.h.b16 %v3064
      %v3542 = vunpack.c.l.b16 %v3065
      %v3543 = vunpack.c.h.b16 %v3065
      %v3544 = vunpack.c.l.b16 %v3066
      %v3545 = vunpack.c.h.b16 %v3066
      %v3546 = vunpack.c.l.b16 %v3067
      %v3547 = vunpack.c.h.b16 %v3067
      %v3548 = vunpack.c.l.b16 %v3068
      %v3549 = vunpack.c.h.b16 %v3068
      %v3550 = vunpack.c.l.b16 %v3069
      %v3551 = vunpack.c.h.b16 %v3069
      %v3552 = vunpack.c.l.b16 %v3070
      %v3553 = vunpack.c.h.b16 %v3070
      %v3554 = vunpack.c.l.b16 %v3071
      %v3555 = vunpack.c.h.b16 %v3071
      %v3556 = vunpack.c.l.b16 %v3072
      %v3557 = vunpack.c.h.b16 %v3072
      %v3558 = vunpack.c.l.b16 %v3073
      %v3559 = vunpack.c.h.b16 %v3073
      %v3560 = vunpack.c.l.b16 %v3074
      %v3561 = vunpack.c.h.b16 %v3074
      %v3562 = vunpack.c.l.b16 %v3075
      %v3563 = vunpack.c.h.b16 %v3075
      %v3564 = vunpack.c.l.b16 %v3076
      %v3565 = vunpack.c.h.b16 %v3076
      %v3566 = vunpack.c.l.b16 %v3077
      %v3567 = vunpack.c.h.b16 %v3077
      %v3568 = vunpack.c.l.b16 %v3078
      %v3569 = vunpack.c.h.b16 %v3078
      %v3570 = vunpack.c.l.b16 %v3079
      %v3571 = vunpack.c.h.b16 %v3079
      %v3572 = vunpack.c.l.b16 %v3080
      %v3573 = vunpack.c.h.b16 %v3080
      %v3574 = vunpack.c.l.b16 %v3081
      %v3575 = vunpack.c.h.b16 %v3081
      %v3576 = vunpack.c.l.b16 %v3082
      %v3577 = vunpack.c.h.b16 %v3082
      %v3578 = vunpack.c.l.b16 %v3083
      %v3579 = vunpack.c.h.b16 %v3083
      %v3580 = vunpack.c.l.b16 %v3084
      %v3581 = vunpack.c.h.b16 %v3084
      %v3582 = vunpack.c.l.b16 %v3085
      %v3583 = vunpack.c.h.b16 %v3085
      %v3584 = vunpack.c.l.b16 %v3086
      %v3585 = vunpack.c.h.b16 %v3086
      %v3586 = vunpack.c.l.b16 %v3087
      %v3587 = vunpack.c.h.b16 %v3087
      %v3588 = vunpack.c.l.b16 %v3088
      %v3589 = vunpack.c.h.b16 %v3088
      %v3590 = vunpack.c.l.b16 %v3089
      %v3591 = vunpack.c.h.b16 %v3089
      %v3592 = vunpack.c.l.b16 %v3090
      %v3593 = vunpack.c.h.b16 %v3090
      %v3594 = vunpack.c.l.b16 %v3091
      %v3595 = vunpack.c.h.b16 %v3091
      %v3596 = vunpack.c.l.b16 %v3092
      %v3597 = vunpack.c.h.b16 %v3092
      %v3598 = vunpack.c.l.b16 %v3093
      %v3599 = vunpack.c.h.b16 %v3093
      %v3600 = vunpack.c.l.b16 %v3094
      %v3601 = vunpack.c.h.b16 %v3094
      %v3602 = vunpack.c.l.b16 %v3095
      %v3603 = vunpack.c.h.b16 %v3095
      %v3604 = vunpack.c.l.b16 %v3096
      %v3605 = vunpack.c.h.b16 %v3096
      %v3606 = vunpack.c.l.b16 %v3097
      %v3607 = vunpack.c.h.b16 %v3097
      %v3608 = vunpack.c.l.b16 %v3098
      %v3609 = vunpack.c.h.b16 %v3098
      %v3610 = vunpack.c.l.b16 %v3099
      %v3611 = vunpack.c.h.b16 %v3099
      %v3612 = vunpack.c.l.b16 %v3100
      %v3613 = vunpack.c.h.b16 %v3100
      %v3614 = vunpack.c.l.b16 %v3101
      %v3615 = vunpack.c.h.b16 %v3101
      %v3616 = vunpack.c.l.b16 %v3102
      %v3617 = vunpack.c.h.b16 %v3102
      %v3618 = vunpack.c.l.b16 %v3103
      %v3619 = vunpack.c.h.b16 %v3103
      %v3620 = vunpack.c.l.b16 %v3104
      %v3621 = vunpack.c.h.b16 %v3104
      %v3622 = vunpack.c.l.b16 %v3105
      %v3623 = vunpack.c.h.b16 %v3105
      %v3624 = vunpack.c.l.b16 %v3106
      %v3625 = vunpack.c.h.b16 %v3106
      %v3626 = vunpack.c.l.b16 %v3107
      %v3627 = vunpack.c.h.b16 %v3107
      %v3628 = vunpack.c.l.b16 %v3108
      %v3629 = vunpack.c.h.b16 %v3108
      %v3630 = vunpack.c.l.b16 %v3109
      %v3631 = vunpack.c.h.b16 %v3109
      %v3632 = vunpack.c.l.b16 %v3110
      %v3633 = vunpack.c.h.b16 %v3110
      %v3634 = vunpack.c.l.b16 %v3111
      %v3635 = vunpack.c.h.b16 %v3111
      %v3636 = vunpack.c.l.b16 %v3112
      %v3637 = vunpack.c.h.b16 %v3112
      %v3638 = vunpack.c.l.b16 %v3113
      %v3639 = vunpack.c.h.b16 %v3113
      %v3640 = vunpack.c.l.b16 %v3114
      %v3641 = vunpack.c.h.b16 %v3114
      %v3642 = vunpack.c.l.b16 %v3115
      %v3643 = vunpack.c.h.b16 %v3115
      %v3644 = vunpack.c.l.b16 %v3116
      %v3645 = vunpack.c.h.b16 %v3116
      %v3646 = vunpack.c.l.b16 %v3117
      %v3647 = vunpack.c.h.b16 %v3117
      %v3648 = vunpack.c.l.b16 %v3118
      %v3649 = vunpack.c.h.b16 %v3118
      %v3650 = vunpack.c.l.b16 %v3119
      %v3651 = vunpack.c.h.b16 %v3119
      %v3652 = vunpack.c.l.b16 %v3120
      %v3653 = vunpack.c.h.b16 %v3120
      %v3654 = vunpack.c.l.b16 %v3121
      %v3655 = vunpack.c.h.b16 %v3121
      %v3656 = vunpack.c.l.b16 %v3122
      %v3657 = vunpack.c.h.b16 %v3122
      %v3658 = vunpack.c.l.b16 %v3123
      %v3659 = vunpack.c.h.b16 %v3123
      %v3660 = vunpack.c.l.b16 %v3124
      %v3661 = vunpack.c.h.b16 %v3124
      %v3662 = vunpack.c.l.b16 %v3125
      %v3663 = vunpack.c.h.b16 %v3125
      %v3664 = vunpack.c.l.b16 %v3126
      %v3665 = vunpack.c.h.b16 %v3126
      %v3666 = vunpack.c.l.b16 %v3127
      %v3667 = vunpack.c.h.b16 %v3127
      %v3668 = vunpack.c.l.b16 %v3128
      %v3669 = vunpack.c.h.b16 %v3128
      %v3670 = vunpack.c.l.b16 %v3129
      %v3671 = vunpack.c.h.b16 %v3129
      %v3672 = vunpack.c.l.b16 %v3130
      %v3673 = vunpack.c.h.b16 %v3130
      %v3674 = vunpack.c.l.b16 %v3131
      %v3675 = vunpack.c.h.b16 %v3131
      %v3676 = vunpack.c.l.b16 %v3132
      %v3677 = vunpack.c.h.b16 %v3132
      %v3678 = vunpack.c.l.b16 %v3133
      %v3679 = vunpack.c.h.b16 %v3133
      %v3680 = vunpack.c.l.b16 %v3134
      %v3681 = vunpack.c.h.b16 %v3134
      %v3682 = vunpack.c.l.b16 %v3135
      %v3683 = vunpack.c.h.b16 %v3135
      %v3684 = vunpack.c.l.b16 %v3136
      %v3685 = vunpack.c.h.b16 %v3136
      %v3686 = vunpack.c.l.b16 %v3137
      %v3687 = vunpack.c.h.b16 %v3137
      %v3688 = vunpack.c.l.b16 %v3138
      %v3689 = vunpack.c.h.b16 %v3138
      %v3690 = vunpack.c.l.b16 %v3139
      %v3691 = vunpack.c.h.b16 %v3139
      %v3692 = vunpack.c.l.b16 %v3140
      %v3693 = vunpack.c.h.b16 %v3140
      %v3694 = vunpack.c.l.b16 %v3141
      %v3695 = vunpack.c.h.b16 %v3141
      %v3696 = vunpack.c.l.b16 %v3142
      %v3697 = vunpack.c.h.b16 %v3142
      %v3698 = vunpack.c.l.b16 %v3143
      %v3699 = vunpack.c.h.b16 %v3143
      %v3700 = vunpack.c.l.b16 %v3144
      %v3701 = vunpack.c.h.b16 %v3144
      %v3702 = vunpack.c.l.b16 %v3145
      %v3703 = vunpack.c.h.b16 %v3145
      %v3704 = vunpack.c.l.b16 %v3146
      %v3705 = vunpack.c.h.b16 %v3146
      %v3706 = vunpack.c.l.b16 %v3147
      %v3707 = vunpack.c.h.b16 %v3147
      %v3708 = vunpack.c.l.b16 %v3148
      %v3709 = vunpack.c.h.b16 %v3148
      %v3710 = vunpack.c.l.b16 %v3149
      %v3711 = vunpack.c.h.b16 %v3149
      %v3712 = vunpack.c.l.b16 %v3150
      %v3713 = vunpack.c.h.b16 %v3150
      %v3714 = vunpack.c.l.b16 %v3151
      %v3715 = vunpack.c.h.b16 %v3151
      %v3716 = vunpack.c.l.b16 %v3152
      %v3717 = vunpack.c.h.b16 %v3152
      %v3718 = vunpack.c.l.b16 %v3153
      %v3719 = vunpack.c.h.b16 %v3153
      %v3720 = vunpack.c.l.b16 %v3154
      %v3721 = vunpack.c.h.b16 %v3154
      %v3722 = vunpack.c.l.b16 %v3155
      %v3723 = vunpack.c.h.b16 %v3155
      %v3724 = vunpack.c.l.b16 %v3156
      %v3725 = vunpack.c.h.b16 %v3156
      %v3726 = vunpack.c.l.b16 %v3157
      %v3727 = vunpack.c.h.b16 %v3157
      %v3728 = vunpack.c.l.b16 %v3158
      %v3729 = vunpack.c.h.b16 %v3158
      %v3730 = vunpack.c.l.b16 %v3159
      %v3731 = vunpack.c.h.b16 %v3159
      %v3732 = vunpack.c.l.b16 %v3160
      %v3733 = vunpack.c.h.b16 %v3160
      %v3734 = vunpack.c.l.b16 %v3161
      %v3735 = vunpack.c.h.b16 %v3161
      %v3736 = vunpack.c.l.b16 %v3162
      %v3737 = vunpack.c.h.b16 %v3162
      %v3738 = vunpack.c.l.b16 %v3163
      %v3739 = vunpack.c.h.b16 %v3163
      %v3740 = vunpack.c.l.b16 %v3164
      %v3741 = vunpack.c.h.b16 %v3164
      %v3742 = vunpack.c.l.b16 %v3165
      %v3743 = vunpack.c.h.b16 %v3165
      %v3744 = vunpack.c.l.b16 %v3166
      %v3745 = vunpack.c.h.b16 %v3166
      %v3746 = vunpack.c.l.b16 %v3167
      %v3747 = vunpack.c.h.b16 %v3167
      %v3748 = vunpack.c.l.b16 %v3168
      %v3749 = vunpack.c.h.b16 %v3168
      %v3750 = vunpack.c.l.b16 %v3169
      %v3751 = vunpack.c.h.b16 %v3169
      %v3752 = vunpack.c.l.b16 %v3170
      %v3753 = vunpack.c.h.b16 %v3170
      %v3754 = vunpack.c.l.b16 %v3171
      %v3755 = vunpack.c.h.b16 %v3171
      %v3756 = vunpack.c.l.b16 %v3172
      %v3757 = vunpack.c.h.b16 %v3172
      %v3758 = vunpack.c.l.b16 %v3173
      %v3759 = vunpack.c.h.b16 %v3173
      %v3760 = vunpack.c.l.b16 %v3174
      %v3761 = vunpack.c.h.b16 %v3174
      %v3762 = vunpack.c.l.b16 %v3175
      %v3763 = vunpack.c.h.b16 %v3175
      %v3764 = vunpack.c.l.b16 %v3176
      %v3765 = vunpack.c.h.b16 %v3176
      %v3766 = vunpack.c.l.b16 %v3177
      %v3767 = vunpack.c.h.b16 %v3177
      %v3768 = vunpack.c.l.b16 %v3178
      %v3769 = vunpack.c.h.b16 %v3178
      %v3770 = vunpack.c.l.b16 %v3179
      %v3771 = vunpack.c.h.b16 %v3179
      %v3772 = vunpack.c.l.b16 %v3180
      %v3773 = vunpack.c.h.b16 %v3180
      %v3774 = vunpack.c.l.b16 %v3181
      %v3775 = vunpack.c.h.b16 %v3181
      %v3776 = vunpack.c.l.b16 %v3182
      %v3777 = vunpack.c.h.b16 %v3182
      %v3778 = vunpack.c.l.b16 %v3183
      %v3779 = vunpack.c.h.b16 %v3183
      %v3780 = vunpack.c.l.b16 %v3184
      %v3781 = vunpack.c.h.b16 %v3184
      %v3782 = vunpack.c.l.b16 %v3185
      %v3783 = vunpack.c.h.b16 %v3185
      %v3784 = vunpack.c.l.b16 %v3186
      %v3785 = vunpack.c.h.b16 %v3186
      %v3786 = vunpack.c.l.b16 %v3187
      %v3787 = vunpack.c.h.b16 %v3187
      %v3788 = vunpack.c.l.b16 %v3188
      %v3789 = vunpack.c.h.b16 %v3188
      %v3790 = vunpack.c.l.b16 %v3189
      %v3791 = vunpack.c.h.b16 %v3189
      %v3792 = vunpack.c.l.b16 %v3190
      %v3793 = vunpack.c.h.b16 %v3190
      %v3794 = vpack.c.b16 %v3414, %v3410
      %v3795 = vpack.c.b16 %v3415, %v3411
      %v3796 = vpack.c.b16 %v3416, %v3412
      %v3797 = vpack.c.b16 %v3417, %v3413
      %v3798 = vpack.c.b16 %v3422, %v3418
      %v3799 = vpack.c.b16 %v3423, %v3419
      %v3800 = vpack.c.b16 %v3424, %v3420
      %v3801 = vpack.c.b16 %v3425, %v3421
      %v3802 = vpack.c.b16 %v3430, %v3426
      %v3803 = vpack.c.b16 %v3431, %v3427
      %v3804 = vpack.c.b16 %v3432, %v3428
      %v3805 = vpack.c.b16 %v3433, %v3429
      %v3806 = vpack.c.b16 %v3438, %v3434
      %v3807 = vpack.c.b16 %v3439, %v3435
      %v3808 = vpack.c.b16 %v3440, %v3436
      %v3809 = vpack.c.b16 %v3441, %v3437
      %v3810 = vpack.c.b16 %v3446, %v3442
      %v3811 = vpack.c.b16 %v3447, %v3443
      %v3812 = vpack.c.b16 %v3448, %v3444
      %v3813 = vpack.c.b16 %v3449, %v3445
      %v3814 = vpack.c.b16 %v3454, %v3450
      %v3815 = vpack.c.b16 %v3455, %v3451
      %v3816 = vpack.c.b16 %v3456, %v3452
      %v3817 = vpack.c.b16 %v3457, %v3453
      %v3818 = vpack.c.b16 %v3462, %v3458
      %v3819 = vpack.c.b16 %v3463, %v3459
      %v3820 = vpack.c.b16 %v3464, %v3460
      %v3821 = vpack.c.b16 %v3465, %v3461
      %v3822 = vpack.c.b16 %v3470, %v3466
      %v3823 = vpack.c.b16 %v3471, %v3467
      %v3824 = vpack.c.b16 %v3472, %v3468
      %v3825 = vpack.c.b16 %v3473, %v3469
      %v3826 = vpack.c.b16 %v3478, %v3474
      %v3827 = vpack.c.b16 %v3479, %v3475
      %v3828 = vpack.c.b16 %v3480, %v3476
      %v3829 = vpack.c.b16 %v3481, %v3477
      %v3830 = vpack.c.b16 %v3486, %v3482
      %v3831 = vpack.c.b16 %v3487, %v3483
      %v3832 = vpack.c.b16 %v3488, %v3484
      %v3833 = vpack.c.b16 %v3489, %v3485
      %v3834 = vpack.c.b16 %v3494, %v3490
      %v3835 = vpack.c.b16 %v3495, %v3491
      %v3836 = vpack.c.b16 %v3496, %v3492
      %v3837 = vpack.c.b16 %v3497, %v3493
      %v3838 = vpack.c.b16 %v3502, %v3498
      %v3839 = vpack.c.b16 %v3503, %v3499
      %v3840 = vpack.c.b16 %v3504, %v3500
      %v3841 = vpack.c.b16 %v3505, %v3501
      %v3842 = vpack.c.b16 %v3510, %v3506
      %v3843 = vpack.c.b16 %v3511, %v3507
      %v3844 = vpack.c.b16 %v3512, %v3508
      %v3845 = vpack.c.b16 %v3513, %v3509
      %v3846 = vpack.c.b16 %v3518, %v3514
      %v3847 = vpack.c.b16 %v3519, %v3515
      %v3848 = vpack.c.b16 %v3520, %v3516
      %v3849 = vpack.c.b16 %v3521, %v3517
      %v3850 = vpack.c.b16 %v3526, %v3522
      %v3851 = vpack.c.b16 %v3527, %v3523
      %v3852 = vpack.c.b16 %v3528, %v3524
      %v3853 = vpack.c.b16 %v3529, %v3525
      %v3854 = vpack.c.b16 %v3534, %v3530
      %v3855 = vpack.c.b16 %v3535, %v3531
      %v3856 = vpack.c.b16 %v3536, %v3532
      %v3857 = vpack.c.b16 %v3537, %v3533
      %v3858 = vpack.c.b16 %v3542, %v3538
      %v3859 = vpack.c.b16 %v3543, %v3539
      %v3860 = vpack.c.b16 %v3544, %v3540
      %v3861 = vpack.c.b16 %v3545, %v3541
      %v3862 = vpack.c.b16 %v3550, %v3546
      %v3863 = vpack.c.b16 %v3551, %v3547
      %v3864 = vpack.c.b16 %v3552, %v3548
      %v3865 = vpack.c.b16 %v3553, %v3549
      %v3866 = vpack.c.b16 %v3558, %v3554
      %v3867 = vpack.c.b16 %v3559, %v3555
      %v3868 = vpack.c.b16 %v3560, %v3556
      %v3869 = vpack.c.b16 %v3561, %v3557
      %v3870 = vpack.c.b16 %v3566, %v3562
      %v3871 = vpack.c.b16 %v3567, %v3563
      %v3872 = vpack.c.b16 %v3568, %v3564
      %v3873 = vpack.c.b16 %v3569, %v3565
      %v3874 = vpack.c.b16 %v3574, %v3570
      %v3875 = vpack.c.b16 %v3575, %v3571
      %v3876 = vpack.c.b16 %v3576, %v3572
      %v3877 = vpack.c.b16 %v3577, %v3573
      %v3878 = vpack.c.b16 %v3582, %v3578
      %v3879 = vpack.c.b16 %v3583, %v3579
      %v3880 = vpack.c.b16 %v3584, %v3580
      %v3881 = vpack.c.b16 %v3585, %v3581
      %v3882 = vpack.c.b16 %v3590, %v3586
      %v3883 = vpack.c.b16 %v3591, %v3587
      %v3884 = vpack.c.b16 %v3592, %v3588
      %v3885 = vpack.c.b16 %v3593, %v3589
      %v3886 = vpack.c.b16 %v3598, %v3594
      %v3887 = vpack.c.b16 %v3599, %v3595
      %v3888 = vpack.c.b16 %v3600, %v3596
      %v3889 = vpack.c.b16 %v3601, %v3597
      %v3890 = vpack.c.b16 %v3606, %v3602
      %v3891 = vpack.c.b16 %v3607, %v3603
      %v3892 = vpack.c.b16 %v3608, %v3604
      %v3893 = vpack.c.b16 %v3609, %v3605
      %v3894 = vpack.c.b16 %v3614, %v3610
      %v3895 = vpack.c.b16 %v3615, %v3611
      %v3896 = vpack.c.b16 %v3616, %v3612
      %v3897 = vpack.c.b16 %v3617, %v3613
      %v3898 = vpack.c.b16 %v3622, %v3618
      %v3899 = vpack.c.b16 %v3623, %v3619
      %v3900 = vpack.c.b16 %v3624, %v3620
      %v3901 = vpack.c.b16 %v3625, %v3621
      %v3902 = vpack.c.b16 %v3630, %v3626
      %v3903 = vpack.c.b16 %v3631, %v3627
      %v3904 = vpack.c.b16 %v3632, %v3628
      %v3905 = vpack.c.b16 %v3633, %v3629
      %v3906 = vpack.c.b16 %v3638, %v3634
      %v3907 = vpack.c.b16 %v3639, %v3635
      %v3908 = vpack.c.b16 %v3640, %v3636
      %v3909 = vpack.c.b16 %v3641, %v3637
      %v3910 = vpack.c.b16 %v3646, %v3642
      %v3911 = vpack.c.b16 %v3647, %v3643
      %v3912 = vpack.c.b16 %v3648, %v3644
      %v3913 = vpack.c.b16 %v3649, %v3645
      %v3914 = vpack.c.b16 %v3654, %v3650
      %v3915 = vpack.c.b16 %v3655, %v3651
      %v3916 = vpack.c.b16 %v3656, %v3652
      %v3917 = vpack.c.b16 %v3657, %v3653
      %v3918 = vpack.c.b16 %v3662, %v3658
      %v3919 = vpack.c.b16 %v3663, %v3659
      %v3920 = vpack.c.b16 %v3664, %v3660
      %v3921 = vpack.c.b16 %v3665, %v3661
      %v3922 = vpack.c.b16 %v3670, %v3666
      %v3923 = vpack.c.b16 %v3671, %v3667
      %v3924 = vpack.c.b16 %v3672, %v3668
      %v3925 = vpack.c.b16 %v3673, %v3669
      %v3926 = vpack.c.b16 %v3678, %v3674
      %v3927 = vpack.c.b16 %v3679, %v3675
      %v3928 = vpack.c.b16 %v3680, %v3676
      %v3929 = vpack.c.b16 %v3681, %v3677
      %v3930 = vpack.c.b16 %v3686, %v3682
      %v3931 = vpack.c.b16 %v3687, %v3683
      %v3932 = vpack.c.b16 %v3688, %v3684
      %v3933 = vpack.c.b16 %v3689, %v3685
      %v3934 = vpack.c.b16 %v3694, %v3690
      %v3935 = vpack.c.b16 %v3695, %v3691
      %v3936 = vpack.c.b16 %v3696, %v3692
      %v3937 = vpack.c.b16 %v3697, %v3693
      %v3938 = vpack.c.b16 %v3702, %v3698
      %v3939 = vpack.c.b16 %v3703, %v3699
      %v3940 = vpack.c.b16 %v3704, %v3700
      %v3941 = vpack.c.b16 %v3705, %v3701
      %v3942 = vpack.c.b16 %v3710, %v3706
      %v3943 = vpack.c.b16 %v3711, %v3707
      %v3944 = vpack.c.b16 %v3712, %v3708
      %v3945 = vpack.c.b16 %v3713, %v3709
      %v3946 = vpack.c.b16 %v3718, %v3714
      %v3947 = vpack.c.b16 %v3719, %v3715
      %v3948 = vpack.c.b16 %v3720, %v3716
      %v3949 = vpack.c.b16 %v3721, %v3717
      %v3950 = vpack.c.b16 %v3726, %v3722
      %v3951 = vpack.c.b16 %v3727, %v3723
      %v3952 = vpack.c.b16 %v3728, %v3724
      %v3953 = vpack.c.b16 %v3729, %v3725
      %v3954 = vpack.c.b16 %v3734, %v3730
      %v3955 = vpack.c.b16 %v3735, %v3731
      %v3956 = vpack.c.b16 %v3736, %v3732
      %v3957 = vpack.c.b16 %v3737, %v3733
      %v3958 = vpack.c.b16 %v3742, %v3738
      %v3959 = vpack.c.b16 %v3743, %v3739
      %v3960 = vpack.c.b16 %v3744, %v3740
      %v3961 = vpack.c.b16 %v3745, %v3741
      %v3962 = vpack.c.b16 %v3750, %v3746
      %v3963 = vpack.c.b16 %v3751, %v3747
      %v3964 = vpack.c.b16 %v3752, %v3748
      %v3965 = vpack.c.b16 %v3753, %v3749
      %v3966 = vpack.c.b16 %v3758, %v3754
      %v3967 = vpack.c.b16 %v3759, %v3755
      %v3968 = vpack.c.b16 %v3760, %v3756
      %v3969 = vpack.c.b16 %v3761, %v3757
      %v3970 = vpack.c.b16 %v3766, %v3762
      %v3971 = vpack.c.b16 %v3767, %v3763
      %v3972 = vpack.c.b16 %v3768, %v3764
      %v3973 = vpack.c.b16 %v3769, %v3765
      %v3974 = vpack.c.b16 %v3774, %v3770
      %v3975 = vpack.c.b16 %v3775, %v3771
      %v3976 = vpack.c.b16 %v3776, %v3772
      %v3977 = vpack.c.b16 %v3777, %v3773
      %v3978 = vpack.c.b16 %v3782, %v3778
      %v3979 = vpack.c.b16 %v3783, %v3779
      %v3980 = vpack.c.b16 %v3784, %v3780
      %v3981 = vpack.c.b16 %v3785, %v3781
      %v3982 = vpack.c.b16 %v3790, %v3786
      %v3983 = vpack.c.b16 %v3791, %v3787
      %v3984 = vpack.c.b16 %v3792, %v3788
      %v3985 = vpack.c.b16 %v3793, %v3789
      %4178 = vmatprep.subr.bf16.mxu0 %v3823
      %4179 = vmatpush1.bf16.msra.mxu0 %v3822
      %4180 = vmatprep.subr.bf16.mxu0 %v3819
      %4181 = vmatpush1.bf16.msra.mxu0 %v3818
      %4182 = vmatprep.subr.bf16.mxu0 %v3815
      %4183 = vmatpush1.bf16.msra.mxu0 %v3814
      %4184 = vmatprep.subr.bf16.mxu0 %v3811
      %4185 = vmatpush1.bf16.msra.mxu0 %v3810
      %4186 = vmatprep.subr.bf16.mxu0 %v3807
      %4187 = vmatpush1.bf16.msra.mxu0 %v3806
      %4188 = vmatprep.subr.bf16.mxu0 %v3803
      %4189 = vmatpush1.bf16.msra.mxu0 %v3802
      %4190 = vmatprep.subr.bf16.mxu0 %v3799
      %4191 = vmatpush1.bf16.msra.mxu0 %v3798
      %4192 = vmatprep.subr.bf16.mxu0 %v3795
      %4193 = vmatpush1.bf16.msra.mxu0 %v3794
      %4194 = vmatprep.subr.bf16.mxu0 %v3855
      %4195 = vmatpush2.bf16.msra.mxu0 %v3854
      %4196 = vmatprep.subr.bf16.mxu0 %v3851
      %4197 = vmatpush2.bf16.msra.mxu0 %v3850
      %4198 = vmatprep.subr.bf16.mxu0 %v3847
      %4199 = vmatpush2.bf16.msra.mxu0 %v3846
      %4200 = vmatprep.subr.bf16.mxu0 %v3843
      %4201 = vmatpush2.bf16.msra.mxu0 %v3842
      %4202 = vmatprep.subr.bf16.mxu0 %v3839
      %4203 = vmatpush2.bf16.msra.mxu0 %v3838
      %4204 = vmatprep.subr.bf16.mxu0 %v3835
      %4205 = vmatpush2.bf16.msra.mxu0 %v3834
      %4206 = vmatprep.subr.bf16.mxu0 %v3831
      %4207 = vmatpush2.bf16.msra.mxu0 %v3830
      %4208 = vmatprep.subr.bf16.mxu0 %v3827
      %4209 = vmatpush2.bf16.msra.mxu0 %v3826
      %4210 = vmatprep.mubr.bf16.mxu0 %v3207
      %4211 = vmatmul.mubr.bf16.gmra.mxu0 %v3206
      %v4212 = vpop.f32.mrf.mxu0
      %v4213 = vadd.f32 0.0, %v4212
      %v4214 = vpop.f32.mrf.mxu0
      %v4215 = vadd.f32 0.0, %v4214
      %v4216 = vpop.f32.mrf.mxu0
      %v4217 = vpop.f32.mrf.mxu0
      %4218 = vdwg.mxu0
      %4219 = vmatprep.subr.bf16.mxu0 %v3887
      %4220 = vmatpush1.bf16.msra.mxu0 %v3886
      %4221 = vmatprep.subr.bf16.mxu0 %v3883
      %4222 = vmatpush1.bf16.msra.mxu0 %v3882
      %4223 = vmatprep.subr.bf16.mxu0 %v3879
      %4224 = vmatpush1.bf16.msra.mxu0 %v3878
      %4225 = vmatprep.subr.bf16.mxu0 %v3875
      %4226 = vmatpush1.bf16.msra.mxu0 %v3874
      %4227 = vmatprep.subr.bf16.mxu0 %v3871
      %4228 = vmatpush1.bf16.msra.mxu0 %v3870
      %4229 = vmatprep.subr.bf16.mxu0 %v3867
      %4230 = vmatpush1.bf16.msra.mxu0 %v3866
      %4231 = vmatprep.subr.bf16.mxu0 %v3863
      %4232 = vmatpush1.bf16.msra.mxu0 %v3862
      %4233 = vmatprep.subr.bf16.mxu0 %v3859
      %4234 = vmatpush1.bf16.msra.mxu0 %v3858
      %4235 = vmatprep.subr.bf16.mxu0 %v3919
      %4236 = vmatpush2.bf16.msra.mxu0 %v3918
      %4237 = vmatprep.subr.bf16.mxu0 %v3915
      %4238 = vmatpush2.bf16.msra.mxu0 %v3914
      %4239 = vmatprep.subr.bf16.mxu0 %v3911
      %4240 = vmatpush2.bf16.msra.mxu0 %v3910
      %4241 = vmatprep.subr.bf16.mxu0 %v3907
      %4242 = vmatpush2.bf16.msra.mxu0 %v3906
      %4243 = vmatprep.subr.bf16.mxu0 %v3903
      %4244 = vmatpush2.bf16.msra.mxu0 %v3902
      %4245 = vmatprep.subr.bf16.mxu0 %v3899
      %4246 = vmatpush2.bf16.msra.mxu0 %v3898
      %4247 = vmatprep.subr.bf16.mxu0 %v3895
      %4248 = vmatpush2.bf16.msra.mxu0 %v3894
      %4249 = vmatprep.subr.bf16.mxu0 %v3891
      %4250 = vmatpush2.bf16.msra.mxu0 %v3890
      %4251 = vmatprep.mubr.bf16.mxu0 %v3209
      %4252 = vmatmul.mubr.bf16.gmra.mxu0 %v3208
      %v4253 = vpop.f32.mrf.mxu0
      %v4254 = vadd.f32 %v4213, %v4253
      %v4255 = vpop.f32.mrf.mxu0
      %v4256 = vadd.f32 %v4215, %v4255
      %v4257 = vpop.f32.mrf.mxu0
      %v4258 = vpop.f32.mrf.mxu0
      %4259 = vdwg.mxu0
      %4260 = vmatprep.subr.bf16.mxu0 %v3951
      %4261 = vmatpush1.bf16.msra.mxu0 %v3950
      %4262 = vmatprep.subr.bf16.mxu0 %v3947
      %4263 = vmatpush1.bf16.msra.mxu0 %v3946
      %4264 = vmatprep.subr.bf16.mxu0 %v3943
      %4265 = vmatpush1.bf16.msra.mxu0 %v3942
      %4266 = vmatprep.subr.bf16.mxu0 %v3939
      %4267 = vmatpush1.bf16.msra.mxu0 %v3938
      %4268 = vmatprep.subr.bf16.mxu0 %v3935
      %4269 = vmatpush1.bf16.msra.mxu0 %v3934
      %4270 = vmatprep.subr.bf16.mxu0 %v3931
      %4271 = vmatpush1.bf16.msra.mxu0 %v3930
      %4272 = vmatprep.subr.bf16.mxu0 %v3927
      %4273 = vmatpush1.bf16.msra.mxu0 %v3926
      %4274 = vmatprep.subr.bf16.mxu0 %v3923
      %4275 = vmatpush1.bf16.msra.mxu0 %v3922
      %4276 = vmatprep.subr.bf16.mxu0 %v3983
      %4277 = vmatpush2.bf16.msra.mxu0 %v3982
      %4278 = vmatprep.subr.bf16.mxu0 %v3979
      %4279 = vmatpush2.bf16.msra.mxu0 %v3978
      %4280 = vmatprep.subr.bf16.mxu0 %v3975
      %4281 = vmatpush2.bf16.msra.mxu0 %v3974
      %4282 = vmatprep.subr.bf16.mxu0 %v3971
      %4283 = vmatpush2.bf16.msra.mxu0 %v3970
      %4284 = vmatprep.subr.bf16.mxu0 %v3967
      %4285 = vmatpush2.bf16.msra.mxu0 %v3966
      %4286 = vmatprep.subr.bf16.mxu0 %v3963
      %4287 = vmatpush2.bf16.msra.mxu0 %v3962
      %4288 = vmatprep.subr.bf16.mxu0 %v3959
      %4289 = vmatpush2.bf16.msra.mxu0 %v3958
      %4290 = vmatprep.subr.bf16.mxu0 %v3955
      %4291 = vmatpush2.bf16.msra.mxu0 %v3954
      %4292 = vmatprep.mubr.bf16.mxu0 %v3211
      %4293 = vmatmul.mubr.bf16.gmra.mxu0 %v3210
      %v4294 = vpop.f32.mrf.mxu0
      %v4295 = vadd.f32 %v4254, %v4294
      %v4296 = vpop.f32.mrf.mxu0
      %v4297 = vadd.f32 %v4256, %v4296
      %v4298 = vpop.f32.mrf.mxu0
      %v4299 = vpop.f32.mrf.mxu0
      %4300 = vdwg.mxu0
      %4301 = vmatprep.subr.bf16.mxu0 %v3825
      %4302 = vmatpush1.bf16.msra.mxu0 %v3824
      %4303 = vmatprep.subr.bf16.mxu0 %v3821
      %4304 = vmatpush1.bf16.msra.mxu0 %v3820
      %4305 = vmatprep.subr.bf16.mxu0 %v3817
      %4306 = vmatpush1.bf16.msra.mxu0 %v3816
      %4307 = vmatprep.subr.bf16.mxu0 %v3813
      %4308 = vmatpush1.bf16.msra.mxu0 %v3812
      %4309 = vmatprep.subr.bf16.mxu0 %v3809
      %4310 = vmatpush1.bf16.msra.mxu0 %v3808
      %4311 = vmatprep.subr.bf16.mxu0 %v3805
      %4312 = vmatpush1.bf16.msra.mxu0 %v3804
      %4313 = vmatprep.subr.bf16.mxu0 %v3801
      %4314 = vmatpush1.bf16.msra.mxu0 %v3800
      %4315 = vmatprep.subr.bf16.mxu0 %v3797
      %4316 = vmatpush1.bf16.msra.mxu0 %v3796
      %4317 = vmatprep.subr.bf16.mxu0 %v3857
      %4318 = vmatpush2.bf16.msra.mxu0 %v3856
      %4319 = vmatprep.subr.bf16.mxu0 %v3853
      %4320 = vmatpush2.bf16.msra.mxu0 %v3852
      %4321 = vmatprep.subr.bf16.mxu0 %v3849
      %4322 = vmatpush2.bf16.msra.mxu0 %v3848
      %4323 = vmatprep.subr.bf16.mxu0 %v3845
      %4324 = vmatpush2.bf16.msra.mxu0 %v3844
      %4325 = vmatprep.subr.bf16.mxu0 %v3841
      %4326 = vmatpush2.bf16.msra.mxu0 %v3840
      %4327 = vmatprep.subr.bf16.mxu0 %v3837
      %4328 = vmatpush2.bf16.msra.mxu0 %v3836
      %4329 = vmatprep.subr.bf16.mxu0 %v3833
      %4330 = vmatpush2.bf16.msra.mxu0 %v3832
      %4331 = vmatprep.subr.bf16.mxu0 %v3829
      %4332 = vmatpush2.bf16.msra.mxu0 %v3828
      %4333 = vmatprep.mubr.bf16.mxu0 %v3207
      %4334 = vmatmul.mubr.bf16.gmra.mxu0 %v3206
      %v4335 = vpop.f32.mrf.mxu0
      %v4336 = vadd.f32 0.0, %v4335
      %v4337 = vpop.f32.mrf.mxu0
      %v4338 = vadd.f32 0.0, %v4337
      %v4339 = vpop.f32.mrf.mxu0
      %v4340 = vpop.f32.mrf.mxu0
      %4341 = vdwg.mxu0
      %4342 = vmatprep.subr.bf16.mxu0 %v3889
      %4343 = vmatpush1.bf16.msra.mxu0 %v3888
      %4344 = vmatprep.subr.bf16.mxu0 %v3885
      %4345 = vmatpush1.bf16.msra.mxu0 %v3884
      %4346 = vmatprep.subr.bf16.mxu0 %v3881
      %4347 = vmatpush1.bf16.msra.mxu0 %v3880
      %4348 = vmatprep.subr.bf16.mxu0 %v3877
      %4349 = vmatpush1.bf16.msra.mxu0 %v3876
      %4350 = vmatprep.subr.bf16.mxu0 %v3873
      %4351 = vmatpush1.bf16.msra.mxu0 %v3872
      %4352 = vmatprep.subr.bf16.mxu0 %v3869
      %4353 = vmatpush1.bf16.msra.mxu0 %v3868
      %4354 = vmatprep.subr.bf16.mxu0 %v3865
      %4355 = vmatpush1.bf16.msra.mxu0 %v3864
      %4356 = vmatprep.subr.bf16.mxu0 %v3861
      %4357 = vmatpush1.bf16.msra.mxu0 %v3860
      %4358 = vmatprep.subr.bf16.mxu0 %v3921
      %4359 = vmatpush2.bf16.msra.mxu0 %v3920
      %4360 = vmatprep.subr.bf16.mxu0 %v3917
      %4361 = vmatpush2.bf16.msra.mxu0 %v3916
      %4362 = vmatprep.subr.bf16.mxu0 %v3913
      %4363 = vmatpush2.bf16.msra.mxu0 %v3912
      %4364 = vmatprep.subr.bf16.mxu0 %v3909
      %4365 = vmatpush2.bf16.msra.mxu0 %v3908
      %4366 = vmatprep.subr.bf16.mxu0 %v3905
      %4367 = vmatpush2.bf16.msra.mxu0 %v3904
      %4368 = vmatprep.subr.bf16.mxu0 %v3901
      %4369 = vmatpush2.bf16.msra.mxu0 %v3900
      %4370 = vmatprep.subr.bf16.mxu0 %v3897
      %4371 = vmatpush2.bf16.msra.mxu0 %v3896
      %4372 = vmatprep.subr.bf16.mxu0 %v3893
      %4373 = vmatpush2.bf16.msra.mxu0 %v3892
      %4374 = vmatprep.mubr.bf16.mxu0 %v3209
      %4375 = vmatmul.mubr.bf16.gmra.mxu0 %v3208
      %v4376 = vpop.f32.mrf.mxu0
      %v4377 = vadd.f32 %v4336, %v4376
      %v4378 = vpop.f32.mrf.mxu0
      %v4379 = vadd.f32 %v4338, %v4378
      %v4380 = vpop.f32.mrf.mxu0
      %v4381 = vpop.f32.mrf.mxu0
      %4382 = vdwg.mxu0
      %4383 = vmatprep.subr.bf16.mxu0 %v3953
      %4384 = vmatpush1.bf16.msra.mxu0 %v3952
      %4385 = vmatprep.subr.bf16.mxu0 %v3949
      %4386 = vmatpush1.bf16.msra.mxu0 %v3948
      %4387 = vmatprep.subr.bf16.mxu0 %v3945
      %4388 = vmatpush1.bf16.msra.mxu0 %v3944
      %4389 = vmatprep.subr.bf16.mxu0 %v3941
      %4390 = vmatpush1.bf16.msra.mxu0 %v3940
      %4391 = vmatprep.subr.bf16.mxu0 %v3937
      %4392 = vmatpush1.bf16.msra.mxu0 %v3936
      %4393 = vmatprep.subr.bf16.mxu0 %v3933
      %4394 = vmatpush1.bf16.msra.mxu0 %v3932
      %4395 = vmatprep.subr.bf16.mxu0 %v3929
      %4396 = vmatpush1.bf16.msra.mxu0 %v3928
      %4397 = vmatprep.subr.bf16.mxu0 %v3925
      %4398 = vmatpush1.bf16.msra.mxu0 %v3924
      %4399 = vmatprep.subr.bf16.mxu0 %v3985
      %4400 = vmatpush2.bf16.msra.mxu0 %v3984
      %4401 = vmatprep.subr.bf16.mxu0 %v3981
      %4402 = vmatpush2.bf16.msra.mxu0 %v3980
      %4403 = vmatprep.subr.bf16.mxu0 %v3977
      %4404 = vmatpush2.bf16.msra.mxu0 %v3976
      %4405 = vmatprep.subr.bf16.mxu0 %v3973
      %4406 = vmatpush2.bf16.msra.mxu0 %v3972
      %4407 = vmatprep.subr.bf16.mxu0 %v3969
      %4408 = vmatpush2.bf16.msra.mxu0 %v3968
      %4409 = vmatprep.subr.bf16.mxu0 %v3965
      %4410 = vmatpush2.bf16.msra.mxu0 %v3964
      %4411 = vmatprep.subr.bf16.mxu0 %v3961
      %4412 = vmatpush2.bf16.msra.mxu0 %v3960
      %4413 = vmatprep.subr.bf16.mxu0 %v3957
      %4414 = vmatpush2.bf16.msra.mxu0 %v3956
      %4415 = vmatprep.mubr.bf16.mxu0 %v3211
      %4416 = vmatmul.mubr.bf16.gmra.mxu0 %v3210
      %v4417 = vpop.f32.mrf.mxu0
      %v4418 = vadd.f32 %v4377, %v4417
      %v4419 = vpop.f32.mrf.mxu0
      %v4420 = vadd.f32 %v4379, %v4419
      %v4421 = vpop.f32.mrf.mxu0
      %v4422 = vpop.f32.mrf.mxu0
      %4423 = vdwg.mxu0
      %v4424 = vadd.f32 %v2866, %v4295
      %v4425 = vadd.f32 %v2868, %v4297
      %v4426 = vadd.f32 %v2989, %v4418
      %v4427 = vadd.f32 %v2991, %v4420
      %vm4428 = vcmask 1043456
      %v4429 = vsel %vm4428, %v4424, 0.0
      %v4430 = vrot.slane %v4429, 4
      %v4431 = vadd.f32 %v4429, %v4430
      %v4432 = vrot.slane %v4431, 2
      %v4433 = vadd.f32 %v4431, %v4432
      %v4434 = vrot.slane %v4433, 1
      %v4435 = vadd.f32 %v4433, %v4434
      %v4436 = vsel %vm4428, %v4425, 0.0
      %v4437 = vrot.slane %v4436, 4
      %v4438 = vadd.f32 %v4436, %v4437
      %v4439 = vrot.slane %v4438, 2
      %v4440 = vadd.f32 %v4438, %v4439
      %v4441 = vrot.slane %v4440, 1
      %v4442 = vadd.f32 %v4440, %v4441
      %v4443 = vsel %vm4428, %v4426, 0.0
      %v4444 = vrot.slane %v4443, 4
      %v4445 = vadd.f32 %v4443, %v4444
      %v4446 = vrot.slane %v4445, 2
      %v4447 = vadd.f32 %v4445, %v4446
      %v4448 = vrot.slane %v4447, 1
      %v4449 = vadd.f32 %v4447, %v4448
      %v4450 = vsel %vm4428, %v4427, 0.0
      %v4451 = vrot.slane %v4450, 4
      %v4452 = vadd.f32 %v4450, %v4451
      %v4453 = vrot.slane %v4452, 2
      %v4454 = vadd.f32 %v4452, %v4453
      %v4455 = vrot.slane %v4454, 1
      %v4456 = vadd.f32 %v4454, %v4455
      %v4457 = vrcp.pop 4.0
      %v4458 = vmul.f32 %v4435, %v4457
      %v4459 = vmul.f32 %v4442, %v4457
      %v4460 = vmul.f32 %v4449, %v4457
      %v4461 = vmul.f32 %v4456, %v4457
      %v4462 = vsub.f32 %v4424, %v4458
      %v4463 = vsub.f32 %v4425, %v4459
      %v4464 = vsub.f32 %v4426, %v4460
      %v4465 = vsub.f32 %v4427, %v4461
      %v4466 = vmul.f32 %v4462, %v4462
      %v4467 = vmul.f32 %v4463, %v4463
      %v4468 = vmul.f32 %v4464, %v4464
      %v4469 = vmul.f32 %v4465, %v4465
      %v4470 = vsel %vm4428, %v4466, 0.0
      %v4471 = vrot.slane %v4470, 4
      %v4472 = vadd.f32 %v4470, %v4471
      %v4473 = vrot.slane %v4472, 2
      %v4474 = vadd.f32 %v4472, %v4473
      %v4475 = vrot.slane %v4474, 1
      %v4476 = vadd.f32 %v4474, %v4475
      %v4477 = vsel %vm4428, %v4467, 0.0
      %v4478 = vrot.slane %v4477, 4
      %v4479 = vadd.f32 %v4477, %v4478
      %v4480 = vrot.slane %v4479, 2
      %v4481 = vadd.f32 %v4479, %v4480
      %v4482 = vrot.slane %v4481, 1
      %v4483 = vadd.f32 %v4481, %v4482
      %v4484 = vsel %vm4428, %v4468, 0.0
      %v4485 = vrot.slane %v4484, 4
      %v4486 = vadd.f32 %v4484, %v4485
      %v4487 = vrot.slane %v4486, 2
      %v4488 = vadd.f32 %v4486, %v4487
      %v4489 = vrot.slane %v4488, 1
      %v4490 = vadd.f32 %v4488, %v4489
      %v4491 = vsel %vm4428, %v4469, 0.0
      %v4492 = vrot.slane %v4491, 4
      %v4493 = vadd.f32 %v4491, %v4492
      %v4494 = vrot.slane %v4493, 2
      %v4495 = vadd.f32 %v4493, %v4494
      %v4496 = vrot.slane %v4495, 1
      %v4497 = vadd.f32 %v4495, %v4496
      %v4498 = vmul.f32 %v4476, %v4457
      %v4499 = vmul.f32 %v4483, %v4457
      %v4500 = vmul.f32 %v4490, %v4457
      %v4501 = vmul.f32 %v4497, %v4457
      %v4502 = vadd.f32 %v4498, 1e-05
      %v4503 = vadd.f32 %v4499, 1e-05
      %v4504 = vadd.f32 %v4500, 1e-05
      %v4505 = vadd.f32 %v4501, 1e-05
      %v4506 = vrsqrt.pop %v4502
      %v4507 = vrsqrt.pop %v4503
      %v4508 = vrsqrt.pop %v4504
      %v4509 = vrsqrt.pop %v4505
      %v4510 = vmul.f32 %v4462, %v4506
      %v4511 = vmul.f32 %v4463, %v4507
      %v4512 = vmul.f32 %v4464, %v4508
      %v4513 = vmul.f32 %v4465, %v4509
      %v4514 = vmul.f32 %v4510, 0.2
      %v4515 = vmul.f32 %v4511, 0.2
      %v4516 = vmul.f32 %v4512, 0.2
      %v4517 = vmul.f32 %v4513, 0.2
      %v4518 = vmax.f32 %v4510, %v4514
      %v4519 = vmax.f32 %v4511, %v4515
      %v4520 = vmax.f32 %v4512, %v4516
      %v4521 = vmax.f32 %v4513, %v4517
      %v4522 = vpack.c.bf16 %v4518, %v4518
      %v4523 = vpack.c.bf16 %v4519, %v4519
      %v4524 = vpack.c.bf16 %v4520, %v4520
      %v4525 = vpack.c.bf16 %v4521, %v4521
      %v4530 = vcombine.low %v4522, %v4523
      %v4531 = vcombine.low %v4524, %v4525
      %v4533 = vunpack.c.l.s4 1983009808
      %v4534 = vunpack.c.0.s8 %v4533
      %v4535 = vlaneseq
      %v4536 = vshrl.u32 %v4535, 7
      %v4537 = vsub.s32 %v4534, %v4536
      %v4538 = vrot.slane %v4530, %v4537
      %v4540 = vunpack.c.l.s4 1983009808
      %v4541 = vunpack.c.0.s8 %v4540
      %v4542 = vlaneseq
      %v4543 = vshrl.u32 %v4542, 7
      %v4544 = vsub.s32 %v4541, %v4543
      %v4545 = vrot.slane %v4531, %v4544
      %v4546 = vcombine.low %v4538, %v4545
      %4548 = vst [vmem:[%s143] sm:$0xff] %v4546
      %p4549 = scmp.lt.s32.totalorder %s13, 1
      %s4550 = scalar_select %p4549, %s13, 1
      %s4551 = smul.addr %s4550, 4
      %s4552 = smul.addr %s4551, 2
      %s4553 = scalar_lea.vmem %s2, %s4552
      // Predicated region
      $region29: #{discriminator_forward.8} parent=27 // pred_check
        %p4554 = pneg %p78
      $region30: #{discriminator_forward.8} parent=27 // pred_check_branch
        %4556 = sbr.rel (%p4554) target = $region32
      $region31: #{discriminator_forward.8} parent=27 // pred_region
        _
      $region32: #{discriminator_forward.8} parent=27 // pred_fallthru
        _
    $region28: #{discriminator_forward.8} parent=5 // pred_fallthru
      _
    %p4557 = scmp.le.s32.totalorder 2, %s8
    // Predicated region
    $region33: #{discriminator_forward.8} parent=5 // pred_check
      %p4558 = pneg %p4557
    $region34: #{discriminator_forward.8} parent=5 // pred_check_branch
      %4560 = sbr.rel (%p4558) target = $region36
    $region35: #{discriminator_forward.8} parent=5 // pred_region
      %s4561 = ssub.s32 %s8, 2
      // Predicated region
      $region37: #{discriminator_forward.8} parent=35 // pred_check
        %p4562 = pneg %p84
      $region38: #{discriminator_forward.8} parent=35 // pred_check_branch
        %4564 = sbr.rel (%p4562) target = $region40
      $region39: #{discriminator_forward.8} parent=35 // pred_region
        %p4565 = scmp.lt.s32.totalorder %s14, 1
        %s4566 = scalar_select %p4565, %s14, 1
        %s4567 = smul.addr %s4566, 4
        %s4568 = smul.addr %s4567, 2
        %s4569 = scalar_lea.vmem %s2, %s4568
      $region40: #{discriminator_forward.8} parent=35 // pred_fallthru
        _
    $region36: #{discriminator_forward.8} parent=5 // pred_fallthru
      _
  $region6: #{discriminator_forward.8} parent=0 // loop_footer
    %s12 = sadd.s32 1, %s8
  $region7: #{discriminator_forward.8} parent=0 // loop_footer_branch
    %7 = sbr.rel target = $region3
  $region8: #{discriminator_forward.8} parent=0 // loop_exit
    _

</llo_original>
